<compile_context>
chip_gen: v7x
topology: tpu7x:2x2x1
jax: 0.10.0
libtpu: 0.0.40
codegen_flags: <defaults>
</compile_context>

<pallas_src>
import functools

import jax
import jax.numpy as jnp
from jax.experimental import pallas as pl
from jax.experimental.pallas import tpu as pltpu

EPS = 1e-5
LANES = 128


def _round_up(v, m):
    return (v + m - 1) // m * m


# --------------------------------- kernels ----------------------------------

def _im2col_3x3(src_ref, B, H, W, Cin):
    """Gather the 9 conv taps of a zero-padded (B, H+2, W+2, Cin) source into a
    single lane-dense (B*H*W, 9*Cin) patch matrix.

    Tap order is kw-major then kh (matching `pack_w3x3` in the wrapper):
    channel block t = kw*3 + kh holds src[b, kh+i, kw+j, :] for output (i, j).
    """
    parts = []
    for b in range(B):                                   # static unroll
        taps = []
        for kw in range(3):
            col = src_ref[b, :, kw:kw + W, :]            # (H+2, W, Cin) slab
            for kh in range(3):
                taps.append(col[kh:kh + H])              # free outer-dim slice
        parts.append(jnp.concatenate(taps, axis=-1).reshape(H * W, 9 * Cin))
    return parts[0] if B == 1 else jnp.concatenate(parts, axis=0)


def _sum_and_sumsq(v):
    return (jnp.sum(v, axis=0, keepdims=True),
            jnp.sum(v * v, axis=0, keepdims=True))


def _make_stage1_kernel(has_proj, H, W, Cpi):
    """c1 = conv1(x); sc = x @ ws (fused 1x1 projection, optional); plus
    per-step BN partial sums for c1 (and sc)."""
    def kernel(xpad_ref, w1_ref, *rest):
        if has_proj:
            ws_ref, c1_ref, sc_ref, st_ref = rest
        else:
            c1_ref, st_ref = rest
        B = xpad_ref.shape[0]
        Cout = c1_ref.shape[-1]
        lhs = _im2col_3x3(xpad_ref, B, H, W, Cpi)        # (B*H*W, 9*Cpi)
        acc = jnp.dot(lhs, w1_ref[...], preferred_element_type=jnp.float32)
        c1_ref[...] = acc.reshape(B, H, W, Cout).astype(c1_ref.dtype)
        rows = list(_sum_and_sumsq(acc))
        if has_proj:
            # 1x1 shortcut reuses the centre tap (kw=1, kh=1 -> block 4) of the
            # already-built patch matrix: 128-aligned lane slice, no reload.
            xin = lhs[:, 4 * Cpi:5 * Cpi]
            sc = jnp.dot(xin, ws_ref[...], preferred_element_type=jnp.float32)
            sc_ref[...] = sc.reshape(B, H, W, Cout).astype(sc_ref.dtype)
            rows += list(_sum_and_sumsq(sc))
        st_ref[0] = jnp.concatenate(rows, axis=0)
    return kernel


def _make_stage2_kernel(H, W, Cpo):
    """h1 = relu(bn1(c1)) (folded scale/shift) written into a zero-halo VMEM
    scratch (correct conv halo, no HBM pad pass), then c2 = conv2(h1) plus its
    BN partial sums."""
    def kernel(c1_ref, w2_ref, a1_ref, b1_ref, c2_ref, st_ref, h1pad_ref):
        B = c1_ref.shape[0]
        Cout = c2_ref.shape[-1]
        dt = h1pad_ref.dtype
        # Zero only the halo rows/columns; the interior is fully overwritten
        # just below (no full-scratch store sweep per step).
        zr = jnp.zeros((B, 1, W + 2, Cpo), dt)
        zc = jnp.zeros((B, H + 2, 1, Cpo), dt)
        h1pad_ref[:, 0:1, :, :] = zr
        h1pad_ref[:, H + 1:H + 2, :, :] = zr
        h1pad_ref[:, :, 0:1, :] = zc
        h1pad_ref[:, :, W + 1:W + 2, :] = zc
        h1 = jnp.maximum(
            c1_ref[...].astype(jnp.float32) * a1_ref[...] + b1_ref[...], 0.0)
        h1pad_ref[:, 1:H + 1, 1:W + 1, :] = h1.astype(dt)
        lhs = _im2col_3x3(h1pad_ref, B, H, W, Cpo)       # (B*H*W, 9*Cpo)
        acc = jnp.dot(lhs, w2_ref[...], preferred_element_type=jnp.float32)
        c2_ref[...] = acc.reshape(B, H, W, Cout).astype(c2_ref.dtype)
        st_ref[0] = jnp.concatenate(list(_sum_and_sumsq(acc)), axis=0)
    return kernel


def _make_stage3_kernel(has_proj):
    """out = relu(bn2(c2) + shortcut); element-wise math stays in f32."""
    def kernel(c2_ref, sc_ref, a2_ref, b2_ref, *rest):
        if has_proj:
            as_ref, bs_ref, out_ref = rest
        else:
            (out_ref,) = rest
        o2 = c2_ref[...].astype(jnp.float32) * a2_ref[...] + b2_ref[...]
        if has_proj:
            sc = sc_ref[...].astype(jnp.float32) * as_ref[...] + bs_ref[...]
        else:
            sc = sc_ref[...].astype(jnp.float32)   # identity: channel-padded x
        out_ref[...] = jnp.maximum(o2 + sc, 0.0).astype(out_ref.dtype)
    return kernel


# -------------------------------- wrapper ------------------------------------

def _bn_affine(sum_, sumsq, gamma, beta, count):
    """Fold training-mode BN (biased batch variance) into scale/shift."""
    mean = sum_ / count
    var = jnp.maximum(sumsq / count - mean * mean, 0.0)
    scale = gamma * jax.lax.rsqrt(var + EPS)
    shift = beta - mean * scale
    return scale[None, :], shift[None, :]


def _pick_batch_tile(N, H, W, Cpi, Cpo, itemsize):
    """Images per grid step: keep matmul M = b*H*W large while the per-step
    working set (im2col patches + f32 accumulator + activations, double
    buffered) stays inside a v7x-safe ~20 MiB VMEM budget."""
    budget = 20 * 1024 * 1024
    per_img = H * W * (9 * max(Cpi, Cpo) * (itemsize + 4) + 8 * Cpo * itemsize)
    bt = 1
    for cand in (8, 4, 2):
        if N % cand == 0 and cand * per_img <= budget:
            bt = cand
            break
    return bt


@functools.partial(jax.jit, static_argnames=("stride", "compute_dtype"))
def basic_block_forward(x_nchw, params, stride=1, compute_dtype=jnp.bfloat16):
    if stride != 1:
        # TODO(synk): strided conv1 / strided 1x1 shortcut not implemented.
        raise NotImplementedError("stride > 1 not implemented")

    N, Cin, H, W = x_nchw.shape
    Cout = params["w1"].shape[0]
    has_proj = "ws" in params
    dt = compute_dtype
    Cpi = _round_up(Cin, LANES)
    Cpo = _round_up(Cout, LANES)
    b_tile = _pick_batch_tile(N, H, W, Cpi, Cpo, jnp.dtype(dt).itemsize)
    n_steps = N // b_tile

    # Repack once per block: NHWC activations (C on lanes) zero-padded to a
    # lane multiple; conv weights flattened to (9*Cpad, Cout) matching the
    # kernel's kw-major/kh tap order.  When chaining blocks, keep activations
    # in this NHWC channel-padded compute-dtype form so this is paid once/net.
    x_nhwc = jnp.transpose(x_nchw, (0, 2, 3, 1))
    x_c = jnp.pad(x_nhwc, ((0, 0), (0, 0), (0, 0), (0, Cpi - Cin))).astype(dt)
    xpad = jnp.pad(x_c, ((0, 0), (1, 1), (1, 1), (0, 0)))

    def pack_w3x3(w, ci, co):
        # OIHW -> (kw, kh, Cin, Cout), zero-pad channels, flatten to (9*ci, co)
        w = jnp.transpose(w, (3, 2, 1, 0))
        w = jnp.pad(w, ((0, 0), (0, 0),
                        (0, ci - w.shape[2]), (0, co - w.shape[3])))
        return w.reshape(9 * ci, co).astype(dt)

    def pad_c(v):                                        # (C,) -> (Cpo,) f32
        return jnp.pad(v.astype(jnp.float32), (0, Cpo - v.shape[0]))

    w1 = pack_w3x3(params["w1"], Cpi, Cpo)
    w2 = pack_w3x3(params["w2"], Cpo, Cpo)

    grid = (n_steps,)
    cparams = pltpu.CompilerParams(dimension_semantics=("parallel",))
    img_spec = pl.BlockSpec((b_tile, H + 2, W + 2, Cpi), lambda n: (n, 0, 0, 0))
    act_spec = pl.BlockSpec((b_tile, H, W, Cpo), lambda n: (n, 0, 0, 0))
    xc_spec = pl.BlockSpec((b_tile, H, W, Cpi), lambda n: (n, 0, 0, 0))
    vec_spec = pl.BlockSpec((1, Cpo), lambda n: (0, 0))

    # ------------------------------ stage 1 ---------------------------------
    n_stats1 = 4 if has_proj else 2
    in_specs1 = [img_spec, pl.BlockSpec((9 * Cpi, Cpo), lambda n: (0, 0))]
    inputs1 = [xpad, w1]
    out_shape1 = [jax.ShapeDtypeStruct((N, H, W, Cpo), dt)]
    out_specs1 = [act_spec]
    if has_proj:
        ws = jnp.pad(jnp.transpose(params["ws"][:, :, 0, 0], (1, 0)),
                     ((0, Cpi - Cin), (0, Cpo - Cout))).astype(dt)
        in_specs1.append(pl.BlockSpec((Cpi, Cpo), lambda n: (0, 0)))
        inputs1.append(ws)
        out_shape1.append(jax.ShapeDtypeStruct((N, H, W, Cpo), dt))
        out_specs1.append(act_spec)
    out_shape1.append(jax.ShapeDtypeStruct((n_steps, n_stats1, Cpo), jnp.float32))
    out_specs1.append(pl.BlockSpec((1, n_stats1, Cpo), lambda n: (n, 0, 0)))

    res1 = pl.pallas_call(
        _make_stage1_kernel(has_proj, H, W, Cpi),
        grid=grid,
        in_specs=in_specs1,
        out_specs=tuple(out_specs1),
        out_shape=tuple(out_shape1),
        compiler_params=cparams,
    )(*inputs1)
    if has_proj:
        c1, sc_raw, stats1 = res1
    else:
        c1, stats1 = res1

    count = float(N * H * W)
    a1, b1 = _bn_affine(stats1[:, 0].sum(0), stats1[:, 1].sum(0),
                        pad_c(params["g1"]), pad_c(params["b1"]), count)

    # ------------------------------ stage 2 ---------------------------------
    c2, stats2 = pl.pallas_call(
        _make_stage2_kernel(H, W, Cpo),
        grid=grid,
        in_specs=[act_spec,
                  pl.BlockSpec((9 * Cpo, Cpo), lambda n: (0, 0)),
                  vec_spec, vec_spec],
        out_specs=(act_spec, pl.BlockSpec((1, 2, Cpo), lambda n: (n, 0, 0))),
        out_shape=(jax.ShapeDtypeStruct((N, H, W, Cpo), dt),
                   jax.ShapeDtypeStruct((n_steps, 2, Cpo), jnp.float32)),
        scratch_shapes=[pltpu.VMEM((b_tile, H + 2, W + 2, Cpo), dt)],
        compiler_params=cparams,
    )(c1, w2, a1, b1)

    a2, b2 = _bn_affine(stats2[:, 0].sum(0), stats2[:, 1].sum(0),
                        pad_c(params["g2"]), pad_c(params["b2"]), count)

    # ------------------------------ stage 3 ---------------------------------
    if has_proj:
        as_, bs_ = _bn_affine(stats1[:, 2].sum(0), stats1[:, 3].sum(0),
                              pad_c(params["gs"]), pad_c(params["bs"]), count)
        inputs3 = [c2, sc_raw, a2, b2, as_, bs_]
        in_specs3 = [act_spec, act_spec, vec_spec, vec_spec, vec_spec, vec_spec]
    else:
        # Identity shortcut: channel-padded (NOT spatially padded) x.
        inputs3 = [c2, x_c, a2, b2]
        in_specs3 = [act_spec, xc_spec, vec_spec, vec_spec]

    out = pl.pallas_call(
        _make_stage3_kernel(has_proj),
        grid=grid,
        in_specs=in_specs3,
        out_specs=act_spec,
        out_shape=jax.ShapeDtypeStruct((N, H, W, Cpo), dt),
        compiler_params=cparams,
    )(*inputs3)

    # Final repack to the module's NCHW f32 contract (paid once per block here;
    # when chaining blocks keep the NHWC channel-padded compute-dtype tensor).
    return jnp.transpose(out[..., :Cout].astype(jnp.float32), (0, 3, 1, 2))


# ------------------------- pure-JAX reference (NCHW) -------------------------

def _conv_ref(x, w, padding):
    return jax.lax.conv_general_dilated(
        x, w, (1, 1), padding, dimension_numbers=("NCHW", "OIHW", "NCHW"),
        precision=jax.lax.Precision.HIGHEST)


def _bn_ref(x, g, b):
    mean = x.mean(axis=(0, 2, 3), keepdims=True)
    var = ((x - mean) ** 2).mean(axis=(0, 2, 3), keepdims=True)
    return ((x - mean) * jax.lax.rsqrt(var + EPS)
            * g.reshape(1, -1, 1, 1) + b.reshape(1, -1, 1, 1))


def reference_forward(x, p):
    c1 = _conv_ref(x, p["w1"], ((1, 1), (1, 1)))
    h1 = jnp.maximum(_bn_ref(c1, p["g1"], p["b1"]), 0.0)
    c2 = _conv_ref(h1, p["w2"], ((1, 1), (1, 1)))
    o2 = _bn_ref(c2, p["g2"], p["b2"])
    if "ws" in p:
        sc = _bn_ref(_conv_ref(x, p["ws"], ((0, 0), (0, 0))), p["gs"], p["bs"])
    else:
        sc = x
    return jnp.maximum(o2 + sc, 0.0)


# ----------------------------------- main ------------------------------------

def init_params(key, in_planes, planes, stride=1):
    k1, k2, k3 = jax.random.split(key, 3)
    p = {
        "w1": jax.random.normal(k1, (planes, in_planes, 3, 3), jnp.float32) * 0.1,
        "g1": jnp.ones((planes,), jnp.float32),
        "b1": jnp.zeros((planes,), jnp.float32),
        "w2": jax.random.normal(k2, (planes, planes, 3, 3), jnp.float32) * 0.1,
        "g2": jnp.ones((planes,), jnp.float32),
        "b2": jnp.zeros((planes,), jnp.float32),
    }
    if stride != 1 or in_planes != planes:
        p["ws"] = jax.random.normal(k3, (planes, in_planes, 1, 1), jnp.float32) * 0.1
        p["gs"] = jnp.ones((planes,), jnp.float32)
        p["bs"] = jnp.zeros((planes,), jnp.float32)
    return p


if __name__ == "__main__":
    key = jax.random.PRNGKey(0)
    kx, kp, kp2 = jax.random.split(key, 3)

    N, H, W = 2, 16, 16
    # projection-shortcut block (in_planes != planes) and identity block
    x1 = jax.random.normal(kx, (N, 4, H, W), jnp.float32)
    p1 = init_params(kp, 4, 8, stride=1)
    x2 = jax.random.normal(kx, (N, 8, H, W), jnp.float32)
    p2 = init_params(kp2, 8, 8, stride=1)

    checks = [
        ("proj/f32", x1, p1, jnp.float32, 2e-2),
        ("proj/bf16", x1, p1, jnp.bfloat16, 5e-2),
        ("identity/f32", x2, p2, jnp.float32, 2e-2),
        ("identity/bf16", x2, p2, jnp.bfloat16, 5e-2),
    ]
    for name, x, p, cdt, tol in checks:
        out = jax.block_until_ready(basic_block_forward(x, p, compute_dtype=cdt))
        ref = jax.block_until_ready(reference_forward(x, p))
        assert out.shape == ref.shape, (name, out.shape, ref.shape)
        err = float(jnp.max(jnp.abs(out - ref)))
        assert jnp.allclose(out, ref, atol=tol, rtol=tol), (name, err)

    print("KERNEL_OK")
</pallas_src>

<mosaic_0001>
module attributes {stable_mosaic.version = 11 : i64} {
  func.func @kernel(%arg0: i32, %arg1: memref<2x18x18x128xf32, #tpu.memory_space<vmem>>, %arg2: memref<1152x128xf32, #tpu.memory_space<vmem>>, %arg3: memref<128x128xf32, #tpu.memory_space<vmem>>, %arg4: memref<2x16x16x128xf32, #tpu.memory_space<vmem>>, %arg5: memref<2x16x16x128xf32, #tpu.memory_space<vmem>>, %arg6: memref<1x4x128xf32, #tpu.memory_space<vmem>>) attributes {dimension_semantics = [#tpu.dimension_semantics<parallel>], iteration_bounds = array<i64: 1>, scalar_prefetch = 0 : i64, scratch_operands = 0 : i64, tpu.core_type = #tpu.core_type<tc>, window_params = [{transform_indices = @transform_0, window_bounds = array<i64: 2, 18, 18, 128>}, {pipeline_mode = #tpu.pipeline_mode<synchronous>, transform_indices = @transform_1, window_bounds = array<i64: 1152, 128>}, {pipeline_mode = #tpu.pipeline_mode<synchronous>, transform_indices = @transform_2, window_bounds = array<i64: 128, 128>}, {transform_indices = @transform_3, window_bounds = array<i64: 2, 16, 16, 128>}, {transform_indices = @transform_4, window_bounds = array<i64: 2, 16, 16, 128>}, {transform_indices = @transform_5, window_bounds = array<i64: 1, 4, 128>}]} {
    %c0 = arith.constant 0 : index
    %c0_0 = arith.constant 0 : index
    %c0_1 = arith.constant 0 : index
    %c0_2 = arith.constant 0 : index
    %0 = vector.load %arg1[%c0, %c0_0, %c0_1, %c0_2] : memref<2x18x18x128xf32, #tpu.memory_space<vmem>>, vector<1x18x16x128xf32>
    %1 = vector.shape_cast %0 : vector<1x18x16x128xf32> to vector<18x16x128xf32>
    %2 = vector.extract_strided_slice %1 {offsets = [0, 0, 0], sizes = [16, 16, 128], strides = [1, 1, 1]} : vector<18x16x128xf32> to vector<16x16x128xf32>
    %3 = vector.extract_strided_slice %1 {offsets = [1, 0, 0], sizes = [16, 16, 128], strides = [1, 1, 1]} : vector<18x16x128xf32> to vector<16x16x128xf32>
    %4 = vector.extract_strided_slice %1 {offsets = [2, 0, 0], sizes = [16, 16, 128], strides = [1, 1, 1]} : vector<18x16x128xf32> to vector<16x16x128xf32>
    %c0_3 = arith.constant 0 : index
    %c0_4 = arith.constant 0 : index
    %c1 = arith.constant 1 : index
    %c0_5 = arith.constant 0 : index
    %5 = vector.load %arg1[%c0_3, %c0_4, %c1, %c0_5] : memref<2x18x18x128xf32, #tpu.memory_space<vmem>>, vector<1x18x16x128xf32>
    %6 = vector.shape_cast %5 : vector<1x18x16x128xf32> to vector<18x16x128xf32>
    %7 = vector.extract_strided_slice %6 {offsets = [0, 0, 0], sizes = [16, 16, 128], strides = [1, 1, 1]} : vector<18x16x128xf32> to vector<16x16x128xf32>
    %8 = vector.extract_strided_slice %6 {offsets = [1, 0, 0], sizes = [16, 16, 128], strides = [1, 1, 1]} : vector<18x16x128xf32> to vector<16x16x128xf32>
    %9 = vector.extract_strided_slice %6 {offsets = [2, 0, 0], sizes = [16, 16, 128], strides = [1, 1, 1]} : vector<18x16x128xf32> to vector<16x16x128xf32>
    %c0_6 = arith.constant 0 : index
    %c0_7 = arith.constant 0 : index
    %c2 = arith.constant 2 : index
    %c0_8 = arith.constant 0 : index
    %10 = vector.load %arg1[%c0_6, %c0_7, %c2, %c0_8] : memref<2x18x18x128xf32, #tpu.memory_space<vmem>>, vector<1x18x16x128xf32>
    %11 = vector.shape_cast %10 : vector<1x18x16x128xf32> to vector<18x16x128xf32>
    %12 = vector.extract_strided_slice %11 {offsets = [0, 0, 0], sizes = [16, 16, 128], strides = [1, 1, 1]} : vector<18x16x128xf32> to vector<16x16x128xf32>
    %13 = vector.extract_strided_slice %11 {offsets = [1, 0, 0], sizes = [16, 16, 128], strides = [1, 1, 1]} : vector<18x16x128xf32> to vector<16x16x128xf32>
    %14 = vector.extract_strided_slice %11 {offsets = [2, 0, 0], sizes = [16, 16, 128], strides = [1, 1, 1]} : vector<18x16x128xf32> to vector<16x16x128xf32>
    %15 = tpu.concatenate %2, %3, %4, %7, %8, %9, %12, %13, %14 in 2 : vector<16x16x128xf32>, vector<16x16x128xf32>, vector<16x16x128xf32>, vector<16x16x128xf32>, vector<16x16x128xf32>, vector<16x16x128xf32>, vector<16x16x128xf32>, vector<16x16x128xf32>, vector<16x16x128xf32> -> vector<16x16x1152xf32>
    %16 = vector.shape_cast %15 : vector<16x16x1152xf32> to vector<256x1152xf32>
    %c1_9 = arith.constant 1 : index
    %c0_10 = arith.constant 0 : index
    %c0_11 = arith.constant 0 : index
    %c0_12 = arith.constant 0 : index
    %17 = vector.load %arg1[%c1_9, %c0_10, %c0_11, %c0_12] : memref<2x18x18x128xf32, #tpu.memory_space<vmem>>, vector<1x18x16x128xf32>
    %18 = vector.shape_cast %17 : vector<1x18x16x128xf32> to vector<18x16x128xf32>
    %19 = vector.extract_strided_slice %18 {offsets = [0, 0, 0], sizes = [16, 16, 128], strides = [1, 1, 1]} : vector<18x16x128xf32> to vector<16x16x128xf32>
    %20 = vector.extract_strided_slice %18 {offsets = [1, 0, 0], sizes = [16, 16, 128], strides = [1, 1, 1]} : vector<18x16x128xf32> to vector<16x16x128xf32>
    %21 = vector.extract_strided_slice %18 {offsets = [2, 0, 0], sizes = [16, 16, 128], strides = [1, 1, 1]} : vector<18x16x128xf32> to vector<16x16x128xf32>
    %c1_13 = arith.constant 1 : index
    %c0_14 = arith.constant 0 : index
    %c1_15 = arith.constant 1 : index
    %c0_16 = arith.constant 0 : index
    %22 = vector.load %arg1[%c1_13, %c0_14, %c1_15, %c0_16] : memref<2x18x18x128xf32, #tpu.memory_space<vmem>>, vector<1x18x16x128xf32>
    %23 = vector.shape_cast %22 : vector<1x18x16x128xf32> to vector<18x16x128xf32>
    %24 = vector.extract_strided_slice %23 {offsets = [0, 0, 0], sizes = [16, 16, 128], strides = [1, 1, 1]} : vector<18x16x128xf32> to vector<16x16x128xf32>
    %25 = vector.extract_strided_slice %23 {offsets = [1, 0, 0], sizes = [16, 16, 128], strides = [1, 1, 1]} : vector<18x16x128xf32> to vector<16x16x128xf32>
    %26 = vector.extract_strided_slice %23 {offsets = [2, 0, 0], sizes = [16, 16, 128], strides = [1, 1, 1]} : vector<18x16x128xf32> to vector<16x16x128xf32>
    %c1_17 = arith.constant 1 : index
    %c0_18 = arith.constant 0 : index
    %c2_19 = arith.constant 2 : index
    %c0_20 = arith.constant 0 : index
    %27 = vector.load %arg1[%c1_17, %c0_18, %c2_19, %c0_20] : memref<2x18x18x128xf32, #tpu.memory_space<vmem>>, vector<1x18x16x128xf32>
    %28 = vector.shape_cast %27 : vector<1x18x16x128xf32> to vector<18x16x128xf32>
    %29 = vector.extract_strided_slice %28 {offsets = [0, 0, 0], sizes = [16, 16, 128], strides = [1, 1, 1]} : vector<18x16x128xf32> to vector<16x16x128xf32>
    %30 = vector.extract_strided_slice %28 {offsets = [1, 0, 0], sizes = [16, 16, 128], strides = [1, 1, 1]} : vector<18x16x128xf32> to vector<16x16x128xf32>
    %31 = vector.extract_strided_slice %28 {offsets = [2, 0, 0], sizes = [16, 16, 128], strides = [1, 1, 1]} : vector<18x16x128xf32> to vector<16x16x128xf32>
    %32 = tpu.concatenate %19, %20, %21, %24, %25, %26, %29, %30, %31 in 2 : vector<16x16x128xf32>, vector<16x16x128xf32>, vector<16x16x128xf32>, vector<16x16x128xf32>, vector<16x16x128xf32>, vector<16x16x128xf32>, vector<16x16x128xf32>, vector<16x16x128xf32>, vector<16x16x128xf32> -> vector<16x16x1152xf32>
    %33 = vector.shape_cast %32 : vector<16x16x1152xf32> to vector<256x1152xf32>
    %34 = tpu.concatenate %16, %33 in 0 : vector<256x1152xf32>, vector<256x1152xf32> -> vector<512x1152xf32>
    %c0_21 = arith.constant 0 : index
    %c0_22 = arith.constant 0 : index
    %35 = vector.load %arg2[%c0_21, %c0_22] : memref<1152x128xf32, #tpu.memory_space<vmem>>, vector<1152x128xf32>
    %cst = arith.constant dense<0.000000e+00> : vector<512x128xf32>
    %36 = tpu.matmul %34, %35, %cst {dimension_numbers = #tpu.dot_dimension_numbers<[1], [0], [0], [1], [0, 0, 1, 1], [], []>} : vector<512x1152xf32>, vector<1152x128xf32>, vector<512x128xf32> -> vector<512x128xf32>
    %37 = vector.shape_cast %36 : vector<512x128xf32> to vector<2x16x16x128xf32>
    %c0_23 = arith.constant 0 : index
    %c0_24 = arith.constant 0 : index
    %c0_25 = arith.constant 0 : index
    %c0_26 = arith.constant 0 : index
    %38 = vector.load %arg4[%c0_23, %c0_24, %c0_25, %c0_26] : memref<2x16x16x128xf32, #tpu.memory_space<vmem>>, vector<2x16x16x128xf32>
    tpu.vector_store %arg4[%c0_23, %c0_24, %c0_25, %c0_26], %37 {strides = array<i32>} : memref<2x16x16x128xf32, #tpu.memory_space<vmem>>, vector<2x16x16x128xf32>,
    %cst_27 = arith.constant dense<0.000000e+00> : vector<128xf32>
    %39 = vector.multi_reduction <add>, %36, %cst_27 [0] : vector<512x128xf32> to vector<128xf32>
    %40 = vector.shape_cast %39 : vector<128xf32> to vector<1x128xf32>
    %41 = arith.mulf %36, %36 : vector<512x128xf32>
    %cst_28 = arith.constant dense<0.000000e+00> : vector<128xf32>
    %42 = vector.multi_reduction <add>, %41, %cst_28 [0] : vector<512x128xf32> to vector<128xf32>
    %43 = vector.shape_cast %42 : vector<128xf32> to vector<1x128xf32>
    %44 = vector.extract_strided_slice %34 {offsets = [0, 512], sizes = [512, 128], strides = [1, 1]} : vector<512x1152xf32> to vector<512x128xf32>
    %c0_29 = arith.constant 0 : index
    %c0_30 = arith.constant 0 : index
    %45 = vector.load %arg3[%c0_29, %c0_30] : memref<128x128xf32, #tpu.memory_space<vmem>>, vector<128x128xf32>
    %cst_31 = arith.constant dense<0.000000e+00> : vector<512x128xf32>
    %46 = tpu.matmul %44, %45, %cst_31 {dimension_numbers = #tpu.dot_dimension_numbers<[1], [0], [0], [1], [0, 0, 1, 1], [], []>} : vector<512x128xf32>, vector<128x128xf32>, vector<512x128xf32> -> vector<512x128xf32>
    %47 = vector.shape_cast %46 : vector<512x128xf32> to vector<2x16x16x128xf32>
    %c0_32 = arith.constant 0 : index
    %c0_33 = arith.constant 0 : index
    %c0_34 = arith.constant 0 : index
    %c0_35 = arith.constant 0 : index
    %48 = vector.load %arg5[%c0_32, %c0_33, %c0_34, %c0_35] : memref<2x16x16x128xf32, #tpu.memory_space<vmem>>, vector<2x16x16x128xf32>
    tpu.vector_store %arg5[%c0_32, %c0_33, %c0_34, %c0_35], %47 {strides = array<i32>} : memref<2x16x16x128xf32, #tpu.memory_space<vmem>>, vector<2x16x16x128xf32>,
    %cst_36 = arith.constant dense<0.000000e+00> : vector<128xf32>
    %49 = vector.multi_reduction <add>, %46, %cst_36 [0] : vector<512x128xf32> to vector<128xf32>
    %50 = vector.shape_cast %49 : vector<128xf32> to vector<1x128xf32>
    %51 = arith.mulf %46, %46 : vector<512x128xf32>
    %cst_37 = arith.constant dense<0.000000e+00> : vector<128xf32>
    %52 = vector.multi_reduction <add>, %51, %cst_37 [0] : vector<512x128xf32> to vector<128xf32>
    %53 = vector.shape_cast %52 : vector<128xf32> to vector<1x128xf32>
    %54 = tpu.concatenate %40, %43, %50, %53 in 0 : vector<1x128xf32>, vector<1x128xf32>, vector<1x128xf32>, vector<1x128xf32> -> vector<4x128xf32>
    %c0_38 = arith.constant 0 : index
    %c0_39 = arith.constant 0 : index
    %c0_40 = arith.constant 0 : index
    %55 = vector.load %arg6[%c0_38, %c0_39, %c0_40] : memref<1x4x128xf32, #tpu.memory_space<vmem>>, vector<1x4x128xf32>
    %56 = vector.shape_cast %55 : vector<1x4x128xf32> to vector<4x128xf32>
    %57 = vector.shape_cast %54 : vector<4x128xf32> to vector<1x4x128xf32>
    tpu.vector_store %arg6[%c0_38, %c0_39, %c0_40], %57 {strides = array<i32>} : memref<1x4x128xf32, #tpu.memory_space<vmem>>, vector<1x4x128xf32>,
    return
  }
  func.func @transform_0(%arg0: i32) -> (i32, i32, i32, i32) {
    %c0_i32 = arith.constant 0 : i32
    %c0_i32_0 = arith.constant 0 : i32
    %c0_i32_1 = arith.constant 0 : i32
    %c0_i32_2 = arith.constant 0 : i32
    return %arg0, %c0_i32, %c0_i32_0, %c0_i32_1 : i32, i32, i32, i32
  }
  func.func @transform_1(%arg0: i32) -> (i32, i32) {
    %c0_i32 = arith.constant 0 : i32
    %c0_i32_0 = arith.constant 0 : i32
    %c0_i32_1 = arith.constant 0 : i32
    return %c0_i32, %c0_i32_0 : i32, i32
  }
  func.func @transform_2(%arg0: i32) -> (i32, i32) {
    %c0_i32 = arith.constant 0 : i32
    %c0_i32_0 = arith.constant 0 : i32
    %c0_i32_1 = arith.constant 0 : i32
    return %c0_i32, %c0_i32_0 : i32, i32
  }
  func.func @transform_3(%arg0: i32) -> (i32, i32, i32, i32) {
    %c0_i32 = arith.constant 0 : i32
    %c0_i32_0 = arith.constant 0 : i32
    %c0_i32_1 = arith.constant 0 : i32
    %c0_i32_2 = arith.constant 0 : i32
    return %arg0, %c0_i32, %c0_i32_0, %c0_i32_1 : i32, i32, i32, i32
  }
  func.func @transform_4(%arg0: i32) -> (i32, i32, i32, i32) {
    %c0_i32 = arith.constant 0 : i32
    %c0_i32_0 = arith.constant 0 : i32
    %c0_i32_1 = arith.constant 0 : i32
    %c0_i32_2 = arith.constant 0 : i32
    return %arg0, %c0_i32, %c0_i32_0, %c0_i32_1 : i32, i32, i32, i32
  }
  func.func @transform_5(%arg0: i32) -> (i32, i32, i32) {
    %c0_i32 = arith.constant 0 : i32
    %c0_i32_0 = arith.constant 0 : i32
    %c0_i32_1 = arith.constant 0 : i32
    return %arg0, %c0_i32, %c0_i32_0 : i32, i32, i32
  }
}

module attributes {stable_mosaic.version = 11 : i64} {
  func.func @kernel(%arg0: i32, %arg1: memref<2x16x16x128xf32, #tpu.memory_space<vmem>>, %arg2: memref<1152x128xf32, #tpu.memory_space<vmem>>, %arg3: memref<1x128xf32, #tpu.memory_space<vmem>>, %arg4: memref<1x128xf32, #tpu.memory_space<vmem>>, %arg5: memref<2x16x16x128xf32, #tpu.memory_space<vmem>>, %arg6: memref<1x2x128xf32, #tpu.memory_space<vmem>>, %arg7: memref<2x18x18x128xf32, #tpu.memory_space<vmem>>) attributes {dimension_semantics = [#tpu.dimension_semantics<parallel>], iteration_bounds = array<i64: 1>, scalar_prefetch = 0 : i64, scratch_operands = 1 : i64, tpu.core_type = #tpu.core_type<tc>, window_params = [{transform_indices = @transform_0, window_bounds = array<i64: 2, 16, 16, 128>}, {pipeline_mode = #tpu.pipeline_mode<synchronous>, transform_indices = @transform_1, window_bounds = array<i64: 1152, 128>}, {pipeline_mode = #tpu.pipeline_mode<synchronous>, transform_indices = @transform_2, window_bounds = array<i64: 1, 128>}, {pipeline_mode = #tpu.pipeline_mode<synchronous>, transform_indices = @transform_3, window_bounds = array<i64: 1, 128>}, {transform_indices = @transform_4, window_bounds = array<i64: 2, 16, 16, 128>}, {transform_indices = @transform_5, window_bounds = array<i64: 1, 2, 128>}]} {
    %cst = arith.constant 0.000000e+00 : f32
    %0 = vector.broadcast %cst : f32 to vector<2x1x18x128xf32>
    %cst_0 = arith.constant 0.000000e+00 : f32
    %1 = vector.broadcast %cst_0 : f32 to vector<2x18x1x128xf32>
    %c0 = arith.constant 0 : index
    %c0_1 = arith.constant 0 : index
    %c0_2 = arith.constant 0 : index
    %c0_3 = arith.constant 0 : index
    %2 = vector.load %arg7[%c0, %c0_1, %c0_2, %c0_3] : memref<2x18x18x128xf32, #tpu.memory_space<vmem>>, vector<2x1x18x128xf32>
    tpu.vector_store %arg7[%c0, %c0_1, %c0_2, %c0_3], %0 {strides = array<i32>} : memref<2x18x18x128xf32, #tpu.memory_space<vmem>>, vector<2x1x18x128xf32>,
    %c0_4 = arith.constant 0 : index
    %c17 = arith.constant 17 : index
    %c0_5 = arith.constant 0 : index
    %c0_6 = arith.constant 0 : index
    %3 = vector.load %arg7[%c0_4, %c17, %c0_5, %c0_6] : memref<2x18x18x128xf32, #tpu.memory_space<vmem>>, vector<2x1x18x128xf32>
    tpu.vector_store %arg7[%c0_4, %c17, %c0_5, %c0_6], %0 {strides = array<i32>} : memref<2x18x18x128xf32, #tpu.memory_space<vmem>>, vector<2x1x18x128xf32>,
    %c0_7 = arith.constant 0 : index
    %c0_8 = arith.constant 0 : index
    %c0_9 = arith.constant 0 : index
    %c0_10 = arith.constant 0 : index
    %4 = vector.load %arg7[%c0_7, %c0_8, %c0_9, %c0_10] : memref<2x18x18x128xf32, #tpu.memory_space<vmem>>, vector<2x18x1x128xf32>
    tpu.vector_store %arg7[%c0_7, %c0_8, %c0_9, %c0_10], %1 {strides = array<i32>} : memref<2x18x18x128xf32, #tpu.memory_space<vmem>>, vector<2x18x1x128xf32>,
    %c0_11 = arith.constant 0 : index
    %c0_12 = arith.constant 0 : index
    %c17_13 = arith.constant 17 : index
    %c0_14 = arith.constant 0 : index
    %5 = vector.load %arg7[%c0_11, %c0_12, %c17_13, %c0_14] : memref<2x18x18x128xf32, #tpu.memory_space<vmem>>, vector<2x18x1x128xf32>
    tpu.vector_store %arg7[%c0_11, %c0_12, %c17_13, %c0_14], %1 {strides = array<i32>} : memref<2x18x18x128xf32, #tpu.memory_space<vmem>>, vector<2x18x1x128xf32>,
    %c0_15 = arith.constant 0 : index
    %c0_16 = arith.constant 0 : index
    %c0_17 = arith.constant 0 : index
    %c0_18 = arith.constant 0 : index
    %6 = vector.load %arg1[%c0_15, %c0_16, %c0_17, %c0_18] : memref<2x16x16x128xf32, #tpu.memory_space<vmem>>, vector<2x16x16x128xf32>
    %c0_19 = arith.constant 0 : index
    %c0_20 = arith.constant 0 : index
    %7 = vector.load %arg3[%c0_19, %c0_20] : memref<1x128xf32, #tpu.memory_space<vmem>>, vector<1x128xf32>
    %8 = vector.shape_cast %7 : vector<1x128xf32> to vector<1x1x1x128xf32>
    %9 = vector.broadcast %8 : vector<1x1x1x128xf32> to vector<2x16x16x128xf32>
    %10 = arith.mulf %6, %9 : vector<2x16x16x128xf32>
    %c0_21 = arith.constant 0 : index
    %c0_22 = arith.constant 0 : index
    %11 = vector.load %arg4[%c0_21, %c0_22] : memref<1x128xf32, #tpu.memory_space<vmem>>, vector<1x128xf32>
    %12 = vector.shape_cast %11 : vector<1x128xf32> to vector<1x1x1x128xf32>
    %13 = vector.broadcast %12 : vector<1x1x1x128xf32> to vector<2x16x16x128xf32>
    %14 = arith.addf %10, %13 : vector<2x16x16x128xf32>
    %cst_23 = arith.constant 0.000000e+00 : f32
    %15 = vector.broadcast %cst_23 : f32 to vector<2x16x16x128xf32>
    %16 = arith.maximumf %14, %15 : vector<2x16x16x128xf32>
    %c0_24 = arith.constant 0 : index
    %c1 = arith.constant 1 : index
    %c1_25 = arith.constant 1 : index
    %c0_26 = arith.constant 0 : index
    %17 = vector.load %arg7[%c0_24, %c1, %c1_25, %c0_26] : memref<2x18x18x128xf32, #tpu.memory_space<vmem>>, vector<2x16x16x128xf32>
    tpu.vector_store %arg7[%c0_24, %c1, %c1_25, %c0_26], %16 {strides = array<i32>} : memref<2x18x18x128xf32, #tpu.memory_space<vmem>>, vector<2x16x16x128xf32>,
    %c0_27 = arith.constant 0 : index
    %c0_28 = arith.constant 0 : index
    %c0_29 = arith.constant 0 : index
    %c0_30 = arith.constant 0 : index
    %18 = vector.load %arg7[%c0_27, %c0_28, %c0_29, %c0_30] : memref<2x18x18x128xf32, #tpu.memory_space<vmem>>, vector<1x18x16x128xf32>
    %19 = vector.shape_cast %18 : vector<1x18x16x128xf32> to vector<18x16x128xf32>
    %20 = vector.extract_strided_slice %19 {offsets = [0, 0, 0], sizes = [16, 16, 128], strides = [1, 1, 1]} : vector<18x16x128xf32> to vector<16x16x128xf32>
    %21 = vector.extract_strided_slice %19 {offsets = [1, 0, 0], sizes = [16, 16, 128], strides = [1, 1, 1]} : vector<18x16x128xf32> to vector<16x16x128xf32>
    %22 = vector.extract_strided_slice %19 {offsets = [2, 0, 0], sizes = [16, 16, 128], strides = [1, 1, 1]} : vector<18x16x128xf32> to vector<16x16x128xf32>
    %c0_31 = arith.constant 0 : index
    %c0_32 = arith.constant 0 : index
    %c1_33 = arith.constant 1 : index
    %c0_34 = arith.constant 0 : index
    %23 = vector.load %arg7[%c0_31, %c0_32, %c1_33, %c0_34] : memref<2x18x18x128xf32, #tpu.memory_space<vmem>>, vector<1x18x16x128xf32>
    %24 = vector.shape_cast %23 : vector<1x18x16x128xf32> to vector<18x16x128xf32>
    %25 = vector.extract_strided_slice %24 {offsets = [0, 0, 0], sizes = [16, 16, 128], strides = [1, 1, 1]} : vector<18x16x128xf32> to vector<16x16x128xf32>
    %26 = vector.extract_strided_slice %24 {offsets = [1, 0, 0], sizes = [16, 16, 128], strides = [1, 1, 1]} : vector<18x16x128xf32> to vector<16x16x128xf32>
    %27 = vector.extract_strided_slice %24 {offsets = [2, 0, 0], sizes = [16, 16, 128], strides = [1, 1, 1]} : vector<18x16x128xf32> to vector<16x16x128xf32>
    %c0_35 = arith.constant 0 : index
    %c0_36 = arith.constant 0 : index
    %c2 = arith.constant 2 : index
    %c0_37 = arith.constant 0 : index
    %28 = vector.load %arg7[%c0_35, %c0_36, %c2, %c0_37] : memref<2x18x18x128xf32, #tpu.memory_space<vmem>>, vector<1x18x16x128xf32>
    %29 = vector.shape_cast %28 : vector<1x18x16x128xf32> to vector<18x16x128xf32>
    %30 = vector.extract_strided_slice %29 {offsets = [0, 0, 0], sizes = [16, 16, 128], strides = [1, 1, 1]} : vector<18x16x128xf32> to vector<16x16x128xf32>
    %31 = vector.extract_strided_slice %29 {offsets = [1, 0, 0], sizes = [16, 16, 128], strides = [1, 1, 1]} : vector<18x16x128xf32> to vector<16x16x128xf32>
    %32 = vector.extract_strided_slice %29 {offsets = [2, 0, 0], sizes = [16, 16, 128], strides = [1, 1, 1]} : vector<18x16x128xf32> to vector<16x16x128xf32>
    %33 = tpu.concatenate %20, %21, %22, %25, %26, %27, %30, %31, %32 in 2 : vector<16x16x128xf32>, vector<16x16x128xf32>, vector<16x16x128xf32>, vector<16x16x128xf32>, vector<16x16x128xf32>, vector<16x16x128xf32>, vector<16x16x128xf32>, vector<16x16x128xf32>, vector<16x16x128xf32> -> vector<16x16x1152xf32>
    %34 = vector.shape_cast %33 : vector<16x16x1152xf32> to vector<256x1152xf32>
    %c1_38 = arith.constant 1 : index
    %c0_39 = arith.constant 0 : index
    %c0_40 = arith.constant 0 : index
    %c0_41 = arith.constant 0 : index
    %35 = vector.load %arg7[%c1_38, %c0_39, %c0_40, %c0_41] : memref<2x18x18x128xf32, #tpu.memory_space<vmem>>, vector<1x18x16x128xf32>
    %36 = vector.shape_cast %35 : vector<1x18x16x128xf32> to vector<18x16x128xf32>
    %37 = vector.extract_strided_slice %36 {offsets = [0, 0, 0], sizes = [16, 16, 128], strides = [1, 1, 1]} : vector<18x16x128xf32> to vector<16x16x128xf32>
    %38 = vector.extract_strided_slice %36 {offsets = [1, 0, 0], sizes = [16, 16, 128], strides = [1, 1, 1]} : vector<18x16x128xf32> to vector<16x16x128xf32>
    %39 = vector.extract_strided_slice %36 {offsets = [2, 0, 0], sizes = [16, 16, 128], strides = [1, 1, 1]} : vector<18x16x128xf32> to vector<16x16x128xf32>
    %c1_42 = arith.constant 1 : index
    %c0_43 = arith.constant 0 : index
    %c1_44 = arith.constant 1 : index
    %c0_45 = arith.constant 0 : index
    %40 = vector.load %arg7[%c1_42, %c0_43, %c1_44, %c0_45] : memref<2x18x18x128xf32, #tpu.memory_space<vmem>>, vector<1x18x16x128xf32>
    %41 = vector.shape_cast %40 : vector<1x18x16x128xf32> to vector<18x16x128xf32>
    %42 = vector.extract_strided_slice %41 {offsets = [0, 0, 0], sizes = [16, 16, 128], strides = [1, 1, 1]} : vector<18x16x128xf32> to vector<16x16x128xf32>
    %43 = vector.extract_strided_slice %41 {offsets = [1, 0, 0], sizes = [16, 16, 128], strides = [1, 1, 1]} : vector<18x16x128xf32> to vector<16x16x128xf32>
    %44 = vector.extract_strided_slice %41 {offsets = [2, 0, 0], sizes = [16, 16, 128], strides = [1, 1, 1]} : vector<18x16x128xf32> to vector<16x16x128xf32>
    %c1_46 = arith.constant 1 : index
    %c0_47 = arith.constant 0 : index
    %c2_48 = arith.constant 2 : index
    %c0_49 = arith.constant 0 : index
    %45 = vector.load %arg7[%c1_46, %c0_47, %c2_48, %c0_49] : memref<2x18x18x128xf32, #tpu.memory_space<vmem>>, vector<1x18x16x128xf32>
    %46 = vector.shape_cast %45 : vector<1x18x16x128xf32> to vector<18x16x128xf32>
    %47 = vector.extract_strided_slice %46 {offsets = [0, 0, 0], sizes = [16, 16, 128], strides = [1, 1, 1]} : vector<18x16x128xf32> to vector<16x16x128xf32>
    %48 = vector.extract_strided_slice %46 {offsets = [1, 0, 0], sizes = [16, 16, 128], strides = [1, 1, 1]} : vector<18x16x128xf32> to vector<16x16x128xf32>
    %49 = vector.extract_strided_slice %46 {offsets = [2, 0, 0], sizes = [16, 16, 128], strides = [1, 1, 1]} : vector<18x16x128xf32> to vector<16x16x128xf32>
    %50 = tpu.concatenate %37, %38, %39, %42, %43, %44, %47, %48, %49 in 2 : vector<16x16x128xf32>, vector<16x16x128xf32>, vector<16x16x128xf32>, vector<16x16x128xf32>, vector<16x16x128xf32>, vector<16x16x128xf32>, vector<16x16x128xf32>, vector<16x16x128xf32>, vector<16x16x128xf32> -> vector<16x16x1152xf32>
    %51 = vector.shape_cast %50 : vector<16x16x1152xf32> to vector<256x1152xf32>
    %52 = tpu.concatenate %34, %51 in 0 : vector<256x1152xf32>, vector<256x1152xf32> -> vector<512x1152xf32>
    %c0_50 = arith.constant 0 : index
    %c0_51 = arith.constant 0 : index
    %53 = vector.load %arg2[%c0_50, %c0_51] : memref<1152x128xf32, #tpu.memory_space<vmem>>, vector<1152x128xf32>
    %cst_52 = arith.constant dense<0.000000e+00> : vector<512x128xf32>
    %54 = tpu.matmul %52, %53, %cst_52 {dimension_numbers = #tpu.dot_dimension_numbers<[1], [0], [0], [1], [0, 0, 1, 1], [], []>} : vector<512x1152xf32>, vector<1152x128xf32>, vector<512x128xf32> -> vector<512x128xf32>
    %55 = vector.shape_cast %54 : vector<512x128xf32> to vector<2x16x16x128xf32>
    %c0_53 = arith.constant 0 : index
    %c0_54 = arith.constant 0 : index
    %c0_55 = arith.constant 0 : index
    %c0_56 = arith.constant 0 : index
    %56 = vector.load %arg5[%c0_53, %c0_54, %c0_55, %c0_56] : memref<2x16x16x128xf32, #tpu.memory_space<vmem>>, vector<2x16x16x128xf32>
    tpu.vector_store %arg5[%c0_53, %c0_54, %c0_55, %c0_56], %55 {strides = array<i32>} : memref<2x16x16x128xf32, #tpu.memory_space<vmem>>, vector<2x16x16x128xf32>,
    %cst_57 = arith.constant dense<0.000000e+00> : vector<128xf32>
    %57 = vector.multi_reduction <add>, %54, %cst_57 [0] : vector<512x128xf32> to vector<128xf32>
    %58 = vector.shape_cast %57 : vector<128xf32> to vector<1x128xf32>
    %59 = arith.mulf %54, %54 : vector<512x128xf32>
    %cst_58 = arith.constant dense<0.000000e+00> : vector<128xf32>
    %60 = vector.multi_reduction <add>, %59, %cst_58 [0] : vector<512x128xf32> to vector<128xf32>
    %61 = vector.shape_cast %60 : vector<128xf32> to vector<1x128xf32>
    %62 = tpu.concatenate %58, %61 in 0 : vector<1x128xf32>, vector<1x128xf32> -> vector<2x128xf32>
    %c0_59 = arith.constant 0 : index
    %c0_60 = arith.constant 0 : index
    %c0_61 = arith.constant 0 : index
    %63 = vector.load %arg6[%c0_59, %c0_60, %c0_61] : memref<1x2x128xf32, #tpu.memory_space<vmem>>, vector<1x2x128xf32>
    %64 = vector.shape_cast %63 : vector<1x2x128xf32> to vector<2x128xf32>
    %65 = vector.shape_cast %62 : vector<2x128xf32> to vector<1x2x128xf32>
    tpu.vector_store %arg6[%c0_59, %c0_60, %c0_61], %65 {strides = array<i32>} : memref<1x2x128xf32, #tpu.memory_space<vmem>>, vector<1x2x128xf32>,
    return
  }
  func.func @transform_0(%arg0: i32) -> (i32, i32, i32, i32) {
    %c0_i32 = arith.constant 0 : i32
    %c0_i32_0 = arith.constant 0 : i32
    %c0_i32_1 = arith.constant 0 : i32
    %c0_i32_2 = arith.constant 0 : i32
    return %arg0, %c0_i32, %c0_i32_0, %c0_i32_1 : i32, i32, i32, i32
  }
  func.func @transform_1(%arg0: i32) -> (i32, i32) {
    %c0_i32 = arith.constant 0 : i32
    %c0_i32_0 = arith.constant 0 : i32
    %c0_i32_1 = arith.constant 0 : i32
    return %c0_i32, %c0_i32_0 : i32, i32
  }
  func.func @transform_2(%arg0: i32) -> (i32, i32) {
    %c0_i32 = arith.constant 0 : i32
    %c0_i32_0 = arith.constant 0 : i32
    %c0_i32_1 = arith.constant 0 : i32
    return %c0_i32, %c0_i32_0 : i32, i32
  }
  func.func @transform_3(%arg0: i32) -> (i32, i32) {
    %c0_i32 = arith.constant 0 : i32
    %c0_i32_0 = arith.constant 0 : i32
    %c0_i32_1 = arith.constant 0 : i32
    return %c0_i32, %c0_i32_0 : i32, i32
  }
  func.func @transform_4(%arg0: i32) -> (i32, i32, i32, i32) {
    %c0_i32 = arith.constant 0 : i32
    %c0_i32_0 = arith.constant 0 : i32
    %c0_i32_1 = arith.constant 0 : i32
    %c0_i32_2 = arith.constant 0 : i32
    return %arg0, %c0_i32, %c0_i32_0, %c0_i32_1 : i32, i32, i32, i32
  }
  func.func @transform_5(%arg0: i32) -> (i32, i32, i32) {
    %c0_i32 = arith.constant 0 : i32
    %c0_i32_0 = arith.constant 0 : i32
    %c0_i32_1 = arith.constant 0 : i32
    return %arg0, %c0_i32, %c0_i32_0 : i32, i32, i32
  }
}

module attributes {stable_mosaic.version = 11 : i64} {
  func.func @kernel(%arg0: i32, %arg1: memref<2x16x16x128xf32, #tpu.memory_space<vmem>>, %arg2: memref<2x16x16x128xf32, #tpu.memory_space<vmem>>, %arg3: memref<1x128xf32, #tpu.memory_space<vmem>>, %arg4: memref<1x128xf32, #tpu.memory_space<vmem>>, %arg5: memref<1x128xf32, #tpu.memory_space<vmem>>, %arg6: memref<1x128xf32, #tpu.memory_space<vmem>>, %arg7: memref<2x16x16x128xf32, #tpu.memory_space<vmem>>) attributes {dimension_semantics = [#tpu.dimension_semantics<parallel>], iteration_bounds = array<i64: 1>, scalar_prefetch = 0 : i64, scratch_operands = 0 : i64, tpu.core_type = #tpu.core_type<tc>, window_params = [{transform_indices = @transform_0, window_bounds = array<i64: 2, 16, 16, 128>}, {transform_indices = @transform_1, window_bounds = array<i64: 2, 16, 16, 128>}, {pipeline_mode = #tpu.pipeline_mode<synchronous>, transform_indices = @transform_2, window_bounds = array<i64: 1, 128>}, {pipeline_mode = #tpu.pipeline_mode<synchronous>, transform_indices = @transform_3, window_bounds = array<i64: 1, 128>}, {pipeline_mode = #tpu.pipeline_mode<synchronous>, transform_indices = @transform_4, window_bounds = array<i64: 1, 128>}, {pipeline_mode = #tpu.pipeline_mode<synchronous>, transform_indices = @transform_5, window_bounds = array<i64: 1, 128>}, {transform_indices = @transform_6, window_bounds = array<i64: 2, 16, 16, 128>}]} {
    %c0 = arith.constant 0 : index
    %c0_0 = arith.constant 0 : index
    %c0_1 = arith.constant 0 : index
    %c0_2 = arith.constant 0 : index
    %0 = vector.load %arg1[%c0, %c0_0, %c0_1, %c0_2] : memref<2x16x16x128xf32, #tpu.memory_space<vmem>>, vector<2x16x16x128xf32>
    %c0_3 = arith.constant 0 : index
    %c0_4 = arith.constant 0 : index
    %1 = vector.load %arg3[%c0_3, %c0_4] : memref<1x128xf32, #tpu.memory_space<vmem>>, vector<1x128xf32>
    %2 = vector.shape_cast %1 : vector<1x128xf32> to vector<1x1x1x128xf32>
    %3 = vector.broadcast %2 : vector<1x1x1x128xf32> to vector<2x16x16x128xf32>
    %4 = arith.mulf %0, %3 : vector<2x16x16x128xf32>
    %c0_5 = arith.constant 0 : index
    %c0_6 = arith.constant 0 : index
    %5 = vector.load %arg4[%c0_5, %c0_6] : memref<1x128xf32, #tpu.memory_space<vmem>>, vector<1x128xf32>
    %6 = vector.shape_cast %5 : vector<1x128xf32> to vector<1x1x1x128xf32>
    %7 = vector.broadcast %6 : vector<1x1x1x128xf32> to vector<2x16x16x128xf32>
    %8 = arith.addf %4, %7 : vector<2x16x16x128xf32>
    %c0_7 = arith.constant 0 : index
    %c0_8 = arith.constant 0 : index
    %c0_9 = arith.constant 0 : index
    %c0_10 = arith.constant 0 : index
    %9 = vector.load %arg2[%c0_7, %c0_8, %c0_9, %c0_10] : memref<2x16x16x128xf32, #tpu.memory_space<vmem>>, vector<2x16x16x128xf32>
    %c0_11 = arith.constant 0 : index
    %c0_12 = arith.constant 0 : index
    %10 = vector.load %arg5[%c0_11, %c0_12] : memref<1x128xf32, #tpu.memory_space<vmem>>, vector<1x128xf32>
    %11 = vector.shape_cast %10 : vector<1x128xf32> to vector<1x1x1x128xf32>
    %12 = vector.broadcast %11 : vector<1x1x1x128xf32> to vector<2x16x16x128xf32>
    %13 = arith.mulf %9, %12 : vector<2x16x16x128xf32>
    %c0_13 = arith.constant 0 : index
    %c0_14 = arith.constant 0 : index
    %14 = vector.load %arg6[%c0_13, %c0_14] : memref<1x128xf32, #tpu.memory_space<vmem>>, vector<1x128xf32>
    %15 = vector.shape_cast %14 : vector<1x128xf32> to vector<1x1x1x128xf32>
    %16 = vector.broadcast %15 : vector<1x1x1x128xf32> to vector<2x16x16x128xf32>
    %17 = arith.addf %13, %16 : vector<2x16x16x128xf32>
    %18 = arith.addf %8, %17 : vector<2x16x16x128xf32>
    %cst = arith.constant 0.000000e+00 : f32
    %19 = vector.broadcast %cst : f32 to vector<2x16x16x128xf32>
    %20 = arith.maximumf %18, %19 : vector<2x16x16x128xf32>
    %c0_15 = arith.constant 0 : index
    %c0_16 = arith.constant 0 : index
    %c0_17 = arith.constant 0 : index
    %c0_18 = arith.constant 0 : index
    %21 = vector.load %arg7[%c0_15, %c0_16, %c0_17, %c0_18] : memref<2x16x16x128xf32, #tpu.memory_space<vmem>>, vector<2x16x16x128xf32>
    tpu.vector_store %arg7[%c0_15, %c0_16, %c0_17, %c0_18], %20 {strides = array<i32>} : memref<2x16x16x128xf32, #tpu.memory_space<vmem>>, vector<2x16x16x128xf32>,
    return
  }
  func.func @transform_0(%arg0: i32) -> (i32, i32, i32, i32) {
    %c0_i32 = arith.constant 0 : i32
    %c0_i32_0 = arith.constant 0 : i32
    %c0_i32_1 = arith.constant 0 : i32
    %c0_i32_2 = arith.constant 0 : i32
    return %arg0, %c0_i32, %c0_i32_0, %c0_i32_1 : i32, i32, i32, i32
  }
  func.func @transform_1(%arg0: i32) -> (i32, i32, i32, i32) {
    %c0_i32 = arith.constant 0 : i32
    %c0_i32_0 = arith.constant 0 : i32
    %c0_i32_1 = arith.constant 0 : i32
    %c0_i32_2 = arith.constant 0 : i32
    return %arg0, %c0_i32, %c0_i32_0, %c0_i32_1 : i32, i32, i32, i32
  }
  func.func @transform_2(%arg0: i32) -> (i32, i32) {
    %c0_i32 = arith.constant 0 : i32
    %c0_i32_0 = arith.constant 0 : i32
    %c0_i32_1 = arith.constant 0 : i32
    return %c0_i32, %c0_i32_0 : i32, i32
  }
  func.func @transform_3(%arg0: i32) -> (i32, i32) {
    %c0_i32 = arith.constant 0 : i32
    %c0_i32_0 = arith.constant 0 : i32
    %c0_i32_1 = arith.constant 0 : i32
    return %c0_i32, %c0_i32_0 : i32, i32
  }
  func.func @transform_4(%arg0: i32) -> (i32, i32) {
    %c0_i32 = arith.constant 0 : i32
    %c0_i32_0 = arith.constant 0 : i32
    %c0_i32_1 = arith.constant 0 : i32
    return %c0_i32, %c0_i32_0 : i32, i32
  }
  func.func @transform_5(%arg0: i32) -> (i32, i32) {
    %c0_i32 = arith.constant 0 : i32
    %c0_i32_0 = arith.constant 0 : i32
    %c0_i32_1 = arith.constant 0 : i32
    return %c0_i32, %c0_i32_0 : i32, i32
  }
  func.func @transform_6(%arg0: i32) -> (i32, i32, i32, i32) {
    %c0_i32 = arith.constant 0 : i32
    %c0_i32_0 = arith.constant 0 : i32
    %c0_i32_1 = arith.constant 0 : i32
    %c0_i32_2 = arith.constant 0 : i32
    return %arg0, %c0_i32, %c0_i32_0, %c0_i32_1 : i32, i32, i32, i32
  }
}

</mosaic_0001>

<llo_original>
// kernel: basic_block_forward.5
$region0: #{basic_block_forward.5}
  #allocation0 [shape = 'u32[]', space=smem, size = 0x4, offset = 0x4, fixed_abs, tag = 'smem constant byte address 0x4 - core index']
  #allocation1 [shape = 'u32[144,128]{1,0:T(1,128)}', space=vmem, size = 0x12000, scoped, tag = 'internal scratch']
  %s0 = inlined_call_operand.vmem [shape: f32[2,16,16,128], index: 0, kind: input, shape index: {}]
  %s1 = inlined_call_operand.vmem [shape: f32[2,16,16,128], index: 1, kind: input, shape index: {}]
  %s2 = inlined_call_operand.vmem [shape: f32[1,128], index: 2, kind: input, shape index: {}]
  %s3 = inlined_call_operand.vmem [shape: f32[1,128], index: 3, kind: input, shape index: {}]
  %s4 = inlined_call_operand.vmem [shape: f32[1,128], index: 4, kind: input, shape index: {}]
  %s5 = inlined_call_operand.vmem [shape: f32[1,128], index: 5, kind: input, shape index: {}]
  %s6 = inlined_call_operand.vmem [shape: f32[2,16,16,128], index: 6, kind: output, shape index: {}]
  %s7 = sld [smem:[#allocation0]]
  $region34: #{basic_block_forward.5} parent=0
    _
  %s9 = ssub.s32 1, %s7
  %s10 = scalar_select 0, %s9, %s7
  // Predicated region
  $region2: #{basic_block_forward.5} parent=0 // pred_check
    _
  $region3: #{basic_block_forward.5} parent=0 // pred_check_branch
    %12 = sbr.rel (0) target = $region5
  $region4: #{basic_block_forward.5} parent=0 // pred_region
    _
  $region5: #{basic_block_forward.5} parent=0 // pred_fallthru
    _
  // Predicated region
  $region6: #{basic_block_forward.5} parent=0 // pred_check
    _
  $region7: #{basic_block_forward.5} parent=0 // pred_check_branch
    %14 = sbr.rel (0) target = $region9
  $region8: #{basic_block_forward.5} parent=0 // pred_region
    _
  $region9: #{basic_block_forward.5} parent=0 // pred_fallthru
    _
  // Predicated region
  $region10: #{basic_block_forward.5} parent=0 // pred_check
    _
  $region11: #{basic_block_forward.5} parent=0 // pred_check_branch
    %16 = sbr.rel (0) target = $region13
  $region12: #{basic_block_forward.5} parent=0 // pred_region
    _
  $region13: #{basic_block_forward.5} parent=0 // pred_fallthru
    _
  // Predicated region
  $region14: #{basic_block_forward.5} parent=0 // pred_check
    _
  $region15: #{basic_block_forward.5} parent=0 // pred_check_branch
    %18 = sbr.rel (0) target = $region17
  $region16: #{basic_block_forward.5} parent=0 // pred_region
    _
  $region17: #{basic_block_forward.5} parent=0 // pred_fallthru
    _
  // Predicated region
  $region18: #{basic_block_forward.5} parent=0 // pred_check
    _
  $region19: #{basic_block_forward.5} parent=0 // pred_check_branch
    %20 = sbr.rel (0) target = $region21
  $region20: #{basic_block_forward.5} parent=0 // pred_region
    _
  $region21: #{basic_block_forward.5} parent=0 // pred_fallthru
    _
  // Predicated region
  $region22: #{basic_block_forward.5} parent=0 // pred_check
    _
  $region23: #{basic_block_forward.5} parent=0 // pred_check_branch
    %22 = sbr.rel (0) target = $region25
  $region24: #{basic_block_forward.5} parent=0 // pred_region
    _
  $region25: #{basic_block_forward.5} parent=0 // pred_fallthru
    _
  %v23 = vld [vmem:[%s0] sm:$0xff]
  %v24 = vld [vmem:[%s0 + $0x8] sm:$0xff]
  %v25 = vld [vmem:[%s0 + $0x10] sm:$0xff]
  %v26 = vld [vmem:[%s0 + $0x18] sm:$0xff]
  %v27 = vld [vmem:[%s0 + $0x20] sm:$0xff]
  %v28 = vld [vmem:[%s0 + $0x28] sm:$0xff]
  %v29 = vld [vmem:[%s0 + $0x30] sm:$0xff]
  %v30 = vld [vmem:[%s0 + $0x38] sm:$0xff]
  %v31 = vld [vmem:[%s0 + $0x40] sm:$0xff]
  %v32 = vld [vmem:[%s0 + $0x48] sm:$0xff]
  %v33 = vld [vmem:[%s0 + $0x50] sm:$0xff]
  %v34 = vld [vmem:[%s0 + $0x58] sm:$0xff]
  %v35 = vld [vmem:[%s0 + $0x60] sm:$0xff]
  %v36 = vld [vmem:[%s0 + $0x68] sm:$0xff]
  %v37 = vld [vmem:[%s0 + $0x70] sm:$0xff]
  %v38 = vld [vmem:[%s0 + $0x78] sm:$0xff]
  %v39 = vld [vmem:[%s0 + $0x80] sm:$0xff]
  %v40 = vld [vmem:[%s0 + $0x88] sm:$0xff]
  %v41 = vld [vmem:[%s0 + $0x90] sm:$0xff]
  %v42 = vld [vmem:[%s0 + $0x98] sm:$0xff]
  %v43 = vld [vmem:[%s0 + $0xa0] sm:$0xff]
  %v44 = vld [vmem:[%s0 + $0xa8] sm:$0xff]
  %v45 = vld [vmem:[%s0 + $0xb0] sm:$0xff]
  %v46 = vld [vmem:[%s0 + $0xb8] sm:$0xff]
  %v47 = vld [vmem:[%s0 + $0xc0] sm:$0xff]
  %v48 = vld [vmem:[%s0 + $0xc8] sm:$0xff]
  %v49 = vld [vmem:[%s0 + $0xd0] sm:$0xff]
  %v50 = vld [vmem:[%s0 + $0xd8] sm:$0xff]
  %v51 = vld [vmem:[%s0 + $0xe0] sm:$0xff]
  %v52 = vld [vmem:[%s0 + $0xe8] sm:$0xff]
  %v53 = vld [vmem:[%s0 + $0xf0] sm:$0xff]
  %v54 = vld [vmem:[%s0 + $0xf8] sm:$0xff]
  %v55 = vld [vmem:[%s0 + $0x100] sm:$0xff]
  %v56 = vld [vmem:[%s0 + $0x108] sm:$0xff]
  %v57 = vld [vmem:[%s0 + $0x110] sm:$0xff]
  %v58 = vld [vmem:[%s0 + $0x118] sm:$0xff]
  %v59 = vld [vmem:[%s0 + $0x120] sm:$0xff]
  %v60 = vld [vmem:[%s0 + $0x128] sm:$0xff]
  %v61 = vld [vmem:[%s0 + $0x130] sm:$0xff]
  %v62 = vld [vmem:[%s0 + $0x138] sm:$0xff]
  %v63 = vld [vmem:[%s0 + $0x140] sm:$0xff]
  %v64 = vld [vmem:[%s0 + $0x148] sm:$0xff]
  %v65 = vld [vmem:[%s0 + $0x150] sm:$0xff]
  %v66 = vld [vmem:[%s0 + $0x158] sm:$0xff]
  %v67 = vld [vmem:[%s0 + $0x160] sm:$0xff]
  %v68 = vld [vmem:[%s0 + $0x168] sm:$0xff]
  %v69 = vld [vmem:[%s0 + $0x170] sm:$0xff]
  %v70 = vld [vmem:[%s0 + $0x178] sm:$0xff]
  %v71 = vld [vmem:[%s0 + $0x180] sm:$0xff]
  %v72 = vld [vmem:[%s0 + $0x188] sm:$0xff]
  %v73 = vld [vmem:[%s0 + $0x190] sm:$0xff]
  %v74 = vld [vmem:[%s0 + $0x198] sm:$0xff]
  %v75 = vld [vmem:[%s0 + $0x1a0] sm:$0xff]
  %v76 = vld [vmem:[%s0 + $0x1a8] sm:$0xff]
  %v77 = vld [vmem:[%s0 + $0x1b0] sm:$0xff]
  %v78 = vld [vmem:[%s0 + $0x1b8] sm:$0xff]
  %v79 = vld [vmem:[%s0 + $0x1c0] sm:$0xff]
  %v80 = vld [vmem:[%s0 + $0x1c8] sm:$0xff]
  %v81 = vld [vmem:[%s0 + $0x1d0] sm:$0xff]
  %v82 = vld [vmem:[%s0 + $0x1d8] sm:$0xff]
  %v83 = vld [vmem:[%s0 + $0x1e0] sm:$0xff]
  %v84 = vld [vmem:[%s0 + $0x1e8] sm:$0xff]
  %v85 = vld [vmem:[%s0 + $0x1f0] sm:$0xff]
  %v86 = vld [vmem:[%s0 + $0x1f8] sm:$0xff]
  %v87 = vld [vmem:[%s2] sm:$0x1]
  %v89 = vlaneseq
  %v90 = vshrl.u32 %v89, 7
  %v91 = vsub.s32 0, %v90
  %v92 = vrot.slane %v87, %v91
  %v94 = vmul.f32 %v23, %v92
  %v95 = vmul.f32 %v24, %v92
  %v96 = vmul.f32 %v25, %v92
  %v97 = vmul.f32 %v26, %v92
  %v98 = vmul.f32 %v27, %v92
  %v99 = vmul.f32 %v28, %v92
  %v100 = vmul.f32 %v29, %v92
  %v101 = vmul.f32 %v30, %v92
  %v102 = vmul.f32 %v31, %v92
  %v103 = vmul.f32 %v32, %v92
  %v104 = vmul.f32 %v33, %v92
  %v105 = vmul.f32 %v34, %v92
  %v106 = vmul.f32 %v35, %v92
  %v107 = vmul.f32 %v36, %v92
  %v108 = vmul.f32 %v37, %v92
  %v109 = vmul.f32 %v38, %v92
  %v110 = vmul.f32 %v39, %v92
  %v111 = vmul.f32 %v40, %v92
  %v112 = vmul.f32 %v41, %v92
  %v113 = vmul.f32 %v42, %v92
  %v114 = vmul.f32 %v43, %v92
  %v115 = vmul.f32 %v44, %v92
  %v116 = vmul.f32 %v45, %v92
  %v117 = vmul.f32 %v46, %v92
  %v118 = vmul.f32 %v47, %v92
  %v119 = vmul.f32 %v48, %v92
  %v120 = vmul.f32 %v49, %v92
  %v121 = vmul.f32 %v50, %v92
  %v122 = vmul.f32 %v51, %v92
  %v123 = vmul.f32 %v52, %v92
  %v124 = vmul.f32 %v53, %v92
  %v125 = vmul.f32 %v54, %v92
  %v126 = vmul.f32 %v55, %v92
  %v127 = vmul.f32 %v56, %v92
  %v128 = vmul.f32 %v57, %v92
  %v129 = vmul.f32 %v58, %v92
  %v130 = vmul.f32 %v59, %v92
  %v131 = vmul.f32 %v60, %v92
  %v132 = vmul.f32 %v61, %v92
  %v133 = vmul.f32 %v62, %v92
  %v134 = vmul.f32 %v63, %v92
  %v135 = vmul.f32 %v64, %v92
  %v136 = vmul.f32 %v65, %v92
  %v137 = vmul.f32 %v66, %v92
  %v138 = vmul.f32 %v67, %v92
  %v139 = vmul.f32 %v68, %v92
  %v140 = vmul.f32 %v69, %v92
  %v141 = vmul.f32 %v70, %v92
  %v142 = vmul.f32 %v71, %v92
  %v143 = vmul.f32 %v72, %v92
  %v144 = vmul.f32 %v73, %v92
  %v145 = vmul.f32 %v74, %v92
  %v146 = vmul.f32 %v75, %v92
  %v147 = vmul.f32 %v76, %v92
  %v148 = vmul.f32 %v77, %v92
  %v149 = vmul.f32 %v78, %v92
  %v150 = vmul.f32 %v79, %v92
  %v151 = vmul.f32 %v80, %v92
  %v152 = vmul.f32 %v81, %v92
  %v153 = vmul.f32 %v82, %v92
  %v154 = vmul.f32 %v83, %v92
  %v155 = vmul.f32 %v84, %v92
  %v156 = vmul.f32 %v85, %v92
  %v157 = vmul.f32 %v86, %v92
  %v158 = vld [vmem:[%s3] sm:$0x1]
  %v160 = vlaneseq
  %v161 = vshrl.u32 %v160, 7
  %v162 = vsub.s32 0, %v161
  %v163 = vrot.slane %v158, %v162
  %v165 = vadd.f32 %v94, %v163
  %v166 = vadd.f32 %v95, %v163
  %v167 = vadd.f32 %v96, %v163
  %v168 = vadd.f32 %v97, %v163
  %v169 = vadd.f32 %v98, %v163
  %v170 = vadd.f32 %v99, %v163
  %v171 = vadd.f32 %v100, %v163
  %v172 = vadd.f32 %v101, %v163
  %v173 = vadd.f32 %v102, %v163
  %v174 = vadd.f32 %v103, %v163
  %v175 = vadd.f32 %v104, %v163
  %v176 = vadd.f32 %v105, %v163
  %v177 = vadd.f32 %v106, %v163
  %v178 = vadd.f32 %v107, %v163
  %v179 = vadd.f32 %v108, %v163
  %v180 = vadd.f32 %v109, %v163
  %v181 = vadd.f32 %v110, %v163
  %v182 = vadd.f32 %v111, %v163
  %v183 = vadd.f32 %v112, %v163
  %v184 = vadd.f32 %v113, %v163
  %v185 = vadd.f32 %v114, %v163
  %v186 = vadd.f32 %v115, %v163
  %v187 = vadd.f32 %v116, %v163
  %v188 = vadd.f32 %v117, %v163
  %v189 = vadd.f32 %v118, %v163
  %v190 = vadd.f32 %v119, %v163
  %v191 = vadd.f32 %v120, %v163
  %v192 = vadd.f32 %v121, %v163
  %v193 = vadd.f32 %v122, %v163
  %v194 = vadd.f32 %v123, %v163
  %v195 = vadd.f32 %v124, %v163
  %v196 = vadd.f32 %v125, %v163
  %v197 = vadd.f32 %v126, %v163
  %v198 = vadd.f32 %v127, %v163
  %v199 = vadd.f32 %v128, %v163
  %v200 = vadd.f32 %v129, %v163
  %v201 = vadd.f32 %v130, %v163
  %v202 = vadd.f32 %v131, %v163
  %v203 = vadd.f32 %v132, %v163
  %v204 = vadd.f32 %v133, %v163
  %v205 = vadd.f32 %v134, %v163
  %v206 = vadd.f32 %v135, %v163
  %v207 = vadd.f32 %v136, %v163
  %v208 = vadd.f32 %v137, %v163
  %v209 = vadd.f32 %v138, %v163
  %v210 = vadd.f32 %v139, %v163
  %v211 = vadd.f32 %v140, %v163
  %v212 = vadd.f32 %v141, %v163
  %v213 = vadd.f32 %v142, %v163
  %v214 = vadd.f32 %v143, %v163
  %v215 = vadd.f32 %v144, %v163
  %v216 = vadd.f32 %v145, %v163
  %v217 = vadd.f32 %v146, %v163
  %v218 = vadd.f32 %v147, %v163
  %v219 = vadd.f32 %v148, %v163
  %v220 = vadd.f32 %v149, %v163
  %v221 = vadd.f32 %v150, %v163
  %v222 = vadd.f32 %v151, %v163
  %v223 = vadd.f32 %v152, %v163
  %v224 = vadd.f32 %v153, %v163
  %v225 = vadd.f32 %v154, %v163
  %v226 = vadd.f32 %v155, %v163
  %v227 = vadd.f32 %v156, %v163
  %v228 = vadd.f32 %v157, %v163
  %v229 = vld [vmem:[%s1] sm:$0xff]
  %v230 = vld [vmem:[%s1 + $0x8] sm:$0xff]
  %v231 = vld [vmem:[%s1 + $0x10] sm:$0xff]
  %v232 = vld [vmem:[%s1 + $0x18] sm:$0xff]
  %v233 = vld [vmem:[%s1 + $0x20] sm:$0xff]
  %v234 = vld [vmem:[%s1 + $0x28] sm:$0xff]
  %v235 = vld [vmem:[%s1 + $0x30] sm:$0xff]
  %v236 = vld [vmem:[%s1 + $0x38] sm:$0xff]
  %v237 = vld [vmem:[%s1 + $0x40] sm:$0xff]
  %v238 = vld [vmem:[%s1 + $0x48] sm:$0xff]
  %v239 = vld [vmem:[%s1 + $0x50] sm:$0xff]
  %v240 = vld [vmem:[%s1 + $0x58] sm:$0xff]
  %v241 = vld [vmem:[%s1 + $0x60] sm:$0xff]
  %v242 = vld [vmem:[%s1 + $0x68] sm:$0xff]
  %v243 = vld [vmem:[%s1 + $0x70] sm:$0xff]
  %v244 = vld [vmem:[%s1 + $0x78] sm:$0xff]
  %v245 = vld [vmem:[%s1 + $0x80] sm:$0xff]
  %v246 = vld [vmem:[%s1 + $0x88] sm:$0xff]
  %v247 = vld [vmem:[%s1 + $0x90] sm:$0xff]
  %v248 = vld [vmem:[%s1 + $0x98] sm:$0xff]
  %v249 = vld [vmem:[%s1 + $0xa0] sm:$0xff]
  %v250 = vld [vmem:[%s1 + $0xa8] sm:$0xff]
  %v251 = vld [vmem:[%s1 + $0xb0] sm:$0xff]
  %v252 = vld [vmem:[%s1 + $0xb8] sm:$0xff]
  %v253 = vld [vmem:[%s1 + $0xc0] sm:$0xff]
  %v254 = vld [vmem:[%s1 + $0xc8] sm:$0xff]
  %v255 = vld [vmem:[%s1 + $0xd0] sm:$0xff]
  %v256 = vld [vmem:[%s1 + $0xd8] sm:$0xff]
  %v257 = vld [vmem:[%s1 + $0xe0] sm:$0xff]
  %v258 = vld [vmem:[%s1 + $0xe8] sm:$0xff]
  %v259 = vld [vmem:[%s1 + $0xf0] sm:$0xff]
  %v260 = vld [vmem:[%s1 + $0xf8] sm:$0xff]
  %v261 = vld [vmem:[%s1 + $0x100] sm:$0xff]
  %v262 = vld [vmem:[%s1 + $0x108] sm:$0xff]
  %v263 = vld [vmem:[%s1 + $0x110] sm:$0xff]
  %v264 = vld [vmem:[%s1 + $0x118] sm:$0xff]
  %v265 = vld [vmem:[%s1 + $0x120] sm:$0xff]
  %v266 = vld [vmem:[%s1 + $0x128] sm:$0xff]
  %v267 = vld [vmem:[%s1 + $0x130] sm:$0xff]
  %v268 = vld [vmem:[%s1 + $0x138] sm:$0xff]
  %v269 = vld [vmem:[%s1 + $0x140] sm:$0xff]
  %v270 = vld [vmem:[%s1 + $0x148] sm:$0xff]
  %v271 = vld [vmem:[%s1 + $0x150] sm:$0xff]
  %v272 = vld [vmem:[%s1 + $0x158] sm:$0xff]
  %v273 = vld [vmem:[%s1 + $0x160] sm:$0xff]
  %v274 = vld [vmem:[%s1 + $0x168] sm:$0xff]
  %v275 = vld [vmem:[%s1 + $0x170] sm:$0xff]
  %v276 = vld [vmem:[%s1 + $0x178] sm:$0xff]
  %v277 = vld [vmem:[%s1 + $0x180] sm:$0xff]
  %v278 = vld [vmem:[%s1 + $0x188] sm:$0xff]
  %v279 = vld [vmem:[%s1 + $0x190] sm:$0xff]
  %v280 = vld [vmem:[%s1 + $0x198] sm:$0xff]
  %v281 = vld [vmem:[%s1 + $0x1a0] sm:$0xff]
  %v282 = vld [vmem:[%s1 + $0x1a8] sm:$0xff]
  %v283 = vld [vmem:[%s1 + $0x1b0] sm:$0xff]
  %v284 = vld [vmem:[%s1 + $0x1b8] sm:$0xff]
  %v285 = vld [vmem:[%s1 + $0x1c0] sm:$0xff]
  %v286 = vld [vmem:[%s1 + $0x1c8] sm:$0xff]
  %v287 = vld [vmem:[%s1 + $0x1d0] sm:$0xff]
  %v288 = vld [vmem:[%s1 + $0x1d8] sm:$0xff]
  %v289 = vld [vmem:[%s1 + $0x1e0] sm:$0xff]
  %v290 = vld [vmem:[%s1 + $0x1e8] sm:$0xff]
  %v291 = vld [vmem:[%s1 + $0x1f0] sm:$0xff]
  %v292 = vld [vmem:[%s1 + $0x1f8] sm:$0xff]
  %v293 = vld [vmem:[%s4] sm:$0x1]
  %v295 = vlaneseq
  %v296 = vshrl.u32 %v295, 7
  %v297 = vsub.s32 0, %v296
  %v298 = vrot.slane %v293, %v297
  %v300 = vmul.f32 %v229, %v298
  %v301 = vmul.f32 %v230, %v298
  %v302 = vmul.f32 %v231, %v298
  %v303 = vmul.f32 %v232, %v298
  %v304 = vmul.f32 %v233, %v298
  %v305 = vmul.f32 %v234, %v298
  %v306 = vmul.f32 %v235, %v298
  %v307 = vmul.f32 %v236, %v298
  %v308 = vmul.f32 %v237, %v298
  %v309 = vmul.f32 %v238, %v298
  %v310 = vmul.f32 %v239, %v298
  %v311 = vmul.f32 %v240, %v298
  %v312 = vmul.f32 %v241, %v298
  %v313 = vmul.f32 %v242, %v298
  %v314 = vmul.f32 %v243, %v298
  %v315 = vmul.f32 %v244, %v298
  %v316 = vmul.f32 %v245, %v298
  %v317 = vmul.f32 %v246, %v298
  %v318 = vmul.f32 %v247, %v298
  %v319 = vmul.f32 %v248, %v298
  %v320 = vmul.f32 %v249, %v298
  %v321 = vmul.f32 %v250, %v298
  %v322 = vmul.f32 %v251, %v298
  %v323 = vmul.f32 %v252, %v298
  %v324 = vmul.f32 %v253, %v298
  %v325 = vmul.f32 %v254, %v298
  %v326 = vmul.f32 %v255, %v298
  %v327 = vmul.f32 %v256, %v298
  %v328 = vmul.f32 %v257, %v298
  %v329 = vmul.f32 %v258, %v298
  %v330 = vmul.f32 %v259, %v298
  %v331 = vmul.f32 %v260, %v298
  %v332 = vmul.f32 %v261, %v298
  %v333 = vmul.f32 %v262, %v298
  %v334 = vmul.f32 %v263, %v298
  %v335 = vmul.f32 %v264, %v298
  %v336 = vmul.f32 %v265, %v298
  %v337 = vmul.f32 %v266, %v298
  %v338 = vmul.f32 %v267, %v298
  %v339 = vmul.f32 %v268, %v298
  %v340 = vmul.f32 %v269, %v298
  %v341 = vmul.f32 %v270, %v298
  %v342 = vmul.f32 %v271, %v298
  %v343 = vmul.f32 %v272, %v298
  %v344 = vmul.f32 %v273, %v298
  %v345 = vmul.f32 %v274, %v298
  %v346 = vmul.f32 %v275, %v298
  %v347 = vmul.f32 %v276, %v298
  %v348 = vmul.f32 %v277, %v298
  %v349 = vmul.f32 %v278, %v298
  %v350 = vmul.f32 %v279, %v298
  %v351 = vmul.f32 %v280, %v298
  %v352 = vmul.f32 %v281, %v298
  %v353 = vmul.f32 %v282, %v298
  %v354 = vmul.f32 %v283, %v298
  %v355 = vmul.f32 %v284, %v298
  %v356 = vmul.f32 %v285, %v298
  %v357 = vmul.f32 %v286, %v298
  %v358 = vmul.f32 %v287, %v298
  %v359 = vmul.f32 %v288, %v298
  %v360 = vmul.f32 %v289, %v298
  %v361 = vmul.f32 %v290, %v298
  %v362 = vmul.f32 %v291, %v298
  %v363 = vmul.f32 %v292, %v298
  %v364 = vld [vmem:[%s5] sm:$0x1]
  %v366 = vlaneseq
  %v367 = vshrl.u32 %v366, 7
  %v368 = vsub.s32 0, %v367
  %v369 = vrot.slane %v364, %v368
  %v371 = vadd.f32 %v300, %v369
  %v372 = vadd.f32 %v301, %v369
  %v373 = vadd.f32 %v302, %v369
  %v374 = vadd.f32 %v303, %v369
  %v375 = vadd.f32 %v304, %v369
  %v376 = vadd.f32 %v305, %v369
  %v377 = vadd.f32 %v306, %v369
  %v378 = vadd.f32 %v307, %v369
  %v379 = vadd.f32 %v308, %v369
  %v380 = vadd.f32 %v309, %v369
  %v381 = vadd.f32 %v310, %v369
  %v382 = vadd.f32 %v311, %v369
  %v383 = vadd.f32 %v312, %v369
  %v384 = vadd.f32 %v313, %v369
  %v385 = vadd.f32 %v314, %v369
  %v386 = vadd.f32 %v315, %v369
  %v387 = vadd.f32 %v316, %v369
  %v388 = vadd.f32 %v317, %v369
  %v389 = vadd.f32 %v318, %v369
  %v390 = vadd.f32 %v319, %v369
  %v391 = vadd.f32 %v320, %v369
  %v392 = vadd.f32 %v321, %v369
  %v393 = vadd.f32 %v322, %v369
  %v394 = vadd.f32 %v323, %v369
  %v395 = vadd.f32 %v324, %v369
  %v396 = vadd.f32 %v325, %v369
  %v397 = vadd.f32 %v326, %v369
  %v398 = vadd.f32 %v327, %v369
  %v399 = vadd.f32 %v328, %v369
  %v400 = vadd.f32 %v329, %v369
  %v401 = vadd.f32 %v330, %v369
  %v402 = vadd.f32 %v331, %v369
  %v403 = vadd.f32 %v332, %v369
  %v404 = vadd.f32 %v333, %v369
  %v405 = vadd.f32 %v334, %v369
  %v406 = vadd.f32 %v335, %v369
  %v407 = vadd.f32 %v336, %v369
  %v408 = vadd.f32 %v337, %v369
  %v409 = vadd.f32 %v338, %v369
  %v410 = vadd.f32 %v339, %v369
  %v411 = vadd.f32 %v340, %v369
  %v412 = vadd.f32 %v341, %v369
  %v413 = vadd.f32 %v342, %v369
  %v414 = vadd.f32 %v343, %v369
  %v415 = vadd.f32 %v344, %v369
  %v416 = vadd.f32 %v345, %v369
  %v417 = vadd.f32 %v346, %v369
  %v418 = vadd.f32 %v347, %v369
  %v419 = vadd.f32 %v348, %v369
  %v420 = vadd.f32 %v349, %v369
  %v421 = vadd.f32 %v350, %v369
  %v422 = vadd.f32 %v351, %v369
  %v423 = vadd.f32 %v352, %v369
  %v424 = vadd.f32 %v353, %v369
  %v425 = vadd.f32 %v354, %v369
  %v426 = vadd.f32 %v355, %v369
  %v427 = vadd.f32 %v356, %v369
  %v428 = vadd.f32 %v357, %v369
  %v429 = vadd.f32 %v358, %v369
  %v430 = vadd.f32 %v359, %v369
  %v431 = vadd.f32 %v360, %v369
  %v432 = vadd.f32 %v361, %v369
  %v433 = vadd.f32 %v362, %v369
  %v434 = vadd.f32 %v363, %v369
  %v435 = vadd.f32 %v165, %v371
  %v436 = vadd.f32 %v166, %v372
  %v437 = vadd.f32 %v167, %v373
  %v438 = vadd.f32 %v168, %v374
  %v439 = vadd.f32 %v169, %v375
  %v440 = vadd.f32 %v170, %v376
  %v441 = vadd.f32 %v171, %v377
  %v442 = vadd.f32 %v172, %v378
  %v443 = vadd.f32 %v173, %v379
  %v444 = vadd.f32 %v174, %v380
  %v445 = vadd.f32 %v175, %v381
  %v446 = vadd.f32 %v176, %v382
  %v447 = vadd.f32 %v177, %v383
  %v448 = vadd.f32 %v178, %v384
  %v449 = vadd.f32 %v179, %v385
  %v450 = vadd.f32 %v180, %v386
  %v451 = vadd.f32 %v181, %v387
  %v452 = vadd.f32 %v182, %v388
  %v453 = vadd.f32 %v183, %v389
  %v454 = vadd.f32 %v184, %v390
  %v455 = vadd.f32 %v185, %v391
  %v456 = vadd.f32 %v186, %v392
  %v457 = vadd.f32 %v187, %v393
  %v458 = vadd.f32 %v188, %v394
  %v459 = vadd.f32 %v189, %v395
  %v460 = vadd.f32 %v190, %v396
  %v461 = vadd.f32 %v191, %v397
  %v462 = vadd.f32 %v192, %v398
  %v463 = vadd.f32 %v193, %v399
  %v464 = vadd.f32 %v194, %v400
  %v465 = vadd.f32 %v195, %v401
  %v466 = vadd.f32 %v196, %v402
  %v467 = vadd.f32 %v197, %v403
  %v468 = vadd.f32 %v198, %v404
  %v469 = vadd.f32 %v199, %v405
  %v470 = vadd.f32 %v200, %v406
  %v471 = vadd.f32 %v201, %v407
  %v472 = vadd.f32 %v202, %v408
  %v473 = vadd.f32 %v203, %v409
  %v474 = vadd.f32 %v204, %v410
  %v475 = vadd.f32 %v205, %v411
  %v476 = vadd.f32 %v206, %v412
  %v477 = vadd.f32 %v207, %v413
  %v478 = vadd.f32 %v208, %v414
  %v479 = vadd.f32 %v209, %v415
  %v480 = vadd.f32 %v210, %v416
  %v481 = vadd.f32 %v211, %v417
  %v482 = vadd.f32 %v212, %v418
  %v483 = vadd.f32 %v213, %v419
  %v484 = vadd.f32 %v214, %v420
  %v485 = vadd.f32 %v215, %v421
  %v486 = vadd.f32 %v216, %v422
  %v487 = vadd.f32 %v217, %v423
  %v488 = vadd.f32 %v218, %v424
  %v489 = vadd.f32 %v219, %v425
  %v490 = vadd.f32 %v220, %v426
  %v491 = vadd.f32 %v221, %v427
  %v492 = vadd.f32 %v222, %v428
  %v493 = vadd.f32 %v223, %v429
  %v494 = vadd.f32 %v224, %v430
  %v495 = vadd.f32 %v225, %v431
  %v496 = vadd.f32 %v226, %v432
  %v497 = vadd.f32 %v227, %v433
  %v498 = vadd.f32 %v228, %v434
  %v499 = vmax.f32 %v435, 0.0
  %v500 = vmax.f32 %v436, 0.0
  %v501 = vmax.f32 %v437, 0.0
  %v502 = vmax.f32 %v438, 0.0
  %v503 = vmax.f32 %v439, 0.0
  %v504 = vmax.f32 %v440, 0.0
  %v505 = vmax.f32 %v441, 0.0
  %v506 = vmax.f32 %v442, 0.0
  %v507 = vmax.f32 %v443, 0.0
  %v508 = vmax.f32 %v444, 0.0
  %v509 = vmax.f32 %v445, 0.0
  %v510 = vmax.f32 %v446, 0.0
  %v511 = vmax.f32 %v447, 0.0
  %v512 = vmax.f32 %v448, 0.0
  %v513 = vmax.f32 %v449, 0.0
  %v514 = vmax.f32 %v450, 0.0
  %v515 = vmax.f32 %v451, 0.0
  %v516 = vmax.f32 %v452, 0.0
  %v517 = vmax.f32 %v453, 0.0
  %v518 = vmax.f32 %v454, 0.0
  %v519 = vmax.f32 %v455, 0.0
  %v520 = vmax.f32 %v456, 0.0
  %v521 = vmax.f32 %v457, 0.0
  %v522 = vmax.f32 %v458, 0.0
  %v523 = vmax.f32 %v459, 0.0
  %v524 = vmax.f32 %v460, 0.0
  %v525 = vmax.f32 %v461, 0.0
  %v526 = vmax.f32 %v462, 0.0
  %v527 = vmax.f32 %v463, 0.0
  %v528 = vmax.f32 %v464, 0.0
  %v529 = vmax.f32 %v465, 0.0
  %v530 = vmax.f32 %v466, 0.0
  %v531 = vmax.f32 %v467, 0.0
  %v532 = vmax.f32 %v468, 0.0
  %v533 = vmax.f32 %v469, 0.0
  %v534 = vmax.f32 %v470, 0.0
  %v535 = vmax.f32 %v471, 0.0
  %v536 = vmax.f32 %v472, 0.0
  %v537 = vmax.f32 %v473, 0.0
  %v538 = vmax.f32 %v474, 0.0
  %v539 = vmax.f32 %v475, 0.0
  %v540 = vmax.f32 %v476, 0.0
  %v541 = vmax.f32 %v477, 0.0
  %v542 = vmax.f32 %v478, 0.0
  %v543 = vmax.f32 %v479, 0.0
  %v544 = vmax.f32 %v480, 0.0
  %v545 = vmax.f32 %v481, 0.0
  %v546 = vmax.f32 %v482, 0.0
  %v547 = vmax.f32 %v483, 0.0
  %v548 = vmax.f32 %v484, 0.0
  %v549 = vmax.f32 %v485, 0.0
  %v550 = vmax.f32 %v486, 0.0
  %v551 = vmax.f32 %v487, 0.0
  %v552 = vmax.f32 %v488, 0.0
  %v553 = vmax.f32 %v489, 0.0
  %v554 = vmax.f32 %v490, 0.0
  %v555 = vmax.f32 %v491, 0.0
  %v556 = vmax.f32 %v492, 0.0
  %v557 = vmax.f32 %v493, 0.0
  %v558 = vmax.f32 %v494, 0.0
  %v559 = vmax.f32 %v495, 0.0
  %v560 = vmax.f32 %v496, 0.0
  %v561 = vmax.f32 %v497, 0.0
  %v562 = vmax.f32 %v498, 0.0
  %563 = vst [vmem:[%s6] sm:$0xff] %v499
  %564 = vst [vmem:[%s6 + $0x8] sm:$0xff] %v500
  %565 = vst [vmem:[%s6 + $0x10] sm:$0xff] %v501
  %566 = vst [vmem:[%s6 + $0x18] sm:$0xff] %v502
  %567 = vst [vmem:[%s6 + $0x20] sm:$0xff] %v503
  %568 = vst [vmem:[%s6 + $0x28] sm:$0xff] %v504
  %569 = vst [vmem:[%s6 + $0x30] sm:$0xff] %v505
  %570 = vst [vmem:[%s6 + $0x38] sm:$0xff] %v506
  %571 = vst [vmem:[%s6 + $0x40] sm:$0xff] %v507
  %572 = vst [vmem:[%s6 + $0x48] sm:$0xff] %v508
  %573 = vst [vmem:[%s6 + $0x50] sm:$0xff] %v509
  %574 = vst [vmem:[%s6 + $0x58] sm:$0xff] %v510
  %575 = vst [vmem:[%s6 + $0x60] sm:$0xff] %v511
  %576 = vst [vmem:[%s6 + $0x68] sm:$0xff] %v512
  %577 = vst [vmem:[%s6 + $0x70] sm:$0xff] %v513
  %578 = vst [vmem:[%s6 + $0x78] sm:$0xff] %v514
  %579 = vst [vmem:[%s6 + $0x80] sm:$0xff] %v515
  %580 = vst [vmem:[%s6 + $0x88] sm:$0xff] %v516
  %581 = vst [vmem:[%s6 + $0x90] sm:$0xff] %v517
  %582 = vst [vmem:[%s6 + $0x98] sm:$0xff] %v518
  %583 = vst [vmem:[%s6 + $0xa0] sm:$0xff] %v519
  %584 = vst [vmem:[%s6 + $0xa8] sm:$0xff] %v520
  %585 = vst [vmem:[%s6 + $0xb0] sm:$0xff] %v521
  %586 = vst [vmem:[%s6 + $0xb8] sm:$0xff] %v522
  %587 = vst [vmem:[%s6 + $0xc0] sm:$0xff] %v523
  %588 = vst [vmem:[%s6 + $0xc8] sm:$0xff] %v524
  %589 = vst [vmem:[%s6 + $0xd0] sm:$0xff] %v525
  %590 = vst [vmem:[%s6 + $0xd8] sm:$0xff] %v526
  %591 = vst [vmem:[%s6 + $0xe0] sm:$0xff] %v527
  %592 = vst [vmem:[%s6 + $0xe8] sm:$0xff] %v528
  %593 = vst [vmem:[%s6 + $0xf0] sm:$0xff] %v529
  %594 = vst [vmem:[%s6 + $0xf8] sm:$0xff] %v530
  %595 = vst [vmem:[%s6 + $0x100] sm:$0xff] %v531
  %596 = vst [vmem:[%s6 + $0x108] sm:$0xff] %v532
  %597 = vst [vmem:[%s6 + $0x110] sm:$0xff] %v533
  %598 = vst [vmem:[%s6 + $0x118] sm:$0xff] %v534
  %599 = vst [vmem:[%s6 + $0x120] sm:$0xff] %v535
  %600 = vst [vmem:[%s6 + $0x128] sm:$0xff] %v536
  %601 = vst [vmem:[%s6 + $0x130] sm:$0xff] %v537
  %602 = vst [vmem:[%s6 + $0x138] sm:$0xff] %v538
  %603 = vst [vmem:[%s6 + $0x140] sm:$0xff] %v539
  %604 = vst [vmem:[%s6 + $0x148] sm:$0xff] %v540
  %605 = vst [vmem:[%s6 + $0x150] sm:$0xff] %v541
  %606 = vst [vmem:[%s6 + $0x158] sm:$0xff] %v542
  %607 = vst [vmem:[%s6 + $0x160] sm:$0xff] %v543
  %608 = vst [vmem:[%s6 + $0x168] sm:$0xff] %v544
  %609 = vst [vmem:[%s6 + $0x170] sm:$0xff] %v545
  %610 = vst [vmem:[%s6 + $0x178] sm:$0xff] %v546
  %611 = vst [vmem:[%s6 + $0x180] sm:$0xff] %v547
  %612 = vst [vmem:[%s6 + $0x188] sm:$0xff] %v548
  %613 = vst [vmem:[%s6 + $0x190] sm:$0xff] %v549
  %614 = vst [vmem:[%s6 + $0x198] sm:$0xff] %v550
  %615 = vst [vmem:[%s6 + $0x1a0] sm:$0xff] %v551
  %616 = vst [vmem:[%s6 + $0x1a8] sm:$0xff] %v552
  %617 = vst [vmem:[%s6 + $0x1b0] sm:$0xff] %v553
  %618 = vst [vmem:[%s6 + $0x1b8] sm:$0xff] %v554
  %619 = vst [vmem:[%s6 + $0x1c0] sm:$0xff] %v555
  %620 = vst [vmem:[%s6 + $0x1c8] sm:$0xff] %v556
  %621 = vst [vmem:[%s6 + $0x1d0] sm:$0xff] %v557
  %622 = vst [vmem:[%s6 + $0x1d8] sm:$0xff] %v558
  %623 = vst [vmem:[%s6 + $0x1e0] sm:$0xff] %v559
  %624 = vst [vmem:[%s6 + $0x1e8] sm:$0xff] %v560
  %625 = vst [vmem:[%s6 + $0x1f0] sm:$0xff] %v561
  %626 = vst [vmem:[%s6 + $0x1f8] sm:$0xff] %v562
  // Predicated region
  $region26: #{basic_block_forward.5} parent=0 // pred_check
    _
  $region27: #{basic_block_forward.5} parent=0 // pred_check_branch
    %628 = sbr.rel (0) target = $region29
  $region28: #{basic_block_forward.5} parent=0 // pred_region
    _
  $region29: #{basic_block_forward.5} parent=0 // pred_fallthru
    _
  // Predicated region
  $region30: #{basic_block_forward.5} parent=0 // pred_check
    _
  $region31: #{basic_block_forward.5} parent=0 // pred_check_branch
    %630 = sbr.rel (0) target = $region33
  $region32: #{basic_block_forward.5} parent=0 // pred_region
    _
  $region33: #{basic_block_forward.5} parent=0 // pred_fallthru
    _

// kernel: basic_block_forward.3
$region0: #{basic_block_forward.3}
  #allocation0 [shape = 'u32[]', space=smem, size = 0x4, offset = 0x4, fixed_abs, tag = 'smem constant byte address 0x4 - core index']
  #allocation1 [shape = 'u32[144,128]{1,0:T(1,128)}', space=vmem, size = 0x12000, scoped, tag = 'internal scratch']
  %s0 = inlined_call_operand.vmem [shape: f32[2,18,18,128], index: 0, kind: input, shape index: {}]
  %s1 = inlined_call_operand.vmem [shape: f32[1152,128], index: 1, kind: input, shape index: {}]
  %s2 = inlined_call_operand.vmem [shape: f32[128,128], index: 2, kind: input, shape index: {}]
  %s3 = inlined_call_operand.vmem [shape: f32[2,16,16,128], index: 3, kind: output, shape index: {0}]
  %s4 = inlined_call_operand.vmem [shape: f32[2,16,16,128], index: 4, kind: output, shape index: {1}]
  %s5 = inlined_call_operand.vmem [shape: f32[1,4,128], index: 5, kind: output, shape index: {2}]
  %6 = xla_tuple %s3, %s4, %s5
  %s7 = sld [smem:[#allocation0]]
  $region38: #{basic_block_forward.3} parent=0
    _
  %s9 = ssub.s32 1, %s7
  %s10 = scalar_select 0, %s9, %s7
  // Predicated region
  $region2: #{basic_block_forward.3} parent=0 // pred_check
    _
  $region3: #{basic_block_forward.3} parent=0 // pred_check_branch
    %12 = sbr.rel (0) target = $region5
  $region4: #{basic_block_forward.3} parent=0 // pred_region
    _
  $region5: #{basic_block_forward.3} parent=0 // pred_fallthru
    _
  // Predicated region
  $region6: #{basic_block_forward.3} parent=0 // pred_check
    _
  $region7: #{basic_block_forward.3} parent=0 // pred_check_branch
    %14 = sbr.rel (0) target = $region9
  $region8: #{basic_block_forward.3} parent=0 // pred_region
    _
  $region9: #{basic_block_forward.3} parent=0 // pred_fallthru
    _
  // Predicated region
  $region10: #{basic_block_forward.3} parent=0 // pred_check
    _
  $region11: #{basic_block_forward.3} parent=0 // pred_check_branch
    %16 = sbr.rel (0) target = $region13
  $region12: #{basic_block_forward.3} parent=0 // pred_region
    _
  $region13: #{basic_block_forward.3} parent=0 // pred_fallthru
    _
  %v17 = vld [vmem:[%s0] sm:$0xff]
  %v18 = vld [vmem:[%s0 + $0x8] sm:$0xff]
  %v19 = vld [vmem:[%s0 + $0x18] sm:$0xff]
  %v20 = vld [vmem:[%s0 + $0x20] sm:$0xff]
  %v21 = vld [vmem:[%s0 + $0x30] sm:$0xff]
  %v22 = vld [vmem:[%s0 + $0x38] sm:$0xff]
  %v23 = vld [vmem:[%s0 + $0x48] sm:$0xff]
  %v24 = vld [vmem:[%s0 + $0x50] sm:$0xff]
  %v25 = vld [vmem:[%s0 + $0x60] sm:$0xff]
  %v26 = vld [vmem:[%s0 + $0x68] sm:$0xff]
  %v27 = vld [vmem:[%s0 + $0x78] sm:$0xff]
  %v28 = vld [vmem:[%s0 + $0x80] sm:$0xff]
  %v29 = vld [vmem:[%s0 + $0x90] sm:$0xff]
  %v30 = vld [vmem:[%s0 + $0x98] sm:$0xff]
  %v31 = vld [vmem:[%s0 + $0xa8] sm:$0xff]
  %v32 = vld [vmem:[%s0 + $0xb0] sm:$0xff]
  %v33 = vld [vmem:[%s0 + $0xc0] sm:$0xff]
  %v34 = vld [vmem:[%s0 + $0xc8] sm:$0xff]
  %v35 = vld [vmem:[%s0 + $0xd8] sm:$0xff]
  %v36 = vld [vmem:[%s0 + $0xe0] sm:$0xff]
  %v37 = vld [vmem:[%s0 + $0xf0] sm:$0xff]
  %v38 = vld [vmem:[%s0 + $0xf8] sm:$0xff]
  %v39 = vld [vmem:[%s0 + $0x108] sm:$0xff]
  %v40 = vld [vmem:[%s0 + $0x110] sm:$0xff]
  %v41 = vld [vmem:[%s0 + $0x120] sm:$0xff]
  %v42 = vld [vmem:[%s0 + $0x128] sm:$0xff]
  %v43 = vld [vmem:[%s0 + $0x138] sm:$0xff]
  %v44 = vld [vmem:[%s0 + $0x140] sm:$0xff]
  %v45 = vld [vmem:[%s0 + $0x150] sm:$0xff]
  %v46 = vld [vmem:[%s0 + $0x158] sm:$0xff]
  %v47 = vld [vmem:[%s0 + $0x168] sm:$0xff]
  %v48 = vld [vmem:[%s0 + $0x170] sm:$0xff]
  %v49 = vld [vmem:[%s0 + $0x180] sm:$0xff]
  %v50 = vld [vmem:[%s0 + $0x188] sm:$0xff]
  %v51 = vld [vmem:[%s0 + $0x198] sm:$0xff]
  %v52 = vld [vmem:[%s0 + $0x1a0] sm:$0xff]
  %v53 = vld [vmem:[%s0 + $0x1] sm:$0xff]
  %v54 = vld [vmem:[%s0 + $0x9] sm:$0xff]
  %v55 = vld [vmem:[%s0 + $0x19] sm:$0xff]
  %v56 = vld [vmem:[%s0 + $0x21] sm:$0xff]
  %v57 = vld [vmem:[%s0 + $0x31] sm:$0xff]
  %v58 = vld [vmem:[%s0 + $0x39] sm:$0xff]
  %v59 = vld [vmem:[%s0 + $0x49] sm:$0xff]
  %v60 = vld [vmem:[%s0 + $0x51] sm:$0xff]
  %v61 = vld [vmem:[%s0 + $0x61] sm:$0xff]
  %v62 = vld [vmem:[%s0 + $0x69] sm:$0xff]
  %v63 = vld [vmem:[%s0 + $0x79] sm:$0xff]
  %v64 = vld [vmem:[%s0 + $0x81] sm:$0xff]
  %v65 = vld [vmem:[%s0 + $0x91] sm:$0xff]
  %v66 = vld [vmem:[%s0 + $0x99] sm:$0xff]
  %v67 = vld [vmem:[%s0 + $0xa9] sm:$0xff]
  %v68 = vld [vmem:[%s0 + $0xb1] sm:$0xff]
  %v69 = vld [vmem:[%s0 + $0xc1] sm:$0xff]
  %v70 = vld [vmem:[%s0 + $0xc9] sm:$0xff]
  %v71 = vld [vmem:[%s0 + $0xd9] sm:$0xff]
  %v72 = vld [vmem:[%s0 + $0xe1] sm:$0xff]
  %v73 = vld [vmem:[%s0 + $0xf1] sm:$0xff]
  %v74 = vld [vmem:[%s0 + $0xf9] sm:$0xff]
  %v75 = vld [vmem:[%s0 + $0x109] sm:$0xff]
  %v76 = vld [vmem:[%s0 + $0x111] sm:$0xff]
  %v77 = vld [vmem:[%s0 + $0x121] sm:$0xff]
  %v78 = vld [vmem:[%s0 + $0x129] sm:$0xff]
  %v79 = vld [vmem:[%s0 + $0x139] sm:$0xff]
  %v80 = vld [vmem:[%s0 + $0x141] sm:$0xff]
  %v81 = vld [vmem:[%s0 + $0x151] sm:$0xff]
  %v82 = vld [vmem:[%s0 + $0x159] sm:$0xff]
  %v83 = vld [vmem:[%s0 + $0x169] sm:$0xff]
  %v84 = vld [vmem:[%s0 + $0x171] sm:$0xff]
  %v85 = vld [vmem:[%s0 + $0x181] sm:$0xff]
  %v86 = vld [vmem:[%s0 + $0x189] sm:$0xff]
  %v87 = vld [vmem:[%s0 + $0x199] sm:$0xff]
  %v88 = vld [vmem:[%s0 + $0x1a1] sm:$0xff]
  %v89 = vld [vmem:[%s0 + $0x2] sm:$0xff]
  %v90 = vld [vmem:[%s0 + $0xa] sm:$0xff]
  %v91 = vld [vmem:[%s0 + $0x1a] sm:$0xff]
  %v92 = vld [vmem:[%s0 + $0x22] sm:$0xff]
  %v93 = vld [vmem:[%s0 + $0x32] sm:$0xff]
  %v94 = vld [vmem:[%s0 + $0x3a] sm:$0xff]
  %v95 = vld [vmem:[%s0 + $0x4a] sm:$0xff]
  %v96 = vld [vmem:[%s0 + $0x52] sm:$0xff]
  %v97 = vld [vmem:[%s0 + $0x62] sm:$0xff]
  %v98 = vld [vmem:[%s0 + $0x6a] sm:$0xff]
  %v99 = vld [vmem:[%s0 + $0x7a] sm:$0xff]
  %v100 = vld [vmem:[%s0 + $0x82] sm:$0xff]
  %v101 = vld [vmem:[%s0 + $0x92] sm:$0xff]
  %v102 = vld [vmem:[%s0 + $0x9a] sm:$0xff]
  %v103 = vld [vmem:[%s0 + $0xaa] sm:$0xff]
  %v104 = vld [vmem:[%s0 + $0xb2] sm:$0xff]
  %v105 = vld [vmem:[%s0 + $0xc2] sm:$0xff]
  %v106 = vld [vmem:[%s0 + $0xca] sm:$0xff]
  %v107 = vld [vmem:[%s0 + $0xda] sm:$0xff]
  %v108 = vld [vmem:[%s0 + $0xe2] sm:$0xff]
  %v109 = vld [vmem:[%s0 + $0xf2] sm:$0xff]
  %v110 = vld [vmem:[%s0 + $0xfa] sm:$0xff]
  %v111 = vld [vmem:[%s0 + $0x10a] sm:$0xff]
  %v112 = vld [vmem:[%s0 + $0x112] sm:$0xff]
  %v113 = vld [vmem:[%s0 + $0x122] sm:$0xff]
  %v114 = vld [vmem:[%s0 + $0x12a] sm:$0xff]
  %v115 = vld [vmem:[%s0 + $0x13a] sm:$0xff]
  %v116 = vld [vmem:[%s0 + $0x142] sm:$0xff]
  %v117 = vld [vmem:[%s0 + $0x152] sm:$0xff]
  %v118 = vld [vmem:[%s0 + $0x15a] sm:$0xff]
  %v119 = vld [vmem:[%s0 + $0x16a] sm:$0xff]
  %v120 = vld [vmem:[%s0 + $0x172] sm:$0xff]
  %v121 = vld [vmem:[%s0 + $0x182] sm:$0xff]
  %v122 = vld [vmem:[%s0 + $0x18a] sm:$0xff]
  %v123 = vld [vmem:[%s0 + $0x19a] sm:$0xff]
  %v124 = vld [vmem:[%s0 + $0x1a2] sm:$0xff]
  %s125 = scalar_lea.vmem %s0, 432
  %v126 = vld [vmem:[%s125] sm:$0xff]
  %v127 = vld [vmem:[%s125 + $0x8] sm:$0xff]
  %v128 = vld [vmem:[%s125 + $0x18] sm:$0xff]
  %v129 = vld [vmem:[%s125 + $0x20] sm:$0xff]
  %v130 = vld [vmem:[%s125 + $0x30] sm:$0xff]
  %v131 = vld [vmem:[%s125 + $0x38] sm:$0xff]
  %v132 = vld [vmem:[%s125 + $0x48] sm:$0xff]
  %v133 = vld [vmem:[%s125 + $0x50] sm:$0xff]
  %v134 = vld [vmem:[%s125 + $0x60] sm:$0xff]
  %v135 = vld [vmem:[%s125 + $0x68] sm:$0xff]
  %v136 = vld [vmem:[%s125 + $0x78] sm:$0xff]
  %v137 = vld [vmem:[%s125 + $0x80] sm:$0xff]
  %v138 = vld [vmem:[%s125 + $0x90] sm:$0xff]
  %v139 = vld [vmem:[%s125 + $0x98] sm:$0xff]
  %v140 = vld [vmem:[%s125 + $0xa8] sm:$0xff]
  %v141 = vld [vmem:[%s125 + $0xb0] sm:$0xff]
  %v142 = vld [vmem:[%s125 + $0xc0] sm:$0xff]
  %v143 = vld [vmem:[%s125 + $0xc8] sm:$0xff]
  %v144 = vld [vmem:[%s125 + $0xd8] sm:$0xff]
  %v145 = vld [vmem:[%s125 + $0xe0] sm:$0xff]
  %v146 = vld [vmem:[%s125 + $0xf0] sm:$0xff]
  %v147 = vld [vmem:[%s125 + $0xf8] sm:$0xff]
  %v148 = vld [vmem:[%s125 + $0x108] sm:$0xff]
  %v149 = vld [vmem:[%s125 + $0x110] sm:$0xff]
  %v150 = vld [vmem:[%s125 + $0x120] sm:$0xff]
  %v151 = vld [vmem:[%s125 + $0x128] sm:$0xff]
  %v152 = vld [vmem:[%s125 + $0x138] sm:$0xff]
  %v153 = vld [vmem:[%s125 + $0x140] sm:$0xff]
  %v154 = vld [vmem:[%s125 + $0x150] sm:$0xff]
  %v155 = vld [vmem:[%s125 + $0x158] sm:$0xff]
  %v156 = vld [vmem:[%s125 + $0x168] sm:$0xff]
  %v157 = vld [vmem:[%s125 + $0x170] sm:$0xff]
  %v158 = vld [vmem:[%s125 + $0x180] sm:$0xff]
  %v159 = vld [vmem:[%s125 + $0x188] sm:$0xff]
  %v160 = vld [vmem:[%s125 + $0x198] sm:$0xff]
  %v161 = vld [vmem:[%s125 + $0x1a0] sm:$0xff]
  %v162 = vld [vmem:[%s125 + $0x1] sm:$0xff]
  %v163 = vld [vmem:[%s125 + $0x9] sm:$0xff]
  %v164 = vld [vmem:[%s125 + $0x19] sm:$0xff]
  %v165 = vld [vmem:[%s125 + $0x21] sm:$0xff]
  %v166 = vld [vmem:[%s125 + $0x31] sm:$0xff]
  %v167 = vld [vmem:[%s125 + $0x39] sm:$0xff]
  %v168 = vld [vmem:[%s125 + $0x49] sm:$0xff]
  %v169 = vld [vmem:[%s125 + $0x51] sm:$0xff]
  %v170 = vld [vmem:[%s125 + $0x61] sm:$0xff]
  %v171 = vld [vmem:[%s125 + $0x69] sm:$0xff]
  %v172 = vld [vmem:[%s125 + $0x79] sm:$0xff]
  %v173 = vld [vmem:[%s125 + $0x81] sm:$0xff]
  %v174 = vld [vmem:[%s125 + $0x91] sm:$0xff]
  %v175 = vld [vmem:[%s125 + $0x99] sm:$0xff]
  %v176 = vld [vmem:[%s125 + $0xa9] sm:$0xff]
  %v177 = vld [vmem:[%s125 + $0xb1] sm:$0xff]
  %v178 = vld [vmem:[%s125 + $0xc1] sm:$0xff]
  %v179 = vld [vmem:[%s125 + $0xc9] sm:$0xff]
  %v180 = vld [vmem:[%s125 + $0xd9] sm:$0xff]
  %v181 = vld [vmem:[%s125 + $0xe1] sm:$0xff]
  %v182 = vld [vmem:[%s125 + $0xf1] sm:$0xff]
  %v183 = vld [vmem:[%s125 + $0xf9] sm:$0xff]
  %v184 = vld [vmem:[%s125 + $0x109] sm:$0xff]
  %v185 = vld [vmem:[%s125 + $0x111] sm:$0xff]
  %v186 = vld [vmem:[%s125 + $0x121] sm:$0xff]
  %v187 = vld [vmem:[%s125 + $0x129] sm:$0xff]
  %v188 = vld [vmem:[%s125 + $0x139] sm:$0xff]
  %v189 = vld [vmem:[%s125 + $0x141] sm:$0xff]
  %v190 = vld [vmem:[%s125 + $0x151] sm:$0xff]
  %v191 = vld [vmem:[%s125 + $0x159] sm:$0xff]
  %v192 = vld [vmem:[%s125 + $0x169] sm:$0xff]
  %v193 = vld [vmem:[%s125 + $0x171] sm:$0xff]
  %v194 = vld [vmem:[%s125 + $0x181] sm:$0xff]
  %v195 = vld [vmem:[%s125 + $0x189] sm:$0xff]
  %v196 = vld [vmem:[%s125 + $0x199] sm:$0xff]
  %v197 = vld [vmem:[%s125 + $0x1a1] sm:$0xff]
  %v198 = vld [vmem:[%s125 + $0x2] sm:$0xff]
  %v199 = vld [vmem:[%s125 + $0xa] sm:$0xff]
  %v200 = vld [vmem:[%s125 + $0x1a] sm:$0xff]
  %v201 = vld [vmem:[%s125 + $0x22] sm:$0xff]
  %v202 = vld [vmem:[%s125 + $0x32] sm:$0xff]
  %v203 = vld [vmem:[%s125 + $0x3a] sm:$0xff]
  %v204 = vld [vmem:[%s125 + $0x4a] sm:$0xff]
  %v205 = vld [vmem:[%s125 + $0x52] sm:$0xff]
  %v206 = vld [vmem:[%s125 + $0x62] sm:$0xff]
  %v207 = vld [vmem:[%s125 + $0x6a] sm:$0xff]
  %v208 = vld [vmem:[%s125 + $0x7a] sm:$0xff]
  %v209 = vld [vmem:[%s125 + $0x82] sm:$0xff]
  %v210 = vld [vmem:[%s125 + $0x92] sm:$0xff]
  %v211 = vld [vmem:[%s125 + $0x9a] sm:$0xff]
  %v212 = vld [vmem:[%s125 + $0xaa] sm:$0xff]
  %v213 = vld [vmem:[%s125 + $0xb2] sm:$0xff]
  %v214 = vld [vmem:[%s125 + $0xc2] sm:$0xff]
  %v215 = vld [vmem:[%s125 + $0xca] sm:$0xff]
  %v216 = vld [vmem:[%s125 + $0xda] sm:$0xff]
  %v217 = vld [vmem:[%s125 + $0xe2] sm:$0xff]
  %v218 = vld [vmem:[%s125 + $0xf2] sm:$0xff]
  %v219 = vld [vmem:[%s125 + $0xfa] sm:$0xff]
  %v220 = vld [vmem:[%s125 + $0x10a] sm:$0xff]
  %v221 = vld [vmem:[%s125 + $0x112] sm:$0xff]
  %v222 = vld [vmem:[%s125 + $0x122] sm:$0xff]
  %v223 = vld [vmem:[%s125 + $0x12a] sm:$0xff]
  %v224 = vld [vmem:[%s125 + $0x13a] sm:$0xff]
  %v225 = vld [vmem:[%s125 + $0x142] sm:$0xff]
  %v226 = vld [vmem:[%s125 + $0x152] sm:$0xff]
  %v227 = vld [vmem:[%s125 + $0x15a] sm:$0xff]
  %v228 = vld [vmem:[%s125 + $0x16a] sm:$0xff]
  %v229 = vld [vmem:[%s125 + $0x172] sm:$0xff]
  %v230 = vld [vmem:[%s125 + $0x182] sm:$0xff]
  %v231 = vld [vmem:[%s125 + $0x18a] sm:$0xff]
  %v232 = vld [vmem:[%s125 + $0x19a] sm:$0xff]
  %v233 = vld [vmem:[%s125 + $0x1a2] sm:$0xff]
  %v234 = vld [vmem:[%s1] sm:$0xff]
  %v235 = vld [vmem:[%s1 + $0x8] sm:$0xff]
  %v236 = vld [vmem:[%s1 + $0x10] sm:$0xff]
  %v237 = vld [vmem:[%s1 + $0x18] sm:$0xff]
  %v238 = vld [vmem:[%s1 + $0x20] sm:$0xff]
  %v239 = vld [vmem:[%s1 + $0x28] sm:$0xff]
  %v240 = vld [vmem:[%s1 + $0x30] sm:$0xff]
  %v241 = vld [vmem:[%s1 + $0x38] sm:$0xff]
  %v242 = vld [vmem:[%s1 + $0x40] sm:$0xff]
  %v243 = vld [vmem:[%s1 + $0x48] sm:$0xff]
  %v244 = vld [vmem:[%s1 + $0x50] sm:$0xff]
  %v245 = vld [vmem:[%s1 + $0x58] sm:$0xff]
  %v246 = vld [vmem:[%s1 + $0x60] sm:$0xff]
  %v247 = vld [vmem:[%s1 + $0x68] sm:$0xff]
  %v248 = vld [vmem:[%s1 + $0x70] sm:$0xff]
  %v249 = vld [vmem:[%s1 + $0x78] sm:$0xff]
  %v250 = vld [vmem:[%s1 + $0x80] sm:$0xff]
  %v251 = vld [vmem:[%s1 + $0x88] sm:$0xff]
  %v252 = vld [vmem:[%s1 + $0x90] sm:$0xff]
  %v253 = vld [vmem:[%s1 + $0x98] sm:$0xff]
  %v254 = vld [vmem:[%s1 + $0xa0] sm:$0xff]
  %v255 = vld [vmem:[%s1 + $0xa8] sm:$0xff]
  %v256 = vld [vmem:[%s1 + $0xb0] sm:$0xff]
  %v257 = vld [vmem:[%s1 + $0xb8] sm:$0xff]
  %v258 = vld [vmem:[%s1 + $0xc0] sm:$0xff]
  %v259 = vld [vmem:[%s1 + $0xc8] sm:$0xff]
  %v260 = vld [vmem:[%s1 + $0xd0] sm:$0xff]
  %v261 = vld [vmem:[%s1 + $0xd8] sm:$0xff]
  %v262 = vld [vmem:[%s1 + $0xe0] sm:$0xff]
  %v263 = vld [vmem:[%s1 + $0xe8] sm:$0xff]
  %v264 = vld [vmem:[%s1 + $0xf0] sm:$0xff]
  %v265 = vld [vmem:[%s1 + $0xf8] sm:$0xff]
  %v266 = vld [vmem:[%s1 + $0x100] sm:$0xff]
  %v267 = vld [vmem:[%s1 + $0x108] sm:$0xff]
  %v268 = vld [vmem:[%s1 + $0x110] sm:$0xff]
  %v269 = vld [vmem:[%s1 + $0x118] sm:$0xff]
  %v270 = vld [vmem:[%s1 + $0x120] sm:$0xff]
  %v271 = vld [vmem:[%s1 + $0x128] sm:$0xff]
  %v272 = vld [vmem:[%s1 + $0x130] sm:$0xff]
  %v273 = vld [vmem:[%s1 + $0x138] sm:$0xff]
  %v274 = vld [vmem:[%s1 + $0x140] sm:$0xff]
  %v275 = vld [vmem:[%s1 + $0x148] sm:$0xff]
  %v276 = vld [vmem:[%s1 + $0x150] sm:$0xff]
  %v277 = vld [vmem:[%s1 + $0x158] sm:$0xff]
  %v278 = vld [vmem:[%s1 + $0x160] sm:$0xff]
  %v279 = vld [vmem:[%s1 + $0x168] sm:$0xff]
  %v280 = vld [vmem:[%s1 + $0x170] sm:$0xff]
  %v281 = vld [vmem:[%s1 + $0x178] sm:$0xff]
  %v282 = vld [vmem:[%s1 + $0x180] sm:$0xff]
  %v283 = vld [vmem:[%s1 + $0x188] sm:$0xff]
  %v284 = vld [vmem:[%s1 + $0x190] sm:$0xff]
  %v285 = vld [vmem:[%s1 + $0x198] sm:$0xff]
  %v286 = vld [vmem:[%s1 + $0x1a0] sm:$0xff]
  %v287 = vld [vmem:[%s1 + $0x1a8] sm:$0xff]
  %v288 = vld [vmem:[%s1 + $0x1b0] sm:$0xff]
  %v289 = vld [vmem:[%s1 + $0x1b8] sm:$0xff]
  %v290 = vld [vmem:[%s1 + $0x1c0] sm:$0xff]
  %v291 = vld [vmem:[%s1 + $0x1c8] sm:$0xff]
  %v292 = vld [vmem:[%s1 + $0x1d0] sm:$0xff]
  %v293 = vld [vmem:[%s1 + $0x1d8] sm:$0xff]
  %v294 = vld [vmem:[%s1 + $0x1e0] sm:$0xff]
  %v295 = vld [vmem:[%s1 + $0x1e8] sm:$0xff]
  %v296 = vld [vmem:[%s1 + $0x1f0] sm:$0xff]
  %v297 = vld [vmem:[%s1 + $0x1f8] sm:$0xff]
  %v298 = vld [vmem:[%s1 + $0x200] sm:$0xff]
  %v299 = vld [vmem:[%s1 + $0x208] sm:$0xff]
  %v300 = vld [vmem:[%s1 + $0x210] sm:$0xff]
  %v301 = vld [vmem:[%s1 + $0x218] sm:$0xff]
  %v302 = vld [vmem:[%s1 + $0x220] sm:$0xff]
  %v303 = vld [vmem:[%s1 + $0x228] sm:$0xff]
  %v304 = vld [vmem:[%s1 + $0x230] sm:$0xff]
  %v305 = vld [vmem:[%s1 + $0x238] sm:$0xff]
  %v306 = vld [vmem:[%s1 + $0x240] sm:$0xff]
  %v307 = vld [vmem:[%s1 + $0x248] sm:$0xff]
  %v308 = vld [vmem:[%s1 + $0x250] sm:$0xff]
  %v309 = vld [vmem:[%s1 + $0x258] sm:$0xff]
  %v310 = vld [vmem:[%s1 + $0x260] sm:$0xff]
  %v311 = vld [vmem:[%s1 + $0x268] sm:$0xff]
  %v312 = vld [vmem:[%s1 + $0x270] sm:$0xff]
  %v313 = vld [vmem:[%s1 + $0x278] sm:$0xff]
  %v314 = vld [vmem:[%s1 + $0x280] sm:$0xff]
  %v315 = vld [vmem:[%s1 + $0x288] sm:$0xff]
  %v316 = vld [vmem:[%s1 + $0x290] sm:$0xff]
  %v317 = vld [vmem:[%s1 + $0x298] sm:$0xff]
  %v318 = vld [vmem:[%s1 + $0x2a0] sm:$0xff]
  %v319 = vld [vmem:[%s1 + $0x2a8] sm:$0xff]
  %v320 = vld [vmem:[%s1 + $0x2b0] sm:$0xff]
  %v321 = vld [vmem:[%s1 + $0x2b8] sm:$0xff]
  %v322 = vld [vmem:[%s1 + $0x2c0] sm:$0xff]
  %v323 = vld [vmem:[%s1 + $0x2c8] sm:$0xff]
  %v324 = vld [vmem:[%s1 + $0x2d0] sm:$0xff]
  %v325 = vld [vmem:[%s1 + $0x2d8] sm:$0xff]
  %v326 = vld [vmem:[%s1 + $0x2e0] sm:$0xff]
  %v327 = vld [vmem:[%s1 + $0x2e8] sm:$0xff]
  %v328 = vld [vmem:[%s1 + $0x2f0] sm:$0xff]
  %v329 = vld [vmem:[%s1 + $0x2f8] sm:$0xff]
  %v330 = vld [vmem:[%s1 + $0x300] sm:$0xff]
  %v331 = vld [vmem:[%s1 + $0x308] sm:$0xff]
  %v332 = vld [vmem:[%s1 + $0x310] sm:$0xff]
  %v333 = vld [vmem:[%s1 + $0x318] sm:$0xff]
  %v334 = vld [vmem:[%s1 + $0x320] sm:$0xff]
  %v335 = vld [vmem:[%s1 + $0x328] sm:$0xff]
  %v336 = vld [vmem:[%s1 + $0x330] sm:$0xff]
  %v337 = vld [vmem:[%s1 + $0x338] sm:$0xff]
  %v338 = vld [vmem:[%s1 + $0x340] sm:$0xff]
  %v339 = vld [vmem:[%s1 + $0x348] sm:$0xff]
  %v340 = vld [vmem:[%s1 + $0x350] sm:$0xff]
  %v341 = vld [vmem:[%s1 + $0x358] sm:$0xff]
  %v342 = vld [vmem:[%s1 + $0x360] sm:$0xff]
  %v343 = vld [vmem:[%s1 + $0x368] sm:$0xff]
  %v344 = vld [vmem:[%s1 + $0x370] sm:$0xff]
  %v345 = vld [vmem:[%s1 + $0x378] sm:$0xff]
  %v346 = vld [vmem:[%s1 + $0x380] sm:$0xff]
  %v347 = vld [vmem:[%s1 + $0x388] sm:$0xff]
  %v348 = vld [vmem:[%s1 + $0x390] sm:$0xff]
  %v349 = vld [vmem:[%s1 + $0x398] sm:$0xff]
  %v350 = vld [vmem:[%s1 + $0x3a0] sm:$0xff]
  %v351 = vld [vmem:[%s1 + $0x3a8] sm:$0xff]
  %v352 = vld [vmem:[%s1 + $0x3b0] sm:$0xff]
  %v353 = vld [vmem:[%s1 + $0x3b8] sm:$0xff]
  %v354 = vld [vmem:[%s1 + $0x3c0] sm:$0xff]
  %v355 = vld [vmem:[%s1 + $0x3c8] sm:$0xff]
  %v356 = vld [vmem:[%s1 + $0x3d0] sm:$0xff]
  %v357 = vld [vmem:[%s1 + $0x3d8] sm:$0xff]
  %v358 = vld [vmem:[%s1 + $0x3e0] sm:$0xff]
  %v359 = vld [vmem:[%s1 + $0x3e8] sm:$0xff]
  %v360 = vld [vmem:[%s1 + $0x3f0] sm:$0xff]
  %v361 = vld [vmem:[%s1 + $0x3f8] sm:$0xff]
  %v362 = vld [vmem:[%s1 + $0x400] sm:$0xff]
  %v363 = vld [vmem:[%s1 + $0x408] sm:$0xff]
  %v364 = vld [vmem:[%s1 + $0x410] sm:$0xff]
  %v365 = vld [vmem:[%s1 + $0x418] sm:$0xff]
  %v366 = vld [vmem:[%s1 + $0x420] sm:$0xff]
  %v367 = vld [vmem:[%s1 + $0x428] sm:$0xff]
  %v368 = vld [vmem:[%s1 + $0x430] sm:$0xff]
  %v369 = vld [vmem:[%s1 + $0x438] sm:$0xff]
  %v370 = vld [vmem:[%s1 + $0x440] sm:$0xff]
  %v371 = vld [vmem:[%s1 + $0x448] sm:$0xff]
  %v372 = vld [vmem:[%s1 + $0x450] sm:$0xff]
  %v373 = vld [vmem:[%s1 + $0x458] sm:$0xff]
  %v374 = vld [vmem:[%s1 + $0x460] sm:$0xff]
  %v375 = vld [vmem:[%s1 + $0x468] sm:$0xff]
  %v376 = vld [vmem:[%s1 + $0x470] sm:$0xff]
  %v377 = vld [vmem:[%s1 + $0x478] sm:$0xff]
  %378 = vmatprep.subr.mxu0 0.0
  %379 = vmatpush1.msra.mxu0 %v234
  %380 = vmatprep.subr.mxu0 0.0
  %381 = vmatpush1.msra.mxu0 %v235
  %382 = vmatprep.subr.mxu0 0.0
  %383 = vmatpush1.msra.mxu0 %v236
  %384 = vmatprep.subr.mxu0 0.0
  %385 = vmatpush1.msra.mxu0 %v237
  %386 = vmatprep.subr.mxu0 0.0
  %387 = vmatpush1.msra.mxu0 %v238
  %388 = vmatprep.subr.mxu0 0.0
  %389 = vmatpush1.msra.mxu0 %v239
  %390 = vmatprep.subr.mxu0 0.0
  %391 = vmatpush1.msra.mxu0 %v240
  %392 = vmatprep.subr.mxu0 0.0
  %393 = vmatpush1.msra.mxu0 %v241
  %394 = vmatprep.subr.mxu0 0.0
  %395 = vmatpush1.msra.mxu0 %v242
  %396 = vmatprep.subr.mxu0 0.0
  %397 = vmatpush1.msra.mxu0 %v243
  %398 = vmatprep.subr.mxu0 0.0
  %399 = vmatpush1.msra.mxu0 %v244
  %400 = vmatprep.subr.mxu0 0.0
  %401 = vmatpush1.msra.mxu0 %v245
  %402 = vmatprep.subr.mxu0 0.0
  %403 = vmatpush1.msra.mxu0 %v246
  %404 = vmatprep.subr.mxu0 0.0
  %405 = vmatpush1.msra.mxu0 %v247
  %406 = vmatprep.subr.mxu0 0.0
  %407 = vmatpush1.msra.mxu0 %v248
  %408 = vmatprep.subr.mxu0 0.0
  %409 = vmatpush1.msra.mxu0 %v249
  %410 = vmatprep.subr.mxu0 0.0
  %411 = vmatpush1.msra.mxu0 %v250
  %412 = vmatprep.subr.mxu0 0.0
  %413 = vmatpush1.msra.mxu0 %v251
  %414 = vmatprep.subr.mxu0 0.0
  %415 = vmatpush1.msra.mxu0 %v252
  %416 = vmatprep.subr.mxu0 0.0
  %417 = vmatpush1.msra.mxu0 %v253
  %418 = vmatprep.subr.mxu0 0.0
  %419 = vmatpush1.msra.mxu0 %v254
  %420 = vmatprep.subr.mxu0 0.0
  %421 = vmatpush1.msra.mxu0 %v255
  %422 = vmatprep.subr.mxu0 0.0
  %423 = vmatpush1.msra.mxu0 %v256
  %424 = vmatprep.subr.mxu0 0.0
  %425 = vmatpush1.msra.mxu0 %v257
  %426 = vmatprep.subr.mxu0 0.0
  %427 = vmatpush1.msra.mxu0 %v258
  %428 = vmatprep.subr.mxu0 0.0
  %429 = vmatpush1.msra.mxu0 %v259
  %430 = vmatprep.subr.mxu0 0.0
  %431 = vmatpush1.msra.mxu0 %v260
  %432 = vmatprep.subr.mxu0 0.0
  %433 = vmatpush1.msra.mxu0 %v261
  %434 = vmatprep.subr.mxu0 0.0
  %435 = vmatpush1.msra.mxu0 %v262
  %436 = vmatprep.subr.mxu0 0.0
  %437 = vmatpush1.msra.mxu0 %v263
  %438 = vmatprep.subr.mxu0 0.0
  %439 = vmatpush1.msra.mxu0 %v264
  %440 = vmatprep.subr.mxu0 0.0
  %441 = vmatpush1.msra.mxu0 %v265
  %442 = vmatprep.mubr.f32.mxu0 %v19
  %443 = vmatmul.mubr.f32.gmra.mrb[0].mxu0 %v17
  %v444 = vpop.f32.mrb[0].mxu0
  %v445 = vadd.f32 0.0, %v444
  %v446 = vpop.f32.mrb[0].mxu0
  %447 = vmatprep.mubr.f32.mxu0 %v20
  %448 = vmatmul.mubr.f32.gmra.mrb[0].mxu0 %v18
  %v449 = vpop.f32.mrb[0].mxu0
  %v450 = vadd.f32 0.0, %v449
  %v451 = vpop.f32.mrb[0].mxu0
  %452 = vmatprep.mubr.f32.mxu0 %v21
  %453 = vmatmul.mubr.f32.gmra.mrb[0].mxu0 %v19
  %v454 = vpop.f32.mrb[0].mxu0
  %v455 = vadd.f32 0.0, %v454
  %v456 = vpop.f32.mrb[0].mxu0
  %457 = vmatprep.mubr.f32.mxu0 %v22
  %458 = vmatmul.mubr.f32.gmra.mrb[0].mxu0 %v20
  %v459 = vpop.f32.mrb[0].mxu0
  %v460 = vadd.f32 0.0, %v459
  %v461 = vpop.f32.mrb[0].mxu0
  %462 = vmatprep.mubr.f32.mxu0 %v23
  %463 = vmatmul.mubr.f32.gmra.mrb[0].mxu0 %v21
  %v464 = vpop.f32.mrb[0].mxu0
  %v465 = vadd.f32 0.0, %v464
  %v466 = vpop.f32.mrb[0].mxu0
  %467 = vmatprep.mubr.f32.mxu0 %v24
  %468 = vmatmul.mubr.f32.gmra.mrb[0].mxu0 %v22
  %v469 = vpop.f32.mrb[0].mxu0
  %v470 = vadd.f32 0.0, %v469
  %v471 = vpop.f32.mrb[0].mxu0
  %472 = vmatprep.mubr.f32.mxu0 %v25
  %473 = vmatmul.mubr.f32.gmra.mrb[0].mxu0 %v23
  %v474 = vpop.f32.mrb[0].mxu0
  %v475 = vadd.f32 0.0, %v474
  %v476 = vpop.f32.mrb[0].mxu0
  %477 = vmatprep.mubr.f32.mxu0 %v26
  %478 = vmatmul.mubr.f32.gmra.mrb[0].mxu0 %v24
  %v479 = vpop.f32.mrb[0].mxu0
  %v480 = vadd.f32 0.0, %v479
  %v481 = vpop.f32.mrb[0].mxu0
  %482 = vmatprep.mubr.f32.mxu0 %v27
  %483 = vmatmul.mubr.f32.gmra.mrb[0].mxu0 %v25
  %v484 = vpop.f32.mrb[0].mxu0
  %v485 = vadd.f32 0.0, %v484
  %v486 = vpop.f32.mrb[0].mxu0
  %487 = vmatprep.mubr.f32.mxu0 %v28
  %488 = vmatmul.mubr.f32.gmra.mrb[0].mxu0 %v26
  %v489 = vpop.f32.mrb[0].mxu0
  %v490 = vadd.f32 0.0, %v489
  %v491 = vpop.f32.mrb[0].mxu0
  %492 = vmatprep.mubr.f32.mxu0 %v29
  %493 = vmatmul.mubr.f32.gmra.mrb[0].mxu0 %v27
  %v494 = vpop.f32.mrb[0].mxu0
  %v495 = vadd.f32 0.0, %v494
  %v496 = vpop.f32.mrb[0].mxu0
  %497 = vmatprep.mubr.f32.mxu0 %v30
  %498 = vmatmul.mubr.f32.gmra.mrb[0].mxu0 %v28
  %v499 = vpop.f32.mrb[0].mxu0
  %v500 = vadd.f32 0.0, %v499
  %v501 = vpop.f32.mrb[0].mxu0
  %502 = vmatprep.mubr.f32.mxu0 %v31
  %503 = vmatmul.mubr.f32.gmra.mrb[0].mxu0 %v29
  %v504 = vpop.f32.mrb[0].mxu0
  %v505 = vadd.f32 0.0, %v504
  %v506 = vpop.f32.mrb[0].mxu0
  %507 = vmatprep.mubr.f32.mxu0 %v32
  %508 = vmatmul.mubr.f32.gmra.mrb[0].mxu0 %v30
  %v509 = vpop.f32.mrb[0].mxu0
  %v510 = vadd.f32 0.0, %v509
  %v511 = vpop.f32.mrb[0].mxu0
  %512 = vmatprep.mubr.f32.mxu0 %v33
  %513 = vmatmul.mubr.f32.gmra.mrb[0].mxu0 %v31
  %v514 = vpop.f32.mrb[0].mxu0
  %v515 = vadd.f32 0.0, %v514
  %v516 = vpop.f32.mrb[0].mxu0
  %517 = vmatprep.mubr.f32.mxu0 %v34
  %518 = vmatmul.mubr.f32.gmra.mrb[0].mxu0 %v32
  %v519 = vpop.f32.mrb[0].mxu0
  %v520 = vadd.f32 0.0, %v519
  %v521 = vpop.f32.mrb[0].mxu0
  %522 = vmatprep.mubr.f32.mxu0 %v35
  %523 = vmatmul.mubr.f32.gmra.mrb[0].mxu0 %v33
  %v524 = vpop.f32.mrb[0].mxu0
  %v525 = vadd.f32 0.0, %v524
  %v526 = vpop.f32.mrb[0].mxu0
  %527 = vmatprep.mubr.f32.mxu0 %v36
  %528 = vmatmul.mubr.f32.gmra.mrb[0].mxu0 %v34
  %v529 = vpop.f32.mrb[0].mxu0
  %v530 = vadd.f32 0.0, %v529
  %v531 = vpop.f32.mrb[0].mxu0
  %532 = vmatprep.mubr.f32.mxu0 %v37
  %533 = vmatmul.mubr.f32.gmra.mrb[0].mxu0 %v35
  %v534 = vpop.f32.mrb[0].mxu0
  %v535 = vadd.f32 0.0, %v534
  %v536 = vpop.f32.mrb[0].mxu0
  %537 = vmatprep.mubr.f32.mxu0 %v38
  %538 = vmatmul.mubr.f32.gmra.mrb[0].mxu0 %v36
  %v539 = vpop.f32.mrb[0].mxu0
  %v540 = vadd.f32 0.0, %v539
  %v541 = vpop.f32.mrb[0].mxu0
  %542 = vmatprep.mubr.f32.mxu0 %v39
  %543 = vmatmul.mubr.f32.gmra.mrb[0].mxu0 %v37
  %v544 = vpop.f32.mrb[0].mxu0
  %v545 = vadd.f32 0.0, %v544
  %v546 = vpop.f32.mrb[0].mxu0
  %547 = vmatprep.mubr.f32.mxu0 %v40
  %548 = vmatmul.mubr.f32.gmra.mrb[0].mxu0 %v38
  %v549 = vpop.f32.mrb[0].mxu0
  %v550 = vadd.f32 0.0, %v549
  %v551 = vpop.f32.mrb[0].mxu0
  %552 = vmatprep.mubr.f32.mxu0 %v41
  %553 = vmatmul.mubr.f32.gmra.mrb[0].mxu0 %v39
  %v554 = vpop.f32.mrb[0].mxu0
  %v555 = vadd.f32 0.0, %v554
  %v556 = vpop.f32.mrb[0].mxu0
  %557 = vmatprep.mubr.f32.mxu0 %v42
  %558 = vmatmul.mubr.f32.gmra.mrb[0].mxu0 %v40
  %v559 = vpop.f32.mrb[0].mxu0
  %v560 = vadd.f32 0.0, %v559
  %v561 = vpop.f32.mrb[0].mxu0
  %562 = vmatprep.mubr.f32.mxu0 %v43
  %563 = vmatmul.mubr.f32.gmra.mrb[0].mxu0 %v41
  %v564 = vpop.f32.mrb[0].mxu0
  %v565 = vadd.f32 0.0, %v564
  %v566 = vpop.f32.mrb[0].mxu0
  %567 = vmatprep.mubr.f32.mxu0 %v44
  %568 = vmatmul.mubr.f32.gmra.mrb[0].mxu0 %v42
  %v569 = vpop.f32.mrb[0].mxu0
  %v570 = vadd.f32 0.0, %v569
  %v571 = vpop.f32.mrb[0].mxu0
  %572 = vmatprep.mubr.f32.mxu0 %v45
  %573 = vmatmul.mubr.f32.gmra.mrb[0].mxu0 %v43
  %v574 = vpop.f32.mrb[0].mxu0
  %v575 = vadd.f32 0.0, %v574
  %v576 = vpop.f32.mrb[0].mxu0
  %577 = vmatprep.mubr.f32.mxu0 %v46
  %578 = vmatmul.mubr.f32.gmra.mrb[0].mxu0 %v44
  %v579 = vpop.f32.mrb[0].mxu0
  %v580 = vadd.f32 0.0, %v579
  %v581 = vpop.f32.mrb[0].mxu0
  %582 = vmatprep.mubr.f32.mxu0 %v47
  %583 = vmatmul.mubr.f32.gmra.mrb[0].mxu0 %v45
  %v584 = vpop.f32.mrb[0].mxu0
  %v585 = vadd.f32 0.0, %v584
  %v586 = vpop.f32.mrb[0].mxu0
  %587 = vmatprep.mubr.f32.mxu0 %v48
  %588 = vmatmul.mubr.f32.gmra.mrb[0].mxu0 %v46
  %v589 = vpop.f32.mrb[0].mxu0
  %v590 = vadd.f32 0.0, %v589
  %v591 = vpop.f32.mrb[0].mxu0
  %592 = vmatprep.mubr.f32.mxu0 %v49
  %593 = vmatmul.mubr.f32.gmra.mrb[0].mxu0 %v47
  %v594 = vpop.f32.mrb[0].mxu0
  %v595 = vadd.f32 0.0, %v594
  %v596 = vpop.f32.mrb[0].mxu0
  %597 = vmatprep.mubr.f32.mxu0 %v50
  %598 = vmatmul.mubr.f32.gmra.mrb[0].mxu0 %v48
  %v599 = vpop.f32.mrb[0].mxu0
  %v600 = vadd.f32 0.0, %v599
  %v601 = vpop.f32.mrb[0].mxu0
  %602 = vmatprep.mubr.f32.mxu0 %v128
  %603 = vmatmul.mubr.f32.gmra.mrb[0].mxu0 %v126
  %v604 = vpop.f32.mrb[0].mxu0
  %v605 = vadd.f32 0.0, %v604
  %v606 = vpop.f32.mrb[0].mxu0
  %607 = vmatprep.mubr.f32.mxu0 %v129
  %608 = vmatmul.mubr.f32.gmra.mrb[0].mxu0 %v127
  %v609 = vpop.f32.mrb[0].mxu0
  %v610 = vadd.f32 0.0, %v609
  %v611 = vpop.f32.mrb[0].mxu0
  %612 = vmatprep.mubr.f32.mxu0 %v130
  %613 = vmatmul.mubr.f32.gmra.mrb[0].mxu0 %v128
  %v614 = vpop.f32.mrb[0].mxu0
  %v615 = vadd.f32 0.0, %v614
  %v616 = vpop.f32.mrb[0].mxu0
  %617 = vmatprep.mubr.f32.mxu0 %v131
  %618 = vmatmul.mubr.f32.gmra.mrb[0].mxu0 %v129
  %v619 = vpop.f32.mrb[0].mxu0
  %v620 = vadd.f32 0.0, %v619
  %v621 = vpop.f32.mrb[0].mxu0
  %622 = vmatprep.mubr.f32.mxu0 %v132
  %623 = vmatmul.mubr.f32.gmra.mrb[0].mxu0 %v130
  %v624 = vpop.f32.mrb[0].mxu0
  %v625 = vadd.f32 0.0, %v624
  %v626 = vpop.f32.mrb[0].mxu0
  %627 = vmatprep.mubr.f32.mxu0 %v133
  %628 = vmatmul.mubr.f32.gmra.mrb[0].mxu0 %v131
  %v629 = vpop.f32.mrb[0].mxu0
  %v630 = vadd.f32 0.0, %v629
  %v631 = vpop.f32.mrb[0].mxu0
  %632 = vmatprep.mubr.f32.mxu0 %v134
  %633 = vmatmul.mubr.f32.gmra.mrb[0].mxu0 %v132
  %v634 = vpop.f32.mrb[0].mxu0
  %v635 = vadd.f32 0.0, %v634
  %v636 = vpop.f32.mrb[0].mxu0
  %637 = vmatprep.mubr.f32.mxu0 %v135
  %638 = vmatmul.mubr.f32.gmra.mrb[0].mxu0 %v133
  %v639 = vpop.f32.mrb[0].mxu0
  %v640 = vadd.f32 0.0, %v639
  %v641 = vpop.f32.mrb[0].mxu0
  %642 = vmatprep.mubr.f32.mxu0 %v136
  %643 = vmatmul.mubr.f32.gmra.mrb[0].mxu0 %v134
  %v644 = vpop.f32.mrb[0].mxu0
  %v645 = vadd.f32 0.0, %v644
  %v646 = vpop.f32.mrb[0].mxu0
  %647 = vmatprep.mubr.f32.mxu0 %v137
  %648 = vmatmul.mubr.f32.gmra.mrb[0].mxu0 %v135
  %v649 = vpop.f32.mrb[0].mxu0
  %v650 = vadd.f32 0.0, %v649
  %v651 = vpop.f32.mrb[0].mxu0
  %652 = vmatprep.mubr.f32.mxu0 %v138
  %653 = vmatmul.mubr.f32.gmra.mrb[0].mxu0 %v136
  %v654 = vpop.f32.mrb[0].mxu0
  %v655 = vadd.f32 0.0, %v654
  %v656 = vpop.f32.mrb[0].mxu0
  %657 = vmatprep.mubr.f32.mxu0 %v139
  %658 = vmatmul.mubr.f32.gmra.mrb[0].mxu0 %v137
  %v659 = vpop.f32.mrb[0].mxu0
  %v660 = vadd.f32 0.0, %v659
  %v661 = vpop.f32.mrb[0].mxu0
  %662 = vmatprep.mubr.f32.mxu0 %v140
  %663 = vmatmul.mubr.f32.gmra.mrb[0].mxu0 %v138
  %v664 = vpop.f32.mrb[0].mxu0
  %v665 = vadd.f32 0.0, %v664
  %v666 = vpop.f32.mrb[0].mxu0
  %667 = vmatprep.mubr.f32.mxu0 %v141
  %668 = vmatmul.mubr.f32.gmra.mrb[0].mxu0 %v139
  %v669 = vpop.f32.mrb[0].mxu0
  %v670 = vadd.f32 0.0, %v669
  %v671 = vpop.f32.mrb[0].mxu0
  %672 = vmatprep.mubr.f32.mxu0 %v142
  %673 = vmatmul.mubr.f32.gmra.mrb[0].mxu0 %v140
  %v674 = vpop.f32.mrb[0].mxu0
  %v675 = vadd.f32 0.0, %v674
  %v676 = vpop.f32.mrb[0].mxu0
  %677 = vmatprep.mubr.f32.mxu0 %v143
  %678 = vmatmul.mubr.f32.gmra.mrb[0].mxu0 %v141
  %v679 = vpop.f32.mrb[0].mxu0
  %v680 = vadd.f32 0.0, %v679
  %v681 = vpop.f32.mrb[0].mxu0
  %682 = vmatprep.mubr.f32.mxu0 %v144
  %683 = vmatmul.mubr.f32.gmra.mrb[0].mxu0 %v142
  %v684 = vpop.f32.mrb[0].mxu0
  %v685 = vadd.f32 0.0, %v684
  %v686 = vpop.f32.mrb[0].mxu0
  %687 = vmatprep.mubr.f32.mxu0 %v145
  %688 = vmatmul.mubr.f32.gmra.mrb[0].mxu0 %v143
  %v689 = vpop.f32.mrb[0].mxu0
  %v690 = vadd.f32 0.0, %v689
  %v691 = vpop.f32.mrb[0].mxu0
  %692 = vmatprep.mubr.f32.mxu0 %v146
  %693 = vmatmul.mubr.f32.gmra.mrb[0].mxu0 %v144
  %v694 = vpop.f32.mrb[0].mxu0
  %v695 = vadd.f32 0.0, %v694
  %v696 = vpop.f32.mrb[0].mxu0
  %697 = vmatprep.mubr.f32.mxu0 %v147
  %698 = vmatmul.mubr.f32.gmra.mrb[0].mxu0 %v145
  %v699 = vpop.f32.mrb[0].mxu0
  %v700 = vadd.f32 0.0, %v699
  %v701 = vpop.f32.mrb[0].mxu0
  %702 = vmatprep.mubr.f32.mxu0 %v148
  %703 = vmatmul.mubr.f32.gmra.mrb[0].mxu0 %v146
  %v704 = vpop.f32.mrb[0].mxu0
  %v705 = vadd.f32 0.0, %v704
  %v706 = vpop.f32.mrb[0].mxu0
  %707 = vmatprep.mubr.f32.mxu0 %v149
  %708 = vmatmul.mubr.f32.gmra.mrb[0].mxu0 %v147
  %v709 = vpop.f32.mrb[0].mxu0
  %v710 = vadd.f32 0.0, %v709
  %v711 = vpop.f32.mrb[0].mxu0
  %712 = vmatprep.mubr.f32.mxu0 %v150
  %713 = vmatmul.mubr.f32.gmra.mrb[0].mxu0 %v148
  %v714 = vpop.f32.mrb[0].mxu0
  %v715 = vadd.f32 0.0, %v714
  %v716 = vpop.f32.mrb[0].mxu0
  %717 = vmatprep.mubr.f32.mxu0 %v151
  %718 = vmatmul.mubr.f32.gmra.mrb[0].mxu0 %v149
  %v719 = vpop.f32.mrb[0].mxu0
  %v720 = vadd.f32 0.0, %v719
  %v721 = vpop.f32.mrb[0].mxu0
  %722 = vmatprep.mubr.f32.mxu0 %v152
  %723 = vmatmul.mubr.f32.gmra.mrb[0].mxu0 %v150
  %v724 = vpop.f32.mrb[0].mxu0
  %v725 = vadd.f32 0.0, %v724
  %v726 = vpop.f32.mrb[0].mxu0
  %727 = vmatprep.mubr.f32.mxu0 %v153
  %728 = vmatmul.mubr.f32.gmra.mrb[0].mxu0 %v151
  %v729 = vpop.f32.mrb[0].mxu0
  %v730 = vadd.f32 0.0, %v729
  %v731 = vpop.f32.mrb[0].mxu0
  %732 = vmatprep.mubr.f32.mxu0 %v154
  %733 = vmatmul.mubr.f32.gmra.mrb[0].mxu0 %v152
  %v734 = vpop.f32.mrb[0].mxu0
  %v735 = vadd.f32 0.0, %v734
  %v736 = vpop.f32.mrb[0].mxu0
  %737 = vmatprep.mubr.f32.mxu0 %v155
  %738 = vmatmul.mubr.f32.gmra.mrb[0].mxu0 %v153
  %v739 = vpop.f32.mrb[0].mxu0
  %v740 = vadd.f32 0.0, %v739
  %v741 = vpop.f32.mrb[0].mxu0
  %742 = vmatprep.mubr.f32.mxu0 %v156
  %743 = vmatmul.mubr.f32.gmra.mrb[0].mxu0 %v154
  %v744 = vpop.f32.mrb[0].mxu0
  %v745 = vadd.f32 0.0, %v744
  %v746 = vpop.f32.mrb[0].mxu0
  %747 = vmatprep.mubr.f32.mxu0 %v157
  %748 = vmatmul.mubr.f32.gmra.mrb[0].mxu0 %v155
  %v749 = vpop.f32.mrb[0].mxu0
  %v750 = vadd.f32 0.0, %v749
  %v751 = vpop.f32.mrb[0].mxu0
  %752 = vmatprep.mubr.f32.mxu0 %v158
  %753 = vmatmul.mubr.f32.gmra.mrb[0].mxu0 %v156
  %v754 = vpop.f32.mrb[0].mxu0
  %v755 = vadd.f32 0.0, %v754
  %v756 = vpop.f32.mrb[0].mxu0
  %757 = vmatprep.mubr.f32.mxu0 %v159
  %758 = vmatmul.mubr.f32.gmra.mrb[0].mxu0 %v157
  %v759 = vpop.f32.mrb[0].mxu0
  %v760 = vadd.f32 0.0, %v759
  %v761 = vpop.f32.mrb[0].mxu0
  %762 = vdwg.mxu0
  %763 = vmatprep.subr.mxu0 0.0
  %764 = vmatpush1.msra.mxu0 %v266
  %765 = vmatprep.subr.mxu0 0.0
  %766 = vmatpush1.msra.mxu0 %v267
  %767 = vmatprep.subr.mxu0 0.0
  %768 = vmatpush1.msra.mxu0 %v268
  %769 = vmatprep.subr.mxu0 0.0
  %770 = vmatpush1.msra.mxu0 %v269
  %771 = vmatprep.subr.mxu0 0.0
  %772 = vmatpush1.msra.mxu0 %v270
  %773 = vmatprep.subr.mxu0 0.0
  %774 = vmatpush1.msra.mxu0 %v271
  %775 = vmatprep.subr.mxu0 0.0
  %776 = vmatpush1.msra.mxu0 %v272
  %777 = vmatprep.subr.mxu0 0.0
  %778 = vmatpush1.msra.mxu0 %v273
  %779 = vmatprep.subr.mxu0 0.0
  %780 = vmatpush1.msra.mxu0 %v274
  %781 = vmatprep.subr.mxu0 0.0
  %782 = vmatpush1.msra.mxu0 %v275
  %783 = vmatprep.subr.mxu0 0.0
  %784 = vmatpush1.msra.mxu0 %v276
  %785 = vmatprep.subr.mxu0 0.0
  %786 = vmatpush1.msra.mxu0 %v277
  %787 = vmatprep.subr.mxu0 0.0
  %788 = vmatpush1.msra.mxu0 %v278
  %789 = vmatprep.subr.mxu0 0.0
  %790 = vmatpush1.msra.mxu0 %v279
  %791 = vmatprep.subr.mxu0 0.0
  %792 = vmatpush1.msra.mxu0 %v280
  %793 = vmatprep.subr.mxu0 0.0
  %794 = vmatpush1.msra.mxu0 %v281
  %795 = vmatprep.subr.mxu0 0.0
  %796 = vmatpush1.msra.mxu0 %v282
  %797 = vmatprep.subr.mxu0 0.0
  %798 = vmatpush1.msra.mxu0 %v283
  %799 = vmatprep.subr.mxu0 0.0
  %800 = vmatpush1.msra.mxu0 %v284
  %801 = vmatprep.subr.mxu0 0.0
  %802 = vmatpush1.msra.mxu0 %v285
  %803 = vmatprep.subr.mxu0 0.0
  %804 = vmatpush1.msra.mxu0 %v286
  %805 = vmatprep.subr.mxu0 0.0
  %806 = vmatpush1.msra.mxu0 %v287
  %807 = vmatprep.subr.mxu0 0.0
  %808 = vmatpush1.msra.mxu0 %v288
  %809 = vmatprep.subr.mxu0 0.0
  %810 = vmatpush1.msra.mxu0 %v289
  %811 = vmatprep.subr.mxu0 0.0
  %812 = vmatpush1.msra.mxu0 %v290
  %813 = vmatprep.subr.mxu0 0.0
  %814 = vmatpush1.msra.mxu0 %v291
  %815 = vmatprep.subr.mxu0 0.0
  %816 = vmatpush1.msra.mxu0 %v292
  %817 = vmatprep.subr.mxu0 0.0
  %818 = vmatpush1.msra.mxu0 %v293
  %819 = vmatprep.subr.mxu0 0.0
  %820 = vmatpush1.msra.mxu0 %v294
  %821 = vmatprep.subr.mxu0 0.0
  %822 = vmatpush1.msra.mxu0 %v295
  %823 = vmatprep.subr.mxu0 0.0
  %824 = vmatpush1.msra.mxu0 %v296
  %825 = vmatprep.subr.mxu0 0.0
  %826 = vmatpush1.msra.mxu0 %v297
  %827 = vmatprep.mubr.f32.mxu0 %v53
  %828 = vmatmul.mubr.f32.gmra.mrb[0].mxu0 %v21
  %v829 = vpop.f32.mrb[0].mxu0
  %v830 = vadd.f32 %v445, %v829
  %v831 = vpop.f32.mrb[0].mxu0
  %832 = vmatprep.mubr.f32.mxu0 %v54
  %833 = vmatmul.mubr.f32.gmra.mrb[0].mxu0 %v22
  %v834 = vpop.f32.mrb[0].mxu0
  %v835 = vadd.f32 %v450, %v834
  %v836 = vpop.f32.mrb[0].mxu0
  %837 = vmatprep.mubr.f32.mxu0 %v55
  %838 = vmatmul.mubr.f32.gmra.mrb[0].mxu0 %v23
  %v839 = vpop.f32.mrb[0].mxu0
  %v840 = vadd.f32 %v455, %v839
  %v841 = vpop.f32.mrb[0].mxu0
  %842 = vmatprep.mubr.f32.mxu0 %v56
  %843 = vmatmul.mubr.f32.gmra.mrb[0].mxu0 %v24
  %v844 = vpop.f32.mrb[0].mxu0
  %v845 = vadd.f32 %v460, %v844
  %v846 = vpop.f32.mrb[0].mxu0
  %847 = vmatprep.mubr.f32.mxu0 %v57
  %848 = vmatmul.mubr.f32.gmra.mrb[0].mxu0 %v25
  %v849 = vpop.f32.mrb[0].mxu0
  %v850 = vadd.f32 %v465, %v849
  %v851 = vpop.f32.mrb[0].mxu0
  %852 = vmatprep.mubr.f32.mxu0 %v58
  %853 = vmatmul.mubr.f32.gmra.mrb[0].mxu0 %v26
  %v854 = vpop.f32.mrb[0].mxu0
  %v855 = vadd.f32 %v470, %v854
  %v856 = vpop.f32.mrb[0].mxu0
  %857 = vmatprep.mubr.f32.mxu0 %v59
  %858 = vmatmul.mubr.f32.gmra.mrb[0].mxu0 %v27
  %v859 = vpop.f32.mrb[0].mxu0
  %v860 = vadd.f32 %v475, %v859
  %v861 = vpop.f32.mrb[0].mxu0
  %862 = vmatprep.mubr.f32.mxu0 %v60
  %863 = vmatmul.mubr.f32.gmra.mrb[0].mxu0 %v28
  %v864 = vpop.f32.mrb[0].mxu0
  %v865 = vadd.f32 %v480, %v864
  %v866 = vpop.f32.mrb[0].mxu0
  %867 = vmatprep.mubr.f32.mxu0 %v61
  %868 = vmatmul.mubr.f32.gmra.mrb[0].mxu0 %v29
  %v869 = vpop.f32.mrb[0].mxu0
  %v870 = vadd.f32 %v485, %v869
  %v871 = vpop.f32.mrb[0].mxu0
  %872 = vmatprep.mubr.f32.mxu0 %v62
  %873 = vmatmul.mubr.f32.gmra.mrb[0].mxu0 %v30
  %v874 = vpop.f32.mrb[0].mxu0
  %v875 = vadd.f32 %v490, %v874
  %v876 = vpop.f32.mrb[0].mxu0
  %877 = vmatprep.mubr.f32.mxu0 %v63
  %878 = vmatmul.mubr.f32.gmra.mrb[0].mxu0 %v31
  %v879 = vpop.f32.mrb[0].mxu0
  %v880 = vadd.f32 %v495, %v879
  %v881 = vpop.f32.mrb[0].mxu0
  %882 = vmatprep.mubr.f32.mxu0 %v64
  %883 = vmatmul.mubr.f32.gmra.mrb[0].mxu0 %v32
  %v884 = vpop.f32.mrb[0].mxu0
  %v885 = vadd.f32 %v500, %v884
  %v886 = vpop.f32.mrb[0].mxu0
  %887 = vmatprep.mubr.f32.mxu0 %v65
  %888 = vmatmul.mubr.f32.gmra.mrb[0].mxu0 %v33
  %v889 = vpop.f32.mrb[0].mxu0
  %v890 = vadd.f32 %v505, %v889
  %v891 = vpop.f32.mrb[0].mxu0
  %892 = vmatprep.mubr.f32.mxu0 %v66
  %893 = vmatmul.mubr.f32.gmra.mrb[0].mxu0 %v34
  %v894 = vpop.f32.mrb[0].mxu0
  %v895 = vadd.f32 %v510, %v894
  %v896 = vpop.f32.mrb[0].mxu0
  %897 = vmatprep.mubr.f32.mxu0 %v67
  %898 = vmatmul.mubr.f32.gmra.mrb[0].mxu0 %v35
  %v899 = vpop.f32.mrb[0].mxu0
  %v900 = vadd.f32 %v515, %v899
  %v901 = vpop.f32.mrb[0].mxu0
  %902 = vmatprep.mubr.f32.mxu0 %v68
  %903 = vmatmul.mubr.f32.gmra.mrb[0].mxu0 %v36
  %v904 = vpop.f32.mrb[0].mxu0
  %v905 = vadd.f32 %v520, %v904
  %v906 = vpop.f32.mrb[0].mxu0
  %907 = vmatprep.mubr.f32.mxu0 %v69
  %908 = vmatmul.mubr.f32.gmra.mrb[0].mxu0 %v37
  %v909 = vpop.f32.mrb[0].mxu0
  %v910 = vadd.f32 %v525, %v909
  %v911 = vpop.f32.mrb[0].mxu0
  %912 = vmatprep.mubr.f32.mxu0 %v70
  %913 = vmatmul.mubr.f32.gmra.mrb[0].mxu0 %v38
  %v914 = vpop.f32.mrb[0].mxu0
  %v915 = vadd.f32 %v530, %v914
  %v916 = vpop.f32.mrb[0].mxu0
  %917 = vmatprep.mubr.f32.mxu0 %v71
  %918 = vmatmul.mubr.f32.gmra.mrb[0].mxu0 %v39
  %v919 = vpop.f32.mrb[0].mxu0
  %v920 = vadd.f32 %v535, %v919
  %v921 = vpop.f32.mrb[0].mxu0
  %922 = vmatprep.mubr.f32.mxu0 %v72
  %923 = vmatmul.mubr.f32.gmra.mrb[0].mxu0 %v40
  %v924 = vpop.f32.mrb[0].mxu0
  %v925 = vadd.f32 %v540, %v924
  %v926 = vpop.f32.mrb[0].mxu0
  %927 = vmatprep.mubr.f32.mxu0 %v73
  %928 = vmatmul.mubr.f32.gmra.mrb[0].mxu0 %v41
  %v929 = vpop.f32.mrb[0].mxu0
  %v930 = vadd.f32 %v545, %v929
  %v931 = vpop.f32.mrb[0].mxu0
  %932 = vmatprep.mubr.f32.mxu0 %v74
  %933 = vmatmul.mubr.f32.gmra.mrb[0].mxu0 %v42
  %v934 = vpop.f32.mrb[0].mxu0
  %v935 = vadd.f32 %v550, %v934
  %v936 = vpop.f32.mrb[0].mxu0
  %937 = vmatprep.mubr.f32.mxu0 %v75
  %938 = vmatmul.mubr.f32.gmra.mrb[0].mxu0 %v43
  %v939 = vpop.f32.mrb[0].mxu0
  %v940 = vadd.f32 %v555, %v939
  %v941 = vpop.f32.mrb[0].mxu0
  %942 = vmatprep.mubr.f32.mxu0 %v76
  %943 = vmatmul.mubr.f32.gmra.mrb[0].mxu0 %v44
  %v944 = vpop.f32.mrb[0].mxu0
  %v945 = vadd.f32 %v560, %v944
  %v946 = vpop.f32.mrb[0].mxu0
  %947 = vmatprep.mubr.f32.mxu0 %v77
  %948 = vmatmul.mubr.f32.gmra.mrb[0].mxu0 %v45
  %v949 = vpop.f32.mrb[0].mxu0
  %v950 = vadd.f32 %v565, %v949
  %v951 = vpop.f32.mrb[0].mxu0
  %952 = vmatprep.mubr.f32.mxu0 %v78
  %953 = vmatmul.mubr.f32.gmra.mrb[0].mxu0 %v46
  %v954 = vpop.f32.mrb[0].mxu0
  %v955 = vadd.f32 %v570, %v954
  %v956 = vpop.f32.mrb[0].mxu0
  %957 = vmatprep.mubr.f32.mxu0 %v79
  %958 = vmatmul.mubr.f32.gmra.mrb[0].mxu0 %v47
  %v959 = vpop.f32.mrb[0].mxu0
  %v960 = vadd.f32 %v575, %v959
  %v961 = vpop.f32.mrb[0].mxu0
  %962 = vmatprep.mubr.f32.mxu0 %v80
  %963 = vmatmul.mubr.f32.gmra.mrb[0].mxu0 %v48
  %v964 = vpop.f32.mrb[0].mxu0
  %v965 = vadd.f32 %v580, %v964
  %v966 = vpop.f32.mrb[0].mxu0
  %967 = vmatprep.mubr.f32.mxu0 %v81
  %968 = vmatmul.mubr.f32.gmra.mrb[0].mxu0 %v49
  %v969 = vpop.f32.mrb[0].mxu0
  %v970 = vadd.f32 %v585, %v969
  %v971 = vpop.f32.mrb[0].mxu0
  %972 = vmatprep.mubr.f32.mxu0 %v82
  %973 = vmatmul.mubr.f32.gmra.mrb[0].mxu0 %v50
  %v974 = vpop.f32.mrb[0].mxu0
  %v975 = vadd.f32 %v590, %v974
  %v976 = vpop.f32.mrb[0].mxu0
  %977 = vmatprep.mubr.f32.mxu0 %v83
  %978 = vmatmul.mubr.f32.gmra.mrb[0].mxu0 %v51
  %v979 = vpop.f32.mrb[0].mxu0
  %v980 = vadd.f32 %v595, %v979
  %v981 = vpop.f32.mrb[0].mxu0
  %982 = vmatprep.mubr.f32.mxu0 %v84
  %983 = vmatmul.mubr.f32.gmra.mrb[0].mxu0 %v52
  %v984 = vpop.f32.mrb[0].mxu0
  %v985 = vadd.f32 %v600, %v984
  %v986 = vpop.f32.mrb[0].mxu0
  %987 = vmatprep.mubr.f32.mxu0 %v162
  %988 = vmatmul.mubr.f32.gmra.mrb[0].mxu0 %v130
  %v989 = vpop.f32.mrb[0].mxu0
  %v990 = vadd.f32 %v605, %v989
  %v991 = vpop.f32.mrb[0].mxu0
  %992 = vmatprep.mubr.f32.mxu0 %v163
  %993 = vmatmul.mubr.f32.gmra.mrb[0].mxu0 %v131
  %v994 = vpop.f32.mrb[0].mxu0
  %v995 = vadd.f32 %v610, %v994
  %v996 = vpop.f32.mrb[0].mxu0
  %997 = vmatprep.mubr.f32.mxu0 %v164
  %998 = vmatmul.mubr.f32.gmra.mrb[0].mxu0 %v132
  %v999 = vpop.f32.mrb[0].mxu0
  %v1000 = vadd.f32 %v615, %v999
  %v1001 = vpop.f32.mrb[0].mxu0
  %1002 = vmatprep.mubr.f32.mxu0 %v165
  %1003 = vmatmul.mubr.f32.gmra.mrb[0].mxu0 %v133
  %v1004 = vpop.f32.mrb[0].mxu0
  %v1005 = vadd.f32 %v620, %v1004
  %v1006 = vpop.f32.mrb[0].mxu0
  %1007 = vmatprep.mubr.f32.mxu0 %v166
  %1008 = vmatmul.mubr.f32.gmra.mrb[0].mxu0 %v134
  %v1009 = vpop.f32.mrb[0].mxu0
  %v1010 = vadd.f32 %v625, %v1009
  %v1011 = vpop.f32.mrb[0].mxu0
  %1012 = vmatprep.mubr.f32.mxu0 %v167
  %1013 = vmatmul.mubr.f32.gmra.mrb[0].mxu0 %v135
  %v1014 = vpop.f32.mrb[0].mxu0
  %v1015 = vadd.f32 %v630, %v1014
  %v1016 = vpop.f32.mrb[0].mxu0
  %1017 = vmatprep.mubr.f32.mxu0 %v168
  %1018 = vmatmul.mubr.f32.gmra.mrb[0].mxu0 %v136
  %v1019 = vpop.f32.mrb[0].mxu0
  %v1020 = vadd.f32 %v635, %v1019
  %v1021 = vpop.f32.mrb[0].mxu0
  %1022 = vmatprep.mubr.f32.mxu0 %v169
  %1023 = vmatmul.mubr.f32.gmra.mrb[0].mxu0 %v137
  %v1024 = vpop.f32.mrb[0].mxu0
  %v1025 = vadd.f32 %v640, %v1024
  %v1026 = vpop.f32.mrb[0].mxu0
  %1027 = vmatprep.mubr.f32.mxu0 %v170
  %1028 = vmatmul.mubr.f32.gmra.mrb[0].mxu0 %v138
  %v1029 = vpop.f32.mrb[0].mxu0
  %v1030 = vadd.f32 %v645, %v1029
  %v1031 = vpop.f32.mrb[0].mxu0
  %1032 = vmatprep.mubr.f32.mxu0 %v171
  %1033 = vmatmul.mubr.f32.gmra.mrb[0].mxu0 %v139
  %v1034 = vpop.f32.mrb[0].mxu0
  %v1035 = vadd.f32 %v650, %v1034
  %v1036 = vpop.f32.mrb[0].mxu0
  %1037 = vmatprep.mubr.f32.mxu0 %v172
  %1038 = vmatmul.mubr.f32.gmra.mrb[0].mxu0 %v140
  %v1039 = vpop.f32.mrb[0].mxu0
  %v1040 = vadd.f32 %v655, %v1039
  %v1041 = vpop.f32.mrb[0].mxu0
  %1042 = vmatprep.mubr.f32.mxu0 %v173
  %1043 = vmatmul.mubr.f32.gmra.mrb[0].mxu0 %v141
  %v1044 = vpop.f32.mrb[0].mxu0
  %v1045 = vadd.f32 %v660, %v1044
  %v1046 = vpop.f32.mrb[0].mxu0
  %1047 = vmatprep.mubr.f32.mxu0 %v174
  %1048 = vmatmul.mubr.f32.gmra.mrb[0].mxu0 %v142
  %v1049 = vpop.f32.mrb[0].mxu0
  %v1050 = vadd.f32 %v665, %v1049
  %v1051 = vpop.f32.mrb[0].mxu0
  %1052 = vmatprep.mubr.f32.mxu0 %v175
  %1053 = vmatmul.mubr.f32.gmra.mrb[0].mxu0 %v143
  %v1054 = vpop.f32.mrb[0].mxu0
  %v1055 = vadd.f32 %v670, %v1054
  %v1056 = vpop.f32.mrb[0].mxu0
  %1057 = vmatprep.mubr.f32.mxu0 %v176
  %1058 = vmatmul.mubr.f32.gmra.mrb[0].mxu0 %v144
  %v1059 = vpop.f32.mrb[0].mxu0
  %v1060 = vadd.f32 %v675, %v1059
  %v1061 = vpop.f32.mrb[0].mxu0
  %1062 = vmatprep.mubr.f32.mxu0 %v177
  %1063 = vmatmul.mubr.f32.gmra.mrb[0].mxu0 %v145
  %v1064 = vpop.f32.mrb[0].mxu0
  %v1065 = vadd.f32 %v680, %v1064
  %v1066 = vpop.f32.mrb[0].mxu0
  %1067 = vmatprep.mubr.f32.mxu0 %v178
  %1068 = vmatmul.mubr.f32.gmra.mrb[0].mxu0 %v146
  %v1069 = vpop.f32.mrb[0].mxu0
  %v1070 = vadd.f32 %v685, %v1069
  %v1071 = vpop.f32.mrb[0].mxu0
  %1072 = vmatprep.mubr.f32.mxu0 %v179
  %1073 = vmatmul.mubr.f32.gmra.mrb[0].mxu0 %v147
  %v1074 = vpop.f32.mrb[0].mxu0
  %v1075 = vadd.f32 %v690, %v1074
  %v1076 = vpop.f32.mrb[0].mxu0
  %1077 = vmatprep.mubr.f32.mxu0 %v180
  %1078 = vmatmul.mubr.f32.gmra.mrb[0].mxu0 %v148
  %v1079 = vpop.f32.mrb[0].mxu0
  %v1080 = vadd.f32 %v695, %v1079
  %v1081 = vpop.f32.mrb[0].mxu0
  %1082 = vmatprep.mubr.f32.mxu0 %v181
  %1083 = vmatmul.mubr.f32.gmra.mrb[0].mxu0 %v149
  %v1084 = vpop.f32.mrb[0].mxu0
  %v1085 = vadd.f32 %v700, %v1084
  %v1086 = vpop.f32.mrb[0].mxu0
  %1087 = vmatprep.mubr.f32.mxu0 %v182
  %1088 = vmatmul.mubr.f32.gmra.mrb[0].mxu0 %v150
  %v1089 = vpop.f32.mrb[0].mxu0
  %v1090 = vadd.f32 %v705, %v1089
  %v1091 = vpop.f32.mrb[0].mxu0
  %1092 = vmatprep.mubr.f32.mxu0 %v183
  %1093 = vmatmul.mubr.f32.gmra.mrb[0].mxu0 %v151
  %v1094 = vpop.f32.mrb[0].mxu0
  %v1095 = vadd.f32 %v710, %v1094
  %v1096 = vpop.f32.mrb[0].mxu0
  %1097 = vmatprep.mubr.f32.mxu0 %v184
  %1098 = vmatmul.mubr.f32.gmra.mrb[0].mxu0 %v152
  %v1099 = vpop.f32.mrb[0].mxu0
  %v1100 = vadd.f32 %v715, %v1099
  %v1101 = vpop.f32.mrb[0].mxu0
  %1102 = vmatprep.mubr.f32.mxu0 %v185
  %1103 = vmatmul.mubr.f32.gmra.mrb[0].mxu0 %v153
  %v1104 = vpop.f32.mrb[0].mxu0
  %v1105 = vadd.f32 %v720, %v1104
  %v1106 = vpop.f32.mrb[0].mxu0
  %1107 = vmatprep.mubr.f32.mxu0 %v186
  %1108 = vmatmul.mubr.f32.gmra.mrb[0].mxu0 %v154
  %v1109 = vpop.f32.mrb[0].mxu0
  %v1110 = vadd.f32 %v725, %v1109
  %v1111 = vpop.f32.mrb[0].mxu0
  %1112 = vmatprep.mubr.f32.mxu0 %v187
  %1113 = vmatmul.mubr.f32.gmra.mrb[0].mxu0 %v155
  %v1114 = vpop.f32.mrb[0].mxu0
  %v1115 = vadd.f32 %v730, %v1114
  %v1116 = vpop.f32.mrb[0].mxu0
  %1117 = vmatprep.mubr.f32.mxu0 %v188
  %1118 = vmatmul.mubr.f32.gmra.mrb[0].mxu0 %v156
  %v1119 = vpop.f32.mrb[0].mxu0
  %v1120 = vadd.f32 %v735, %v1119
  %v1121 = vpop.f32.mrb[0].mxu0
  %1122 = vmatprep.mubr.f32.mxu0 %v189
  %1123 = vmatmul.mubr.f32.gmra.mrb[0].mxu0 %v157
  %v1124 = vpop.f32.mrb[0].mxu0
  %v1125 = vadd.f32 %v740, %v1124
  %v1126 = vpop.f32.mrb[0].mxu0
  %1127 = vmatprep.mubr.f32.mxu0 %v190
  %1128 = vmatmul.mubr.f32.gmra.mrb[0].mxu0 %v158
  %v1129 = vpop.f32.mrb[0].mxu0
  %v1130 = vadd.f32 %v745, %v1129
  %v1131 = vpop.f32.mrb[0].mxu0
  %1132 = vmatprep.mubr.f32.mxu0 %v191
  %1133 = vmatmul.mubr.f32.gmra.mrb[0].mxu0 %v159
  %v1134 = vpop.f32.mrb[0].mxu0
  %v1135 = vadd.f32 %v750, %v1134
  %v1136 = vpop.f32.mrb[0].mxu0
  %1137 = vmatprep.mubr.f32.mxu0 %v192
  %1138 = vmatmul.mubr.f32.gmra.mrb[0].mxu0 %v160
  %v1139 = vpop.f32.mrb[0].mxu0
  %v1140 = vadd.f32 %v755, %v1139
  %v1141 = vpop.f32.mrb[0].mxu0
  %1142 = vmatprep.mubr.f32.mxu0 %v193
  %1143 = vmatmul.mubr.f32.gmra.mrb[0].mxu0 %v161
  %v1144 = vpop.f32.mrb[0].mxu0
  %v1145 = vadd.f32 %v760, %v1144
  %v1146 = vpop.f32.mrb[0].mxu0
  %1147 = vdwg.mxu0
  %1148 = vmatprep.subr.mxu0 0.0
  %1149 = vmatpush1.msra.mxu0 %v298
  %1150 = vmatprep.subr.mxu0 0.0
  %1151 = vmatpush1.msra.mxu0 %v299
  %1152 = vmatprep.subr.mxu0 0.0
  %1153 = vmatpush1.msra.mxu0 %v300
  %1154 = vmatprep.subr.mxu0 0.0
  %1155 = vmatpush1.msra.mxu0 %v301
  %1156 = vmatprep.subr.mxu0 0.0
  %1157 = vmatpush1.msra.mxu0 %v302
  %1158 = vmatprep.subr.mxu0 0.0
  %1159 = vmatpush1.msra.mxu0 %v303
  %1160 = vmatprep.subr.mxu0 0.0
  %1161 = vmatpush1.msra.mxu0 %v304
  %1162 = vmatprep.subr.mxu0 0.0
  %1163 = vmatpush1.msra.mxu0 %v305
  %1164 = vmatprep.subr.mxu0 0.0
  %1165 = vmatpush1.msra.mxu0 %v306
  %1166 = vmatprep.subr.mxu0 0.0
  %1167 = vmatpush1.msra.mxu0 %v307
  %1168 = vmatprep.subr.mxu0 0.0
  %1169 = vmatpush1.msra.mxu0 %v308
  %1170 = vmatprep.subr.mxu0 0.0
  %1171 = vmatpush1.msra.mxu0 %v309
  %1172 = vmatprep.subr.mxu0 0.0
  %1173 = vmatpush1.msra.mxu0 %v310
  %1174 = vmatprep.subr.mxu0 0.0
  %1175 = vmatpush1.msra.mxu0 %v311
  %1176 = vmatprep.subr.mxu0 0.0
  %1177 = vmatpush1.msra.mxu0 %v312
  %1178 = vmatprep.subr.mxu0 0.0
  %1179 = vmatpush1.msra.mxu0 %v313
  %1180 = vmatprep.subr.mxu0 0.0
  %1181 = vmatpush1.msra.mxu0 %v314
  %1182 = vmatprep.subr.mxu0 0.0
  %1183 = vmatpush1.msra.mxu0 %v315
  %1184 = vmatprep.subr.mxu0 0.0
  %1185 = vmatpush1.msra.mxu0 %v316
  %1186 = vmatprep.subr.mxu0 0.0
  %1187 = vmatpush1.msra.mxu0 %v317
  %1188 = vmatprep.subr.mxu0 0.0
  %1189 = vmatpush1.msra.mxu0 %v318
  %1190 = vmatprep.subr.mxu0 0.0
  %1191 = vmatpush1.msra.mxu0 %v319
  %1192 = vmatprep.subr.mxu0 0.0
  %1193 = vmatpush1.msra.mxu0 %v320
  %1194 = vmatprep.subr.mxu0 0.0
  %1195 = vmatpush1.msra.mxu0 %v321
  %1196 = vmatprep.subr.mxu0 0.0
  %1197 = vmatpush1.msra.mxu0 %v322
  %1198 = vmatprep.subr.mxu0 0.0
  %1199 = vmatpush1.msra.mxu0 %v323
  %1200 = vmatprep.subr.mxu0 0.0
  %1201 = vmatpush1.msra.mxu0 %v324
  %1202 = vmatprep.subr.mxu0 0.0
  %1203 = vmatpush1.msra.mxu0 %v325
  %1204 = vmatprep.subr.mxu0 0.0
  %1205 = vmatpush1.msra.mxu0 %v326
  %1206 = vmatprep.subr.mxu0 0.0
  %1207 = vmatpush1.msra.mxu0 %v327
  %1208 = vmatprep.subr.mxu0 0.0
  %1209 = vmatpush1.msra.mxu0 %v328
  %1210 = vmatprep.subr.mxu0 0.0
  %1211 = vmatpush1.msra.mxu0 %v329
  %1212 = vmatprep.mubr.f32.mxu0 %v57
  %1213 = vmatmul.mubr.f32.gmra.mrb[0].mxu0 %v55
  %v1214 = vpop.f32.mrb[0].mxu0
  %v1215 = vadd.f32 %v830, %v1214
  %v1216 = vpop.f32.mrb[0].mxu0
  %1217 = vmatprep.mubr.f32.mxu0 %v58
  %1218 = vmatmul.mubr.f32.gmra.mrb[0].mxu0 %v56
  %v1219 = vpop.f32.mrb[0].mxu0
  %v1220 = vadd.f32 %v835, %v1219
  %v1221 = vpop.f32.mrb[0].mxu0
  %1222 = vmatprep.mubr.f32.mxu0 %v59
  %1223 = vmatmul.mubr.f32.gmra.mrb[0].mxu0 %v57
  %v1224 = vpop.f32.mrb[0].mxu0
  %v1225 = vadd.f32 %v840, %v1224
  %v1226 = vpop.f32.mrb[0].mxu0
  %1227 = vmatprep.mubr.f32.mxu0 %v60
  %1228 = vmatmul.mubr.f32.gmra.mrb[0].mxu0 %v58
  %v1229 = vpop.f32.mrb[0].mxu0
  %v1230 = vadd.f32 %v845, %v1229
  %v1231 = vpop.f32.mrb[0].mxu0
  %1232 = vmatprep.mubr.f32.mxu0 %v61
  %1233 = vmatmul.mubr.f32.gmra.mrb[0].mxu0 %v59
  %v1234 = vpop.f32.mrb[0].mxu0
  %v1235 = vadd.f32 %v850, %v1234
  %v1236 = vpop.f32.mrb[0].mxu0
  %1237 = vmatprep.mubr.f32.mxu0 %v62
  %1238 = vmatmul.mubr.f32.gmra.mrb[0].mxu0 %v60
  %v1239 = vpop.f32.mrb[0].mxu0
  %v1240 = vadd.f32 %v855, %v1239
  %v1241 = vpop.f32.mrb[0].mxu0
  %1242 = vmatprep.mubr.f32.mxu0 %v63
  %1243 = vmatmul.mubr.f32.gmra.mrb[0].mxu0 %v61
  %v1244 = vpop.f32.mrb[0].mxu0
  %v1245 = vadd.f32 %v860, %v1244
  %v1246 = vpop.f32.mrb[0].mxu0
  %1247 = vmatprep.mubr.f32.mxu0 %v64
  %1248 = vmatmul.mubr.f32.gmra.mrb[0].mxu0 %v62
  %v1249 = vpop.f32.mrb[0].mxu0
  %v1250 = vadd.f32 %v865, %v1249
  %v1251 = vpop.f32.mrb[0].mxu0
  %1252 = vmatprep.mubr.f32.mxu0 %v65
  %1253 = vmatmul.mubr.f32.gmra.mrb[0].mxu0 %v63
  %v1254 = vpop.f32.mrb[0].mxu0
  %v1255 = vadd.f32 %v870, %v1254
  %v1256 = vpop.f32.mrb[0].mxu0
  %1257 = vmatprep.mubr.f32.mxu0 %v66
  %1258 = vmatmul.mubr.f32.gmra.mrb[0].mxu0 %v64
  %v1259 = vpop.f32.mrb[0].mxu0
  %v1260 = vadd.f32 %v875, %v1259
  %v1261 = vpop.f32.mrb[0].mxu0
  %1262 = vmatprep.mubr.f32.mxu0 %v67
  %1263 = vmatmul.mubr.f32.gmra.mrb[0].mxu0 %v65
  %v1264 = vpop.f32.mrb[0].mxu0
  %v1265 = vadd.f32 %v880, %v1264
  %v1266 = vpop.f32.mrb[0].mxu0
  %1267 = vmatprep.mubr.f32.mxu0 %v68
  %1268 = vmatmul.mubr.f32.gmra.mrb[0].mxu0 %v66
  %v1269 = vpop.f32.mrb[0].mxu0
  %v1270 = vadd.f32 %v885, %v1269
  %v1271 = vpop.f32.mrb[0].mxu0
  %1272 = vmatprep.mubr.f32.mxu0 %v69
  %1273 = vmatmul.mubr.f32.gmra.mrb[0].mxu0 %v67
  %v1274 = vpop.f32.mrb[0].mxu0
  %v1275 = vadd.f32 %v890, %v1274
  %v1276 = vpop.f32.mrb[0].mxu0
  %1277 = vmatprep.mubr.f32.mxu0 %v70
  %1278 = vmatmul.mubr.f32.gmra.mrb[0].mxu0 %v68
  %v1279 = vpop.f32.mrb[0].mxu0
  %v1280 = vadd.f32 %v895, %v1279
  %v1281 = vpop.f32.mrb[0].mxu0
  %1282 = vmatprep.mubr.f32.mxu0 %v71
  %1283 = vmatmul.mubr.f32.gmra.mrb[0].mxu0 %v69
  %v1284 = vpop.f32.mrb[0].mxu0
  %v1285 = vadd.f32 %v900, %v1284
  %v1286 = vpop.f32.mrb[0].mxu0
  %1287 = vmatprep.mubr.f32.mxu0 %v72
  %1288 = vmatmul.mubr.f32.gmra.mrb[0].mxu0 %v70
  %v1289 = vpop.f32.mrb[0].mxu0
  %v1290 = vadd.f32 %v905, %v1289
  %v1291 = vpop.f32.mrb[0].mxu0
  %1292 = vmatprep.mubr.f32.mxu0 %v73
  %1293 = vmatmul.mubr.f32.gmra.mrb[0].mxu0 %v71
  %v1294 = vpop.f32.mrb[0].mxu0
  %v1295 = vadd.f32 %v910, %v1294
  %v1296 = vpop.f32.mrb[0].mxu0
  %1297 = vmatprep.mubr.f32.mxu0 %v74
  %1298 = vmatmul.mubr.f32.gmra.mrb[0].mxu0 %v72
  %v1299 = vpop.f32.mrb[0].mxu0
  %v1300 = vadd.f32 %v915, %v1299
  %v1301 = vpop.f32.mrb[0].mxu0
  %1302 = vmatprep.mubr.f32.mxu0 %v75
  %1303 = vmatmul.mubr.f32.gmra.mrb[0].mxu0 %v73
  %v1304 = vpop.f32.mrb[0].mxu0
  %v1305 = vadd.f32 %v920, %v1304
  %v1306 = vpop.f32.mrb[0].mxu0
  %1307 = vmatprep.mubr.f32.mxu0 %v76
  %1308 = vmatmul.mubr.f32.gmra.mrb[0].mxu0 %v74
  %v1309 = vpop.f32.mrb[0].mxu0
  %v1310 = vadd.f32 %v925, %v1309
  %v1311 = vpop.f32.mrb[0].mxu0
  %1312 = vmatprep.mubr.f32.mxu0 %v77
  %1313 = vmatmul.mubr.f32.gmra.mrb[0].mxu0 %v75
  %v1314 = vpop.f32.mrb[0].mxu0
  %v1315 = vadd.f32 %v930, %v1314
  %v1316 = vpop.f32.mrb[0].mxu0
  %1317 = vmatprep.mubr.f32.mxu0 %v78
  %1318 = vmatmul.mubr.f32.gmra.mrb[0].mxu0 %v76
  %v1319 = vpop.f32.mrb[0].mxu0
  %v1320 = vadd.f32 %v935, %v1319
  %v1321 = vpop.f32.mrb[0].mxu0
  %1322 = vmatprep.mubr.f32.mxu0 %v79
  %1323 = vmatmul.mubr.f32.gmra.mrb[0].mxu0 %v77
  %v1324 = vpop.f32.mrb[0].mxu0
  %v1325 = vadd.f32 %v940, %v1324
  %v1326 = vpop.f32.mrb[0].mxu0
  %1327 = vmatprep.mubr.f32.mxu0 %v80
  %1328 = vmatmul.mubr.f32.gmra.mrb[0].mxu0 %v78
  %v1329 = vpop.f32.mrb[0].mxu0
  %v1330 = vadd.f32 %v945, %v1329
  %v1331 = vpop.f32.mrb[0].mxu0
  %1332 = vmatprep.mubr.f32.mxu0 %v81
  %1333 = vmatmul.mubr.f32.gmra.mrb[0].mxu0 %v79
  %v1334 = vpop.f32.mrb[0].mxu0
  %v1335 = vadd.f32 %v950, %v1334
  %v1336 = vpop.f32.mrb[0].mxu0
  %1337 = vmatprep.mubr.f32.mxu0 %v82
  %1338 = vmatmul.mubr.f32.gmra.mrb[0].mxu0 %v80
  %v1339 = vpop.f32.mrb[0].mxu0
  %v1340 = vadd.f32 %v955, %v1339
  %v1341 = vpop.f32.mrb[0].mxu0
  %1342 = vmatprep.mubr.f32.mxu0 %v83
  %1343 = vmatmul.mubr.f32.gmra.mrb[0].mxu0 %v81
  %v1344 = vpop.f32.mrb[0].mxu0
  %v1345 = vadd.f32 %v960, %v1344
  %v1346 = vpop.f32.mrb[0].mxu0
  %1347 = vmatprep.mubr.f32.mxu0 %v84
  %1348 = vmatmul.mubr.f32.gmra.mrb[0].mxu0 %v82
  %v1349 = vpop.f32.mrb[0].mxu0
  %v1350 = vadd.f32 %v965, %v1349
  %v1351 = vpop.f32.mrb[0].mxu0
  %1352 = vmatprep.mubr.f32.mxu0 %v85
  %1353 = vmatmul.mubr.f32.gmra.mrb[0].mxu0 %v83
  %v1354 = vpop.f32.mrb[0].mxu0
  %v1355 = vadd.f32 %v970, %v1354
  %v1356 = vpop.f32.mrb[0].mxu0
  %1357 = vmatprep.mubr.f32.mxu0 %v86
  %1358 = vmatmul.mubr.f32.gmra.mrb[0].mxu0 %v84
  %v1359 = vpop.f32.mrb[0].mxu0
  %v1360 = vadd.f32 %v975, %v1359
  %v1361 = vpop.f32.mrb[0].mxu0
  %1362 = vmatprep.mubr.f32.mxu0 %v87
  %1363 = vmatmul.mubr.f32.gmra.mrb[0].mxu0 %v85
  %v1364 = vpop.f32.mrb[0].mxu0
  %v1365 = vadd.f32 %v980, %v1364
  %v1366 = vpop.f32.mrb[0].mxu0
  %1367 = vmatprep.mubr.f32.mxu0 %v88
  %1368 = vmatmul.mubr.f32.gmra.mrb[0].mxu0 %v86
  %v1369 = vpop.f32.mrb[0].mxu0
  %v1370 = vadd.f32 %v985, %v1369
  %v1371 = vpop.f32.mrb[0].mxu0
  %1372 = vmatprep.mubr.f32.mxu0 %v166
  %1373 = vmatmul.mubr.f32.gmra.mrb[0].mxu0 %v164
  %v1374 = vpop.f32.mrb[0].mxu0
  %v1375 = vadd.f32 %v990, %v1374
  %v1376 = vpop.f32.mrb[0].mxu0
  %1377 = vmatprep.mubr.f32.mxu0 %v167
  %1378 = vmatmul.mubr.f32.gmra.mrb[0].mxu0 %v165
  %v1379 = vpop.f32.mrb[0].mxu0
  %v1380 = vadd.f32 %v995, %v1379
  %v1381 = vpop.f32.mrb[0].mxu0
  %1382 = vmatprep.mubr.f32.mxu0 %v168
  %1383 = vmatmul.mubr.f32.gmra.mrb[0].mxu0 %v166
  %v1384 = vpop.f32.mrb[0].mxu0
  %v1385 = vadd.f32 %v1000, %v1384
  %v1386 = vpop.f32.mrb[0].mxu0
  %1387 = vmatprep.mubr.f32.mxu0 %v169
  %1388 = vmatmul.mubr.f32.gmra.mrb[0].mxu0 %v167
  %v1389 = vpop.f32.mrb[0].mxu0
  %v1390 = vadd.f32 %v1005, %v1389
  %v1391 = vpop.f32.mrb[0].mxu0
  %1392 = vmatprep.mubr.f32.mxu0 %v170
  %1393 = vmatmul.mubr.f32.gmra.mrb[0].mxu0 %v168
  %v1394 = vpop.f32.mrb[0].mxu0
  %v1395 = vadd.f32 %v1010, %v1394
  %v1396 = vpop.f32.mrb[0].mxu0
  %1397 = vmatprep.mubr.f32.mxu0 %v171
  %1398 = vmatmul.mubr.f32.gmra.mrb[0].mxu0 %v169
  %v1399 = vpop.f32.mrb[0].mxu0
  %v1400 = vadd.f32 %v1015, %v1399
  %v1401 = vpop.f32.mrb[0].mxu0
  %1402 = vmatprep.mubr.f32.mxu0 %v172
  %1403 = vmatmul.mubr.f32.gmra.mrb[0].mxu0 %v170
  %v1404 = vpop.f32.mrb[0].mxu0
  %v1405 = vadd.f32 %v1020, %v1404
  %v1406 = vpop.f32.mrb[0].mxu0
  %1407 = vmatprep.mubr.f32.mxu0 %v173
  %1408 = vmatmul.mubr.f32.gmra.mrb[0].mxu0 %v171
  %v1409 = vpop.f32.mrb[0].mxu0
  %v1410 = vadd.f32 %v1025, %v1409
  %v1411 = vpop.f32.mrb[0].mxu0
  %1412 = vmatprep.mubr.f32.mxu0 %v174
  %1413 = vmatmul.mubr.f32.gmra.mrb[0].mxu0 %v172
  %v1414 = vpop.f32.mrb[0].mxu0
  %v1415 = vadd.f32 %v1030, %v1414
  %v1416 = vpop.f32.mrb[0].mxu0
  %1417 = vmatprep.mubr.f32.mxu0 %v175
  %1418 = vmatmul.mubr.f32.gmra.mrb[0].mxu0 %v173
  %v1419 = vpop.f32.mrb[0].mxu0
  %v1420 = vadd.f32 %v1035, %v1419
  %v1421 = vpop.f32.mrb[0].mxu0
  %1422 = vmatprep.mubr.f32.mxu0 %v176
  %1423 = vmatmul.mubr.f32.gmra.mrb[0].mxu0 %v174
  %v1424 = vpop.f32.mrb[0].mxu0
  %v1425 = vadd.f32 %v1040, %v1424
  %v1426 = vpop.f32.mrb[0].mxu0
  %1427 = vmatprep.mubr.f32.mxu0 %v177
  %1428 = vmatmul.mubr.f32.gmra.mrb[0].mxu0 %v175
  %v1429 = vpop.f32.mrb[0].mxu0
  %v1430 = vadd.f32 %v1045, %v1429
  %v1431 = vpop.f32.mrb[0].mxu0
  %1432 = vmatprep.mubr.f32.mxu0 %v178
  %1433 = vmatmul.mubr.f32.gmra.mrb[0].mxu0 %v176
  %v1434 = vpop.f32.mrb[0].mxu0
  %v1435 = vadd.f32 %v1050, %v1434
  %v1436 = vpop.f32.mrb[0].mxu0
  %1437 = vmatprep.mubr.f32.mxu0 %v179
  %1438 = vmatmul.mubr.f32.gmra.mrb[0].mxu0 %v177
  %v1439 = vpop.f32.mrb[0].mxu0
  %v1440 = vadd.f32 %v1055, %v1439
  %v1441 = vpop.f32.mrb[0].mxu0
  %1442 = vmatprep.mubr.f32.mxu0 %v180
  %1443 = vmatmul.mubr.f32.gmra.mrb[0].mxu0 %v178
  %v1444 = vpop.f32.mrb[0].mxu0
  %v1445 = vadd.f32 %v1060, %v1444
  %v1446 = vpop.f32.mrb[0].mxu0
  %1447 = vmatprep.mubr.f32.mxu0 %v181
  %1448 = vmatmul.mubr.f32.gmra.mrb[0].mxu0 %v179
  %v1449 = vpop.f32.mrb[0].mxu0
  %v1450 = vadd.f32 %v1065, %v1449
  %v1451 = vpop.f32.mrb[0].mxu0
  %1452 = vmatprep.mubr.f32.mxu0 %v182
  %1453 = vmatmul.mubr.f32.gmra.mrb[0].mxu0 %v180
  %v1454 = vpop.f32.mrb[0].mxu0
  %v1455 = vadd.f32 %v1070, %v1454
  %v1456 = vpop.f32.mrb[0].mxu0
  %1457 = vmatprep.mubr.f32.mxu0 %v183
  %1458 = vmatmul.mubr.f32.gmra.mrb[0].mxu0 %v181
  %v1459 = vpop.f32.mrb[0].mxu0
  %v1460 = vadd.f32 %v1075, %v1459
  %v1461 = vpop.f32.mrb[0].mxu0
  %1462 = vmatprep.mubr.f32.mxu0 %v184
  %1463 = vmatmul.mubr.f32.gmra.mrb[0].mxu0 %v182
  %v1464 = vpop.f32.mrb[0].mxu0
  %v1465 = vadd.f32 %v1080, %v1464
  %v1466 = vpop.f32.mrb[0].mxu0
  %1467 = vmatprep.mubr.f32.mxu0 %v185
  %1468 = vmatmul.mubr.f32.gmra.mrb[0].mxu0 %v183
  %v1469 = vpop.f32.mrb[0].mxu0
  %v1470 = vadd.f32 %v1085, %v1469
  %v1471 = vpop.f32.mrb[0].mxu0
  %1472 = vmatprep.mubr.f32.mxu0 %v186
  %1473 = vmatmul.mubr.f32.gmra.mrb[0].mxu0 %v184
  %v1474 = vpop.f32.mrb[0].mxu0
  %v1475 = vadd.f32 %v1090, %v1474
  %v1476 = vpop.f32.mrb[0].mxu0
  %1477 = vmatprep.mubr.f32.mxu0 %v187
  %1478 = vmatmul.mubr.f32.gmra.mrb[0].mxu0 %v185
  %v1479 = vpop.f32.mrb[0].mxu0
  %v1480 = vadd.f32 %v1095, %v1479
  %v1481 = vpop.f32.mrb[0].mxu0
  %1482 = vmatprep.mubr.f32.mxu0 %v188
  %1483 = vmatmul.mubr.f32.gmra.mrb[0].mxu0 %v186
  %v1484 = vpop.f32.mrb[0].mxu0
  %v1485 = vadd.f32 %v1100, %v1484
  %v1486 = vpop.f32.mrb[0].mxu0
  %1487 = vmatprep.mubr.f32.mxu0 %v189
  %1488 = vmatmul.mubr.f32.gmra.mrb[0].mxu0 %v187
  %v1489 = vpop.f32.mrb[0].mxu0
  %v1490 = vadd.f32 %v1105, %v1489
  %v1491 = vpop.f32.mrb[0].mxu0
  %1492 = vmatprep.mubr.f32.mxu0 %v190
  %1493 = vmatmul.mubr.f32.gmra.mrb[0].mxu0 %v188
  %v1494 = vpop.f32.mrb[0].mxu0
  %v1495 = vadd.f32 %v1110, %v1494
  %v1496 = vpop.f32.mrb[0].mxu0
  %1497 = vmatprep.mubr.f32.mxu0 %v191
  %1498 = vmatmul.mubr.f32.gmra.mrb[0].mxu0 %v189
  %v1499 = vpop.f32.mrb[0].mxu0
  %v1500 = vadd.f32 %v1115, %v1499
  %v1501 = vpop.f32.mrb[0].mxu0
  %1502 = vmatprep.mubr.f32.mxu0 %v192
  %1503 = vmatmul.mubr.f32.gmra.mrb[0].mxu0 %v190
  %v1504 = vpop.f32.mrb[0].mxu0
  %v1505 = vadd.f32 %v1120, %v1504
  %v1506 = vpop.f32.mrb[0].mxu0
  %1507 = vmatprep.mubr.f32.mxu0 %v193
  %1508 = vmatmul.mubr.f32.gmra.mrb[0].mxu0 %v191
  %v1509 = vpop.f32.mrb[0].mxu0
  %v1510 = vadd.f32 %v1125, %v1509
  %v1511 = vpop.f32.mrb[0].mxu0
  %1512 = vmatprep.mubr.f32.mxu0 %v194
  %1513 = vmatmul.mubr.f32.gmra.mrb[0].mxu0 %v192
  %v1514 = vpop.f32.mrb[0].mxu0
  %v1515 = vadd.f32 %v1130, %v1514
  %v1516 = vpop.f32.mrb[0].mxu0
  %1517 = vmatprep.mubr.f32.mxu0 %v195
  %1518 = vmatmul.mubr.f32.gmra.mrb[0].mxu0 %v193
  %v1519 = vpop.f32.mrb[0].mxu0
  %v1520 = vadd.f32 %v1135, %v1519
  %v1521 = vpop.f32.mrb[0].mxu0
  %1522 = vmatprep.mubr.f32.mxu0 %v196
  %1523 = vmatmul.mubr.f32.gmra.mrb[0].mxu0 %v194
  %v1524 = vpop.f32.mrb[0].mxu0
  %v1525 = vadd.f32 %v1140, %v1524
  %v1526 = vpop.f32.mrb[0].mxu0
  %1527 = vmatprep.mubr.f32.mxu0 %v197
  %1528 = vmatmul.mubr.f32.gmra.mrb[0].mxu0 %v195
  %v1529 = vpop.f32.mrb[0].mxu0
  %v1530 = vadd.f32 %v1145, %v1529
  %v1531 = vpop.f32.mrb[0].mxu0
  %1532 = vdwg.mxu0
  %1533 = vmatprep.subr.mxu0 0.0
  %1534 = vmatpush1.msra.mxu0 %v330
  %1535 = vmatprep.subr.mxu0 0.0
  %1536 = vmatpush1.msra.mxu0 %v331
  %1537 = vmatprep.subr.mxu0 0.0
  %1538 = vmatpush1.msra.mxu0 %v332
  %1539 = vmatprep.subr.mxu0 0.0
  %1540 = vmatpush1.msra.mxu0 %v333
  %1541 = vmatprep.subr.mxu0 0.0
  %1542 = vmatpush1.msra.mxu0 %v334
  %1543 = vmatprep.subr.mxu0 0.0
  %1544 = vmatpush1.msra.mxu0 %v335
  %1545 = vmatprep.subr.mxu0 0.0
  %1546 = vmatpush1.msra.mxu0 %v336
  %1547 = vmatprep.subr.mxu0 0.0
  %1548 = vmatpush1.msra.mxu0 %v337
  %1549 = vmatprep.subr.mxu0 0.0
  %1550 = vmatpush1.msra.mxu0 %v338
  %1551 = vmatprep.subr.mxu0 0.0
  %1552 = vmatpush1.msra.mxu0 %v339
  %1553 = vmatprep.subr.mxu0 0.0
  %1554 = vmatpush1.msra.mxu0 %v340
  %1555 = vmatprep.subr.mxu0 0.0
  %1556 = vmatpush1.msra.mxu0 %v341
  %1557 = vmatprep.subr.mxu0 0.0
  %1558 = vmatpush1.msra.mxu0 %v342
  %1559 = vmatprep.subr.mxu0 0.0
  %1560 = vmatpush1.msra.mxu0 %v343
  %1561 = vmatprep.subr.mxu0 0.0
  %1562 = vmatpush1.msra.mxu0 %v344
  %1563 = vmatprep.subr.mxu0 0.0
  %1564 = vmatpush1.msra.mxu0 %v345
  %1565 = vmatprep.subr.mxu0 0.0
  %1566 = vmatpush1.msra.mxu0 %v346
  %1567 = vmatprep.subr.mxu0 0.0
  %1568 = vmatpush1.msra.mxu0 %v347
  %1569 = vmatprep.subr.mxu0 0.0
  %1570 = vmatpush1.msra.mxu0 %v348
  %1571 = vmatprep.subr.mxu0 0.0
  %1572 = vmatpush1.msra.mxu0 %v349
  %1573 = vmatprep.subr.mxu0 0.0
  %1574 = vmatpush1.msra.mxu0 %v350
  %1575 = vmatprep.subr.mxu0 0.0
  %1576 = vmatpush1.msra.mxu0 %v351
  %1577 = vmatprep.subr.mxu0 0.0
  %1578 = vmatpush1.msra.mxu0 %v352
  %1579 = vmatprep.subr.mxu0 0.0
  %1580 = vmatpush1.msra.mxu0 %v353
  %1581 = vmatprep.subr.mxu0 0.0
  %1582 = vmatpush1.msra.mxu0 %v354
  %1583 = vmatprep.subr.mxu0 0.0
  %1584 = vmatpush1.msra.mxu0 %v355
  %1585 = vmatprep.subr.mxu0 0.0
  %1586 = vmatpush1.msra.mxu0 %v356
  %1587 = vmatprep.subr.mxu0 0.0
  %1588 = vmatpush1.msra.mxu0 %v357
  %1589 = vmatprep.subr.mxu0 0.0
  %1590 = vmatpush1.msra.mxu0 %v358
  %1591 = vmatprep.subr.mxu0 0.0
  %1592 = vmatpush1.msra.mxu0 %v359
  %1593 = vmatprep.subr.mxu0 0.0
  %1594 = vmatpush1.msra.mxu0 %v360
  %1595 = vmatprep.subr.mxu0 0.0
  %1596 = vmatpush1.msra.mxu0 %v361
  %1597 = vmatprep.mubr.f32.mxu0 %v91
  %1598 = vmatmul.mubr.f32.gmra.mrb[0].mxu0 %v89
  %v1599 = vpop.f32.mrb[0].mxu0
  %v1600 = vadd.f32 %v1215, %v1599
  %v1601 = vpop.f32.mrb[0].mxu0
  %1602 = vmatprep.mubr.f32.mxu0 %v92
  %1603 = vmatmul.mubr.f32.gmra.mrb[0].mxu0 %v90
  %v1604 = vpop.f32.mrb[0].mxu0
  %v1605 = vadd.f32 %v1220, %v1604
  %v1606 = vpop.f32.mrb[0].mxu0
  %1607 = vmatprep.mubr.f32.mxu0 %v93
  %1608 = vmatmul.mubr.f32.gmra.mrb[0].mxu0 %v91
  %v1609 = vpop.f32.mrb[0].mxu0
  %v1610 = vadd.f32 %v1225, %v1609
  %v1611 = vpop.f32.mrb[0].mxu0
  %1612 = vmatprep.mubr.f32.mxu0 %v94
  %1613 = vmatmul.mubr.f32.gmra.mrb[0].mxu0 %v92
  %v1614 = vpop.f32.mrb[0].mxu0
  %v1615 = vadd.f32 %v1230, %v1614
  %v1616 = vpop.f32.mrb[0].mxu0
  %1617 = vmatprep.mubr.f32.mxu0 %v95
  %1618 = vmatmul.mubr.f32.gmra.mrb[0].mxu0 %v93
  %v1619 = vpop.f32.mrb[0].mxu0
  %v1620 = vadd.f32 %v1235, %v1619
  %v1621 = vpop.f32.mrb[0].mxu0
  %1622 = vmatprep.mubr.f32.mxu0 %v96
  %1623 = vmatmul.mubr.f32.gmra.mrb[0].mxu0 %v94
  %v1624 = vpop.f32.mrb[0].mxu0
  %v1625 = vadd.f32 %v1240, %v1624
  %v1626 = vpop.f32.mrb[0].mxu0
  %1627 = vmatprep.mubr.f32.mxu0 %v97
  %1628 = vmatmul.mubr.f32.gmra.mrb[0].mxu0 %v95
  %v1629 = vpop.f32.mrb[0].mxu0
  %v1630 = vadd.f32 %v1245, %v1629
  %v1631 = vpop.f32.mrb[0].mxu0
  %1632 = vmatprep.mubr.f32.mxu0 %v98
  %1633 = vmatmul.mubr.f32.gmra.mrb[0].mxu0 %v96
  %v1634 = vpop.f32.mrb[0].mxu0
  %v1635 = vadd.f32 %v1250, %v1634
  %v1636 = vpop.f32.mrb[0].mxu0
  %1637 = vmatprep.mubr.f32.mxu0 %v99
  %1638 = vmatmul.mubr.f32.gmra.mrb[0].mxu0 %v97
  %v1639 = vpop.f32.mrb[0].mxu0
  %v1640 = vadd.f32 %v1255, %v1639
  %v1641 = vpop.f32.mrb[0].mxu0
  %1642 = vmatprep.mubr.f32.mxu0 %v100
  %1643 = vmatmul.mubr.f32.gmra.mrb[0].mxu0 %v98
  %v1644 = vpop.f32.mrb[0].mxu0
  %v1645 = vadd.f32 %v1260, %v1644
  %v1646 = vpop.f32.mrb[0].mxu0
  %1647 = vmatprep.mubr.f32.mxu0 %v101
  %1648 = vmatmul.mubr.f32.gmra.mrb[0].mxu0 %v99
  %v1649 = vpop.f32.mrb[0].mxu0
  %v1650 = vadd.f32 %v1265, %v1649
  %v1651 = vpop.f32.mrb[0].mxu0
  %1652 = vmatprep.mubr.f32.mxu0 %v102
  %1653 = vmatmul.mubr.f32.gmra.mrb[0].mxu0 %v100
  %v1654 = vpop.f32.mrb[0].mxu0
  %v1655 = vadd.f32 %v1270, %v1654
  %v1656 = vpop.f32.mrb[0].mxu0
  %1657 = vmatprep.mubr.f32.mxu0 %v103
  %1658 = vmatmul.mubr.f32.gmra.mrb[0].mxu0 %v101
  %v1659 = vpop.f32.mrb[0].mxu0
  %v1660 = vadd.f32 %v1275, %v1659
  %v1661 = vpop.f32.mrb[0].mxu0
  %1662 = vmatprep.mubr.f32.mxu0 %v104
  %1663 = vmatmul.mubr.f32.gmra.mrb[0].mxu0 %v102
  %v1664 = vpop.f32.mrb[0].mxu0
  %v1665 = vadd.f32 %v1280, %v1664
  %v1666 = vpop.f32.mrb[0].mxu0
  %1667 = vmatprep.mubr.f32.mxu0 %v105
  %1668 = vmatmul.mubr.f32.gmra.mrb[0].mxu0 %v103
  %v1669 = vpop.f32.mrb[0].mxu0
  %v1670 = vadd.f32 %v1285, %v1669
  %v1671 = vpop.f32.mrb[0].mxu0
  %1672 = vmatprep.mubr.f32.mxu0 %v106
  %1673 = vmatmul.mubr.f32.gmra.mrb[0].mxu0 %v104
  %v1674 = vpop.f32.mrb[0].mxu0
  %v1675 = vadd.f32 %v1290, %v1674
  %v1676 = vpop.f32.mrb[0].mxu0
  %1677 = vmatprep.mubr.f32.mxu0 %v107
  %1678 = vmatmul.mubr.f32.gmra.mrb[0].mxu0 %v105
  %v1679 = vpop.f32.mrb[0].mxu0
  %v1680 = vadd.f32 %v1295, %v1679
  %v1681 = vpop.f32.mrb[0].mxu0
  %1682 = vmatprep.mubr.f32.mxu0 %v108
  %1683 = vmatmul.mubr.f32.gmra.mrb[0].mxu0 %v106
  %v1684 = vpop.f32.mrb[0].mxu0
  %v1685 = vadd.f32 %v1300, %v1684
  %v1686 = vpop.f32.mrb[0].mxu0
  %1687 = vmatprep.mubr.f32.mxu0 %v109
  %1688 = vmatmul.mubr.f32.gmra.mrb[0].mxu0 %v107
  %v1689 = vpop.f32.mrb[0].mxu0
  %v1690 = vadd.f32 %v1305, %v1689
  %v1691 = vpop.f32.mrb[0].mxu0
  %1692 = vmatprep.mubr.f32.mxu0 %v110
  %1693 = vmatmul.mubr.f32.gmra.mrb[0].mxu0 %v108
  %v1694 = vpop.f32.mrb[0].mxu0
  %v1695 = vadd.f32 %v1310, %v1694
  %v1696 = vpop.f32.mrb[0].mxu0
  %1697 = vmatprep.mubr.f32.mxu0 %v111
  %1698 = vmatmul.mubr.f32.gmra.mrb[0].mxu0 %v109
  %v1699 = vpop.f32.mrb[0].mxu0
  %v1700 = vadd.f32 %v1315, %v1699
  %v1701 = vpop.f32.mrb[0].mxu0
  %1702 = vmatprep.mubr.f32.mxu0 %v112
  %1703 = vmatmul.mubr.f32.gmra.mrb[0].mxu0 %v110
  %v1704 = vpop.f32.mrb[0].mxu0
  %v1705 = vadd.f32 %v1320, %v1704
  %v1706 = vpop.f32.mrb[0].mxu0
  %1707 = vmatprep.mubr.f32.mxu0 %v113
  %1708 = vmatmul.mubr.f32.gmra.mrb[0].mxu0 %v111
  %v1709 = vpop.f32.mrb[0].mxu0
  %v1710 = vadd.f32 %v1325, %v1709
  %v1711 = vpop.f32.mrb[0].mxu0
  %1712 = vmatprep.mubr.f32.mxu0 %v114
  %1713 = vmatmul.mubr.f32.gmra.mrb[0].mxu0 %v112
  %v1714 = vpop.f32.mrb[0].mxu0
  %v1715 = vadd.f32 %v1330, %v1714
  %v1716 = vpop.f32.mrb[0].mxu0
  %1717 = vmatprep.mubr.f32.mxu0 %v115
  %1718 = vmatmul.mubr.f32.gmra.mrb[0].mxu0 %v113
  %v1719 = vpop.f32.mrb[0].mxu0
  %v1720 = vadd.f32 %v1335, %v1719
  %v1721 = vpop.f32.mrb[0].mxu0
  %1722 = vmatprep.mubr.f32.mxu0 %v116
  %1723 = vmatmul.mubr.f32.gmra.mrb[0].mxu0 %v114
  %v1724 = vpop.f32.mrb[0].mxu0
  %v1725 = vadd.f32 %v1340, %v1724
  %v1726 = vpop.f32.mrb[0].mxu0
  %1727 = vmatprep.mubr.f32.mxu0 %v117
  %1728 = vmatmul.mubr.f32.gmra.mrb[0].mxu0 %v115
  %v1729 = vpop.f32.mrb[0].mxu0
  %v1730 = vadd.f32 %v1345, %v1729
  %v1731 = vpop.f32.mrb[0].mxu0
  %1732 = vmatprep.mubr.f32.mxu0 %v118
  %1733 = vmatmul.mubr.f32.gmra.mrb[0].mxu0 %v116
  %v1734 = vpop.f32.mrb[0].mxu0
  %v1735 = vadd.f32 %v1350, %v1734
  %v1736 = vpop.f32.mrb[0].mxu0
  %1737 = vmatprep.mubr.f32.mxu0 %v119
  %1738 = vmatmul.mubr.f32.gmra.mrb[0].mxu0 %v117
  %v1739 = vpop.f32.mrb[0].mxu0
  %v1740 = vadd.f32 %v1355, %v1739
  %v1741 = vpop.f32.mrb[0].mxu0
  %1742 = vmatprep.mubr.f32.mxu0 %v120
  %1743 = vmatmul.mubr.f32.gmra.mrb[0].mxu0 %v118
  %v1744 = vpop.f32.mrb[0].mxu0
  %v1745 = vadd.f32 %v1360, %v1744
  %v1746 = vpop.f32.mrb[0].mxu0
  %1747 = vmatprep.mubr.f32.mxu0 %v121
  %1748 = vmatmul.mubr.f32.gmra.mrb[0].mxu0 %v119
  %v1749 = vpop.f32.mrb[0].mxu0
  %v1750 = vadd.f32 %v1365, %v1749
  %v1751 = vpop.f32.mrb[0].mxu0
  %1752 = vmatprep.mubr.f32.mxu0 %v122
  %1753 = vmatmul.mubr.f32.gmra.mrb[0].mxu0 %v120
  %v1754 = vpop.f32.mrb[0].mxu0
  %v1755 = vadd.f32 %v1370, %v1754
  %v1756 = vpop.f32.mrb[0].mxu0
  %1757 = vmatprep.mubr.f32.mxu0 %v200
  %1758 = vmatmul.mubr.f32.gmra.mrb[0].mxu0 %v198
  %v1759 = vpop.f32.mrb[0].mxu0
  %v1760 = vadd.f32 %v1375, %v1759
  %v1761 = vpop.f32.mrb[0].mxu0
  %1762 = vmatprep.mubr.f32.mxu0 %v201
  %1763 = vmatmul.mubr.f32.gmra.mrb[0].mxu0 %v199
  %v1764 = vpop.f32.mrb[0].mxu0
  %v1765 = vadd.f32 %v1380, %v1764
  %v1766 = vpop.f32.mrb[0].mxu0
  %1767 = vmatprep.mubr.f32.mxu0 %v202
  %1768 = vmatmul.mubr.f32.gmra.mrb[0].mxu0 %v200
  %v1769 = vpop.f32.mrb[0].mxu0
  %v1770 = vadd.f32 %v1385, %v1769
  %v1771 = vpop.f32.mrb[0].mxu0
  %1772 = vmatprep.mubr.f32.mxu0 %v203
  %1773 = vmatmul.mubr.f32.gmra.mrb[0].mxu0 %v201
  %v1774 = vpop.f32.mrb[0].mxu0
  %v1775 = vadd.f32 %v1390, %v1774
  %v1776 = vpop.f32.mrb[0].mxu0
  %1777 = vmatprep.mubr.f32.mxu0 %v204
  %1778 = vmatmul.mubr.f32.gmra.mrb[0].mxu0 %v202
  %v1779 = vpop.f32.mrb[0].mxu0
  %v1780 = vadd.f32 %v1395, %v1779
  %v1781 = vpop.f32.mrb[0].mxu0
  %1782 = vmatprep.mubr.f32.mxu0 %v205
  %1783 = vmatmul.mubr.f32.gmra.mrb[0].mxu0 %v203
  %v1784 = vpop.f32.mrb[0].mxu0
  %v1785 = vadd.f32 %v1400, %v1784
  %v1786 = vpop.f32.mrb[0].mxu0
  %1787 = vmatprep.mubr.f32.mxu0 %v206
  %1788 = vmatmul.mubr.f32.gmra.mrb[0].mxu0 %v204
  %v1789 = vpop.f32.mrb[0].mxu0
  %v1790 = vadd.f32 %v1405, %v1789
  %v1791 = vpop.f32.mrb[0].mxu0
  %1792 = vmatprep.mubr.f32.mxu0 %v207
  %1793 = vmatmul.mubr.f32.gmra.mrb[0].mxu0 %v205
  %v1794 = vpop.f32.mrb[0].mxu0
  %v1795 = vadd.f32 %v1410, %v1794
  %v1796 = vpop.f32.mrb[0].mxu0
  %1797 = vmatprep.mubr.f32.mxu0 %v208
  %1798 = vmatmul.mubr.f32.gmra.mrb[0].mxu0 %v206
  %v1799 = vpop.f32.mrb[0].mxu0
  %v1800 = vadd.f32 %v1415, %v1799
  %v1801 = vpop.f32.mrb[0].mxu0
  %1802 = vmatprep.mubr.f32.mxu0 %v209
  %1803 = vmatmul.mubr.f32.gmra.mrb[0].mxu0 %v207
  %v1804 = vpop.f32.mrb[0].mxu0
  %v1805 = vadd.f32 %v1420, %v1804
  %v1806 = vpop.f32.mrb[0].mxu0
  %1807 = vmatprep.mubr.f32.mxu0 %v210
  %1808 = vmatmul.mubr.f32.gmra.mrb[0].mxu0 %v208
  %v1809 = vpop.f32.mrb[0].mxu0
  %v1810 = vadd.f32 %v1425, %v1809
  %v1811 = vpop.f32.mrb[0].mxu0
  %1812 = vmatprep.mubr.f32.mxu0 %v211
  %1813 = vmatmul.mubr.f32.gmra.mrb[0].mxu0 %v209
  %v1814 = vpop.f32.mrb[0].mxu0
  %v1815 = vadd.f32 %v1430, %v1814
  %v1816 = vpop.f32.mrb[0].mxu0
  %1817 = vmatprep.mubr.f32.mxu0 %v212
  %1818 = vmatmul.mubr.f32.gmra.mrb[0].mxu0 %v210
  %v1819 = vpop.f32.mrb[0].mxu0
  %v1820 = vadd.f32 %v1435, %v1819
  %v1821 = vpop.f32.mrb[0].mxu0
  %1822 = vmatprep.mubr.f32.mxu0 %v213
  %1823 = vmatmul.mubr.f32.gmra.mrb[0].mxu0 %v211
  %v1824 = vpop.f32.mrb[0].mxu0
  %v1825 = vadd.f32 %v1440, %v1824
  %v1826 = vpop.f32.mrb[0].mxu0
  %1827 = vmatprep.mubr.f32.mxu0 %v214
  %1828 = vmatmul.mubr.f32.gmra.mrb[0].mxu0 %v212
  %v1829 = vpop.f32.mrb[0].mxu0
  %v1830 = vadd.f32 %v1445, %v1829
  %v1831 = vpop.f32.mrb[0].mxu0
  %1832 = vmatprep.mubr.f32.mxu0 %v215
  %1833 = vmatmul.mubr.f32.gmra.mrb[0].mxu0 %v213
  %v1834 = vpop.f32.mrb[0].mxu0
  %v1835 = vadd.f32 %v1450, %v1834
  %v1836 = vpop.f32.mrb[0].mxu0
  %1837 = vmatprep.mubr.f32.mxu0 %v216
  %1838 = vmatmul.mubr.f32.gmra.mrb[0].mxu0 %v214
  %v1839 = vpop.f32.mrb[0].mxu0
  %v1840 = vadd.f32 %v1455, %v1839
  %v1841 = vpop.f32.mrb[0].mxu0
  %1842 = vmatprep.mubr.f32.mxu0 %v217
  %1843 = vmatmul.mubr.f32.gmra.mrb[0].mxu0 %v215
  %v1844 = vpop.f32.mrb[0].mxu0
  %v1845 = vadd.f32 %v1460, %v1844
  %v1846 = vpop.f32.mrb[0].mxu0
  %1847 = vmatprep.mubr.f32.mxu0 %v218
  %1848 = vmatmul.mubr.f32.gmra.mrb[0].mxu0 %v216
  %v1849 = vpop.f32.mrb[0].mxu0
  %v1850 = vadd.f32 %v1465, %v1849
  %v1851 = vpop.f32.mrb[0].mxu0
  %1852 = vmatprep.mubr.f32.mxu0 %v219
  %1853 = vmatmul.mubr.f32.gmra.mrb[0].mxu0 %v217
  %v1854 = vpop.f32.mrb[0].mxu0
  %v1855 = vadd.f32 %v1470, %v1854
  %v1856 = vpop.f32.mrb[0].mxu0
  %1857 = vmatprep.mubr.f32.mxu0 %v220
  %1858 = vmatmul.mubr.f32.gmra.mrb[0].mxu0 %v218
  %v1859 = vpop.f32.mrb[0].mxu0
  %v1860 = vadd.f32 %v1475, %v1859
  %v1861 = vpop.f32.mrb[0].mxu0
  %1862 = vmatprep.mubr.f32.mxu0 %v221
  %1863 = vmatmul.mubr.f32.gmra.mrb[0].mxu0 %v219
  %v1864 = vpop.f32.mrb[0].mxu0
  %v1865 = vadd.f32 %v1480, %v1864
  %v1866 = vpop.f32.mrb[0].mxu0
  %1867 = vmatprep.mubr.f32.mxu0 %v222
  %1868 = vmatmul.mubr.f32.gmra.mrb[0].mxu0 %v220
  %v1869 = vpop.f32.mrb[0].mxu0
  %v1870 = vadd.f32 %v1485, %v1869
  %v1871 = vpop.f32.mrb[0].mxu0
  %1872 = vmatprep.mubr.f32.mxu0 %v223
  %1873 = vmatmul.mubr.f32.gmra.mrb[0].mxu0 %v221
  %v1874 = vpop.f32.mrb[0].mxu0
  %v1875 = vadd.f32 %v1490, %v1874
  %v1876 = vpop.f32.mrb[0].mxu0
  %1877 = vmatprep.mubr.f32.mxu0 %v224
  %1878 = vmatmul.mubr.f32.gmra.mrb[0].mxu0 %v222
  %v1879 = vpop.f32.mrb[0].mxu0
  %v1880 = vadd.f32 %v1495, %v1879
  %v1881 = vpop.f32.mrb[0].mxu0
  %1882 = vmatprep.mubr.f32.mxu0 %v225
  %1883 = vmatmul.mubr.f32.gmra.mrb[0].mxu0 %v223
  %v1884 = vpop.f32.mrb[0].mxu0
  %v1885 = vadd.f32 %v1500, %v1884
  %v1886 = vpop.f32.mrb[0].mxu0
  %1887 = vmatprep.mubr.f32.mxu0 %v226
  %1888 = vmatmul.mubr.f32.gmra.mrb[0].mxu0 %v224
  %v1889 = vpop.f32.mrb[0].mxu0
  %v1890 = vadd.f32 %v1505, %v1889
  %v1891 = vpop.f32.mrb[0].mxu0
  %1892 = vmatprep.mubr.f32.mxu0 %v227
  %1893 = vmatmul.mubr.f32.gmra.mrb[0].mxu0 %v225
  %v1894 = vpop.f32.mrb[0].mxu0
  %v1895 = vadd.f32 %v1510, %v1894
  %v1896 = vpop.f32.mrb[0].mxu0
  %1897 = vmatprep.mubr.f32.mxu0 %v228
  %1898 = vmatmul.mubr.f32.gmra.mrb[0].mxu0 %v226
  %v1899 = vpop.f32.mrb[0].mxu0
  %v1900 = vadd.f32 %v1515, %v1899
  %v1901 = vpop.f32.mrb[0].mxu0
  %1902 = vmatprep.mubr.f32.mxu0 %v229
  %1903 = vmatmul.mubr.f32.gmra.mrb[0].mxu0 %v227
  %v1904 = vpop.f32.mrb[0].mxu0
  %v1905 = vadd.f32 %v1520, %v1904
  %v1906 = vpop.f32.mrb[0].mxu0
  %1907 = vmatprep.mubr.f32.mxu0 %v230
  %1908 = vmatmul.mubr.f32.gmra.mrb[0].mxu0 %v228
  %v1909 = vpop.f32.mrb[0].mxu0
  %v1910 = vadd.f32 %v1525, %v1909
  %v1911 = vpop.f32.mrb[0].mxu0
  %1912 = vmatprep.mubr.f32.mxu0 %v231
  %1913 = vmatmul.mubr.f32.gmra.mrb[0].mxu0 %v229
  %v1914 = vpop.f32.mrb[0].mxu0
  %v1915 = vadd.f32 %v1530, %v1914
  %v1916 = vpop.f32.mrb[0].mxu0
  %1917 = vdwg.mxu0
  %1918 = vmatprep.subr.mxu0 0.0
  %1919 = vmatpush1.msra.mxu0 %v362
  %1920 = vmatprep.subr.mxu0 0.0
  %1921 = vmatpush1.msra.mxu0 %v363
  %1922 = vmatprep.subr.mxu0 0.0
  %1923 = vmatpush1.msra.mxu0 %v364
  %1924 = vmatprep.subr.mxu0 0.0
  %1925 = vmatpush1.msra.mxu0 %v365
  %1926 = vmatprep.subr.mxu0 0.0
  %1927 = vmatpush1.msra.mxu0 %v366
  %1928 = vmatprep.subr.mxu0 0.0
  %1929 = vmatpush1.msra.mxu0 %v367
  %1930 = vmatprep.subr.mxu0 0.0
  %1931 = vmatpush1.msra.mxu0 %v368
  %1932 = vmatprep.subr.mxu0 0.0
  %1933 = vmatpush1.msra.mxu0 %v369
  %1934 = vmatprep.subr.mxu0 0.0
  %1935 = vmatpush1.msra.mxu0 %v370
  %1936 = vmatprep.subr.mxu0 0.0
  %1937 = vmatpush1.msra.mxu0 %v371
  %1938 = vmatprep.subr.mxu0 0.0
  %1939 = vmatpush1.msra.mxu0 %v372
  %1940 = vmatprep.subr.mxu0 0.0
  %1941 = vmatpush1.msra.mxu0 %v373
  %1942 = vmatprep.subr.mxu0 0.0
  %1943 = vmatpush1.msra.mxu0 %v374
  %1944 = vmatprep.subr.mxu0 0.0
  %1945 = vmatpush1.msra.mxu0 %v375
  %1946 = vmatprep.subr.mxu0 0.0
  %1947 = vmatpush1.msra.mxu0 %v376
  %1948 = vmatprep.subr.mxu0 0.0
  %1949 = vmatpush1.msra.mxu0 %v377
  %1950 = vmatprep.subr.mxu0 0.0
  %1951 = vmatpush1.msra.mxu0 0.0
  %1952 = vmatprep.subr.mxu0 0.0
  %1953 = vmatpush1.msra.mxu0 0.0
  %1954 = vmatprep.subr.mxu0 0.0
  %1955 = vmatpush1.msra.mxu0 0.0
  %1956 = vmatprep.subr.mxu0 0.0
  %1957 = vmatpush1.msra.mxu0 0.0
  %1958 = vmatprep.subr.mxu0 0.0
  %1959 = vmatpush1.msra.mxu0 0.0
  %1960 = vmatprep.subr.mxu0 0.0
  %1961 = vmatpush1.msra.mxu0 0.0
  %1962 = vmatprep.subr.mxu0 0.0
  %1963 = vmatpush1.msra.mxu0 0.0
  %1964 = vmatprep.subr.mxu0 0.0
  %1965 = vmatpush1.msra.mxu0 0.0
  %1966 = vmatprep.subr.mxu0 0.0
  %1967 = vmatpush1.msra.mxu0 0.0
  %1968 = vmatprep.subr.mxu0 0.0
  %1969 = vmatpush1.msra.mxu0 0.0
  %1970 = vmatprep.subr.mxu0 0.0
  %1971 = vmatpush1.msra.mxu0 0.0
  %1972 = vmatprep.subr.mxu0 0.0
  %1973 = vmatpush1.msra.mxu0 0.0
  %1974 = vmatprep.subr.mxu0 0.0
  %1975 = vmatpush1.msra.mxu0 0.0
  %1976 = vmatprep.subr.mxu0 0.0
  %1977 = vmatpush1.msra.mxu0 0.0
  %1978 = vmatprep.subr.mxu0 0.0
  %1979 = vmatpush1.msra.mxu0 0.0
  %1980 = vmatprep.subr.mxu0 0.0
  %1981 = vmatpush1.msra.mxu0 0.0
  %1982 = vmatprep.mubr.f32.mxu0 0.0
  %1983 = vmatmul.mubr.f32.gmra.mrb[0].mxu0 %v93
  %v1984 = vpop.f32.mrb[0].mxu0
  %v1985 = vadd.f32 %v1600, %v1984
  %v1986 = vpop.f32.mrb[0].mxu0
  %1987 = vmatprep.mubr.f32.mxu0 0.0
  %1988 = vmatmul.mubr.f32.gmra.mrb[0].mxu0 %v94
  %v1989 = vpop.f32.mrb[0].mxu0
  %v1990 = vadd.f32 %v1605, %v1989
  %v1991 = vpop.f32.mrb[0].mxu0
  %1992 = vmatprep.mubr.f32.mxu0 0.0
  %1993 = vmatmul.mubr.f32.gmra.mrb[0].mxu0 %v95
  %v1994 = vpop.f32.mrb[0].mxu0
  %v1995 = vadd.f32 %v1610, %v1994
  %v1996 = vpop.f32.mrb[0].mxu0
  %1997 = vmatprep.mubr.f32.mxu0 0.0
  %1998 = vmatmul.mubr.f32.gmra.mrb[0].mxu0 %v96
  %v1999 = vpop.f32.mrb[0].mxu0
  %v2000 = vadd.f32 %v1615, %v1999
  %v2001 = vpop.f32.mrb[0].mxu0
  %2002 = vmatprep.mubr.f32.mxu0 0.0
  %2003 = vmatmul.mubr.f32.gmra.mrb[0].mxu0 %v97
  %v2004 = vpop.f32.mrb[0].mxu0
  %v2005 = vadd.f32 %v1620, %v2004
  %v2006 = vpop.f32.mrb[0].mxu0
  %2007 = vmatprep.mubr.f32.mxu0 0.0
  %2008 = vmatmul.mubr.f32.gmra.mrb[0].mxu0 %v98
  %v2009 = vpop.f32.mrb[0].mxu0
  %v2010 = vadd.f32 %v1625, %v2009
  %v2011 = vpop.f32.mrb[0].mxu0
  %2012 = vmatprep.mubr.f32.mxu0 0.0
  %2013 = vmatmul.mubr.f32.gmra.mrb[0].mxu0 %v99
  %v2014 = vpop.f32.mrb[0].mxu0
  %v2015 = vadd.f32 %v1630, %v2014
  %v2016 = vpop.f32.mrb[0].mxu0
  %2017 = vmatprep.mubr.f32.mxu0 0.0
  %2018 = vmatmul.mubr.f32.gmra.mrb[0].mxu0 %v100
  %v2019 = vpop.f32.mrb[0].mxu0
  %v2020 = vadd.f32 %v1635, %v2019
  %v2021 = vpop.f32.mrb[0].mxu0
  %2022 = vmatprep.mubr.f32.mxu0 0.0
  %2023 = vmatmul.mubr.f32.gmra.mrb[0].mxu0 %v101
  %v2024 = vpop.f32.mrb[0].mxu0
  %v2025 = vadd.f32 %v1640, %v2024
  %v2026 = vpop.f32.mrb[0].mxu0
  %2027 = vmatprep.mubr.f32.mxu0 0.0
  %2028 = vmatmul.mubr.f32.gmra.mrb[0].mxu0 %v102
  %v2029 = vpop.f32.mrb[0].mxu0
  %v2030 = vadd.f32 %v1645, %v2029
  %v2031 = vpop.f32.mrb[0].mxu0
  %2032 = vmatprep.mubr.f32.mxu0 0.0
  %2033 = vmatmul.mubr.f32.gmra.mrb[0].mxu0 %v103
  %v2034 = vpop.f32.mrb[0].mxu0
  %v2035 = vadd.f32 %v1650, %v2034
  %v2036 = vpop.f32.mrb[0].mxu0
  %2037 = vmatprep.mubr.f32.mxu0 0.0
  %2038 = vmatmul.mubr.f32.gmra.mrb[0].mxu0 %v104
  %v2039 = vpop.f32.mrb[0].mxu0
  %v2040 = vadd.f32 %v1655, %v2039
  %v2041 = vpop.f32.mrb[0].mxu0
  %2042 = vmatprep.mubr.f32.mxu0 0.0
  %2043 = vmatmul.mubr.f32.gmra.mrb[0].mxu0 %v105
  %v2044 = vpop.f32.mrb[0].mxu0
  %v2045 = vadd.f32 %v1660, %v2044
  %v2046 = vpop.f32.mrb[0].mxu0
  %2047 = vmatprep.mubr.f32.mxu0 0.0
  %2048 = vmatmul.mubr.f32.gmra.mrb[0].mxu0 %v106
  %v2049 = vpop.f32.mrb[0].mxu0
  %v2050 = vadd.f32 %v1665, %v2049
  %v2051 = vpop.f32.mrb[0].mxu0
  %2052 = vmatprep.mubr.f32.mxu0 0.0
  %2053 = vmatmul.mubr.f32.gmra.mrb[0].mxu0 %v107
  %v2054 = vpop.f32.mrb[0].mxu0
  %v2055 = vadd.f32 %v1670, %v2054
  %v2056 = vpop.f32.mrb[0].mxu0
  %2057 = vmatprep.mubr.f32.mxu0 0.0
  %2058 = vmatmul.mubr.f32.gmra.mrb[0].mxu0 %v108
  %v2059 = vpop.f32.mrb[0].mxu0
  %v2060 = vadd.f32 %v1675, %v2059
  %v2061 = vpop.f32.mrb[0].mxu0
  %2062 = vmatprep.mubr.f32.mxu0 0.0
  %2063 = vmatmul.mubr.f32.gmra.mrb[0].mxu0 %v109
  %v2064 = vpop.f32.mrb[0].mxu0
  %v2065 = vadd.f32 %v1680, %v2064
  %v2066 = vpop.f32.mrb[0].mxu0
  %2067 = vmatprep.mubr.f32.mxu0 0.0
  %2068 = vmatmul.mubr.f32.gmra.mrb[0].mxu0 %v110
  %v2069 = vpop.f32.mrb[0].mxu0
  %v2070 = vadd.f32 %v1685, %v2069
  %v2071 = vpop.f32.mrb[0].mxu0
  %2072 = vmatprep.mubr.f32.mxu0 0.0
  %2073 = vmatmul.mubr.f32.gmra.mrb[0].mxu0 %v111
  %v2074 = vpop.f32.mrb[0].mxu0
  %v2075 = vadd.f32 %v1690, %v2074
  %v2076 = vpop.f32.mrb[0].mxu0
  %2077 = vmatprep.mubr.f32.mxu0 0.0
  %2078 = vmatmul.mubr.f32.gmra.mrb[0].mxu0 %v112
  %v2079 = vpop.f32.mrb[0].mxu0
  %v2080 = vadd.f32 %v1695, %v2079
  %v2081 = vpop.f32.mrb[0].mxu0
  %2082 = vmatprep.mubr.f32.mxu0 0.0
  %2083 = vmatmul.mubr.f32.gmra.mrb[0].mxu0 %v113
  %v2084 = vpop.f32.mrb[0].mxu0
  %v2085 = vadd.f32 %v1700, %v2084
  %v2086 = vpop.f32.mrb[0].mxu0
  %2087 = vmatprep.mubr.f32.mxu0 0.0
  %2088 = vmatmul.mubr.f32.gmra.mrb[0].mxu0 %v114
  %v2089 = vpop.f32.mrb[0].mxu0
  %v2090 = vadd.f32 %v1705, %v2089
  %v2091 = vpop.f32.mrb[0].mxu0
  %2092 = vmatprep.mubr.f32.mxu0 0.0
  %2093 = vmatmul.mubr.f32.gmra.mrb[0].mxu0 %v115
  %v2094 = vpop.f32.mrb[0].mxu0
  %v2095 = vadd.f32 %v1710, %v2094
  %v2096 = vpop.f32.mrb[0].mxu0
  %2097 = vmatprep.mubr.f32.mxu0 0.0
  %2098 = vmatmul.mubr.f32.gmra.mrb[0].mxu0 %v116
  %v2099 = vpop.f32.mrb[0].mxu0
  %v2100 = vadd.f32 %v1715, %v2099
  %v2101 = vpop.f32.mrb[0].mxu0
  %2102 = vmatprep.mubr.f32.mxu0 0.0
  %2103 = vmatmul.mubr.f32.gmra.mrb[0].mxu0 %v117
  %v2104 = vpop.f32.mrb[0].mxu0
  %v2105 = vadd.f32 %v1720, %v2104
  %v2106 = vpop.f32.mrb[0].mxu0
  %2107 = vmatprep.mubr.f32.mxu0 0.0
  %2108 = vmatmul.mubr.f32.gmra.mrb[0].mxu0 %v118
  %v2109 = vpop.f32.mrb[0].mxu0
  %v2110 = vadd.f32 %v1725, %v2109
  %v2111 = vpop.f32.mrb[0].mxu0
  %2112 = vmatprep.mubr.f32.mxu0 0.0
  %2113 = vmatmul.mubr.f32.gmra.mrb[0].mxu0 %v119
  %v2114 = vpop.f32.mrb[0].mxu0
  %v2115 = vadd.f32 %v1730, %v2114
  %v2116 = vpop.f32.mrb[0].mxu0
  %2117 = vmatprep.mubr.f32.mxu0 0.0
  %2118 = vmatmul.mubr.f32.gmra.mrb[0].mxu0 %v120
  %v2119 = vpop.f32.mrb[0].mxu0
  %v2120 = vadd.f32 %v1735, %v2119
  %v2121 = vpop.f32.mrb[0].mxu0
  %2122 = vmatprep.mubr.f32.mxu0 0.0
  %2123 = vmatmul.mubr.f32.gmra.mrb[0].mxu0 %v121
  %v2124 = vpop.f32.mrb[0].mxu0
  %v2125 = vadd.f32 %v1740, %v2124
  %v2126 = vpop.f32.mrb[0].mxu0
  %2127 = vmatprep.mubr.f32.mxu0 0.0
  %2128 = vmatmul.mubr.f32.gmra.mrb[0].mxu0 %v122
  %v2129 = vpop.f32.mrb[0].mxu0
  %v2130 = vadd.f32 %v1745, %v2129
  %v2131 = vpop.f32.mrb[0].mxu0
  %2132 = vmatprep.mubr.f32.mxu0 0.0
  %2133 = vmatmul.mubr.f32.gmra.mrb[0].mxu0 %v123
  %v2134 = vpop.f32.mrb[0].mxu0
  %v2135 = vadd.f32 %v1750, %v2134
  %v2136 = vpop.f32.mrb[0].mxu0
  %2137 = vmatprep.mubr.f32.mxu0 0.0
  %2138 = vmatmul.mubr.f32.gmra.mrb[0].mxu0 %v124
  %v2139 = vpop.f32.mrb[0].mxu0
  %v2140 = vadd.f32 %v1755, %v2139
  %v2141 = vpop.f32.mrb[0].mxu0
  %2142 = vmatprep.mubr.f32.mxu0 0.0
  %2143 = vmatmul.mubr.f32.gmra.mrb[0].mxu0 %v202
  %v2144 = vpop.f32.mrb[0].mxu0
  %v2145 = vadd.f32 %v1760, %v2144
  %v2146 = vpop.f32.mrb[0].mxu0
  %2147 = vmatprep.mubr.f32.mxu0 0.0
  %2148 = vmatmul.mubr.f32.gmra.mrb[0].mxu0 %v203
  %v2149 = vpop.f32.mrb[0].mxu0
  %v2150 = vadd.f32 %v1765, %v2149
  %v2151 = vpop.f32.mrb[0].mxu0
  %2152 = vmatprep.mubr.f32.mxu0 0.0
  %2153 = vmatmul.mubr.f32.gmra.mrb[0].mxu0 %v204
  %v2154 = vpop.f32.mrb[0].mxu0
  %v2155 = vadd.f32 %v1770, %v2154
  %v2156 = vpop.f32.mrb[0].mxu0
  %2157 = vmatprep.mubr.f32.mxu0 0.0
  %2158 = vmatmul.mubr.f32.gmra.mrb[0].mxu0 %v205
  %v2159 = vpop.f32.mrb[0].mxu0
  %v2160 = vadd.f32 %v1775, %v2159
  %v2161 = vpop.f32.mrb[0].mxu0
  %2162 = vmatprep.mubr.f32.mxu0 0.0
  %2163 = vmatmul.mubr.f32.gmra.mrb[0].mxu0 %v206
  %v2164 = vpop.f32.mrb[0].mxu0
  %v2165 = vadd.f32 %v1780, %v2164
  %v2166 = vpop.f32.mrb[0].mxu0
  %2167 = vmatprep.mubr.f32.mxu0 0.0
  %2168 = vmatmul.mubr.f32.gmra.mrb[0].mxu0 %v207
  %v2169 = vpop.f32.mrb[0].mxu0
  %v2170 = vadd.f32 %v1785, %v2169
  %v2171 = vpop.f32.mrb[0].mxu0
  %2172 = vmatprep.mubr.f32.mxu0 0.0
  %2173 = vmatmul.mubr.f32.gmra.mrb[0].mxu0 %v208
  %v2174 = vpop.f32.mrb[0].mxu0
  %v2175 = vadd.f32 %v1790, %v2174
  %v2176 = vpop.f32.mrb[0].mxu0
  %2177 = vmatprep.mubr.f32.mxu0 0.0
  %2178 = vmatmul.mubr.f32.gmra.mrb[0].mxu0 %v209
  %v2179 = vpop.f32.mrb[0].mxu0
  %v2180 = vadd.f32 %v1795, %v2179
  %v2181 = vpop.f32.mrb[0].mxu0
  %2182 = vmatprep.mubr.f32.mxu0 0.0
  %2183 = vmatmul.mubr.f32.gmra.mrb[0].mxu0 %v210
  %v2184 = vpop.f32.mrb[0].mxu0
  %v2185 = vadd.f32 %v1800, %v2184
  %v2186 = vpop.f32.mrb[0].mxu0
  %2187 = vmatprep.mubr.f32.mxu0 0.0
  %2188 = vmatmul.mubr.f32.gmra.mrb[0].mxu0 %v211
  %v2189 = vpop.f32.mrb[0].mxu0
  %v2190 = vadd.f32 %v1805, %v2189
  %v2191 = vpop.f32.mrb[0].mxu0
  %2192 = vmatprep.mubr.f32.mxu0 0.0
  %2193 = vmatmul.mubr.f32.gmra.mrb[0].mxu0 %v212
  %v2194 = vpop.f32.mrb[0].mxu0
  %v2195 = vadd.f32 %v1810, %v2194
  %v2196 = vpop.f32.mrb[0].mxu0
  %2197 = vmatprep.mubr.f32.mxu0 0.0
  %2198 = vmatmul.mubr.f32.gmra.mrb[0].mxu0 %v213
  %v2199 = vpop.f32.mrb[0].mxu0
  %v2200 = vadd.f32 %v1815, %v2199
  %v2201 = vpop.f32.mrb[0].mxu0
  %2202 = vmatprep.mubr.f32.mxu0 0.0
  %2203 = vmatmul.mubr.f32.gmra.mrb[0].mxu0 %v214
  %v2204 = vpop.f32.mrb[0].mxu0
  %v2205 = vadd.f32 %v1820, %v2204
  %v2206 = vpop.f32.mrb[0].mxu0
  %2207 = vmatprep.mubr.f32.mxu0 0.0
  %2208 = vmatmul.mubr.f32.gmra.mrb[0].mxu0 %v215
  %v2209 = vpop.f32.mrb[0].mxu0
  %v2210 = vadd.f32 %v1825, %v2209
  %v2211 = vpop.f32.mrb[0].mxu0
  %2212 = vmatprep.mubr.f32.mxu0 0.0
  %2213 = vmatmul.mubr.f32.gmra.mrb[0].mxu0 %v216
  %v2214 = vpop.f32.mrb[0].mxu0
  %v2215 = vadd.f32 %v1830, %v2214
  %v2216 = vpop.f32.mrb[0].mxu0
  %2217 = vmatprep.mubr.f32.mxu0 0.0
  %2218 = vmatmul.mubr.f32.gmra.mrb[0].mxu0 %v217
  %v2219 = vpop.f32.mrb[0].mxu0
  %v2220 = vadd.f32 %v1835, %v2219
  %v2221 = vpop.f32.mrb[0].mxu0
  %2222 = vmatprep.mubr.f32.mxu0 0.0
  %2223 = vmatmul.mubr.f32.gmra.mrb[0].mxu0 %v218
  %v2224 = vpop.f32.mrb[0].mxu0
  %v2225 = vadd.f32 %v1840, %v2224
  %v2226 = vpop.f32.mrb[0].mxu0
  %2227 = vmatprep.mubr.f32.mxu0 0.0
  %2228 = vmatmul.mubr.f32.gmra.mrb[0].mxu0 %v219
  %v2229 = vpop.f32.mrb[0].mxu0
  %v2230 = vadd.f32 %v1845, %v2229
  %v2231 = vpop.f32.mrb[0].mxu0
  %2232 = vmatprep.mubr.f32.mxu0 0.0
  %2233 = vmatmul.mubr.f32.gmra.mrb[0].mxu0 %v220
  %v2234 = vpop.f32.mrb[0].mxu0
  %v2235 = vadd.f32 %v1850, %v2234
  %v2236 = vpop.f32.mrb[0].mxu0
  %2237 = vmatprep.mubr.f32.mxu0 0.0
  %2238 = vmatmul.mubr.f32.gmra.mrb[0].mxu0 %v221
  %v2239 = vpop.f32.mrb[0].mxu0
  %v2240 = vadd.f32 %v1855, %v2239
  %v2241 = vpop.f32.mrb[0].mxu0
  %2242 = vmatprep.mubr.f32.mxu0 0.0
  %2243 = vmatmul.mubr.f32.gmra.mrb[0].mxu0 %v222
  %v2244 = vpop.f32.mrb[0].mxu0
  %v2245 = vadd.f32 %v1860, %v2244
  %v2246 = vpop.f32.mrb[0].mxu0
  %2247 = vmatprep.mubr.f32.mxu0 0.0
  %2248 = vmatmul.mubr.f32.gmra.mrb[0].mxu0 %v223
  %v2249 = vpop.f32.mrb[0].mxu0
  %v2250 = vadd.f32 %v1865, %v2249
  %v2251 = vpop.f32.mrb[0].mxu0
  %2252 = vmatprep.mubr.f32.mxu0 0.0
  %2253 = vmatmul.mubr.f32.gmra.mrb[0].mxu0 %v224
  %v2254 = vpop.f32.mrb[0].mxu0
  %v2255 = vadd.f32 %v1870, %v2254
  %v2256 = vpop.f32.mrb[0].mxu0
  %2257 = vmatprep.mubr.f32.mxu0 0.0
  %2258 = vmatmul.mubr.f32.gmra.mrb[0].mxu0 %v225
  %v2259 = vpop.f32.mrb[0].mxu0
  %v2260 = vadd.f32 %v1875, %v2259
  %v2261 = vpop.f32.mrb[0].mxu0
  %2262 = vmatprep.mubr.f32.mxu0 0.0
  %2263 = vmatmul.mubr.f32.gmra.mrb[0].mxu0 %v226
  %v2264 = vpop.f32.mrb[0].mxu0
  %v2265 = vadd.f32 %v1880, %v2264
  %v2266 = vpop.f32.mrb[0].mxu0
  %2267 = vmatprep.mubr.f32.mxu0 0.0
  %2268 = vmatmul.mubr.f32.gmra.mrb[0].mxu0 %v227
  %v2269 = vpop.f32.mrb[0].mxu0
  %v2270 = vadd.f32 %v1885, %v2269
  %v2271 = vpop.f32.mrb[0].mxu0
  %2272 = vmatprep.mubr.f32.mxu0 0.0
  %2273 = vmatmul.mubr.f32.gmra.mrb[0].mxu0 %v228
  %v2274 = vpop.f32.mrb[0].mxu0
  %v2275 = vadd.f32 %v1890, %v2274
  %v2276 = vpop.f32.mrb[0].mxu0
  %2277 = vmatprep.mubr.f32.mxu0 0.0
  %2278 = vmatmul.mubr.f32.gmra.mrb[0].mxu0 %v229
  %v2279 = vpop.f32.mrb[0].mxu0
  %v2280 = vadd.f32 %v1895, %v2279
  %v2281 = vpop.f32.mrb[0].mxu0
  %2282 = vmatprep.mubr.f32.mxu0 0.0
  %2283 = vmatmul.mubr.f32.gmra.mrb[0].mxu0 %v230
  %v2284 = vpop.f32.mrb[0].mxu0
  %v2285 = vadd.f32 %v1900, %v2284
  %v2286 = vpop.f32.mrb[0].mxu0
  %2287 = vmatprep.mubr.f32.mxu0 0.0
  %2288 = vmatmul.mubr.f32.gmra.mrb[0].mxu0 %v231
  %v2289 = vpop.f32.mrb[0].mxu0
  %v2290 = vadd.f32 %v1905, %v2289
  %v2291 = vpop.f32.mrb[0].mxu0
  %2292 = vmatprep.mubr.f32.mxu0 0.0
  %2293 = vmatmul.mubr.f32.gmra.mrb[0].mxu0 %v232
  %v2294 = vpop.f32.mrb[0].mxu0
  %v2295 = vadd.f32 %v1910, %v2294
  %v2296 = vpop.f32.mrb[0].mxu0
  %2297 = vmatprep.mubr.f32.mxu0 0.0
  %2298 = vmatmul.mubr.f32.gmra.mrb[0].mxu0 %v233
  %v2299 = vpop.f32.mrb[0].mxu0
  %v2300 = vadd.f32 %v1915, %v2299
  %v2301 = vpop.f32.mrb[0].mxu0
  %2302 = vdwg.mxu0
  %2303 = vst [vmem:[%s3] sm:$0xff] %v1985
  %2304 = vst [vmem:[%s3 + $0x8] sm:$0xff] %v1990
  %2305 = vst [vmem:[%s3 + $0x10] sm:$0xff] %v1995
  %2306 = vst [vmem:[%s3 + $0x18] sm:$0xff] %v2000
  %2307 = vst [vmem:[%s3 + $0x20] sm:$0xff] %v2005
  %2308 = vst [vmem:[%s3 + $0x28] sm:$0xff] %v2010
  %2309 = vst [vmem:[%s3 + $0x30] sm:$0xff] %v2015
  %2310 = vst [vmem:[%s3 + $0x38] sm:$0xff] %v2020
  %2311 = vst [vmem:[%s3 + $0x40] sm:$0xff] %v2025
  %2312 = vst [vmem:[%s3 + $0x48] sm:$0xff] %v2030
  %2313 = vst [vmem:[%s3 + $0x50] sm:$0xff] %v2035
  %2314 = vst [vmem:[%s3 + $0x58] sm:$0xff] %v2040
  %2315 = vst [vmem:[%s3 + $0x60] sm:$0xff] %v2045
  %2316 = vst [vmem:[%s3 + $0x68] sm:$0xff] %v2050
  %2317 = vst [vmem:[%s3 + $0x70] sm:$0xff] %v2055
  %2318 = vst [vmem:[%s3 + $0x78] sm:$0xff] %v2060
  %2319 = vst [vmem:[%s3 + $0x80] sm:$0xff] %v2065
  %2320 = vst [vmem:[%s3 + $0x88] sm:$0xff] %v2070
  %2321 = vst [vmem:[%s3 + $0x90] sm:$0xff] %v2075
  %2322 = vst [vmem:[%s3 + $0x98] sm:$0xff] %v2080
  %2323 = vst [vmem:[%s3 + $0xa0] sm:$0xff] %v2085
  %2324 = vst [vmem:[%s3 + $0xa8] sm:$0xff] %v2090
  %2325 = vst [vmem:[%s3 + $0xb0] sm:$0xff] %v2095
  %2326 = vst [vmem:[%s3 + $0xb8] sm:$0xff] %v2100
  %2327 = vst [vmem:[%s3 + $0xc0] sm:$0xff] %v2105
  %2328 = vst [vmem:[%s3 + $0xc8] sm:$0xff] %v2110
  %2329 = vst [vmem:[%s3 + $0xd0] sm:$0xff] %v2115
  %2330 = vst [vmem:[%s3 + $0xd8] sm:$0xff] %v2120
  %2331 = vst [vmem:[%s3 + $0xe0] sm:$0xff] %v2125
  %2332 = vst [vmem:[%s3 + $0xe8] sm:$0xff] %v2130
  %2333 = vst [vmem:[%s3 + $0xf0] sm:$0xff] %v2135
  %2334 = vst [vmem:[%s3 + $0xf8] sm:$0xff] %v2140
  %2335 = vst [vmem:[%s3 + $0x100] sm:$0xff] %v2145
  %2336 = vst [vmem:[%s3 + $0x108] sm:$0xff] %v2150
  %2337 = vst [vmem:[%s3 + $0x110] sm:$0xff] %v2155
  %2338 = vst [vmem:[%s3 + $0x118] sm:$0xff] %v2160
  %2339 = vst [vmem:[%s3 + $0x120] sm:$0xff] %v2165
  %2340 = vst [vmem:[%s3 + $0x128] sm:$0xff] %v2170
  %2341 = vst [vmem:[%s3 + $0x130] sm:$0xff] %v2175
  %2342 = vst [vmem:[%s3 + $0x138] sm:$0xff] %v2180
  %2343 = vst [vmem:[%s3 + $0x140] sm:$0xff] %v2185
  %2344 = vst [vmem:[%s3 + $0x148] sm:$0xff] %v2190
  %2345 = vst [vmem:[%s3 + $0x150] sm:$0xff] %v2195
  %2346 = vst [vmem:[%s3 + $0x158] sm:$0xff] %v2200
  %2347 = vst [vmem:[%s3 + $0x160] sm:$0xff] %v2205
  %2348 = vst [vmem:[%s3 + $0x168] sm:$0xff] %v2210
  %2349 = vst [vmem:[%s3 + $0x170] sm:$0xff] %v2215
  %2350 = vst [vmem:[%s3 + $0x178] sm:$0xff] %v2220
  %2351 = vst [vmem:[%s3 + $0x180] sm:$0xff] %v2225
  %2352 = vst [vmem:[%s3 + $0x188] sm:$0xff] %v2230
  %2353 = vst [vmem:[%s3 + $0x190] sm:$0xff] %v2235
  %2354 = vst [vmem:[%s3 + $0x198] sm:$0xff] %v2240
  %2355 = vst [vmem:[%s3 + $0x1a0] sm:$0xff] %v2245
  %2356 = vst [vmem:[%s3 + $0x1a8] sm:$0xff] %v2250
  %2357 = vst [vmem:[%s3 + $0x1b0] sm:$0xff] %v2255
  %2358 = vst [vmem:[%s3 + $0x1b8] sm:$0xff] %v2260
  %2359 = vst [vmem:[%s3 + $0x1c0] sm:$0xff] %v2265
  %2360 = vst [vmem:[%s3 + $0x1c8] sm:$0xff] %v2270
  %2361 = vst [vmem:[%s3 + $0x1d0] sm:$0xff] %v2275
  %2362 = vst [vmem:[%s3 + $0x1d8] sm:$0xff] %v2280
  %2363 = vst [vmem:[%s3 + $0x1e0] sm:$0xff] %v2285
  %2364 = vst [vmem:[%s3 + $0x1e8] sm:$0xff] %v2290
  %2365 = vst [vmem:[%s3 + $0x1f0] sm:$0xff] %v2295
  %2366 = vst [vmem:[%s3 + $0x1f8] sm:$0xff] %v2300
  %v2367 = vadd.f32 %v1985, %v1990
  %v2368 = vadd.f32 %v2367, %v1995
  %v2369 = vadd.f32 %v2368, %v2000
  %v2370 = vadd.f32 %v2369, %v2005
  %v2371 = vadd.f32 %v2370, %v2010
  %v2372 = vadd.f32 %v2371, %v2015
  %v2373 = vadd.f32 %v2372, %v2020
  %v2374 = vadd.f32 %v2373, %v2025
  %v2375 = vadd.f32 %v2374, %v2030
  %v2376 = vadd.f32 %v2375, %v2035
  %v2377 = vadd.f32 %v2376, %v2040
  %v2378 = vadd.f32 %v2377, %v2045
  %v2379 = vadd.f32 %v2378, %v2050
  %v2380 = vadd.f32 %v2379, %v2055
  %v2381 = vadd.f32 %v2380, %v2060
  %v2382 = vadd.f32 %v2381, %v2065
  %v2383 = vadd.f32 %v2382, %v2070
  %v2384 = vadd.f32 %v2383, %v2075
  %v2385 = vadd.f32 %v2384, %v2080
  %v2386 = vadd.f32 %v2385, %v2085
  %v2387 = vadd.f32 %v2386, %v2090
  %v2388 = vadd.f32 %v2387, %v2095
  %v2389 = vadd.f32 %v2388, %v2100
  %v2390 = vadd.f32 %v2389, %v2105
  %v2391 = vadd.f32 %v2390, %v2110
  %v2392 = vadd.f32 %v2391, %v2115
  %v2393 = vadd.f32 %v2392, %v2120
  %v2394 = vadd.f32 %v2393, %v2125
  %v2395 = vadd.f32 %v2394, %v2130
  %v2396 = vadd.f32 %v2395, %v2135
  %v2397 = vadd.f32 %v2396, %v2140
  %v2398 = vadd.f32 %v2397, %v2145
  %v2399 = vadd.f32 %v2398, %v2150
  %v2400 = vadd.f32 %v2399, %v2155
  %v2401 = vadd.f32 %v2400, %v2160
  %v2402 = vadd.f32 %v2401, %v2165
  %v2403 = vadd.f32 %v2402, %v2170
  %v2404 = vadd.f32 %v2403, %v2175
  %v2405 = vadd.f32 %v2404, %v2180
  %v2406 = vadd.f32 %v2405, %v2185
  %v2407 = vadd.f32 %v2406, %v2190
  %v2408 = vadd.f32 %v2407, %v2195
  %v2409 = vadd.f32 %v2408, %v2200
  %v2410 = vadd.f32 %v2409, %v2205
  %v2411 = vadd.f32 %v2410, %v2210
  %v2412 = vadd.f32 %v2411, %v2215
  %v2413 = vadd.f32 %v2412, %v2220
  %v2414 = vadd.f32 %v2413, %v2225
  %v2415 = vadd.f32 %v2414, %v2230
  %v2416 = vadd.f32 %v2415, %v2235
  %v2417 = vadd.f32 %v2416, %v2240
  %v2418 = vadd.f32 %v2417, %v2245
  %v2419 = vadd.f32 %v2418, %v2250
  %v2420 = vadd.f32 %v2419, %v2255
  %v2421 = vadd.f32 %v2420, %v2260
  %v2422 = vadd.f32 %v2421, %v2265
  %v2423 = vadd.f32 %v2422, %v2270
  %v2424 = vadd.f32 %v2423, %v2275
  %v2425 = vadd.f32 %v2424, %v2280
  %v2426 = vadd.f32 %v2425, %v2285
  %v2427 = vadd.f32 %v2426, %v2290
  %v2428 = vadd.f32 %v2427, %v2295
  %v2429 = vadd.f32 %v2428, %v2300
  %v2430 = vrot.slane %v2429, 4
  %v2431 = vadd.f32 %v2429, %v2430
  %v2432 = vrot.slane %v2431, 2
  %v2433 = vadd.f32 %v2431, %v2432
  %v2434 = vrot.slane %v2433, 1
  %v2435 = vadd.f32 %v2433, %v2434
  %v2436 = vmul.f32 %v1985, %v1985
  %v2437 = vmul.f32 %v1990, %v1990
  %v2438 = vmul.f32 %v1995, %v1995
  %v2439 = vmul.f32 %v2000, %v2000
  %v2440 = vmul.f32 %v2005, %v2005
  %v2441 = vmul.f32 %v2010, %v2010
  %v2442 = vmul.f32 %v2015, %v2015
  %v2443 = vmul.f32 %v2020, %v2020
  %v2444 = vmul.f32 %v2025, %v2025
  %v2445 = vmul.f32 %v2030, %v2030
  %v2446 = vmul.f32 %v2035, %v2035
  %v2447 = vmul.f32 %v2040, %v2040
  %v2448 = vmul.f32 %v2045, %v2045
  %v2449 = vmul.f32 %v2050, %v2050
  %v2450 = vmul.f32 %v2055, %v2055
  %v2451 = vmul.f32 %v2060, %v2060
  %v2452 = vmul.f32 %v2065, %v2065
  %v2453 = vmul.f32 %v2070, %v2070
  %v2454 = vmul.f32 %v2075, %v2075
  %v2455 = vmul.f32 %v2080, %v2080
  %v2456 = vmul.f32 %v2085, %v2085
  %v2457 = vmul.f32 %v2090, %v2090
  %v2458 = vmul.f32 %v2095, %v2095
  %v2459 = vmul.f32 %v2100, %v2100
  %v2460 = vmul.f32 %v2105, %v2105
  %v2461 = vmul.f32 %v2110, %v2110
  %v2462 = vmul.f32 %v2115, %v2115
  %v2463 = vmul.f32 %v2120, %v2120
  %v2464 = vmul.f32 %v2125, %v2125
  %v2465 = vmul.f32 %v2130, %v2130
  %v2466 = vmul.f32 %v2135, %v2135
  %v2467 = vmul.f32 %v2140, %v2140
  %v2468 = vmul.f32 %v2145, %v2145
  %v2469 = vmul.f32 %v2150, %v2150
  %v2470 = vmul.f32 %v2155, %v2155
  %v2471 = vmul.f32 %v2160, %v2160
  %v2472 = vmul.f32 %v2165, %v2165
  %v2473 = vmul.f32 %v2170, %v2170
  %v2474 = vmul.f32 %v2175, %v2175
  %v2475 = vmul.f32 %v2180, %v2180
  %v2476 = vmul.f32 %v2185, %v2185
  %v2477 = vmul.f32 %v2190, %v2190
  %v2478 = vmul.f32 %v2195, %v2195
  %v2479 = vmul.f32 %v2200, %v2200
  %v2480 = vmul.f32 %v2205, %v2205
  %v2481 = vmul.f32 %v2210, %v2210
  %v2482 = vmul.f32 %v2215, %v2215
  %v2483 = vmul.f32 %v2220, %v2220
  %v2484 = vmul.f32 %v2225, %v2225
  %v2485 = vmul.f32 %v2230, %v2230
  %v2486 = vmul.f32 %v2235, %v2235
  %v2487 = vmul.f32 %v2240, %v2240
  %v2488 = vmul.f32 %v2245, %v2245
  %v2489 = vmul.f32 %v2250, %v2250
  %v2490 = vmul.f32 %v2255, %v2255
  %v2491 = vmul.f32 %v2260, %v2260
  %v2492 = vmul.f32 %v2265, %v2265
  %v2493 = vmul.f32 %v2270, %v2270
  %v2494 = vmul.f32 %v2275, %v2275
  %v2495 = vmul.f32 %v2280, %v2280
  %v2496 = vmul.f32 %v2285, %v2285
  %v2497 = vmul.f32 %v2290, %v2290
  %v2498 = vmul.f32 %v2295, %v2295
  %v2499 = vmul.f32 %v2300, %v2300
  %v2500 = vadd.f32 %v2436, %v2437
  %v2501 = vadd.f32 %v2500, %v2438
  %v2502 = vadd.f32 %v2501, %v2439
  %v2503 = vadd.f32 %v2502, %v2440
  %v2504 = vadd.f32 %v2503, %v2441
  %v2505 = vadd.f32 %v2504, %v2442
  %v2506 = vadd.f32 %v2505, %v2443
  %v2507 = vadd.f32 %v2506, %v2444
  %v2508 = vadd.f32 %v2507, %v2445
  %v2509 = vadd.f32 %v2508, %v2446
  %v2510 = vadd.f32 %v2509, %v2447
  %v2511 = vadd.f32 %v2510, %v2448
  %v2512 = vadd.f32 %v2511, %v2449
  %v2513 = vadd.f32 %v2512, %v2450
  %v2514 = vadd.f32 %v2513, %v2451
  %v2515 = vadd.f32 %v2514, %v2452
  %v2516 = vadd.f32 %v2515, %v2453
  %v2517 = vadd.f32 %v2516, %v2454
  %v2518 = vadd.f32 %v2517, %v2455
  %v2519 = vadd.f32 %v2518, %v2456
  %v2520 = vadd.f32 %v2519, %v2457
  %v2521 = vadd.f32 %v2520, %v2458
  %v2522 = vadd.f32 %v2521, %v2459
  %v2523 = vadd.f32 %v2522, %v2460
  %v2524 = vadd.f32 %v2523, %v2461
  %v2525 = vadd.f32 %v2524, %v2462
  %v2526 = vadd.f32 %v2525, %v2463
  %v2527 = vadd.f32 %v2526, %v2464
  %v2528 = vadd.f32 %v2527, %v2465
  %v2529 = vadd.f32 %v2528, %v2466
  %v2530 = vadd.f32 %v2529, %v2467
  %v2531 = vadd.f32 %v2530, %v2468
  %v2532 = vadd.f32 %v2531, %v2469
  %v2533 = vadd.f32 %v2532, %v2470
  %v2534 = vadd.f32 %v2533, %v2471
  %v2535 = vadd.f32 %v2534, %v2472
  %v2536 = vadd.f32 %v2535, %v2473
  %v2537 = vadd.f32 %v2536, %v2474
  %v2538 = vadd.f32 %v2537, %v2475
  %v2539 = vadd.f32 %v2538, %v2476
  %v2540 = vadd.f32 %v2539, %v2477
  %v2541 = vadd.f32 %v2540, %v2478
  %v2542 = vadd.f32 %v2541, %v2479
  %v2543 = vadd.f32 %v2542, %v2480
  %v2544 = vadd.f32 %v2543, %v2481
  %v2545 = vadd.f32 %v2544, %v2482
  %v2546 = vadd.f32 %v2545, %v2483
  %v2547 = vadd.f32 %v2546, %v2484
  %v2548 = vadd.f32 %v2547, %v2485
  %v2549 = vadd.f32 %v2548, %v2486
  %v2550 = vadd.f32 %v2549, %v2487
  %v2551 = vadd.f32 %v2550, %v2488
  %v2552 = vadd.f32 %v2551, %v2489
  %v2553 = vadd.f32 %v2552, %v2490
  %v2554 = vadd.f32 %v2553, %v2491
  %v2555 = vadd.f32 %v2554, %v2492
  %v2556 = vadd.f32 %v2555, %v2493
  %v2557 = vadd.f32 %v2556, %v2494
  %v2558 = vadd.f32 %v2557, %v2495
  %v2559 = vadd.f32 %v2558, %v2496
  %v2560 = vadd.f32 %v2559, %v2497
  %v2561 = vadd.f32 %v2560, %v2498
  %v2562 = vadd.f32 %v2561, %v2499
  %v2563 = vrot.slane %v2562, 4
  %v2564 = vadd.f32 %v2562, %v2563
  %v2565 = vrot.slane %v2564, 2
  %v2566 = vadd.f32 %v2564, %v2565
  %v2567 = vrot.slane %v2566, 1
  %v2568 = vadd.f32 %v2566, %v2567
  %v2569 = vld [vmem:[%s2] sm:$0xff]
  %v2570 = vld [vmem:[%s2 + $0x8] sm:$0xff]
  %v2571 = vld [vmem:[%s2 + $0x10] sm:$0xff]
  %v2572 = vld [vmem:[%s2 + $0x18] sm:$0xff]
  %v2573 = vld [vmem:[%s2 + $0x20] sm:$0xff]
  %v2574 = vld [vmem:[%s2 + $0x28] sm:$0xff]
  %v2575 = vld [vmem:[%s2 + $0x30] sm:$0xff]
  %v2576 = vld [vmem:[%s2 + $0x38] sm:$0xff]
  %v2577 = vld [vmem:[%s2 + $0x40] sm:$0xff]
  %v2578 = vld [vmem:[%s2 + $0x48] sm:$0xff]
  %v2579 = vld [vmem:[%s2 + $0x50] sm:$0xff]
  %v2580 = vld [vmem:[%s2 + $0x58] sm:$0xff]
  %v2581 = vld [vmem:[%s2 + $0x60] sm:$0xff]
  %v2582 = vld [vmem:[%s2 + $0x68] sm:$0xff]
  %v2583 = vld [vmem:[%s2 + $0x70] sm:$0xff]
  %v2584 = vld [vmem:[%s2 + $0x78] sm:$0xff]
  %2585 = vmatprep.subr.mxu0 0.0
  %2586 = vmatpush1.msra.mxu0 %v2569
  %2587 = vmatprep.subr.mxu0 0.0
  %2588 = vmatpush1.msra.mxu0 %v2570
  %2589 = vmatprep.subr.mxu0 0.0
  %2590 = vmatpush1.msra.mxu0 %v2571
  %2591 = vmatprep.subr.mxu0 0.0
  %2592 = vmatpush1.msra.mxu0 %v2572
  %2593 = vmatprep.subr.mxu0 0.0
  %2594 = vmatpush1.msra.mxu0 %v2573
  %2595 = vmatprep.subr.mxu0 0.0
  %2596 = vmatpush1.msra.mxu0 %v2574
  %2597 = vmatprep.subr.mxu0 0.0
  %2598 = vmatpush1.msra.mxu0 %v2575
  %2599 = vmatprep.subr.mxu0 0.0
  %2600 = vmatpush1.msra.mxu0 %v2576
  %2601 = vmatprep.subr.mxu0 0.0
  %2602 = vmatpush1.msra.mxu0 %v2577
  %2603 = vmatprep.subr.mxu0 0.0
  %2604 = vmatpush1.msra.mxu0 %v2578
  %2605 = vmatprep.subr.mxu0 0.0
  %2606 = vmatpush1.msra.mxu0 %v2579
  %2607 = vmatprep.subr.mxu0 0.0
  %2608 = vmatpush1.msra.mxu0 %v2580
  %2609 = vmatprep.subr.mxu0 0.0
  %2610 = vmatpush1.msra.mxu0 %v2581
  %2611 = vmatprep.subr.mxu0 0.0
  %2612 = vmatpush1.msra.mxu0 %v2582
  %2613 = vmatprep.subr.mxu0 0.0
  %2614 = vmatpush1.msra.mxu0 %v2583
  %2615 = vmatprep.subr.mxu0 0.0
  %2616 = vmatpush1.msra.mxu0 %v2584
  %2617 = vmatprep.subr.mxu0 0.0
  %2618 = vmatpush1.msra.mxu0 0.0
  %2619 = vmatprep.subr.mxu0 0.0
  %2620 = vmatpush1.msra.mxu0 0.0
  %2621 = vmatprep.subr.mxu0 0.0
  %2622 = vmatpush1.msra.mxu0 0.0
  %2623 = vmatprep.subr.mxu0 0.0
  %2624 = vmatpush1.msra.mxu0 0.0
  %2625 = vmatprep.subr.mxu0 0.0
  %2626 = vmatpush1.msra.mxu0 0.0
  %2627 = vmatprep.subr.mxu0 0.0
  %2628 = vmatpush1.msra.mxu0 0.0
  %2629 = vmatprep.subr.mxu0 0.0
  %2630 = vmatpush1.msra.mxu0 0.0
  %2631 = vmatprep.subr.mxu0 0.0
  %2632 = vmatpush1.msra.mxu0 0.0
  %2633 = vmatprep.subr.mxu0 0.0
  %2634 = vmatpush1.msra.mxu0 0.0
  %2635 = vmatprep.subr.mxu0 0.0
  %2636 = vmatpush1.msra.mxu0 0.0
  %2637 = vmatprep.subr.mxu0 0.0
  %2638 = vmatpush1.msra.mxu0 0.0
  %2639 = vmatprep.subr.mxu0 0.0
  %2640 = vmatpush1.msra.mxu0 0.0
  %2641 = vmatprep.subr.mxu0 0.0
  %2642 = vmatpush1.msra.mxu0 0.0
  %2643 = vmatprep.subr.mxu0 0.0
  %2644 = vmatpush1.msra.mxu0 0.0
  %2645 = vmatprep.subr.mxu0 0.0
  %2646 = vmatpush1.msra.mxu0 0.0
  %2647 = vmatprep.subr.mxu0 0.0
  %2648 = vmatpush1.msra.mxu0 0.0
  %2649 = vmatprep.mubr.f32.mxu0 0.0
  %2650 = vmatmul.mubr.f32.gmra.mrb[0].mxu0 %v55
  %v2651 = vpop.f32.mrb[0].mxu0
  %v2652 = vadd.f32 0.0, %v2651
  %v2653 = vpop.f32.mrb[0].mxu0
  %2654 = vmatprep.mubr.f32.mxu0 0.0
  %2655 = vmatmul.mubr.f32.gmra.mrb[0].mxu0 %v56
  %v2656 = vpop.f32.mrb[0].mxu0
  %v2657 = vadd.f32 0.0, %v2656
  %v2658 = vpop.f32.mrb[0].mxu0
  %2659 = vmatprep.mubr.f32.mxu0 0.0
  %2660 = vmatmul.mubr.f32.gmra.mrb[0].mxu0 %v57
  %v2661 = vpop.f32.mrb[0].mxu0
  %v2662 = vadd.f32 0.0, %v2661
  %v2663 = vpop.f32.mrb[0].mxu0
  %2664 = vmatprep.mubr.f32.mxu0 0.0
  %2665 = vmatmul.mubr.f32.gmra.mrb[0].mxu0 %v58
  %v2666 = vpop.f32.mrb[0].mxu0
  %v2667 = vadd.f32 0.0, %v2666
  %v2668 = vpop.f32.mrb[0].mxu0
  %2669 = vmatprep.mubr.f32.mxu0 0.0
  %2670 = vmatmul.mubr.f32.gmra.mrb[0].mxu0 %v59
  %v2671 = vpop.f32.mrb[0].mxu0
  %v2672 = vadd.f32 0.0, %v2671
  %v2673 = vpop.f32.mrb[0].mxu0
  %2674 = vmatprep.mubr.f32.mxu0 0.0
  %2675 = vmatmul.mubr.f32.gmra.mrb[0].mxu0 %v60
  %v2676 = vpop.f32.mrb[0].mxu0
  %v2677 = vadd.f32 0.0, %v2676
  %v2678 = vpop.f32.mrb[0].mxu0
  %2679 = vmatprep.mubr.f32.mxu0 0.0
  %2680 = vmatmul.mubr.f32.gmra.mrb[0].mxu0 %v61
  %v2681 = vpop.f32.mrb[0].mxu0
  %v2682 = vadd.f32 0.0, %v2681
  %v2683 = vpop.f32.mrb[0].mxu0
  %2684 = vmatprep.mubr.f32.mxu0 0.0
  %2685 = vmatmul.mubr.f32.gmra.mrb[0].mxu0 %v62
  %v2686 = vpop.f32.mrb[0].mxu0
  %v2687 = vadd.f32 0.0, %v2686
  %v2688 = vpop.f32.mrb[0].mxu0
  %2689 = vmatprep.mubr.f32.mxu0 0.0
  %2690 = vmatmul.mubr.f32.gmra.mrb[0].mxu0 %v63
  %v2691 = vpop.f32.mrb[0].mxu0
  %v2692 = vadd.f32 0.0, %v2691
  %v2693 = vpop.f32.mrb[0].mxu0
  %2694 = vmatprep.mubr.f32.mxu0 0.0
  %2695 = vmatmul.mubr.f32.gmra.mrb[0].mxu0 %v64
  %v2696 = vpop.f32.mrb[0].mxu0
  %v2697 = vadd.f32 0.0, %v2696
  %v2698 = vpop.f32.mrb[0].mxu0
  %2699 = vmatprep.mubr.f32.mxu0 0.0
  %2700 = vmatmul.mubr.f32.gmra.mrb[0].mxu0 %v65
  %v2701 = vpop.f32.mrb[0].mxu0
  %v2702 = vadd.f32 0.0, %v2701
  %v2703 = vpop.f32.mrb[0].mxu0
  %2704 = vmatprep.mubr.f32.mxu0 0.0
  %2705 = vmatmul.mubr.f32.gmra.mrb[0].mxu0 %v66
  %v2706 = vpop.f32.mrb[0].mxu0
  %v2707 = vadd.f32 0.0, %v2706
  %v2708 = vpop.f32.mrb[0].mxu0
  %2709 = vmatprep.mubr.f32.mxu0 0.0
  %2710 = vmatmul.mubr.f32.gmra.mrb[0].mxu0 %v67
  %v2711 = vpop.f32.mrb[0].mxu0
  %v2712 = vadd.f32 0.0, %v2711
  %v2713 = vpop.f32.mrb[0].mxu0
  %2714 = vmatprep.mubr.f32.mxu0 0.0
  %2715 = vmatmul.mubr.f32.gmra.mrb[0].mxu0 %v68
  %v2716 = vpop.f32.mrb[0].mxu0
  %v2717 = vadd.f32 0.0, %v2716
  %v2718 = vpop.f32.mrb[0].mxu0
  %2719 = vmatprep.mubr.f32.mxu0 0.0
  %2720 = vmatmul.mubr.f32.gmra.mrb[0].mxu0 %v69
  %v2721 = vpop.f32.mrb[0].mxu0
  %v2722 = vadd.f32 0.0, %v2721
  %v2723 = vpop.f32.mrb[0].mxu0
  %2724 = vmatprep.mubr.f32.mxu0 0.0
  %2725 = vmatmul.mubr.f32.gmra.mrb[0].mxu0 %v70
  %v2726 = vpop.f32.mrb[0].mxu0
  %v2727 = vadd.f32 0.0, %v2726
  %v2728 = vpop.f32.mrb[0].mxu0
  %2729 = vmatprep.mubr.f32.mxu0 0.0
  %2730 = vmatmul.mubr.f32.gmra.mrb[0].mxu0 %v71
  %v2731 = vpop.f32.mrb[0].mxu0
  %v2732 = vadd.f32 0.0, %v2731
  %v2733 = vpop.f32.mrb[0].mxu0
  %2734 = vmatprep.mubr.f32.mxu0 0.0
  %2735 = vmatmul.mubr.f32.gmra.mrb[0].mxu0 %v72
  %v2736 = vpop.f32.mrb[0].mxu0
  %v2737 = vadd.f32 0.0, %v2736
  %v2738 = vpop.f32.mrb[0].mxu0
  %2739 = vmatprep.mubr.f32.mxu0 0.0
  %2740 = vmatmul.mubr.f32.gmra.mrb[0].mxu0 %v73
  %v2741 = vpop.f32.mrb[0].mxu0
  %v2742 = vadd.f32 0.0, %v2741
  %v2743 = vpop.f32.mrb[0].mxu0
  %2744 = vmatprep.mubr.f32.mxu0 0.0
  %2745 = vmatmul.mubr.f32.gmra.mrb[0].mxu0 %v74
  %v2746 = vpop.f32.mrb[0].mxu0
  %v2747 = vadd.f32 0.0, %v2746
  %v2748 = vpop.f32.mrb[0].mxu0
  %2749 = vmatprep.mubr.f32.mxu0 0.0
  %2750 = vmatmul.mubr.f32.gmra.mrb[0].mxu0 %v75
  %v2751 = vpop.f32.mrb[0].mxu0
  %v2752 = vadd.f32 0.0, %v2751
  %v2753 = vpop.f32.mrb[0].mxu0
  %2754 = vmatprep.mubr.f32.mxu0 0.0
  %2755 = vmatmul.mubr.f32.gmra.mrb[0].mxu0 %v76
  %v2756 = vpop.f32.mrb[0].mxu0
  %v2757 = vadd.f32 0.0, %v2756
  %v2758 = vpop.f32.mrb[0].mxu0
  %2759 = vmatprep.mubr.f32.mxu0 0.0
  %2760 = vmatmul.mubr.f32.gmra.mrb[0].mxu0 %v77
  %v2761 = vpop.f32.mrb[0].mxu0
  %v2762 = vadd.f32 0.0, %v2761
  %v2763 = vpop.f32.mrb[0].mxu0
  %2764 = vmatprep.mubr.f32.mxu0 0.0
  %2765 = vmatmul.mubr.f32.gmra.mrb[0].mxu0 %v78
  %v2766 = vpop.f32.mrb[0].mxu0
  %v2767 = vadd.f32 0.0, %v2766
  %v2768 = vpop.f32.mrb[0].mxu0
  %2769 = vmatprep.mubr.f32.mxu0 0.0
  %2770 = vmatmul.mubr.f32.gmra.mrb[0].mxu0 %v79
  %v2771 = vpop.f32.mrb[0].mxu0
  %v2772 = vadd.f32 0.0, %v2771
  %v2773 = vpop.f32.mrb[0].mxu0
  %2774 = vmatprep.mubr.f32.mxu0 0.0
  %2775 = vmatmul.mubr.f32.gmra.mrb[0].mxu0 %v80
  %v2776 = vpop.f32.mrb[0].mxu0
  %v2777 = vadd.f32 0.0, %v2776
  %v2778 = vpop.f32.mrb[0].mxu0
  %2779 = vmatprep.mubr.f32.mxu0 0.0
  %2780 = vmatmul.mubr.f32.gmra.mrb[0].mxu0 %v81
  %v2781 = vpop.f32.mrb[0].mxu0
  %v2782 = vadd.f32 0.0, %v2781
  %v2783 = vpop.f32.mrb[0].mxu0
  %2784 = vmatprep.mubr.f32.mxu0 0.0
  %2785 = vmatmul.mubr.f32.gmra.mrb[0].mxu0 %v82
  %v2786 = vpop.f32.mrb[0].mxu0
  %v2787 = vadd.f32 0.0, %v2786
  %v2788 = vpop.f32.mrb[0].mxu0
  %2789 = vmatprep.mubr.f32.mxu0 0.0
  %2790 = vmatmul.mubr.f32.gmra.mrb[0].mxu0 %v83
  %v2791 = vpop.f32.mrb[0].mxu0
  %v2792 = vadd.f32 0.0, %v2791
  %v2793 = vpop.f32.mrb[0].mxu0
  %2794 = vmatprep.mubr.f32.mxu0 0.0
  %2795 = vmatmul.mubr.f32.gmra.mrb[0].mxu0 %v84
  %v2796 = vpop.f32.mrb[0].mxu0
  %v2797 = vadd.f32 0.0, %v2796
  %v2798 = vpop.f32.mrb[0].mxu0
  %2799 = vmatprep.mubr.f32.mxu0 0.0
  %2800 = vmatmul.mubr.f32.gmra.mrb[0].mxu0 %v85
  %v2801 = vpop.f32.mrb[0].mxu0
  %v2802 = vadd.f32 0.0, %v2801
  %v2803 = vpop.f32.mrb[0].mxu0
  %2804 = vmatprep.mubr.f32.mxu0 0.0
  %2805 = vmatmul.mubr.f32.gmra.mrb[0].mxu0 %v86
  %v2806 = vpop.f32.mrb[0].mxu0
  %v2807 = vadd.f32 0.0, %v2806
  %v2808 = vpop.f32.mrb[0].mxu0
  %2809 = vmatprep.mubr.f32.mxu0 0.0
  %2810 = vmatmul.mubr.f32.gmra.mrb[0].mxu0 %v164
  %v2811 = vpop.f32.mrb[0].mxu0
  %v2812 = vadd.f32 0.0, %v2811
  %v2813 = vpop.f32.mrb[0].mxu0
  %2814 = vmatprep.mubr.f32.mxu0 0.0
  %2815 = vmatmul.mubr.f32.gmra.mrb[0].mxu0 %v165
  %v2816 = vpop.f32.mrb[0].mxu0
  %v2817 = vadd.f32 0.0, %v2816
  %v2818 = vpop.f32.mrb[0].mxu0
  %2819 = vmatprep.mubr.f32.mxu0 0.0
  %2820 = vmatmul.mubr.f32.gmra.mrb[0].mxu0 %v166
  %v2821 = vpop.f32.mrb[0].mxu0
  %v2822 = vadd.f32 0.0, %v2821
  %v2823 = vpop.f32.mrb[0].mxu0
  %2824 = vmatprep.mubr.f32.mxu0 0.0
  %2825 = vmatmul.mubr.f32.gmra.mrb[0].mxu0 %v167
  %v2826 = vpop.f32.mrb[0].mxu0
  %v2827 = vadd.f32 0.0, %v2826
  %v2828 = vpop.f32.mrb[0].mxu0
  %2829 = vmatprep.mubr.f32.mxu0 0.0
  %2830 = vmatmul.mubr.f32.gmra.mrb[0].mxu0 %v168
  %v2831 = vpop.f32.mrb[0].mxu0
  %v2832 = vadd.f32 0.0, %v2831
  %v2833 = vpop.f32.mrb[0].mxu0
  %2834 = vmatprep.mubr.f32.mxu0 0.0
  %2835 = vmatmul.mubr.f32.gmra.mrb[0].mxu0 %v169
  %v2836 = vpop.f32.mrb[0].mxu0
  %v2837 = vadd.f32 0.0, %v2836
  %v2838 = vpop.f32.mrb[0].mxu0
  %2839 = vmatprep.mubr.f32.mxu0 0.0
  %2840 = vmatmul.mubr.f32.gmra.mrb[0].mxu0 %v170
  %v2841 = vpop.f32.mrb[0].mxu0
  %v2842 = vadd.f32 0.0, %v2841
  %v2843 = vpop.f32.mrb[0].mxu0
  %2844 = vmatprep.mubr.f32.mxu0 0.0
  %2845 = vmatmul.mubr.f32.gmra.mrb[0].mxu0 %v171
  %v2846 = vpop.f32.mrb[0].mxu0
  %v2847 = vadd.f32 0.0, %v2846
  %v2848 = vpop.f32.mrb[0].mxu0
  %2849 = vmatprep.mubr.f32.mxu0 0.0
  %2850 = vmatmul.mubr.f32.gmra.mrb[0].mxu0 %v172
  %v2851 = vpop.f32.mrb[0].mxu0
  %v2852 = vadd.f32 0.0, %v2851
  %v2853 = vpop.f32.mrb[0].mxu0
  %2854 = vmatprep.mubr.f32.mxu0 0.0
  %2855 = vmatmul.mubr.f32.gmra.mrb[0].mxu0 %v173
  %v2856 = vpop.f32.mrb[0].mxu0
  %v2857 = vadd.f32 0.0, %v2856
  %v2858 = vpop.f32.mrb[0].mxu0
  %2859 = vmatprep.mubr.f32.mxu0 0.0
  %2860 = vmatmul.mubr.f32.gmra.mrb[0].mxu0 %v174
  %v2861 = vpop.f32.mrb[0].mxu0
  %v2862 = vadd.f32 0.0, %v2861
  %v2863 = vpop.f32.mrb[0].mxu0
  %2864 = vmatprep.mubr.f32.mxu0 0.0
  %2865 = vmatmul.mubr.f32.gmra.mrb[0].mxu0 %v175
  %v2866 = vpop.f32.mrb[0].mxu0
  %v2867 = vadd.f32 0.0, %v2866
  %v2868 = vpop.f32.mrb[0].mxu0
  %2869 = vmatprep.mubr.f32.mxu0 0.0
  %2870 = vmatmul.mubr.f32.gmra.mrb[0].mxu0 %v176
  %v2871 = vpop.f32.mrb[0].mxu0
  %v2872 = vadd.f32 0.0, %v2871
  %v2873 = vpop.f32.mrb[0].mxu0
  %2874 = vmatprep.mubr.f32.mxu0 0.0
  %2875 = vmatmul.mubr.f32.gmra.mrb[0].mxu0 %v177
  %v2876 = vpop.f32.mrb[0].mxu0
  %v2877 = vadd.f32 0.0, %v2876
  %v2878 = vpop.f32.mrb[0].mxu0
  %2879 = vmatprep.mubr.f32.mxu0 0.0
  %2880 = vmatmul.mubr.f32.gmra.mrb[0].mxu0 %v178
  %v2881 = vpop.f32.mrb[0].mxu0
  %v2882 = vadd.f32 0.0, %v2881
  %v2883 = vpop.f32.mrb[0].mxu0
  %2884 = vmatprep.mubr.f32.mxu0 0.0
  %2885 = vmatmul.mubr.f32.gmra.mrb[0].mxu0 %v179
  %v2886 = vpop.f32.mrb[0].mxu0
  %v2887 = vadd.f32 0.0, %v2886
  %v2888 = vpop.f32.mrb[0].mxu0
  %2889 = vmatprep.mubr.f32.mxu0 0.0
  %2890 = vmatmul.mubr.f32.gmra.mrb[0].mxu0 %v180
  %v2891 = vpop.f32.mrb[0].mxu0
  %v2892 = vadd.f32 0.0, %v2891
  %v2893 = vpop.f32.mrb[0].mxu0
  %2894 = vmatprep.mubr.f32.mxu0 0.0
  %2895 = vmatmul.mubr.f32.gmra.mrb[0].mxu0 %v181
  %v2896 = vpop.f32.mrb[0].mxu0
  %v2897 = vadd.f32 0.0, %v2896
  %v2898 = vpop.f32.mrb[0].mxu0
  %2899 = vmatprep.mubr.f32.mxu0 0.0
  %2900 = vmatmul.mubr.f32.gmra.mrb[0].mxu0 %v182
  %v2901 = vpop.f32.mrb[0].mxu0
  %v2902 = vadd.f32 0.0, %v2901
  %v2903 = vpop.f32.mrb[0].mxu0
  %2904 = vmatprep.mubr.f32.mxu0 0.0
  %2905 = vmatmul.mubr.f32.gmra.mrb[0].mxu0 %v183
  %v2906 = vpop.f32.mrb[0].mxu0
  %v2907 = vadd.f32 0.0, %v2906
  %v2908 = vpop.f32.mrb[0].mxu0
  %2909 = vmatprep.mubr.f32.mxu0 0.0
  %2910 = vmatmul.mubr.f32.gmra.mrb[0].mxu0 %v184
  %v2911 = vpop.f32.mrb[0].mxu0
  %v2912 = vadd.f32 0.0, %v2911
  %v2913 = vpop.f32.mrb[0].mxu0
  %2914 = vmatprep.mubr.f32.mxu0 0.0
  %2915 = vmatmul.mubr.f32.gmra.mrb[0].mxu0 %v185
  %v2916 = vpop.f32.mrb[0].mxu0
  %v2917 = vadd.f32 0.0, %v2916
  %v2918 = vpop.f32.mrb[0].mxu0
  %2919 = vmatprep.mubr.f32.mxu0 0.0
  %2920 = vmatmul.mubr.f32.gmra.mrb[0].mxu0 %v186
  %v2921 = vpop.f32.mrb[0].mxu0
  %v2922 = vadd.f32 0.0, %v2921
  %v2923 = vpop.f32.mrb[0].mxu0
  %2924 = vmatprep.mubr.f32.mxu0 0.0
  %2925 = vmatmul.mubr.f32.gmra.mrb[0].mxu0 %v187
  %v2926 = vpop.f32.mrb[0].mxu0
  %v2927 = vadd.f32 0.0, %v2926
  %v2928 = vpop.f32.mrb[0].mxu0
  %2929 = vmatprep.mubr.f32.mxu0 0.0
  %2930 = vmatmul.mubr.f32.gmra.mrb[0].mxu0 %v188
  %v2931 = vpop.f32.mrb[0].mxu0
  %v2932 = vadd.f32 0.0, %v2931
  %v2933 = vpop.f32.mrb[0].mxu0
  %2934 = vmatprep.mubr.f32.mxu0 0.0
  %2935 = vmatmul.mubr.f32.gmra.mrb[0].mxu0 %v189
  %v2936 = vpop.f32.mrb[0].mxu0
  %v2937 = vadd.f32 0.0, %v2936
  %v2938 = vpop.f32.mrb[0].mxu0
  %2939 = vmatprep.mubr.f32.mxu0 0.0
  %2940 = vmatmul.mubr.f32.gmra.mrb[0].mxu0 %v190
  %v2941 = vpop.f32.mrb[0].mxu0
  %v2942 = vadd.f32 0.0, %v2941
  %v2943 = vpop.f32.mrb[0].mxu0
  %2944 = vmatprep.mubr.f32.mxu0 0.0
  %2945 = vmatmul.mubr.f32.gmra.mrb[0].mxu0 %v191
  %v2946 = vpop.f32.mrb[0].mxu0
  %v2947 = vadd.f32 0.0, %v2946
  %v2948 = vpop.f32.mrb[0].mxu0
  %2949 = vmatprep.mubr.f32.mxu0 0.0
  %2950 = vmatmul.mubr.f32.gmra.mrb[0].mxu0 %v192
  %v2951 = vpop.f32.mrb[0].mxu0
  %v2952 = vadd.f32 0.0, %v2951
  %v2953 = vpop.f32.mrb[0].mxu0
  %2954 = vmatprep.mubr.f32.mxu0 0.0
  %2955 = vmatmul.mubr.f32.gmra.mrb[0].mxu0 %v193
  %v2956 = vpop.f32.mrb[0].mxu0
  %v2957 = vadd.f32 0.0, %v2956
  %v2958 = vpop.f32.mrb[0].mxu0
  %2959 = vmatprep.mubr.f32.mxu0 0.0
  %2960 = vmatmul.mubr.f32.gmra.mrb[0].mxu0 %v194
  %v2961 = vpop.f32.mrb[0].mxu0
  %v2962 = vadd.f32 0.0, %v2961
  %v2963 = vpop.f32.mrb[0].mxu0
  %2964 = vmatprep.mubr.f32.mxu0 0.0
  %2965 = vmatmul.mubr.f32.gmra.mrb[0].mxu0 %v195
  %v2966 = vpop.f32.mrb[0].mxu0
  %v2967 = vadd.f32 0.0, %v2966
  %v2968 = vpop.f32.mrb[0].mxu0
  %2969 = vdwg.mxu0
  %2970 = vst [vmem:[%s4] sm:$0xff] %v2652
  %2971 = vst [vmem:[%s4 + $0x8] sm:$0xff] %v2657
  %2972 = vst [vmem:[%s4 + $0x10] sm:$0xff] %v2662
  %2973 = vst [vmem:[%s4 + $0x18] sm:$0xff] %v2667
  %2974 = vst [vmem:[%s4 + $0x20] sm:$0xff] %v2672
  %2975 = vst [vmem:[%s4 + $0x28] sm:$0xff] %v2677
  %2976 = vst [vmem:[%s4 + $0x30] sm:$0xff] %v2682
  %2977 = vst [vmem:[%s4 + $0x38] sm:$0xff] %v2687
  %2978 = vst [vmem:[%s4 + $0x40] sm:$0xff] %v2692
  %2979 = vst [vmem:[%s4 + $0x48] sm:$0xff] %v2697
  %2980 = vst [vmem:[%s4 + $0x50] sm:$0xff] %v2702
  %2981 = vst [vmem:[%s4 + $0x58] sm:$0xff] %v2707
  %2982 = vst [vmem:[%s4 + $0x60] sm:$0xff] %v2712
  %2983 = vst [vmem:[%s4 + $0x68] sm:$0xff] %v2717
  %2984 = vst [vmem:[%s4 + $0x70] sm:$0xff] %v2722
  %2985 = vst [vmem:[%s4 + $0x78] sm:$0xff] %v2727
  %2986 = vst [vmem:[%s4 + $0x80] sm:$0xff] %v2732
  %2987 = vst [vmem:[%s4 + $0x88] sm:$0xff] %v2737
  %2988 = vst [vmem:[%s4 + $0x90] sm:$0xff] %v2742
  %2989 = vst [vmem:[%s4 + $0x98] sm:$0xff] %v2747
  %2990 = vst [vmem:[%s4 + $0xa0] sm:$0xff] %v2752
  %2991 = vst [vmem:[%s4 + $0xa8] sm:$0xff] %v2757
  %2992 = vst [vmem:[%s4 + $0xb0] sm:$0xff] %v2762
  %2993 = vst [vmem:[%s4 + $0xb8] sm:$0xff] %v2767
  %2994 = vst [vmem:[%s4 + $0xc0] sm:$0xff] %v2772
  %2995 = vst [vmem:[%s4 + $0xc8] sm:$0xff] %v2777
  %2996 = vst [vmem:[%s4 + $0xd0] sm:$0xff] %v2782
  %2997 = vst [vmem:[%s4 + $0xd8] sm:$0xff] %v2787
  %2998 = vst [vmem:[%s4 + $0xe0] sm:$0xff] %v2792
  %2999 = vst [vmem:[%s4 + $0xe8] sm:$0xff] %v2797
  %3000 = vst [vmem:[%s4 + $0xf0] sm:$0xff] %v2802
  %3001 = vst [vmem:[%s4 + $0xf8] sm:$0xff] %v2807
  %3002 = vst [vmem:[%s4 + $0x100] sm:$0xff] %v2812
  %3003 = vst [vmem:[%s4 + $0x108] sm:$0xff] %v2817
  %3004 = vst [vmem:[%s4 + $0x110] sm:$0xff] %v2822
  %3005 = vst [vmem:[%s4 + $0x118] sm:$0xff] %v2827
  %3006 = vst [vmem:[%s4 + $0x120] sm:$0xff] %v2832
  %3007 = vst [vmem:[%s4 + $0x128] sm:$0xff] %v2837
  %3008 = vst [vmem:[%s4 + $0x130] sm:$0xff] %v2842
  %3009 = vst [vmem:[%s4 + $0x138] sm:$0xff] %v2847
  %3010 = vst [vmem:[%s4 + $0x140] sm:$0xff] %v2852
  %3011 = vst [vmem:[%s4 + $0x148] sm:$0xff] %v2857
  %3012 = vst [vmem:[%s4 + $0x150] sm:$0xff] %v2862
  %3013 = vst [vmem:[%s4 + $0x158] sm:$0xff] %v2867
  %3014 = vst [vmem:[%s4 + $0x160] sm:$0xff] %v2872
  %3015 = vst [vmem:[%s4 + $0x168] sm:$0xff] %v2877
  %3016 = vst [vmem:[%s4 + $0x170] sm:$0xff] %v2882
  %3017 = vst [vmem:[%s4 + $0x178] sm:$0xff] %v2887
  %3018 = vst [vmem:[%s4 + $0x180] sm:$0xff] %v2892
  %3019 = vst [vmem:[%s4 + $0x188] sm:$0xff] %v2897
  %3020 = vst [vmem:[%s4 + $0x190] sm:$0xff] %v2902
  %3021 = vst [vmem:[%s4 + $0x198] sm:$0xff] %v2907
  %3022 = vst [vmem:[%s4 + $0x1a0] sm:$0xff] %v2912
  %3023 = vst [vmem:[%s4 + $0x1a8] sm:$0xff] %v2917
  %3024 = vst [vmem:[%s4 + $0x1b0] sm:$0xff] %v2922
  %3025 = vst [vmem:[%s4 + $0x1b8] sm:$0xff] %v2927
  %3026 = vst [vmem:[%s4 + $0x1c0] sm:$0xff] %v2932
  %3027 = vst [vmem:[%s4 + $0x1c8] sm:$0xff] %v2937
  %3028 = vst [vmem:[%s4 + $0x1d0] sm:$0xff] %v2942
  %3029 = vst [vmem:[%s4 + $0x1d8] sm:$0xff] %v2947
  %3030 = vst [vmem:[%s4 + $0x1e0] sm:$0xff] %v2952
  %3031 = vst [vmem:[%s4 + $0x1e8] sm:$0xff] %v2957
  %3032 = vst [vmem:[%s4 + $0x1f0] sm:$0xff] %v2962
  %3033 = vst [vmem:[%s4 + $0x1f8] sm:$0xff] %v2967
  %v3034 = vadd.f32 %v2652, %v2657
  %v3035 = vadd.f32 %v3034, %v2662
  %v3036 = vadd.f32 %v3035, %v2667
  %v3037 = vadd.f32 %v3036, %v2672
  %v3038 = vadd.f32 %v3037, %v2677
  %v3039 = vadd.f32 %v3038, %v2682
  %v3040 = vadd.f32 %v3039, %v2687
  %v3041 = vadd.f32 %v3040, %v2692
  %v3042 = vadd.f32 %v3041, %v2697
  %v3043 = vadd.f32 %v3042, %v2702
  %v3044 = vadd.f32 %v3043, %v2707
  %v3045 = vadd.f32 %v3044, %v2712
  %v3046 = vadd.f32 %v3045, %v2717
  %v3047 = vadd.f32 %v3046, %v2722
  %v3048 = vadd.f32 %v3047, %v2727
  %v3049 = vadd.f32 %v3048, %v2732
  %v3050 = vadd.f32 %v3049, %v2737
  %v3051 = vadd.f32 %v3050, %v2742
  %v3052 = vadd.f32 %v3051, %v2747
  %v3053 = vadd.f32 %v3052, %v2752
  %v3054 = vadd.f32 %v3053, %v2757
  %v3055 = vadd.f32 %v3054, %v2762
  %v3056 = vadd.f32 %v3055, %v2767
  %v3057 = vadd.f32 %v3056, %v2772
  %v3058 = vadd.f32 %v3057, %v2777
  %v3059 = vadd.f32 %v3058, %v2782
  %v3060 = vadd.f32 %v3059, %v2787
  %v3061 = vadd.f32 %v3060, %v2792
  %v3062 = vadd.f32 %v3061, %v2797
  %v3063 = vadd.f32 %v3062, %v2802
  %v3064 = vadd.f32 %v3063, %v2807
  %v3065 = vadd.f32 %v3064, %v2812
  %v3066 = vadd.f32 %v3065, %v2817
  %v3067 = vadd.f32 %v3066, %v2822
  %v3068 = vadd.f32 %v3067, %v2827
  %v3069 = vadd.f32 %v3068, %v2832
  %v3070 = vadd.f32 %v3069, %v2837
  %v3071 = vadd.f32 %v3070, %v2842
  %v3072 = vadd.f32 %v3071, %v2847
  %v3073 = vadd.f32 %v3072, %v2852
  %v3074 = vadd.f32 %v3073, %v2857
  %v3075 = vadd.f32 %v3074, %v2862
  %v3076 = vadd.f32 %v3075, %v2867
  %v3077 = vadd.f32 %v3076, %v2872
  %v3078 = vadd.f32 %v3077, %v2877
  %v3079 = vadd.f32 %v3078, %v2882
  %v3080 = vadd.f32 %v3079, %v2887
  %v3081 = vadd.f32 %v3080, %v2892
  %v3082 = vadd.f32 %v3081, %v2897
  %v3083 = vadd.f32 %v3082, %v2902
  %v3084 = vadd.f32 %v3083, %v2907
  %v3085 = vadd.f32 %v3084, %v2912
  %v3086 = vadd.f32 %v3085, %v2917
  %v3087 = vadd.f32 %v3086, %v2922
  %v3088 = vadd.f32 %v3087, %v2927
  %v3089 = vadd.f32 %v3088, %v2932
  %v3090 = vadd.f32 %v3089, %v2937
  %v3091 = vadd.f32 %v3090, %v2942
  %v3092 = vadd.f32 %v3091, %v2947
  %v3093 = vadd.f32 %v3092, %v2952
  %v3094 = vadd.f32 %v3093, %v2957
  %v3095 = vadd.f32 %v3094, %v2962
  %v3096 = vadd.f32 %v3095, %v2967
  %v3097 = vrot.slane %v3096, 4
  %v3098 = vadd.f32 %v3096, %v3097
  %v3099 = vrot.slane %v3098, 2
  %v3100 = vadd.f32 %v3098, %v3099
  %v3101 = vrot.slane %v3100, 1
  %v3102 = vadd.f32 %v3100, %v3101
  %v3103 = vmul.f32 %v2652, %v2652
  %v3104 = vmul.f32 %v2657, %v2657
  %v3105 = vmul.f32 %v2662, %v2662
  %v3106 = vmul.f32 %v2667, %v2667
  %v3107 = vmul.f32 %v2672, %v2672
  %v3108 = vmul.f32 %v2677, %v2677
  %v3109 = vmul.f32 %v2682, %v2682
  %v3110 = vmul.f32 %v2687, %v2687
  %v3111 = vmul.f32 %v2692, %v2692
  %v3112 = vmul.f32 %v2697, %v2697
  %v3113 = vmul.f32 %v2702, %v2702
  %v3114 = vmul.f32 %v2707, %v2707
  %v3115 = vmul.f32 %v2712, %v2712
  %v3116 = vmul.f32 %v2717, %v2717
  %v3117 = vmul.f32 %v2722, %v2722
  %v3118 = vmul.f32 %v2727, %v2727
  %v3119 = vmul.f32 %v2732, %v2732
  %v3120 = vmul.f32 %v2737, %v2737
  %v3121 = vmul.f32 %v2742, %v2742
  %v3122 = vmul.f32 %v2747, %v2747
  %v3123 = vmul.f32 %v2752, %v2752
  %v3124 = vmul.f32 %v2757, %v2757
  %v3125 = vmul.f32 %v2762, %v2762
  %v3126 = vmul.f32 %v2767, %v2767
  %v3127 = vmul.f32 %v2772, %v2772
  %v3128 = vmul.f32 %v2777, %v2777
  %v3129 = vmul.f32 %v2782, %v2782
  %v3130 = vmul.f32 %v2787, %v2787
  %v3131 = vmul.f32 %v2792, %v2792
  %v3132 = vmul.f32 %v2797, %v2797
  %v3133 = vmul.f32 %v2802, %v2802
  %v3134 = vmul.f32 %v2807, %v2807
  %v3135 = vmul.f32 %v2812, %v2812
  %v3136 = vmul.f32 %v2817, %v2817
  %v3137 = vmul.f32 %v2822, %v2822
  %v3138 = vmul.f32 %v2827, %v2827
  %v3139 = vmul.f32 %v2832, %v2832
  %v3140 = vmul.f32 %v2837, %v2837
  %v3141 = vmul.f32 %v2842, %v2842
  %v3142 = vmul.f32 %v2847, %v2847
  %v3143 = vmul.f32 %v2852, %v2852
  %v3144 = vmul.f32 %v2857, %v2857
  %v3145 = vmul.f32 %v2862, %v2862
  %v3146 = vmul.f32 %v2867, %v2867
  %v3147 = vmul.f32 %v2872, %v2872
  %v3148 = vmul.f32 %v2877, %v2877
  %v3149 = vmul.f32 %v2882, %v2882
  %v3150 = vmul.f32 %v2887, %v2887
  %v3151 = vmul.f32 %v2892, %v2892
  %v3152 = vmul.f32 %v2897, %v2897
  %v3153 = vmul.f32 %v2902, %v2902
  %v3154 = vmul.f32 %v2907, %v2907
  %v3155 = vmul.f32 %v2912, %v2912
  %v3156 = vmul.f32 %v2917, %v2917
  %v3157 = vmul.f32 %v2922, %v2922
  %v3158 = vmul.f32 %v2927, %v2927
  %v3159 = vmul.f32 %v2932, %v2932
  %v3160 = vmul.f32 %v2937, %v2937
  %v3161 = vmul.f32 %v2942, %v2942
  %v3162 = vmul.f32 %v2947, %v2947
  %v3163 = vmul.f32 %v2952, %v2952
  %v3164 = vmul.f32 %v2957, %v2957
  %v3165 = vmul.f32 %v2962, %v2962
  %v3166 = vmul.f32 %v2967, %v2967
  %v3167 = vadd.f32 %v3103, %v3104
  %v3168 = vadd.f32 %v3167, %v3105
  %v3169 = vadd.f32 %v3168, %v3106
  %v3170 = vadd.f32 %v3169, %v3107
  %v3171 = vadd.f32 %v3170, %v3108
  %v3172 = vadd.f32 %v3171, %v3109
  %v3173 = vadd.f32 %v3172, %v3110
  %v3174 = vadd.f32 %v3173, %v3111
  %v3175 = vadd.f32 %v3174, %v3112
  %v3176 = vadd.f32 %v3175, %v3113
  %v3177 = vadd.f32 %v3176, %v3114
  %v3178 = vadd.f32 %v3177, %v3115
  %v3179 = vadd.f32 %v3178, %v3116
  %v3180 = vadd.f32 %v3179, %v3117
  %v3181 = vadd.f32 %v3180, %v3118
  %v3182 = vadd.f32 %v3181, %v3119
  %v3183 = vadd.f32 %v3182, %v3120
  %v3184 = vadd.f32 %v3183, %v3121
  %v3185 = vadd.f32 %v3184, %v3122
  %v3186 = vadd.f32 %v3185, %v3123
  %v3187 = vadd.f32 %v3186, %v3124
  %v3188 = vadd.f32 %v3187, %v3125
  %v3189 = vadd.f32 %v3188, %v3126
  %v3190 = vadd.f32 %v3189, %v3127
  %v3191 = vadd.f32 %v3190, %v3128
  %v3192 = vadd.f32 %v3191, %v3129
  %v3193 = vadd.f32 %v3192, %v3130
  %v3194 = vadd.f32 %v3193, %v3131
  %v3195 = vadd.f32 %v3194, %v3132
  %v3196 = vadd.f32 %v3195, %v3133
  %v3197 = vadd.f32 %v3196, %v3134
  %v3198 = vadd.f32 %v3197, %v3135
  %v3199 = vadd.f32 %v3198, %v3136
  %v3200 = vadd.f32 %v3199, %v3137
  %v3201 = vadd.f32 %v3200, %v3138
  %v3202 = vadd.f32 %v3201, %v3139
  %v3203 = vadd.f32 %v3202, %v3140
  %v3204 = vadd.f32 %v3203, %v3141
  %v3205 = vadd.f32 %v3204, %v3142
  %v3206 = vadd.f32 %v3205, %v3143
  %v3207 = vadd.f32 %v3206, %v3144
  %v3208 = vadd.f32 %v3207, %v3145
  %v3209 = vadd.f32 %v3208, %v3146
  %v3210 = vadd.f32 %v3209, %v3147
  %v3211 = vadd.f32 %v3210, %v3148
  %v3212 = vadd.f32 %v3211, %v3149
  %v3213 = vadd.f32 %v3212, %v3150
  %v3214 = vadd.f32 %v3213, %v3151
  %v3215 = vadd.f32 %v3214, %v3152
  %v3216 = vadd.f32 %v3215, %v3153
  %v3217 = vadd.f32 %v3216, %v3154
  %v3218 = vadd.f32 %v3217, %v3155
  %v3219 = vadd.f32 %v3218, %v3156
  %v3220 = vadd.f32 %v3219, %v3157
  %v3221 = vadd.f32 %v3220, %v3158
  %v3222 = vadd.f32 %v3221, %v3159
  %v3223 = vadd.f32 %v3222, %v3160
  %v3224 = vadd.f32 %v3223, %v3161
  %v3225 = vadd.f32 %v3224, %v3162
  %v3226 = vadd.f32 %v3225, %v3163
  %v3227 = vadd.f32 %v3226, %v3164
  %v3228 = vadd.f32 %v3227, %v3165
  %v3229 = vadd.f32 %v3228, %v3166
  %v3230 = vrot.slane %v3229, 4
  %v3231 = vadd.f32 %v3229, %v3230
  %v3232 = vrot.slane %v3231, 2
  %v3233 = vadd.f32 %v3231, %v3232
  %v3234 = vrot.slane %v3233, 1
  %v3235 = vadd.f32 %v3233, %v3234
  %vm3236 = vcmask 1040384
  %v3237 = vsel %vm3236, %v2435, %v2568
  %vm3238 = vcmask 1041408
  %v3239 = vsel %vm3238, %v3237, %v3102
  %vm3240 = vcmask 1042432
  %v3241 = vsel %vm3240, %v3239, %v3235
  %3242 = vst [vmem:[%s5] sm:$0xf] %v3241
  // Predicated region
  $region14: #{basic_block_forward.3} parent=0 // pred_check
    _
  $region15: #{basic_block_forward.3} parent=0 // pred_check_branch
    %3244 = sbr.rel (0) target = $region17
  $region16: #{basic_block_forward.3} parent=0 // pred_region
    _
  $region17: #{basic_block_forward.3} parent=0 // pred_fallthru
    _
  // Predicated region
  $region18: #{basic_block_forward.3} parent=0 // pred_check
    _
  $region19: #{basic_block_forward.3} parent=0 // pred_check_branch
    %3246 = sbr.rel (0) target = $region21
  $region20: #{basic_block_forward.3} parent=0 // pred_region
    _
  $region21: #{basic_block_forward.3} parent=0 // pred_fallthru
    _
  // Predicated region
  $region22: #{basic_block_forward.3} parent=0 // pred_check
    _
  $region23: #{basic_block_forward.3} parent=0 // pred_check_branch
    %3248 = sbr.rel (0) target = $region25
  $region24: #{basic_block_forward.3} parent=0 // pred_region
    _
  $region25: #{basic_block_forward.3} parent=0 // pred_fallthru
    _
  // Predicated region
  $region26: #{basic_block_forward.3} parent=0 // pred_check
    _
  $region27: #{basic_block_forward.3} parent=0 // pred_check_branch
    %3250 = sbr.rel (0) target = $region29
  $region28: #{basic_block_forward.3} parent=0 // pred_region
    _
  $region29: #{basic_block_forward.3} parent=0 // pred_fallthru
    _
  // Predicated region
  $region30: #{basic_block_forward.3} parent=0 // pred_check
    _
  $region31: #{basic_block_forward.3} parent=0 // pred_check_branch
    %3252 = sbr.rel (0) target = $region33
  $region32: #{basic_block_forward.3} parent=0 // pred_region
    _
  $region33: #{basic_block_forward.3} parent=0 // pred_fallthru
    _
  // Predicated region
  $region34: #{basic_block_forward.3} parent=0 // pred_check
    _
  $region35: #{basic_block_forward.3} parent=0 // pred_check_branch
    %3254 = sbr.rel (0) target = $region37
  $region36: #{basic_block_forward.3} parent=0 // pred_region
    _
  $region37: #{basic_block_forward.3} parent=0 // pred_fallthru
    _

// kernel: basic_block_forward.4
$region0: #{basic_block_forward.4}
  #allocation0 [shape = 'u32[]', space=smem, size = 0x4, offset = 0x4, fixed_abs, tag = 'smem constant byte address 0x4 - core index']
  #allocation1 [shape = 'u32[144,128]{1,0:T(1,128)}', space=vmem, size = 0x12000, scoped, tag = 'internal scratch']
  #allocation2 [shape = 'f32[2,18,18,128]{3,2,1,0:T(8,128)}', space=vmem, size = 0x6c000, scoped, tag = 'scratch operand']
  %s0 = inlined_call_operand.vmem [shape: f32[2,16,16,128], index: 0, kind: input, shape index: {}]
  %s1 = inlined_call_operand.vmem [shape: f32[1152,128], index: 1, kind: input, shape index: {}]
  %s2 = inlined_call_operand.vmem [shape: f32[1,128], index: 2, kind: input, shape index: {}]
  %s3 = inlined_call_operand.vmem [shape: f32[1,128], index: 3, kind: input, shape index: {}]
  %s4 = inlined_call_operand.vmem [shape: f32[2,16,16,128], index: 4, kind: output, shape index: {0}]
  %s5 = inlined_call_operand.vmem [shape: f32[1,2,128], index: 5, kind: output, shape index: {1}]
  %6 = xla_tuple %s4, %s5
  %s7 = sld [smem:[#allocation0]]
  $region34: #{basic_block_forward.4} parent=0
    _
  %s9 = ssub.s32 1, %s7
  %s10 = scalar_select 0, %s9, %s7
  // Predicated region
  $region2: #{basic_block_forward.4} parent=0 // pred_check
    _
  $region3: #{basic_block_forward.4} parent=0 // pred_check_branch
    %12 = sbr.rel (0) target = $region5
  $region4: #{basic_block_forward.4} parent=0 // pred_region
    _
  $region5: #{basic_block_forward.4} parent=0 // pred_fallthru
    _
  // Predicated region
  $region6: #{basic_block_forward.4} parent=0 // pred_check
    _
  $region7: #{basic_block_forward.4} parent=0 // pred_check_branch
    %14 = sbr.rel (0) target = $region9
  $region8: #{basic_block_forward.4} parent=0 // pred_region
    _
  $region9: #{basic_block_forward.4} parent=0 // pred_fallthru
    _
  // Predicated region
  $region10: #{basic_block_forward.4} parent=0 // pred_check
    _
  $region11: #{basic_block_forward.4} parent=0 // pred_check_branch
    %16 = sbr.rel (0) target = $region13
  $region12: #{basic_block_forward.4} parent=0 // pred_region
    _
  $region13: #{basic_block_forward.4} parent=0 // pred_fallthru
    _
  // Predicated region
  $region14: #{basic_block_forward.4} parent=0 // pred_check
    _
  $region15: #{basic_block_forward.4} parent=0 // pred_check_branch
    %18 = sbr.rel (0) target = $region17
  $region16: #{basic_block_forward.4} parent=0 // pred_region
    _
  $region17: #{basic_block_forward.4} parent=0 // pred_fallthru
    _
  %19 = vst [vmem:[#allocation2] sm:$0xff] 0.0
  %20 = vst [vmem:[#allocation2 + $0x8] sm:$0xff] 0.0
  %21 = vst [vmem:[#allocation2 + $0x10] sm:$0x3] 0.0
  %22 = vst [vmem:[#allocation2 + $0x1b0] sm:$0xff] 0.0
  %23 = vst [vmem:[#allocation2 + $0x1b8] sm:$0xff] 0.0
  %24 = vst [vmem:[#allocation2 + $0x1c0] sm:$0x3] 0.0
  %s25 = scalar_lea.vmem [#allocation2], 408
  %26 = vst [vmem:[%s25] sm:$0xff] 0.0
  %27 = vst [vmem:[%s25 + $0x8] sm:$0xff] 0.0
  %28 = vst [vmem:[%s25 + $0x10] sm:$0x3] 0.0
  %29 = vst [vmem:[%s25 + $0x1b0] sm:$0xff] 0.0
  %30 = vst [vmem:[%s25 + $0x1b8] sm:$0xff] 0.0
  %31 = vst [vmem:[%s25 + $0x1c0] sm:$0x3] 0.0
  %32 = vst [vmem:[#allocation2] sm:$0x1] 0.0
  %33 = vst [vmem:[#allocation2 + $0x18] sm:$0x1] 0.0
  %34 = vst [vmem:[#allocation2 + $0x30] sm:$0x1] 0.0
  %35 = vst [vmem:[#allocation2 + $0x48] sm:$0x1] 0.0
  %36 = vst [vmem:[#allocation2 + $0x60] sm:$0x1] 0.0
  %37 = vst [vmem:[#allocation2 + $0x78] sm:$0x1] 0.0
  %38 = vst [vmem:[#allocation2 + $0x90] sm:$0x1] 0.0
  %39 = vst [vmem:[#allocation2 + $0xa8] sm:$0x1] 0.0
  %40 = vst [vmem:[#allocation2 + $0xc0] sm:$0x1] 0.0
  %41 = vst [vmem:[#allocation2 + $0xd8] sm:$0x1] 0.0
  %42 = vst [vmem:[#allocation2 + $0xf0] sm:$0x1] 0.0
  %43 = vst [vmem:[#allocation2 + $0x108] sm:$0x1] 0.0
  %44 = vst [vmem:[#allocation2 + $0x120] sm:$0x1] 0.0
  %45 = vst [vmem:[#allocation2 + $0x138] sm:$0x1] 0.0
  %46 = vst [vmem:[#allocation2 + $0x150] sm:$0x1] 0.0
  %47 = vst [vmem:[#allocation2 + $0x168] sm:$0x1] 0.0
  %48 = vst [vmem:[#allocation2 + $0x180] sm:$0x1] 0.0
  %49 = vst [vmem:[#allocation2 + $0x198] sm:$0x1] 0.0
  %50 = vst [vmem:[#allocation2 + $0x1b0] sm:$0x1] 0.0
  %51 = vst [vmem:[#allocation2 + $0x1c8] sm:$0x1] 0.0
  %52 = vst [vmem:[#allocation2 + $0x1e0] sm:$0x1] 0.0
  %53 = vst [vmem:[#allocation2 + $0x1f8] sm:$0x1] 0.0
  %54 = vst [vmem:[#allocation2 + $0x210] sm:$0x1] 0.0
  %55 = vst [vmem:[#allocation2 + $0x228] sm:$0x1] 0.0
  %56 = vst [vmem:[#allocation2 + $0x240] sm:$0x1] 0.0
  %57 = vst [vmem:[#allocation2 + $0x258] sm:$0x1] 0.0
  %58 = vst [vmem:[#allocation2 + $0x270] sm:$0x1] 0.0
  %59 = vst [vmem:[#allocation2 + $0x288] sm:$0x1] 0.0
  %60 = vst [vmem:[#allocation2 + $0x2a0] sm:$0x1] 0.0
  %61 = vst [vmem:[#allocation2 + $0x2b8] sm:$0x1] 0.0
  %62 = vst [vmem:[#allocation2 + $0x2d0] sm:$0x1] 0.0
  %63 = vst [vmem:[#allocation2 + $0x2e8] sm:$0x1] 0.0
  %64 = vst [vmem:[#allocation2 + $0x300] sm:$0x1] 0.0
  %65 = vst [vmem:[#allocation2 + $0x318] sm:$0x1] 0.0
  %66 = vst [vmem:[#allocation2 + $0x330] sm:$0x1] 0.0
  %67 = vst [vmem:[#allocation2 + $0x348] sm:$0x1] 0.0
  %68 = vst [vmem:[#allocation2 + $0x11] sm:$0x1] 0.0
  %69 = vst [vmem:[#allocation2 + $0x29] sm:$0x1] 0.0
  %70 = vst [vmem:[#allocation2 + $0x41] sm:$0x1] 0.0
  %71 = vst [vmem:[#allocation2 + $0x59] sm:$0x1] 0.0
  %72 = vst [vmem:[#allocation2 + $0x71] sm:$0x1] 0.0
  %73 = vst [vmem:[#allocation2 + $0x89] sm:$0x1] 0.0
  %74 = vst [vmem:[#allocation2 + $0xa1] sm:$0x1] 0.0
  %75 = vst [vmem:[#allocation2 + $0xb9] sm:$0x1] 0.0
  %76 = vst [vmem:[#allocation2 + $0xd1] sm:$0x1] 0.0
  %77 = vst [vmem:[#allocation2 + $0xe9] sm:$0x1] 0.0
  %78 = vst [vmem:[#allocation2 + $0x101] sm:$0x1] 0.0
  %79 = vst [vmem:[#allocation2 + $0x119] sm:$0x1] 0.0
  %80 = vst [vmem:[#allocation2 + $0x131] sm:$0x1] 0.0
  %81 = vst [vmem:[#allocation2 + $0x149] sm:$0x1] 0.0
  %82 = vst [vmem:[#allocation2 + $0x161] sm:$0x1] 0.0
  %83 = vst [vmem:[#allocation2 + $0x179] sm:$0x1] 0.0
  %84 = vst [vmem:[#allocation2 + $0x191] sm:$0x1] 0.0
  %85 = vst [vmem:[#allocation2 + $0x1a9] sm:$0x1] 0.0
  %86 = vst [vmem:[#allocation2 + $0x1c1] sm:$0x1] 0.0
  %87 = vst [vmem:[#allocation2 + $0x1d9] sm:$0x1] 0.0
  %88 = vst [vmem:[#allocation2 + $0x1f1] sm:$0x1] 0.0
  %89 = vst [vmem:[#allocation2 + $0x209] sm:$0x1] 0.0
  %90 = vst [vmem:[#allocation2 + $0x221] sm:$0x1] 0.0
  %91 = vst [vmem:[#allocation2 + $0x239] sm:$0x1] 0.0
  %92 = vst [vmem:[#allocation2 + $0x251] sm:$0x1] 0.0
  %93 = vst [vmem:[#allocation2 + $0x269] sm:$0x1] 0.0
  %94 = vst [vmem:[#allocation2 + $0x281] sm:$0x1] 0.0
  %95 = vst [vmem:[#allocation2 + $0x299] sm:$0x1] 0.0
  %96 = vst [vmem:[#allocation2 + $0x2b1] sm:$0x1] 0.0
  %97 = vst [vmem:[#allocation2 + $0x2c9] sm:$0x1] 0.0
  %98 = vst [vmem:[#allocation2 + $0x2e1] sm:$0x1] 0.0
  %99 = vst [vmem:[#allocation2 + $0x2f9] sm:$0x1] 0.0
  %100 = vst [vmem:[#allocation2 + $0x311] sm:$0x1] 0.0
  %101 = vst [vmem:[#allocation2 + $0x329] sm:$0x1] 0.0
  %102 = vst [vmem:[#allocation2 + $0x341] sm:$0x1] 0.0
  %103 = vst [vmem:[#allocation2 + $0x359] sm:$0x1] 0.0
  %v104 = vld [vmem:[%s0] sm:$0xff]
  %v105 = vld [vmem:[%s0 + $0x8] sm:$0xff]
  %v106 = vld [vmem:[%s0 + $0x10] sm:$0xff]
  %v107 = vld [vmem:[%s0 + $0x18] sm:$0xff]
  %v108 = vld [vmem:[%s0 + $0x20] sm:$0xff]
  %v109 = vld [vmem:[%s0 + $0x28] sm:$0xff]
  %v110 = vld [vmem:[%s0 + $0x30] sm:$0xff]
  %v111 = vld [vmem:[%s0 + $0x38] sm:$0xff]
  %v112 = vld [vmem:[%s0 + $0x40] sm:$0xff]
  %v113 = vld [vmem:[%s0 + $0x48] sm:$0xff]
  %v114 = vld [vmem:[%s0 + $0x50] sm:$0xff]
  %v115 = vld [vmem:[%s0 + $0x58] sm:$0xff]
  %v116 = vld [vmem:[%s0 + $0x60] sm:$0xff]
  %v117 = vld [vmem:[%s0 + $0x68] sm:$0xff]
  %v118 = vld [vmem:[%s0 + $0x70] sm:$0xff]
  %v119 = vld [vmem:[%s0 + $0x78] sm:$0xff]
  %v120 = vld [vmem:[%s0 + $0x80] sm:$0xff]
  %v121 = vld [vmem:[%s0 + $0x88] sm:$0xff]
  %v122 = vld [vmem:[%s0 + $0x90] sm:$0xff]
  %v123 = vld [vmem:[%s0 + $0x98] sm:$0xff]
  %v124 = vld [vmem:[%s0 + $0xa0] sm:$0xff]
  %v125 = vld [vmem:[%s0 + $0xa8] sm:$0xff]
  %v126 = vld [vmem:[%s0 + $0xb0] sm:$0xff]
  %v127 = vld [vmem:[%s0 + $0xb8] sm:$0xff]
  %v128 = vld [vmem:[%s0 + $0xc0] sm:$0xff]
  %v129 = vld [vmem:[%s0 + $0xc8] sm:$0xff]
  %v130 = vld [vmem:[%s0 + $0xd0] sm:$0xff]
  %v131 = vld [vmem:[%s0 + $0xd8] sm:$0xff]
  %v132 = vld [vmem:[%s0 + $0xe0] sm:$0xff]
  %v133 = vld [vmem:[%s0 + $0xe8] sm:$0xff]
  %v134 = vld [vmem:[%s0 + $0xf0] sm:$0xff]
  %v135 = vld [vmem:[%s0 + $0xf8] sm:$0xff]
  %v136 = vld [vmem:[%s0 + $0x100] sm:$0xff]
  %v137 = vld [vmem:[%s0 + $0x108] sm:$0xff]
  %v138 = vld [vmem:[%s0 + $0x110] sm:$0xff]
  %v139 = vld [vmem:[%s0 + $0x118] sm:$0xff]
  %v140 = vld [vmem:[%s0 + $0x120] sm:$0xff]
  %v141 = vld [vmem:[%s0 + $0x128] sm:$0xff]
  %v142 = vld [vmem:[%s0 + $0x130] sm:$0xff]
  %v143 = vld [vmem:[%s0 + $0x138] sm:$0xff]
  %v144 = vld [vmem:[%s0 + $0x140] sm:$0xff]
  %v145 = vld [vmem:[%s0 + $0x148] sm:$0xff]
  %v146 = vld [vmem:[%s0 + $0x150] sm:$0xff]
  %v147 = vld [vmem:[%s0 + $0x158] sm:$0xff]
  %v148 = vld [vmem:[%s0 + $0x160] sm:$0xff]
  %v149 = vld [vmem:[%s0 + $0x168] sm:$0xff]
  %v150 = vld [vmem:[%s0 + $0x170] sm:$0xff]
  %v151 = vld [vmem:[%s0 + $0x178] sm:$0xff]
  %v152 = vld [vmem:[%s0 + $0x180] sm:$0xff]
  %v153 = vld [vmem:[%s0 + $0x188] sm:$0xff]
  %v154 = vld [vmem:[%s0 + $0x190] sm:$0xff]
  %v155 = vld [vmem:[%s0 + $0x198] sm:$0xff]
  %v156 = vld [vmem:[%s0 + $0x1a0] sm:$0xff]
  %v157 = vld [vmem:[%s0 + $0x1a8] sm:$0xff]
  %v158 = vld [vmem:[%s0 + $0x1b0] sm:$0xff]
  %v159 = vld [vmem:[%s0 + $0x1b8] sm:$0xff]
  %v160 = vld [vmem:[%s0 + $0x1c0] sm:$0xff]
  %v161 = vld [vmem:[%s0 + $0x1c8] sm:$0xff]
  %v162 = vld [vmem:[%s0 + $0x1d0] sm:$0xff]
  %v163 = vld [vmem:[%s0 + $0x1d8] sm:$0xff]
  %v164 = vld [vmem:[%s0 + $0x1e0] sm:$0xff]
  %v165 = vld [vmem:[%s0 + $0x1e8] sm:$0xff]
  %v166 = vld [vmem:[%s0 + $0x1f0] sm:$0xff]
  %v167 = vld [vmem:[%s0 + $0x1f8] sm:$0xff]
  %v168 = vld [vmem:[%s2] sm:$0x1]
  %v170 = vlaneseq
  %v171 = vshrl.u32 %v170, 7
  %v172 = vsub.s32 0, %v171
  %v173 = vrot.slane %v168, %v172
  %v175 = vmul.f32 %v104, %v173
  %v176 = vmul.f32 %v105, %v173
  %v177 = vmul.f32 %v106, %v173
  %v178 = vmul.f32 %v107, %v173
  %v179 = vmul.f32 %v108, %v173
  %v180 = vmul.f32 %v109, %v173
  %v181 = vmul.f32 %v110, %v173
  %v182 = vmul.f32 %v111, %v173
  %v183 = vmul.f32 %v112, %v173
  %v184 = vmul.f32 %v113, %v173
  %v185 = vmul.f32 %v114, %v173
  %v186 = vmul.f32 %v115, %v173
  %v187 = vmul.f32 %v116, %v173
  %v188 = vmul.f32 %v117, %v173
  %v189 = vmul.f32 %v118, %v173
  %v190 = vmul.f32 %v119, %v173
  %v191 = vmul.f32 %v120, %v173
  %v192 = vmul.f32 %v121, %v173
  %v193 = vmul.f32 %v122, %v173
  %v194 = vmul.f32 %v123, %v173
  %v195 = vmul.f32 %v124, %v173
  %v196 = vmul.f32 %v125, %v173
  %v197 = vmul.f32 %v126, %v173
  %v198 = vmul.f32 %v127, %v173
  %v199 = vmul.f32 %v128, %v173
  %v200 = vmul.f32 %v129, %v173
  %v201 = vmul.f32 %v130, %v173
  %v202 = vmul.f32 %v131, %v173
  %v203 = vmul.f32 %v132, %v173
  %v204 = vmul.f32 %v133, %v173
  %v205 = vmul.f32 %v134, %v173
  %v206 = vmul.f32 %v135, %v173
  %v207 = vmul.f32 %v136, %v173
  %v208 = vmul.f32 %v137, %v173
  %v209 = vmul.f32 %v138, %v173
  %v210 = vmul.f32 %v139, %v173
  %v211 = vmul.f32 %v140, %v173
  %v212 = vmul.f32 %v141, %v173
  %v213 = vmul.f32 %v142, %v173
  %v214 = vmul.f32 %v143, %v173
  %v215 = vmul.f32 %v144, %v173
  %v216 = vmul.f32 %v145, %v173
  %v217 = vmul.f32 %v146, %v173
  %v218 = vmul.f32 %v147, %v173
  %v219 = vmul.f32 %v148, %v173
  %v220 = vmul.f32 %v149, %v173
  %v221 = vmul.f32 %v150, %v173
  %v222 = vmul.f32 %v151, %v173
  %v223 = vmul.f32 %v152, %v173
  %v224 = vmul.f32 %v153, %v173
  %v225 = vmul.f32 %v154, %v173
  %v226 = vmul.f32 %v155, %v173
  %v227 = vmul.f32 %v156, %v173
  %v228 = vmul.f32 %v157, %v173
  %v229 = vmul.f32 %v158, %v173
  %v230 = vmul.f32 %v159, %v173
  %v231 = vmul.f32 %v160, %v173
  %v232 = vmul.f32 %v161, %v173
  %v233 = vmul.f32 %v162, %v173
  %v234 = vmul.f32 %v163, %v173
  %v235 = vmul.f32 %v164, %v173
  %v236 = vmul.f32 %v165, %v173
  %v237 = vmul.f32 %v166, %v173
  %v238 = vmul.f32 %v167, %v173
  %v239 = vld [vmem:[%s3] sm:$0x1]
  %v241 = vlaneseq
  %v242 = vshrl.u32 %v241, 7
  %v243 = vsub.s32 0, %v242
  %v244 = vrot.slane %v239, %v243
  %v246 = vadd.f32 %v175, %v244
  %v247 = vadd.f32 %v176, %v244
  %v248 = vadd.f32 %v177, %v244
  %v249 = vadd.f32 %v178, %v244
  %v250 = vadd.f32 %v179, %v244
  %v251 = vadd.f32 %v180, %v244
  %v252 = vadd.f32 %v181, %v244
  %v253 = vadd.f32 %v182, %v244
  %v254 = vadd.f32 %v183, %v244
  %v255 = vadd.f32 %v184, %v244
  %v256 = vadd.f32 %v185, %v244
  %v257 = vadd.f32 %v186, %v244
  %v258 = vadd.f32 %v187, %v244
  %v259 = vadd.f32 %v188, %v244
  %v260 = vadd.f32 %v189, %v244
  %v261 = vadd.f32 %v190, %v244
  %v262 = vadd.f32 %v191, %v244
  %v263 = vadd.f32 %v192, %v244
  %v264 = vadd.f32 %v193, %v244
  %v265 = vadd.f32 %v194, %v244
  %v266 = vadd.f32 %v195, %v244
  %v267 = vadd.f32 %v196, %v244
  %v268 = vadd.f32 %v197, %v244
  %v269 = vadd.f32 %v198, %v244
  %v270 = vadd.f32 %v199, %v244
  %v271 = vadd.f32 %v200, %v244
  %v272 = vadd.f32 %v201, %v244
  %v273 = vadd.f32 %v202, %v244
  %v274 = vadd.f32 %v203, %v244
  %v275 = vadd.f32 %v204, %v244
  %v276 = vadd.f32 %v205, %v244
  %v277 = vadd.f32 %v206, %v244
  %v278 = vadd.f32 %v207, %v244
  %v279 = vadd.f32 %v208, %v244
  %v280 = vadd.f32 %v209, %v244
  %v281 = vadd.f32 %v210, %v244
  %v282 = vadd.f32 %v211, %v244
  %v283 = vadd.f32 %v212, %v244
  %v284 = vadd.f32 %v213, %v244
  %v285 = vadd.f32 %v214, %v244
  %v286 = vadd.f32 %v215, %v244
  %v287 = vadd.f32 %v216, %v244
  %v288 = vadd.f32 %v217, %v244
  %v289 = vadd.f32 %v218, %v244
  %v290 = vadd.f32 %v219, %v244
  %v291 = vadd.f32 %v220, %v244
  %v292 = vadd.f32 %v221, %v244
  %v293 = vadd.f32 %v222, %v244
  %v294 = vadd.f32 %v223, %v244
  %v295 = vadd.f32 %v224, %v244
  %v296 = vadd.f32 %v225, %v244
  %v297 = vadd.f32 %v226, %v244
  %v298 = vadd.f32 %v227, %v244
  %v299 = vadd.f32 %v228, %v244
  %v300 = vadd.f32 %v229, %v244
  %v301 = vadd.f32 %v230, %v244
  %v302 = vadd.f32 %v231, %v244
  %v303 = vadd.f32 %v232, %v244
  %v304 = vadd.f32 %v233, %v244
  %v305 = vadd.f32 %v234, %v244
  %v306 = vadd.f32 %v235, %v244
  %v307 = vadd.f32 %v236, %v244
  %v308 = vadd.f32 %v237, %v244
  %v309 = vadd.f32 %v238, %v244
  %v310 = vmax.f32 %v246, 0.0
  %v311 = vmax.f32 %v247, 0.0
  %v312 = vmax.f32 %v248, 0.0
  %v313 = vmax.f32 %v249, 0.0
  %v314 = vmax.f32 %v250, 0.0
  %v315 = vmax.f32 %v251, 0.0
  %v316 = vmax.f32 %v252, 0.0
  %v317 = vmax.f32 %v253, 0.0
  %v318 = vmax.f32 %v254, 0.0
  %v319 = vmax.f32 %v255, 0.0
  %v320 = vmax.f32 %v256, 0.0
  %v321 = vmax.f32 %v257, 0.0
  %v322 = vmax.f32 %v258, 0.0
  %v323 = vmax.f32 %v259, 0.0
  %v324 = vmax.f32 %v260, 0.0
  %v325 = vmax.f32 %v261, 0.0
  %v326 = vmax.f32 %v262, 0.0
  %v327 = vmax.f32 %v263, 0.0
  %v328 = vmax.f32 %v264, 0.0
  %v329 = vmax.f32 %v265, 0.0
  %v330 = vmax.f32 %v266, 0.0
  %v331 = vmax.f32 %v267, 0.0
  %v332 = vmax.f32 %v268, 0.0
  %v333 = vmax.f32 %v269, 0.0
  %v334 = vmax.f32 %v270, 0.0
  %v335 = vmax.f32 %v271, 0.0
  %v336 = vmax.f32 %v272, 0.0
  %v337 = vmax.f32 %v273, 0.0
  %v338 = vmax.f32 %v274, 0.0
  %v339 = vmax.f32 %v275, 0.0
  %v340 = vmax.f32 %v276, 0.0
  %v341 = vmax.f32 %v277, 0.0
  %v342 = vmax.f32 %v278, 0.0
  %v343 = vmax.f32 %v279, 0.0
  %v344 = vmax.f32 %v280, 0.0
  %v345 = vmax.f32 %v281, 0.0
  %v346 = vmax.f32 %v282, 0.0
  %v347 = vmax.f32 %v283, 0.0
  %v348 = vmax.f32 %v284, 0.0
  %v349 = vmax.f32 %v285, 0.0
  %v350 = vmax.f32 %v286, 0.0
  %v351 = vmax.f32 %v287, 0.0
  %v352 = vmax.f32 %v288, 0.0
  %v353 = vmax.f32 %v289, 0.0
  %v354 = vmax.f32 %v290, 0.0
  %v355 = vmax.f32 %v291, 0.0
  %v356 = vmax.f32 %v292, 0.0
  %v357 = vmax.f32 %v293, 0.0
  %v358 = vmax.f32 %v294, 0.0
  %v359 = vmax.f32 %v295, 0.0
  %v360 = vmax.f32 %v296, 0.0
  %v361 = vmax.f32 %v297, 0.0
  %v362 = vmax.f32 %v298, 0.0
  %v363 = vmax.f32 %v299, 0.0
  %v364 = vmax.f32 %v300, 0.0
  %v365 = vmax.f32 %v301, 0.0
  %v366 = vmax.f32 %v302, 0.0
  %v367 = vmax.f32 %v303, 0.0
  %v368 = vmax.f32 %v304, 0.0
  %v369 = vmax.f32 %v305, 0.0
  %v370 = vmax.f32 %v306, 0.0
  %v371 = vmax.f32 %v307, 0.0
  %v372 = vmax.f32 %v308, 0.0
  %v373 = vmax.f32 %v309, 0.0
  %s374 = scalar_lea.vmem [#allocation2], 24
  %375 = vst [vmem:[%s374 + $0x1] sm:$0xff] %v310
  %376 = vst [vmem:[%s374 + $0x9] sm:$0xff] %v311
  %377 = vst [vmem:[%s374 + $0x19] sm:$0xff] %v312
  %378 = vst [vmem:[%s374 + $0x21] sm:$0xff] %v313
  %379 = vst [vmem:[%s374 + $0x31] sm:$0xff] %v314
  %380 = vst [vmem:[%s374 + $0x39] sm:$0xff] %v315
  %381 = vst [vmem:[%s374 + $0x49] sm:$0xff] %v316
  %382 = vst [vmem:[%s374 + $0x51] sm:$0xff] %v317
  %383 = vst [vmem:[%s374 + $0x61] sm:$0xff] %v318
  %384 = vst [vmem:[%s374 + $0x69] sm:$0xff] %v319
  %385 = vst [vmem:[%s374 + $0x79] sm:$0xff] %v320
  %386 = vst [vmem:[%s374 + $0x81] sm:$0xff] %v321
  %387 = vst [vmem:[%s374 + $0x91] sm:$0xff] %v322
  %388 = vst [vmem:[%s374 + $0x99] sm:$0xff] %v323
  %389 = vst [vmem:[%s374 + $0xa9] sm:$0xff] %v324
  %390 = vst [vmem:[%s374 + $0xb1] sm:$0xff] %v325
  %391 = vst [vmem:[%s374 + $0xc1] sm:$0xff] %v326
  %392 = vst [vmem:[%s374 + $0xc9] sm:$0xff] %v327
  %393 = vst [vmem:[%s374 + $0xd9] sm:$0xff] %v328
  %394 = vst [vmem:[%s374 + $0xe1] sm:$0xff] %v329
  %395 = vst [vmem:[%s374 + $0xf1] sm:$0xff] %v330
  %396 = vst [vmem:[%s374 + $0xf9] sm:$0xff] %v331
  %397 = vst [vmem:[%s374 + $0x109] sm:$0xff] %v332
  %398 = vst [vmem:[%s374 + $0x111] sm:$0xff] %v333
  %399 = vst [vmem:[%s374 + $0x121] sm:$0xff] %v334
  %400 = vst [vmem:[%s374 + $0x129] sm:$0xff] %v335
  %401 = vst [vmem:[%s374 + $0x139] sm:$0xff] %v336
  %402 = vst [vmem:[%s374 + $0x141] sm:$0xff] %v337
  %403 = vst [vmem:[%s374 + $0x151] sm:$0xff] %v338
  %404 = vst [vmem:[%s374 + $0x159] sm:$0xff] %v339
  %405 = vst [vmem:[%s374 + $0x169] sm:$0xff] %v340
  %406 = vst [vmem:[%s374 + $0x171] sm:$0xff] %v341
  %407 = vst [vmem:[%s374 + $0x1b1] sm:$0xff] %v342
  %408 = vst [vmem:[%s374 + $0x1b9] sm:$0xff] %v343
  %409 = vst [vmem:[%s374 + $0x1c9] sm:$0xff] %v344
  %410 = vst [vmem:[%s374 + $0x1d1] sm:$0xff] %v345
  %411 = vst [vmem:[%s374 + $0x1e1] sm:$0xff] %v346
  %412 = vst [vmem:[%s374 + $0x1e9] sm:$0xff] %v347
  %413 = vst [vmem:[%s374 + $0x1f9] sm:$0xff] %v348
  %414 = vst [vmem:[%s374 + $0x201] sm:$0xff] %v349
  %415 = vst [vmem:[%s374 + $0x211] sm:$0xff] %v350
  %416 = vst [vmem:[%s374 + $0x219] sm:$0xff] %v351
  %417 = vst [vmem:[%s374 + $0x229] sm:$0xff] %v352
  %418 = vst [vmem:[%s374 + $0x231] sm:$0xff] %v353
  %419 = vst [vmem:[%s374 + $0x241] sm:$0xff] %v354
  %420 = vst [vmem:[%s374 + $0x249] sm:$0xff] %v355
  %421 = vst [vmem:[%s374 + $0x259] sm:$0xff] %v356
  %422 = vst [vmem:[%s374 + $0x261] sm:$0xff] %v357
  %423 = vst [vmem:[%s374 + $0x271] sm:$0xff] %v358
  %424 = vst [vmem:[%s374 + $0x279] sm:$0xff] %v359
  %425 = vst [vmem:[%s374 + $0x289] sm:$0xff] %v360
  %426 = vst [vmem:[%s374 + $0x291] sm:$0xff] %v361
  %427 = vst [vmem:[%s374 + $0x2a1] sm:$0xff] %v362
  %428 = vst [vmem:[%s374 + $0x2a9] sm:$0xff] %v363
  %429 = vst [vmem:[%s374 + $0x2b9] sm:$0xff] %v364
  %430 = vst [vmem:[%s374 + $0x2c1] sm:$0xff] %v365
  %431 = vst [vmem:[%s374 + $0x2d1] sm:$0xff] %v366
  %432 = vst [vmem:[%s374 + $0x2d9] sm:$0xff] %v367
  %433 = vst [vmem:[%s374 + $0x2e9] sm:$0xff] %v368
  %434 = vst [vmem:[%s374 + $0x2f1] sm:$0xff] %v369
  %435 = vst [vmem:[%s374 + $0x301] sm:$0xff] %v370
  %436 = vst [vmem:[%s374 + $0x309] sm:$0xff] %v371
  %437 = vst [vmem:[%s374 + $0x319] sm:$0xff] %v372
  %438 = vst [vmem:[%s374 + $0x321] sm:$0xff] %v373
  %v439 = vld [vmem:[#allocation2] sm:$0xff]
  %v440 = vld [vmem:[#allocation2 + $0x8] sm:$0xff]
  %v441 = vld [vmem:[#allocation2 + $0x18] sm:$0xff]
  %v442 = vld [vmem:[#allocation2 + $0x20] sm:$0xff]
  %v443 = vld [vmem:[#allocation2 + $0x30] sm:$0xff]
  %v444 = vld [vmem:[#allocation2 + $0x38] sm:$0xff]
  %v445 = vld [vmem:[#allocation2 + $0x48] sm:$0xff]
  %v446 = vld [vmem:[#allocation2 + $0x50] sm:$0xff]
  %v447 = vld [vmem:[#allocation2 + $0x60] sm:$0xff]
  %v448 = vld [vmem:[#allocation2 + $0x68] sm:$0xff]
  %v449 = vld [vmem:[#allocation2 + $0x78] sm:$0xff]
  %v450 = vld [vmem:[#allocation2 + $0x80] sm:$0xff]
  %v451 = vld [vmem:[#allocation2 + $0x90] sm:$0xff]
  %v452 = vld [vmem:[#allocation2 + $0x98] sm:$0xff]
  %v453 = vld [vmem:[#allocation2 + $0xa8] sm:$0xff]
  %v454 = vld [vmem:[#allocation2 + $0xb0] sm:$0xff]
  %v455 = vld [vmem:[#allocation2 + $0xc0] sm:$0xff]
  %v456 = vld [vmem:[#allocation2 + $0xc8] sm:$0xff]
  %v457 = vld [vmem:[#allocation2 + $0xd8] sm:$0xff]
  %v458 = vld [vmem:[#allocation2 + $0xe0] sm:$0xff]
  %v459 = vld [vmem:[#allocation2 + $0xf0] sm:$0xff]
  %v460 = vld [vmem:[#allocation2 + $0xf8] sm:$0xff]
  %v461 = vld [vmem:[#allocation2 + $0x108] sm:$0xff]
  %v462 = vld [vmem:[#allocation2 + $0x110] sm:$0xff]
  %v463 = vld [vmem:[#allocation2 + $0x120] sm:$0xff]
  %v464 = vld [vmem:[#allocation2 + $0x128] sm:$0xff]
  %v465 = vld [vmem:[#allocation2 + $0x138] sm:$0xff]
  %v466 = vld [vmem:[#allocation2 + $0x140] sm:$0xff]
  %v467 = vld [vmem:[#allocation2 + $0x150] sm:$0xff]
  %v468 = vld [vmem:[#allocation2 + $0x158] sm:$0xff]
  %v469 = vld [vmem:[#allocation2 + $0x168] sm:$0xff]
  %v470 = vld [vmem:[#allocation2 + $0x170] sm:$0xff]
  %v471 = vld [vmem:[#allocation2 + $0x180] sm:$0xff]
  %v472 = vld [vmem:[#allocation2 + $0x188] sm:$0xff]
  %v473 = vld [vmem:[#allocation2 + $0x198] sm:$0xff]
  %v474 = vld [vmem:[#allocation2 + $0x1a0] sm:$0xff]
  %v475 = vld [vmem:[#allocation2 + $0x1] sm:$0xff]
  %v476 = vld [vmem:[#allocation2 + $0x9] sm:$0xff]
  %v477 = vld [vmem:[#allocation2 + $0x19] sm:$0xff]
  %v478 = vld [vmem:[#allocation2 + $0x21] sm:$0xff]
  %v479 = vld [vmem:[#allocation2 + $0x31] sm:$0xff]
  %v480 = vld [vmem:[#allocation2 + $0x39] sm:$0xff]
  %v481 = vld [vmem:[#allocation2 + $0x49] sm:$0xff]
  %v482 = vld [vmem:[#allocation2 + $0x51] sm:$0xff]
  %v483 = vld [vmem:[#allocation2 + $0x61] sm:$0xff]
  %v484 = vld [vmem:[#allocation2 + $0x69] sm:$0xff]
  %v485 = vld [vmem:[#allocation2 + $0x79] sm:$0xff]
  %v486 = vld [vmem:[#allocation2 + $0x81] sm:$0xff]
  %v487 = vld [vmem:[#allocation2 + $0x91] sm:$0xff]
  %v488 = vld [vmem:[#allocation2 + $0x99] sm:$0xff]
  %v489 = vld [vmem:[#allocation2 + $0xa9] sm:$0xff]
  %v490 = vld [vmem:[#allocation2 + $0xb1] sm:$0xff]
  %v491 = vld [vmem:[#allocation2 + $0xc1] sm:$0xff]
  %v492 = vld [vmem:[#allocation2 + $0xc9] sm:$0xff]
  %v493 = vld [vmem:[#allocation2 + $0xd9] sm:$0xff]
  %v494 = vld [vmem:[#allocation2 + $0xe1] sm:$0xff]
  %v495 = vld [vmem:[#allocation2 + $0xf1] sm:$0xff]
  %v496 = vld [vmem:[#allocation2 + $0xf9] sm:$0xff]
  %v497 = vld [vmem:[#allocation2 + $0x109] sm:$0xff]
  %v498 = vld [vmem:[#allocation2 + $0x111] sm:$0xff]
  %v499 = vld [vmem:[#allocation2 + $0x121] sm:$0xff]
  %v500 = vld [vmem:[#allocation2 + $0x129] sm:$0xff]
  %v501 = vld [vmem:[#allocation2 + $0x139] sm:$0xff]
  %v502 = vld [vmem:[#allocation2 + $0x141] sm:$0xff]
  %v503 = vld [vmem:[#allocation2 + $0x151] sm:$0xff]
  %v504 = vld [vmem:[#allocation2 + $0x159] sm:$0xff]
  %v505 = vld [vmem:[#allocation2 + $0x169] sm:$0xff]
  %v506 = vld [vmem:[#allocation2 + $0x171] sm:$0xff]
  %v507 = vld [vmem:[#allocation2 + $0x181] sm:$0xff]
  %v508 = vld [vmem:[#allocation2 + $0x189] sm:$0xff]
  %v509 = vld [vmem:[#allocation2 + $0x199] sm:$0xff]
  %v510 = vld [vmem:[#allocation2 + $0x1a1] sm:$0xff]
  %v511 = vld [vmem:[#allocation2 + $0x2] sm:$0xff]
  %v512 = vld [vmem:[#allocation2 + $0xa] sm:$0xff]
  %v513 = vld [vmem:[#allocation2 + $0x1a] sm:$0xff]
  %v514 = vld [vmem:[#allocation2 + $0x22] sm:$0xff]
  %v515 = vld [vmem:[#allocation2 + $0x32] sm:$0xff]
  %v516 = vld [vmem:[#allocation2 + $0x3a] sm:$0xff]
  %v517 = vld [vmem:[#allocation2 + $0x4a] sm:$0xff]
  %v518 = vld [vmem:[#allocation2 + $0x52] sm:$0xff]
  %v519 = vld [vmem:[#allocation2 + $0x62] sm:$0xff]
  %v520 = vld [vmem:[#allocation2 + $0x6a] sm:$0xff]
  %v521 = vld [vmem:[#allocation2 + $0x7a] sm:$0xff]
  %v522 = vld [vmem:[#allocation2 + $0x82] sm:$0xff]
  %v523 = vld [vmem:[#allocation2 + $0x92] sm:$0xff]
  %v524 = vld [vmem:[#allocation2 + $0x9a] sm:$0xff]
  %v525 = vld [vmem:[#allocation2 + $0xaa] sm:$0xff]
  %v526 = vld [vmem:[#allocation2 + $0xb2] sm:$0xff]
  %v527 = vld [vmem:[#allocation2 + $0xc2] sm:$0xff]
  %v528 = vld [vmem:[#allocation2 + $0xca] sm:$0xff]
  %v529 = vld [vmem:[#allocation2 + $0xda] sm:$0xff]
  %v530 = vld [vmem:[#allocation2 + $0xe2] sm:$0xff]
  %v531 = vld [vmem:[#allocation2 + $0xf2] sm:$0xff]
  %v532 = vld [vmem:[#allocation2 + $0xfa] sm:$0xff]
  %v533 = vld [vmem:[#allocation2 + $0x10a] sm:$0xff]
  %v534 = vld [vmem:[#allocation2 + $0x112] sm:$0xff]
  %v535 = vld [vmem:[#allocation2 + $0x122] sm:$0xff]
  %v536 = vld [vmem:[#allocation2 + $0x12a] sm:$0xff]
  %v537 = vld [vmem:[#allocation2 + $0x13a] sm:$0xff]
  %v538 = vld [vmem:[#allocation2 + $0x142] sm:$0xff]
  %v539 = vld [vmem:[#allocation2 + $0x152] sm:$0xff]
  %v540 = vld [vmem:[#allocation2 + $0x15a] sm:$0xff]
  %v541 = vld [vmem:[#allocation2 + $0x16a] sm:$0xff]
  %v542 = vld [vmem:[#allocation2 + $0x172] sm:$0xff]
  %v543 = vld [vmem:[#allocation2 + $0x182] sm:$0xff]
  %v544 = vld [vmem:[#allocation2 + $0x18a] sm:$0xff]
  %v545 = vld [vmem:[#allocation2 + $0x19a] sm:$0xff]
  %v546 = vld [vmem:[#allocation2 + $0x1a2] sm:$0xff]
  %s547 = scalar_lea.vmem [#allocation2], 432
  %v548 = vld [vmem:[%s547] sm:$0xff]
  %v549 = vld [vmem:[%s547 + $0x8] sm:$0xff]
  %v550 = vld [vmem:[%s547 + $0x18] sm:$0xff]
  %v551 = vld [vmem:[%s547 + $0x20] sm:$0xff]
  %v552 = vld [vmem:[%s547 + $0x30] sm:$0xff]
  %v553 = vld [vmem:[%s547 + $0x38] sm:$0xff]
  %v554 = vld [vmem:[%s547 + $0x48] sm:$0xff]
  %v555 = vld [vmem:[%s547 + $0x50] sm:$0xff]
  %v556 = vld [vmem:[%s547 + $0x60] sm:$0xff]
  %v557 = vld [vmem:[%s547 + $0x68] sm:$0xff]
  %v558 = vld [vmem:[%s547 + $0x78] sm:$0xff]
  %v559 = vld [vmem:[%s547 + $0x80] sm:$0xff]
  %v560 = vld [vmem:[%s547 + $0x90] sm:$0xff]
  %v561 = vld [vmem:[%s547 + $0x98] sm:$0xff]
  %v562 = vld [vmem:[%s547 + $0xa8] sm:$0xff]
  %v563 = vld [vmem:[%s547 + $0xb0] sm:$0xff]
  %v564 = vld [vmem:[%s547 + $0xc0] sm:$0xff]
  %v565 = vld [vmem:[%s547 + $0xc8] sm:$0xff]
  %v566 = vld [vmem:[%s547 + $0xd8] sm:$0xff]
  %v567 = vld [vmem:[%s547 + $0xe0] sm:$0xff]
  %v568 = vld [vmem:[%s547 + $0xf0] sm:$0xff]
  %v569 = vld [vmem:[%s547 + $0xf8] sm:$0xff]
  %v570 = vld [vmem:[%s547 + $0x108] sm:$0xff]
  %v571 = vld [vmem:[%s547 + $0x110] sm:$0xff]
  %v572 = vld [vmem:[%s547 + $0x120] sm:$0xff]
  %v573 = vld [vmem:[%s547 + $0x128] sm:$0xff]
  %v574 = vld [vmem:[%s547 + $0x138] sm:$0xff]
  %v575 = vld [vmem:[%s547 + $0x140] sm:$0xff]
  %v576 = vld [vmem:[%s547 + $0x150] sm:$0xff]
  %v577 = vld [vmem:[%s547 + $0x158] sm:$0xff]
  %v578 = vld [vmem:[%s547 + $0x168] sm:$0xff]
  %v579 = vld [vmem:[%s547 + $0x170] sm:$0xff]
  %v580 = vld [vmem:[%s547 + $0x180] sm:$0xff]
  %v581 = vld [vmem:[%s547 + $0x188] sm:$0xff]
  %v582 = vld [vmem:[%s547 + $0x198] sm:$0xff]
  %v583 = vld [vmem:[%s547 + $0x1a0] sm:$0xff]
  %v584 = vld [vmem:[%s547 + $0x1] sm:$0xff]
  %v585 = vld [vmem:[%s547 + $0x9] sm:$0xff]
  %v586 = vld [vmem:[%s547 + $0x19] sm:$0xff]
  %v587 = vld [vmem:[%s547 + $0x21] sm:$0xff]
  %v588 = vld [vmem:[%s547 + $0x31] sm:$0xff]
  %v589 = vld [vmem:[%s547 + $0x39] sm:$0xff]
  %v590 = vld [vmem:[%s547 + $0x49] sm:$0xff]
  %v591 = vld [vmem:[%s547 + $0x51] sm:$0xff]
  %v592 = vld [vmem:[%s547 + $0x61] sm:$0xff]
  %v593 = vld [vmem:[%s547 + $0x69] sm:$0xff]
  %v594 = vld [vmem:[%s547 + $0x79] sm:$0xff]
  %v595 = vld [vmem:[%s547 + $0x81] sm:$0xff]
  %v596 = vld [vmem:[%s547 + $0x91] sm:$0xff]
  %v597 = vld [vmem:[%s547 + $0x99] sm:$0xff]
  %v598 = vld [vmem:[%s547 + $0xa9] sm:$0xff]
  %v599 = vld [vmem:[%s547 + $0xb1] sm:$0xff]
  %v600 = vld [vmem:[%s547 + $0xc1] sm:$0xff]
  %v601 = vld [vmem:[%s547 + $0xc9] sm:$0xff]
  %v602 = vld [vmem:[%s547 + $0xd9] sm:$0xff]
  %v603 = vld [vmem:[%s547 + $0xe1] sm:$0xff]
  %v604 = vld [vmem:[%s547 + $0xf1] sm:$0xff]
  %v605 = vld [vmem:[%s547 + $0xf9] sm:$0xff]
  %v606 = vld [vmem:[%s547 + $0x109] sm:$0xff]
  %v607 = vld [vmem:[%s547 + $0x111] sm:$0xff]
  %v608 = vld [vmem:[%s547 + $0x121] sm:$0xff]
  %v609 = vld [vmem:[%s547 + $0x129] sm:$0xff]
  %v610 = vld [vmem:[%s547 + $0x139] sm:$0xff]
  %v611 = vld [vmem:[%s547 + $0x141] sm:$0xff]
  %v612 = vld [vmem:[%s547 + $0x151] sm:$0xff]
  %v613 = vld [vmem:[%s547 + $0x159] sm:$0xff]
  %v614 = vld [vmem:[%s547 + $0x169] sm:$0xff]
  %v615 = vld [vmem:[%s547 + $0x171] sm:$0xff]
  %v616 = vld [vmem:[%s547 + $0x181] sm:$0xff]
  %v617 = vld [vmem:[%s547 + $0x189] sm:$0xff]
  %v618 = vld [vmem:[%s547 + $0x199] sm:$0xff]
  %v619 = vld [vmem:[%s547 + $0x1a1] sm:$0xff]
  %v620 = vld [vmem:[%s547 + $0x2] sm:$0xff]
  %v621 = vld [vmem:[%s547 + $0xa] sm:$0xff]
  %v622 = vld [vmem:[%s547 + $0x1a] sm:$0xff]
  %v623 = vld [vmem:[%s547 + $0x22] sm:$0xff]
  %v624 = vld [vmem:[%s547 + $0x32] sm:$0xff]
  %v625 = vld [vmem:[%s547 + $0x3a] sm:$0xff]
  %v626 = vld [vmem:[%s547 + $0x4a] sm:$0xff]
  %v627 = vld [vmem:[%s547 + $0x52] sm:$0xff]
  %v628 = vld [vmem:[%s547 + $0x62] sm:$0xff]
  %v629 = vld [vmem:[%s547 + $0x6a] sm:$0xff]
  %v630 = vld [vmem:[%s547 + $0x7a] sm:$0xff]
  %v631 = vld [vmem:[%s547 + $0x82] sm:$0xff]
  %v632 = vld [vmem:[%s547 + $0x92] sm:$0xff]
  %v633 = vld [vmem:[%s547 + $0x9a] sm:$0xff]
  %v634 = vld [vmem:[%s547 + $0xaa] sm:$0xff]
  %v635 = vld [vmem:[%s547 + $0xb2] sm:$0xff]
  %v636 = vld [vmem:[%s547 + $0xc2] sm:$0xff]
  %v637 = vld [vmem:[%s547 + $0xca] sm:$0xff]
  %v638 = vld [vmem:[%s547 + $0xda] sm:$0xff]
  %v639 = vld [vmem:[%s547 + $0xe2] sm:$0xff]
  %v640 = vld [vmem:[%s547 + $0xf2] sm:$0xff]
  %v641 = vld [vmem:[%s547 + $0xfa] sm:$0xff]
  %v642 = vld [vmem:[%s547 + $0x10a] sm:$0xff]
  %v643 = vld [vmem:[%s547 + $0x112] sm:$0xff]
  %v644 = vld [vmem:[%s547 + $0x122] sm:$0xff]
  %v645 = vld [vmem:[%s547 + $0x12a] sm:$0xff]
  %v646 = vld [vmem:[%s547 + $0x13a] sm:$0xff]
  %v647 = vld [vmem:[%s547 + $0x142] sm:$0xff]
  %v648 = vld [vmem:[%s547 + $0x152] sm:$0xff]
  %v649 = vld [vmem:[%s547 + $0x15a] sm:$0xff]
  %v650 = vld [vmem:[%s547 + $0x16a] sm:$0xff]
  %v651 = vld [vmem:[%s547 + $0x172] sm:$0xff]
  %v652 = vld [vmem:[%s547 + $0x182] sm:$0xff]
  %v653 = vld [vmem:[%s547 + $0x18a] sm:$0xff]
  %v654 = vld [vmem:[%s547 + $0x19a] sm:$0xff]
  %v655 = vld [vmem:[%s547 + $0x1a2] sm:$0xff]
  %v656 = vld [vmem:[%s1] sm:$0xff]
  %v657 = vld [vmem:[%s1 + $0x8] sm:$0xff]
  %v658 = vld [vmem:[%s1 + $0x10] sm:$0xff]
  %v659 = vld [vmem:[%s1 + $0x18] sm:$0xff]
  %v660 = vld [vmem:[%s1 + $0x20] sm:$0xff]
  %v661 = vld [vmem:[%s1 + $0x28] sm:$0xff]
  %v662 = vld [vmem:[%s1 + $0x30] sm:$0xff]
  %v663 = vld [vmem:[%s1 + $0x38] sm:$0xff]
  %v664 = vld [vmem:[%s1 + $0x40] sm:$0xff]
  %v665 = vld [vmem:[%s1 + $0x48] sm:$0xff]
  %v666 = vld [vmem:[%s1 + $0x50] sm:$0xff]
  %v667 = vld [vmem:[%s1 + $0x58] sm:$0xff]
  %v668 = vld [vmem:[%s1 + $0x60] sm:$0xff]
  %v669 = vld [vmem:[%s1 + $0x68] sm:$0xff]
  %v670 = vld [vmem:[%s1 + $0x70] sm:$0xff]
  %v671 = vld [vmem:[%s1 + $0x78] sm:$0xff]
  %v672 = vld [vmem:[%s1 + $0x80] sm:$0xff]
  %v673 = vld [vmem:[%s1 + $0x88] sm:$0xff]
  %v674 = vld [vmem:[%s1 + $0x90] sm:$0xff]
  %v675 = vld [vmem:[%s1 + $0x98] sm:$0xff]
  %v676 = vld [vmem:[%s1 + $0xa0] sm:$0xff]
  %v677 = vld [vmem:[%s1 + $0xa8] sm:$0xff]
  %v678 = vld [vmem:[%s1 + $0xb0] sm:$0xff]
  %v679 = vld [vmem:[%s1 + $0xb8] sm:$0xff]
  %v680 = vld [vmem:[%s1 + $0xc0] sm:$0xff]
  %v681 = vld [vmem:[%s1 + $0xc8] sm:$0xff]
  %v682 = vld [vmem:[%s1 + $0xd0] sm:$0xff]
  %v683 = vld [vmem:[%s1 + $0xd8] sm:$0xff]
  %v684 = vld [vmem:[%s1 + $0xe0] sm:$0xff]
  %v685 = vld [vmem:[%s1 + $0xe8] sm:$0xff]
  %v686 = vld [vmem:[%s1 + $0xf0] sm:$0xff]
  %v687 = vld [vmem:[%s1 + $0xf8] sm:$0xff]
  %v688 = vld [vmem:[%s1 + $0x100] sm:$0xff]
  %v689 = vld [vmem:[%s1 + $0x108] sm:$0xff]
  %v690 = vld [vmem:[%s1 + $0x110] sm:$0xff]
  %v691 = vld [vmem:[%s1 + $0x118] sm:$0xff]
  %v692 = vld [vmem:[%s1 + $0x120] sm:$0xff]
  %v693 = vld [vmem:[%s1 + $0x128] sm:$0xff]
  %v694 = vld [vmem:[%s1 + $0x130] sm:$0xff]
  %v695 = vld [vmem:[%s1 + $0x138] sm:$0xff]
  %v696 = vld [vmem:[%s1 + $0x140] sm:$0xff]
  %v697 = vld [vmem:[%s1 + $0x148] sm:$0xff]
  %v698 = vld [vmem:[%s1 + $0x150] sm:$0xff]
  %v699 = vld [vmem:[%s1 + $0x158] sm:$0xff]
  %v700 = vld [vmem:[%s1 + $0x160] sm:$0xff]
  %v701 = vld [vmem:[%s1 + $0x168] sm:$0xff]
  %v702 = vld [vmem:[%s1 + $0x170] sm:$0xff]
  %v703 = vld [vmem:[%s1 + $0x178] sm:$0xff]
  %v704 = vld [vmem:[%s1 + $0x180] sm:$0xff]
  %v705 = vld [vmem:[%s1 + $0x188] sm:$0xff]
  %v706 = vld [vmem:[%s1 + $0x190] sm:$0xff]
  %v707 = vld [vmem:[%s1 + $0x198] sm:$0xff]
  %v708 = vld [vmem:[%s1 + $0x1a0] sm:$0xff]
  %v709 = vld [vmem:[%s1 + $0x1a8] sm:$0xff]
  %v710 = vld [vmem:[%s1 + $0x1b0] sm:$0xff]
  %v711 = vld [vmem:[%s1 + $0x1b8] sm:$0xff]
  %v712 = vld [vmem:[%s1 + $0x1c0] sm:$0xff]
  %v713 = vld [vmem:[%s1 + $0x1c8] sm:$0xff]
  %v714 = vld [vmem:[%s1 + $0x1d0] sm:$0xff]
  %v715 = vld [vmem:[%s1 + $0x1d8] sm:$0xff]
  %v716 = vld [vmem:[%s1 + $0x1e0] sm:$0xff]
  %v717 = vld [vmem:[%s1 + $0x1e8] sm:$0xff]
  %v718 = vld [vmem:[%s1 + $0x1f0] sm:$0xff]
  %v719 = vld [vmem:[%s1 + $0x1f8] sm:$0xff]
  %v720 = vld [vmem:[%s1 + $0x200] sm:$0xff]
  %v721 = vld [vmem:[%s1 + $0x208] sm:$0xff]
  %v722 = vld [vmem:[%s1 + $0x210] sm:$0xff]
  %v723 = vld [vmem:[%s1 + $0x218] sm:$0xff]
  %v724 = vld [vmem:[%s1 + $0x220] sm:$0xff]
  %v725 = vld [vmem:[%s1 + $0x228] sm:$0xff]
  %v726 = vld [vmem:[%s1 + $0x230] sm:$0xff]
  %v727 = vld [vmem:[%s1 + $0x238] sm:$0xff]
  %v728 = vld [vmem:[%s1 + $0x240] sm:$0xff]
  %v729 = vld [vmem:[%s1 + $0x248] sm:$0xff]
  %v730 = vld [vmem:[%s1 + $0x250] sm:$0xff]
  %v731 = vld [vmem:[%s1 + $0x258] sm:$0xff]
  %v732 = vld [vmem:[%s1 + $0x260] sm:$0xff]
  %v733 = vld [vmem:[%s1 + $0x268] sm:$0xff]
  %v734 = vld [vmem:[%s1 + $0x270] sm:$0xff]
  %v735 = vld [vmem:[%s1 + $0x278] sm:$0xff]
  %v736 = vld [vmem:[%s1 + $0x280] sm:$0xff]
  %v737 = vld [vmem:[%s1 + $0x288] sm:$0xff]
  %v738 = vld [vmem:[%s1 + $0x290] sm:$0xff]
  %v739 = vld [vmem:[%s1 + $0x298] sm:$0xff]
  %v740 = vld [vmem:[%s1 + $0x2a0] sm:$0xff]
  %v741 = vld [vmem:[%s1 + $0x2a8] sm:$0xff]
  %v742 = vld [vmem:[%s1 + $0x2b0] sm:$0xff]
  %v743 = vld [vmem:[%s1 + $0x2b8] sm:$0xff]
  %v744 = vld [vmem:[%s1 + $0x2c0] sm:$0xff]
  %v745 = vld [vmem:[%s1 + $0x2c8] sm:$0xff]
  %v746 = vld [vmem:[%s1 + $0x2d0] sm:$0xff]
  %v747 = vld [vmem:[%s1 + $0x2d8] sm:$0xff]
  %v748 = vld [vmem:[%s1 + $0x2e0] sm:$0xff]
  %v749 = vld [vmem:[%s1 + $0x2e8] sm:$0xff]
  %v750 = vld [vmem:[%s1 + $0x2f0] sm:$0xff]
  %v751 = vld [vmem:[%s1 + $0x2f8] sm:$0xff]
  %v752 = vld [vmem:[%s1 + $0x300] sm:$0xff]
  %v753 = vld [vmem:[%s1 + $0x308] sm:$0xff]
  %v754 = vld [vmem:[%s1 + $0x310] sm:$0xff]
  %v755 = vld [vmem:[%s1 + $0x318] sm:$0xff]
  %v756 = vld [vmem:[%s1 + $0x320] sm:$0xff]
  %v757 = vld [vmem:[%s1 + $0x328] sm:$0xff]
  %v758 = vld [vmem:[%s1 + $0x330] sm:$0xff]
  %v759 = vld [vmem:[%s1 + $0x338] sm:$0xff]
  %v760 = vld [vmem:[%s1 + $0x340] sm:$0xff]
  %v761 = vld [vmem:[%s1 + $0x348] sm:$0xff]
  %v762 = vld [vmem:[%s1 + $0x350] sm:$0xff]
  %v763 = vld [vmem:[%s1 + $0x358] sm:$0xff]
  %v764 = vld [vmem:[%s1 + $0x360] sm:$0xff]
  %v765 = vld [vmem:[%s1 + $0x368] sm:$0xff]
  %v766 = vld [vmem:[%s1 + $0x370] sm:$0xff]
  %v767 = vld [vmem:[%s1 + $0x378] sm:$0xff]
  %v768 = vld [vmem:[%s1 + $0x380] sm:$0xff]
  %v769 = vld [vmem:[%s1 + $0x388] sm:$0xff]
  %v770 = vld [vmem:[%s1 + $0x390] sm:$0xff]
  %v771 = vld [vmem:[%s1 + $0x398] sm:$0xff]
  %v772 = vld [vmem:[%s1 + $0x3a0] sm:$0xff]
  %v773 = vld [vmem:[%s1 + $0x3a8] sm:$0xff]
  %v774 = vld [vmem:[%s1 + $0x3b0] sm:$0xff]
  %v775 = vld [vmem:[%s1 + $0x3b8] sm:$0xff]
  %v776 = vld [vmem:[%s1 + $0x3c0] sm:$0xff]
  %v777 = vld [vmem:[%s1 + $0x3c8] sm:$0xff]
  %v778 = vld [vmem:[%s1 + $0x3d0] sm:$0xff]
  %v779 = vld [vmem:[%s1 + $0x3d8] sm:$0xff]
  %v780 = vld [vmem:[%s1 + $0x3e0] sm:$0xff]
  %v781 = vld [vmem:[%s1 + $0x3e8] sm:$0xff]
  %v782 = vld [vmem:[%s1 + $0x3f0] sm:$0xff]
  %v783 = vld [vmem:[%s1 + $0x3f8] sm:$0xff]
  %v784 = vld [vmem:[%s1 + $0x400] sm:$0xff]
  %v785 = vld [vmem:[%s1 + $0x408] sm:$0xff]
  %v786 = vld [vmem:[%s1 + $0x410] sm:$0xff]
  %v787 = vld [vmem:[%s1 + $0x418] sm:$0xff]
  %v788 = vld [vmem:[%s1 + $0x420] sm:$0xff]
  %v789 = vld [vmem:[%s1 + $0x428] sm:$0xff]
  %v790 = vld [vmem:[%s1 + $0x430] sm:$0xff]
  %v791 = vld [vmem:[%s1 + $0x438] sm:$0xff]
  %v792 = vld [vmem:[%s1 + $0x440] sm:$0xff]
  %v793 = vld [vmem:[%s1 + $0x448] sm:$0xff]
  %v794 = vld [vmem:[%s1 + $0x450] sm:$0xff]
  %v795 = vld [vmem:[%s1 + $0x458] sm:$0xff]
  %v796 = vld [vmem:[%s1 + $0x460] sm:$0xff]
  %v797 = vld [vmem:[%s1 + $0x468] sm:$0xff]
  %v798 = vld [vmem:[%s1 + $0x470] sm:$0xff]
  %v799 = vld [vmem:[%s1 + $0x478] sm:$0xff]
  %800 = vmatprep.subr.mxu0 0.0
  %801 = vmatpush1.msra.mxu0 %v656
  %802 = vmatprep.subr.mxu0 0.0
  %803 = vmatpush1.msra.mxu0 %v657
  %804 = vmatprep.subr.mxu0 0.0
  %805 = vmatpush1.msra.mxu0 %v658
  %806 = vmatprep.subr.mxu0 0.0
  %807 = vmatpush1.msra.mxu0 %v659
  %808 = vmatprep.subr.mxu0 0.0
  %809 = vmatpush1.msra.mxu0 %v660
  %810 = vmatprep.subr.mxu0 0.0
  %811 = vmatpush1.msra.mxu0 %v661
  %812 = vmatprep.subr.mxu0 0.0
  %813 = vmatpush1.msra.mxu0 %v662
  %814 = vmatprep.subr.mxu0 0.0
  %815 = vmatpush1.msra.mxu0 %v663
  %816 = vmatprep.subr.mxu0 0.0
  %817 = vmatpush1.msra.mxu0 %v664
  %818 = vmatprep.subr.mxu0 0.0
  %819 = vmatpush1.msra.mxu0 %v665
  %820 = vmatprep.subr.mxu0 0.0
  %821 = vmatpush1.msra.mxu0 %v666
  %822 = vmatprep.subr.mxu0 0.0
  %823 = vmatpush1.msra.mxu0 %v667
  %824 = vmatprep.subr.mxu0 0.0
  %825 = vmatpush1.msra.mxu0 %v668
  %826 = vmatprep.subr.mxu0 0.0
  %827 = vmatpush1.msra.mxu0 %v669
  %828 = vmatprep.subr.mxu0 0.0
  %829 = vmatpush1.msra.mxu0 %v670
  %830 = vmatprep.subr.mxu0 0.0
  %831 = vmatpush1.msra.mxu0 %v671
  %832 = vmatprep.subr.mxu0 0.0
  %833 = vmatpush1.msra.mxu0 %v672
  %834 = vmatprep.subr.mxu0 0.0
  %835 = vmatpush1.msra.mxu0 %v673
  %836 = vmatprep.subr.mxu0 0.0
  %837 = vmatpush1.msra.mxu0 %v674
  %838 = vmatprep.subr.mxu0 0.0
  %839 = vmatpush1.msra.mxu0 %v675
  %840 = vmatprep.subr.mxu0 0.0
  %841 = vmatpush1.msra.mxu0 %v676
  %842 = vmatprep.subr.mxu0 0.0
  %843 = vmatpush1.msra.mxu0 %v677
  %844 = vmatprep.subr.mxu0 0.0
  %845 = vmatpush1.msra.mxu0 %v678
  %846 = vmatprep.subr.mxu0 0.0
  %847 = vmatpush1.msra.mxu0 %v679
  %848 = vmatprep.subr.mxu0 0.0
  %849 = vmatpush1.msra.mxu0 %v680
  %850 = vmatprep.subr.mxu0 0.0
  %851 = vmatpush1.msra.mxu0 %v681
  %852 = vmatprep.subr.mxu0 0.0
  %853 = vmatpush1.msra.mxu0 %v682
  %854 = vmatprep.subr.mxu0 0.0
  %855 = vmatpush1.msra.mxu0 %v683
  %856 = vmatprep.subr.mxu0 0.0
  %857 = vmatpush1.msra.mxu0 %v684
  %858 = vmatprep.subr.mxu0 0.0
  %859 = vmatpush1.msra.mxu0 %v685
  %860 = vmatprep.subr.mxu0 0.0
  %861 = vmatpush1.msra.mxu0 %v686
  %862 = vmatprep.subr.mxu0 0.0
  %863 = vmatpush1.msra.mxu0 %v687
  %864 = vmatprep.mubr.f32.mxu0 %v441
  %865 = vmatmul.mubr.f32.gmra.mrb[0].mxu0 %v439
  %v866 = vpop.f32.mrb[0].mxu0
  %v867 = vadd.f32 0.0, %v866
  %v868 = vpop.f32.mrb[0].mxu0
  %869 = vmatprep.mubr.f32.mxu0 %v442
  %870 = vmatmul.mubr.f32.gmra.mrb[0].mxu0 %v440
  %v871 = vpop.f32.mrb[0].mxu0
  %v872 = vadd.f32 0.0, %v871
  %v873 = vpop.f32.mrb[0].mxu0
  %874 = vmatprep.mubr.f32.mxu0 %v443
  %875 = vmatmul.mubr.f32.gmra.mrb[0].mxu0 %v441
  %v876 = vpop.f32.mrb[0].mxu0
  %v877 = vadd.f32 0.0, %v876
  %v878 = vpop.f32.mrb[0].mxu0
  %879 = vmatprep.mubr.f32.mxu0 %v444
  %880 = vmatmul.mubr.f32.gmra.mrb[0].mxu0 %v442
  %v881 = vpop.f32.mrb[0].mxu0
  %v882 = vadd.f32 0.0, %v881
  %v883 = vpop.f32.mrb[0].mxu0
  %884 = vmatprep.mubr.f32.mxu0 %v445
  %885 = vmatmul.mubr.f32.gmra.mrb[0].mxu0 %v443
  %v886 = vpop.f32.mrb[0].mxu0
  %v887 = vadd.f32 0.0, %v886
  %v888 = vpop.f32.mrb[0].mxu0
  %889 = vmatprep.mubr.f32.mxu0 %v446
  %890 = vmatmul.mubr.f32.gmra.mrb[0].mxu0 %v444
  %v891 = vpop.f32.mrb[0].mxu0
  %v892 = vadd.f32 0.0, %v891
  %v893 = vpop.f32.mrb[0].mxu0
  %894 = vmatprep.mubr.f32.mxu0 %v447
  %895 = vmatmul.mubr.f32.gmra.mrb[0].mxu0 %v445
  %v896 = vpop.f32.mrb[0].mxu0
  %v897 = vadd.f32 0.0, %v896
  %v898 = vpop.f32.mrb[0].mxu0
  %899 = vmatprep.mubr.f32.mxu0 %v448
  %900 = vmatmul.mubr.f32.gmra.mrb[0].mxu0 %v446
  %v901 = vpop.f32.mrb[0].mxu0
  %v902 = vadd.f32 0.0, %v901
  %v903 = vpop.f32.mrb[0].mxu0
  %904 = vmatprep.mubr.f32.mxu0 %v449
  %905 = vmatmul.mubr.f32.gmra.mrb[0].mxu0 %v447
  %v906 = vpop.f32.mrb[0].mxu0
  %v907 = vadd.f32 0.0, %v906
  %v908 = vpop.f32.mrb[0].mxu0
  %909 = vmatprep.mubr.f32.mxu0 %v450
  %910 = vmatmul.mubr.f32.gmra.mrb[0].mxu0 %v448
  %v911 = vpop.f32.mrb[0].mxu0
  %v912 = vadd.f32 0.0, %v911
  %v913 = vpop.f32.mrb[0].mxu0
  %914 = vmatprep.mubr.f32.mxu0 %v451
  %915 = vmatmul.mubr.f32.gmra.mrb[0].mxu0 %v449
  %v916 = vpop.f32.mrb[0].mxu0
  %v917 = vadd.f32 0.0, %v916
  %v918 = vpop.f32.mrb[0].mxu0
  %919 = vmatprep.mubr.f32.mxu0 %v452
  %920 = vmatmul.mubr.f32.gmra.mrb[0].mxu0 %v450
  %v921 = vpop.f32.mrb[0].mxu0
  %v922 = vadd.f32 0.0, %v921
  %v923 = vpop.f32.mrb[0].mxu0
  %924 = vmatprep.mubr.f32.mxu0 %v453
  %925 = vmatmul.mubr.f32.gmra.mrb[0].mxu0 %v451
  %v926 = vpop.f32.mrb[0].mxu0
  %v927 = vadd.f32 0.0, %v926
  %v928 = vpop.f32.mrb[0].mxu0
  %929 = vmatprep.mubr.f32.mxu0 %v454
  %930 = vmatmul.mubr.f32.gmra.mrb[0].mxu0 %v452
  %v931 = vpop.f32.mrb[0].mxu0
  %v932 = vadd.f32 0.0, %v931
  %v933 = vpop.f32.mrb[0].mxu0
  %934 = vmatprep.mubr.f32.mxu0 %v455
  %935 = vmatmul.mubr.f32.gmra.mrb[0].mxu0 %v453
  %v936 = vpop.f32.mrb[0].mxu0
  %v937 = vadd.f32 0.0, %v936
  %v938 = vpop.f32.mrb[0].mxu0
  %939 = vmatprep.mubr.f32.mxu0 %v456
  %940 = vmatmul.mubr.f32.gmra.mrb[0].mxu0 %v454
  %v941 = vpop.f32.mrb[0].mxu0
  %v942 = vadd.f32 0.0, %v941
  %v943 = vpop.f32.mrb[0].mxu0
  %944 = vmatprep.mubr.f32.mxu0 %v457
  %945 = vmatmul.mubr.f32.gmra.mrb[0].mxu0 %v455
  %v946 = vpop.f32.mrb[0].mxu0
  %v947 = vadd.f32 0.0, %v946
  %v948 = vpop.f32.mrb[0].mxu0
  %949 = vmatprep.mubr.f32.mxu0 %v458
  %950 = vmatmul.mubr.f32.gmra.mrb[0].mxu0 %v456
  %v951 = vpop.f32.mrb[0].mxu0
  %v952 = vadd.f32 0.0, %v951
  %v953 = vpop.f32.mrb[0].mxu0
  %954 = vmatprep.mubr.f32.mxu0 %v459
  %955 = vmatmul.mubr.f32.gmra.mrb[0].mxu0 %v457
  %v956 = vpop.f32.mrb[0].mxu0
  %v957 = vadd.f32 0.0, %v956
  %v958 = vpop.f32.mrb[0].mxu0
  %959 = vmatprep.mubr.f32.mxu0 %v460
  %960 = vmatmul.mubr.f32.gmra.mrb[0].mxu0 %v458
  %v961 = vpop.f32.mrb[0].mxu0
  %v962 = vadd.f32 0.0, %v961
  %v963 = vpop.f32.mrb[0].mxu0
  %964 = vmatprep.mubr.f32.mxu0 %v461
  %965 = vmatmul.mubr.f32.gmra.mrb[0].mxu0 %v459
  %v966 = vpop.f32.mrb[0].mxu0
  %v967 = vadd.f32 0.0, %v966
  %v968 = vpop.f32.mrb[0].mxu0
  %969 = vmatprep.mubr.f32.mxu0 %v462
  %970 = vmatmul.mubr.f32.gmra.mrb[0].mxu0 %v460
  %v971 = vpop.f32.mrb[0].mxu0
  %v972 = vadd.f32 0.0, %v971
  %v973 = vpop.f32.mrb[0].mxu0
  %974 = vmatprep.mubr.f32.mxu0 %v463
  %975 = vmatmul.mubr.f32.gmra.mrb[0].mxu0 %v461
  %v976 = vpop.f32.mrb[0].mxu0
  %v977 = vadd.f32 0.0, %v976
  %v978 = vpop.f32.mrb[0].mxu0
  %979 = vmatprep.mubr.f32.mxu0 %v464
  %980 = vmatmul.mubr.f32.gmra.mrb[0].mxu0 %v462
  %v981 = vpop.f32.mrb[0].mxu0
  %v982 = vadd.f32 0.0, %v981
  %v983 = vpop.f32.mrb[0].mxu0
  %984 = vmatprep.mubr.f32.mxu0 %v465
  %985 = vmatmul.mubr.f32.gmra.mrb[0].mxu0 %v463
  %v986 = vpop.f32.mrb[0].mxu0
  %v987 = vadd.f32 0.0, %v986
  %v988 = vpop.f32.mrb[0].mxu0
  %989 = vmatprep.mubr.f32.mxu0 %v466
  %990 = vmatmul.mubr.f32.gmra.mrb[0].mxu0 %v464
  %v991 = vpop.f32.mrb[0].mxu0
  %v992 = vadd.f32 0.0, %v991
  %v993 = vpop.f32.mrb[0].mxu0
  %994 = vmatprep.mubr.f32.mxu0 %v467
  %995 = vmatmul.mubr.f32.gmra.mrb[0].mxu0 %v465
  %v996 = vpop.f32.mrb[0].mxu0
  %v997 = vadd.f32 0.0, %v996
  %v998 = vpop.f32.mrb[0].mxu0
  %999 = vmatprep.mubr.f32.mxu0 %v468
  %1000 = vmatmul.mubr.f32.gmra.mrb[0].mxu0 %v466
  %v1001 = vpop.f32.mrb[0].mxu0
  %v1002 = vadd.f32 0.0, %v1001
  %v1003 = vpop.f32.mrb[0].mxu0
  %1004 = vmatprep.mubr.f32.mxu0 %v469
  %1005 = vmatmul.mubr.f32.gmra.mrb[0].mxu0 %v467
  %v1006 = vpop.f32.mrb[0].mxu0
  %v1007 = vadd.f32 0.0, %v1006
  %v1008 = vpop.f32.mrb[0].mxu0
  %1009 = vmatprep.mubr.f32.mxu0 %v470
  %1010 = vmatmul.mubr.f32.gmra.mrb[0].mxu0 %v468
  %v1011 = vpop.f32.mrb[0].mxu0
  %v1012 = vadd.f32 0.0, %v1011
  %v1013 = vpop.f32.mrb[0].mxu0
  %1014 = vmatprep.mubr.f32.mxu0 %v471
  %1015 = vmatmul.mubr.f32.gmra.mrb[0].mxu0 %v469
  %v1016 = vpop.f32.mrb[0].mxu0
  %v1017 = vadd.f32 0.0, %v1016
  %v1018 = vpop.f32.mrb[0].mxu0
  %1019 = vmatprep.mubr.f32.mxu0 %v472
  %1020 = vmatmul.mubr.f32.gmra.mrb[0].mxu0 %v470
  %v1021 = vpop.f32.mrb[0].mxu0
  %v1022 = vadd.f32 0.0, %v1021
  %v1023 = vpop.f32.mrb[0].mxu0
  %1024 = vmatprep.mubr.f32.mxu0 %v550
  %1025 = vmatmul.mubr.f32.gmra.mrb[0].mxu0 %v548
  %v1026 = vpop.f32.mrb[0].mxu0
  %v1027 = vadd.f32 0.0, %v1026
  %v1028 = vpop.f32.mrb[0].mxu0
  %1029 = vmatprep.mubr.f32.mxu0 %v551
  %1030 = vmatmul.mubr.f32.gmra.mrb[0].mxu0 %v549
  %v1031 = vpop.f32.mrb[0].mxu0
  %v1032 = vadd.f32 0.0, %v1031
  %v1033 = vpop.f32.mrb[0].mxu0
  %1034 = vmatprep.mubr.f32.mxu0 %v552
  %1035 = vmatmul.mubr.f32.gmra.mrb[0].mxu0 %v550
  %v1036 = vpop.f32.mrb[0].mxu0
  %v1037 = vadd.f32 0.0, %v1036
  %v1038 = vpop.f32.mrb[0].mxu0
  %1039 = vmatprep.mubr.f32.mxu0 %v553
  %1040 = vmatmul.mubr.f32.gmra.mrb[0].mxu0 %v551
  %v1041 = vpop.f32.mrb[0].mxu0
  %v1042 = vadd.f32 0.0, %v1041
  %v1043 = vpop.f32.mrb[0].mxu0
  %1044 = vmatprep.mubr.f32.mxu0 %v554
  %1045 = vmatmul.mubr.f32.gmra.mrb[0].mxu0 %v552
  %v1046 = vpop.f32.mrb[0].mxu0
  %v1047 = vadd.f32 0.0, %v1046
  %v1048 = vpop.f32.mrb[0].mxu0
  %1049 = vmatprep.mubr.f32.mxu0 %v555
  %1050 = vmatmul.mubr.f32.gmra.mrb[0].mxu0 %v553
  %v1051 = vpop.f32.mrb[0].mxu0
  %v1052 = vadd.f32 0.0, %v1051
  %v1053 = vpop.f32.mrb[0].mxu0
  %1054 = vmatprep.mubr.f32.mxu0 %v556
  %1055 = vmatmul.mubr.f32.gmra.mrb[0].mxu0 %v554
  %v1056 = vpop.f32.mrb[0].mxu0
  %v1057 = vadd.f32 0.0, %v1056
  %v1058 = vpop.f32.mrb[0].mxu0
  %1059 = vmatprep.mubr.f32.mxu0 %v557
  %1060 = vmatmul.mubr.f32.gmra.mrb[0].mxu0 %v555
  %v1061 = vpop.f32.mrb[0].mxu0
  %v1062 = vadd.f32 0.0, %v1061
  %v1063 = vpop.f32.mrb[0].mxu0
  %1064 = vmatprep.mubr.f32.mxu0 %v558
  %1065 = vmatmul.mubr.f32.gmra.mrb[0].mxu0 %v556
  %v1066 = vpop.f32.mrb[0].mxu0
  %v1067 = vadd.f32 0.0, %v1066
  %v1068 = vpop.f32.mrb[0].mxu0
  %1069 = vmatprep.mubr.f32.mxu0 %v559
  %1070 = vmatmul.mubr.f32.gmra.mrb[0].mxu0 %v557
  %v1071 = vpop.f32.mrb[0].mxu0
  %v1072 = vadd.f32 0.0, %v1071
  %v1073 = vpop.f32.mrb[0].mxu0
  %1074 = vmatprep.mubr.f32.mxu0 %v560
  %1075 = vmatmul.mubr.f32.gmra.mrb[0].mxu0 %v558
  %v1076 = vpop.f32.mrb[0].mxu0
  %v1077 = vadd.f32 0.0, %v1076
  %v1078 = vpop.f32.mrb[0].mxu0
  %1079 = vmatprep.mubr.f32.mxu0 %v561
  %1080 = vmatmul.mubr.f32.gmra.mrb[0].mxu0 %v559
  %v1081 = vpop.f32.mrb[0].mxu0
  %v1082 = vadd.f32 0.0, %v1081
  %v1083 = vpop.f32.mrb[0].mxu0
  %1084 = vmatprep.mubr.f32.mxu0 %v562
  %1085 = vmatmul.mubr.f32.gmra.mrb[0].mxu0 %v560
  %v1086 = vpop.f32.mrb[0].mxu0
  %v1087 = vadd.f32 0.0, %v1086
  %v1088 = vpop.f32.mrb[0].mxu0
  %1089 = vmatprep.mubr.f32.mxu0 %v563
  %1090 = vmatmul.mubr.f32.gmra.mrb[0].mxu0 %v561
  %v1091 = vpop.f32.mrb[0].mxu0
  %v1092 = vadd.f32 0.0, %v1091
  %v1093 = vpop.f32.mrb[0].mxu0
  %1094 = vmatprep.mubr.f32.mxu0 %v564
  %1095 = vmatmul.mubr.f32.gmra.mrb[0].mxu0 %v562
  %v1096 = vpop.f32.mrb[0].mxu0
  %v1097 = vadd.f32 0.0, %v1096
  %v1098 = vpop.f32.mrb[0].mxu0
  %1099 = vmatprep.mubr.f32.mxu0 %v565
  %1100 = vmatmul.mubr.f32.gmra.mrb[0].mxu0 %v563
  %v1101 = vpop.f32.mrb[0].mxu0
  %v1102 = vadd.f32 0.0, %v1101
  %v1103 = vpop.f32.mrb[0].mxu0
  %1104 = vmatprep.mubr.f32.mxu0 %v566
  %1105 = vmatmul.mubr.f32.gmra.mrb[0].mxu0 %v564
  %v1106 = vpop.f32.mrb[0].mxu0
  %v1107 = vadd.f32 0.0, %v1106
  %v1108 = vpop.f32.mrb[0].mxu0
  %1109 = vmatprep.mubr.f32.mxu0 %v567
  %1110 = vmatmul.mubr.f32.gmra.mrb[0].mxu0 %v565
  %v1111 = vpop.f32.mrb[0].mxu0
  %v1112 = vadd.f32 0.0, %v1111
  %v1113 = vpop.f32.mrb[0].mxu0
  %1114 = vmatprep.mubr.f32.mxu0 %v568
  %1115 = vmatmul.mubr.f32.gmra.mrb[0].mxu0 %v566
  %v1116 = vpop.f32.mrb[0].mxu0
  %v1117 = vadd.f32 0.0, %v1116
  %v1118 = vpop.f32.mrb[0].mxu0
  %1119 = vmatprep.mubr.f32.mxu0 %v569
  %1120 = vmatmul.mubr.f32.gmra.mrb[0].mxu0 %v567
  %v1121 = vpop.f32.mrb[0].mxu0
  %v1122 = vadd.f32 0.0, %v1121
  %v1123 = vpop.f32.mrb[0].mxu0
  %1124 = vmatprep.mubr.f32.mxu0 %v570
  %1125 = vmatmul.mubr.f32.gmra.mrb[0].mxu0 %v568
  %v1126 = vpop.f32.mrb[0].mxu0
  %v1127 = vadd.f32 0.0, %v1126
  %v1128 = vpop.f32.mrb[0].mxu0
  %1129 = vmatprep.mubr.f32.mxu0 %v571
  %1130 = vmatmul.mubr.f32.gmra.mrb[0].mxu0 %v569
  %v1131 = vpop.f32.mrb[0].mxu0
  %v1132 = vadd.f32 0.0, %v1131
  %v1133 = vpop.f32.mrb[0].mxu0
  %1134 = vmatprep.mubr.f32.mxu0 %v572
  %1135 = vmatmul.mubr.f32.gmra.mrb[0].mxu0 %v570
  %v1136 = vpop.f32.mrb[0].mxu0
  %v1137 = vadd.f32 0.0, %v1136
  %v1138 = vpop.f32.mrb[0].mxu0
  %1139 = vmatprep.mubr.f32.mxu0 %v573
  %1140 = vmatmul.mubr.f32.gmra.mrb[0].mxu0 %v571
  %v1141 = vpop.f32.mrb[0].mxu0
  %v1142 = vadd.f32 0.0, %v1141
  %v1143 = vpop.f32.mrb[0].mxu0
  %1144 = vmatprep.mubr.f32.mxu0 %v574
  %1145 = vmatmul.mubr.f32.gmra.mrb[0].mxu0 %v572
  %v1146 = vpop.f32.mrb[0].mxu0
  %v1147 = vadd.f32 0.0, %v1146
  %v1148 = vpop.f32.mrb[0].mxu0
  %1149 = vmatprep.mubr.f32.mxu0 %v575
  %1150 = vmatmul.mubr.f32.gmra.mrb[0].mxu0 %v573
  %v1151 = vpop.f32.mrb[0].mxu0
  %v1152 = vadd.f32 0.0, %v1151
  %v1153 = vpop.f32.mrb[0].mxu0
  %1154 = vmatprep.mubr.f32.mxu0 %v576
  %1155 = vmatmul.mubr.f32.gmra.mrb[0].mxu0 %v574
  %v1156 = vpop.f32.mrb[0].mxu0
  %v1157 = vadd.f32 0.0, %v1156
  %v1158 = vpop.f32.mrb[0].mxu0
  %1159 = vmatprep.mubr.f32.mxu0 %v577
  %1160 = vmatmul.mubr.f32.gmra.mrb[0].mxu0 %v575
  %v1161 = vpop.f32.mrb[0].mxu0
  %v1162 = vadd.f32 0.0, %v1161
  %v1163 = vpop.f32.mrb[0].mxu0
  %1164 = vmatprep.mubr.f32.mxu0 %v578
  %1165 = vmatmul.mubr.f32.gmra.mrb[0].mxu0 %v576
  %v1166 = vpop.f32.mrb[0].mxu0
  %v1167 = vadd.f32 0.0, %v1166
  %v1168 = vpop.f32.mrb[0].mxu0
  %1169 = vmatprep.mubr.f32.mxu0 %v579
  %1170 = vmatmul.mubr.f32.gmra.mrb[0].mxu0 %v577
  %v1171 = vpop.f32.mrb[0].mxu0
  %v1172 = vadd.f32 0.0, %v1171
  %v1173 = vpop.f32.mrb[0].mxu0
  %1174 = vmatprep.mubr.f32.mxu0 %v580
  %1175 = vmatmul.mubr.f32.gmra.mrb[0].mxu0 %v578
  %v1176 = vpop.f32.mrb[0].mxu0
  %v1177 = vadd.f32 0.0, %v1176
  %v1178 = vpop.f32.mrb[0].mxu0
  %1179 = vmatprep.mubr.f32.mxu0 %v581
  %1180 = vmatmul.mubr.f32.gmra.mrb[0].mxu0 %v579
  %v1181 = vpop.f32.mrb[0].mxu0
  %v1182 = vadd.f32 0.0, %v1181
  %v1183 = vpop.f32.mrb[0].mxu0
  %1184 = vdwg.mxu0
  %1185 = vmatprep.subr.mxu0 0.0
  %1186 = vmatpush1.msra.mxu0 %v688
  %1187 = vmatprep.subr.mxu0 0.0
  %1188 = vmatpush1.msra.mxu0 %v689
  %1189 = vmatprep.subr.mxu0 0.0
  %1190 = vmatpush1.msra.mxu0 %v690
  %1191 = vmatprep.subr.mxu0 0.0
  %1192 = vmatpush1.msra.mxu0 %v691
  %1193 = vmatprep.subr.mxu0 0.0
  %1194 = vmatpush1.msra.mxu0 %v692
  %1195 = vmatprep.subr.mxu0 0.0
  %1196 = vmatpush1.msra.mxu0 %v693
  %1197 = vmatprep.subr.mxu0 0.0
  %1198 = vmatpush1.msra.mxu0 %v694
  %1199 = vmatprep.subr.mxu0 0.0
  %1200 = vmatpush1.msra.mxu0 %v695
  %1201 = vmatprep.subr.mxu0 0.0
  %1202 = vmatpush1.msra.mxu0 %v696
  %1203 = vmatprep.subr.mxu0 0.0
  %1204 = vmatpush1.msra.mxu0 %v697
  %1205 = vmatprep.subr.mxu0 0.0
  %1206 = vmatpush1.msra.mxu0 %v698
  %1207 = vmatprep.subr.mxu0 0.0
  %1208 = vmatpush1.msra.mxu0 %v699
  %1209 = vmatprep.subr.mxu0 0.0
  %1210 = vmatpush1.msra.mxu0 %v700
  %1211 = vmatprep.subr.mxu0 0.0
  %1212 = vmatpush1.msra.mxu0 %v701
  %1213 = vmatprep.subr.mxu0 0.0
  %1214 = vmatpush1.msra.mxu0 %v702
  %1215 = vmatprep.subr.mxu0 0.0
  %1216 = vmatpush1.msra.mxu0 %v703
  %1217 = vmatprep.subr.mxu0 0.0
  %1218 = vmatpush1.msra.mxu0 %v704
  %1219 = vmatprep.subr.mxu0 0.0
  %1220 = vmatpush1.msra.mxu0 %v705
  %1221 = vmatprep.subr.mxu0 0.0
  %1222 = vmatpush1.msra.mxu0 %v706
  %1223 = vmatprep.subr.mxu0 0.0
  %1224 = vmatpush1.msra.mxu0 %v707
  %1225 = vmatprep.subr.mxu0 0.0
  %1226 = vmatpush1.msra.mxu0 %v708
  %1227 = vmatprep.subr.mxu0 0.0
  %1228 = vmatpush1.msra.mxu0 %v709
  %1229 = vmatprep.subr.mxu0 0.0
  %1230 = vmatpush1.msra.mxu0 %v710
  %1231 = vmatprep.subr.mxu0 0.0
  %1232 = vmatpush1.msra.mxu0 %v711
  %1233 = vmatprep.subr.mxu0 0.0
  %1234 = vmatpush1.msra.mxu0 %v712
  %1235 = vmatprep.subr.mxu0 0.0
  %1236 = vmatpush1.msra.mxu0 %v713
  %1237 = vmatprep.subr.mxu0 0.0
  %1238 = vmatpush1.msra.mxu0 %v714
  %1239 = vmatprep.subr.mxu0 0.0
  %1240 = vmatpush1.msra.mxu0 %v715
  %1241 = vmatprep.subr.mxu0 0.0
  %1242 = vmatpush1.msra.mxu0 %v716
  %1243 = vmatprep.subr.mxu0 0.0
  %1244 = vmatpush1.msra.mxu0 %v717
  %1245 = vmatprep.subr.mxu0 0.0
  %1246 = vmatpush1.msra.mxu0 %v718
  %1247 = vmatprep.subr.mxu0 0.0
  %1248 = vmatpush1.msra.mxu0 %v719
  %1249 = vmatprep.mubr.f32.mxu0 %v475
  %1250 = vmatmul.mubr.f32.gmra.mrb[0].mxu0 %v443
  %v1251 = vpop.f32.mrb[0].mxu0
  %v1252 = vadd.f32 %v867, %v1251
  %v1253 = vpop.f32.mrb[0].mxu0
  %1254 = vmatprep.mubr.f32.mxu0 %v476
  %1255 = vmatmul.mubr.f32.gmra.mrb[0].mxu0 %v444
  %v1256 = vpop.f32.mrb[0].mxu0
  %v1257 = vadd.f32 %v872, %v1256
  %v1258 = vpop.f32.mrb[0].mxu0
  %1259 = vmatprep.mubr.f32.mxu0 %v477
  %1260 = vmatmul.mubr.f32.gmra.mrb[0].mxu0 %v445
  %v1261 = vpop.f32.mrb[0].mxu0
  %v1262 = vadd.f32 %v877, %v1261
  %v1263 = vpop.f32.mrb[0].mxu0
  %1264 = vmatprep.mubr.f32.mxu0 %v478
  %1265 = vmatmul.mubr.f32.gmra.mrb[0].mxu0 %v446
  %v1266 = vpop.f32.mrb[0].mxu0
  %v1267 = vadd.f32 %v882, %v1266
  %v1268 = vpop.f32.mrb[0].mxu0
  %1269 = vmatprep.mubr.f32.mxu0 %v479
  %1270 = vmatmul.mubr.f32.gmra.mrb[0].mxu0 %v447
  %v1271 = vpop.f32.mrb[0].mxu0
  %v1272 = vadd.f32 %v887, %v1271
  %v1273 = vpop.f32.mrb[0].mxu0
  %1274 = vmatprep.mubr.f32.mxu0 %v480
  %1275 = vmatmul.mubr.f32.gmra.mrb[0].mxu0 %v448
  %v1276 = vpop.f32.mrb[0].mxu0
  %v1277 = vadd.f32 %v892, %v1276
  %v1278 = vpop.f32.mrb[0].mxu0
  %1279 = vmatprep.mubr.f32.mxu0 %v481
  %1280 = vmatmul.mubr.f32.gmra.mrb[0].mxu0 %v449
  %v1281 = vpop.f32.mrb[0].mxu0
  %v1282 = vadd.f32 %v897, %v1281
  %v1283 = vpop.f32.mrb[0].mxu0
  %1284 = vmatprep.mubr.f32.mxu0 %v482
  %1285 = vmatmul.mubr.f32.gmra.mrb[0].mxu0 %v450
  %v1286 = vpop.f32.mrb[0].mxu0
  %v1287 = vadd.f32 %v902, %v1286
  %v1288 = vpop.f32.mrb[0].mxu0
  %1289 = vmatprep.mubr.f32.mxu0 %v483
  %1290 = vmatmul.mubr.f32.gmra.mrb[0].mxu0 %v451
  %v1291 = vpop.f32.mrb[0].mxu0
  %v1292 = vadd.f32 %v907, %v1291
  %v1293 = vpop.f32.mrb[0].mxu0
  %1294 = vmatprep.mubr.f32.mxu0 %v484
  %1295 = vmatmul.mubr.f32.gmra.mrb[0].mxu0 %v452
  %v1296 = vpop.f32.mrb[0].mxu0
  %v1297 = vadd.f32 %v912, %v1296
  %v1298 = vpop.f32.mrb[0].mxu0
  %1299 = vmatprep.mubr.f32.mxu0 %v485
  %1300 = vmatmul.mubr.f32.gmra.mrb[0].mxu0 %v453
  %v1301 = vpop.f32.mrb[0].mxu0
  %v1302 = vadd.f32 %v917, %v1301
  %v1303 = vpop.f32.mrb[0].mxu0
  %1304 = vmatprep.mubr.f32.mxu0 %v486
  %1305 = vmatmul.mubr.f32.gmra.mrb[0].mxu0 %v454
  %v1306 = vpop.f32.mrb[0].mxu0
  %v1307 = vadd.f32 %v922, %v1306
  %v1308 = vpop.f32.mrb[0].mxu0
  %1309 = vmatprep.mubr.f32.mxu0 %v487
  %1310 = vmatmul.mubr.f32.gmra.mrb[0].mxu0 %v455
  %v1311 = vpop.f32.mrb[0].mxu0
  %v1312 = vadd.f32 %v927, %v1311
  %v1313 = vpop.f32.mrb[0].mxu0
  %1314 = vmatprep.mubr.f32.mxu0 %v488
  %1315 = vmatmul.mubr.f32.gmra.mrb[0].mxu0 %v456
  %v1316 = vpop.f32.mrb[0].mxu0
  %v1317 = vadd.f32 %v932, %v1316
  %v1318 = vpop.f32.mrb[0].mxu0
  %1319 = vmatprep.mubr.f32.mxu0 %v489
  %1320 = vmatmul.mubr.f32.gmra.mrb[0].mxu0 %v457
  %v1321 = vpop.f32.mrb[0].mxu0
  %v1322 = vadd.f32 %v937, %v1321
  %v1323 = vpop.f32.mrb[0].mxu0
  %1324 = vmatprep.mubr.f32.mxu0 %v490
  %1325 = vmatmul.mubr.f32.gmra.mrb[0].mxu0 %v458
  %v1326 = vpop.f32.mrb[0].mxu0
  %v1327 = vadd.f32 %v942, %v1326
  %v1328 = vpop.f32.mrb[0].mxu0
  %1329 = vmatprep.mubr.f32.mxu0 %v491
  %1330 = vmatmul.mubr.f32.gmra.mrb[0].mxu0 %v459
  %v1331 = vpop.f32.mrb[0].mxu0
  %v1332 = vadd.f32 %v947, %v1331
  %v1333 = vpop.f32.mrb[0].mxu0
  %1334 = vmatprep.mubr.f32.mxu0 %v492
  %1335 = vmatmul.mubr.f32.gmra.mrb[0].mxu0 %v460
  %v1336 = vpop.f32.mrb[0].mxu0
  %v1337 = vadd.f32 %v952, %v1336
  %v1338 = vpop.f32.mrb[0].mxu0
  %1339 = vmatprep.mubr.f32.mxu0 %v493
  %1340 = vmatmul.mubr.f32.gmra.mrb[0].mxu0 %v461
  %v1341 = vpop.f32.mrb[0].mxu0
  %v1342 = vadd.f32 %v957, %v1341
  %v1343 = vpop.f32.mrb[0].mxu0
  %1344 = vmatprep.mubr.f32.mxu0 %v494
  %1345 = vmatmul.mubr.f32.gmra.mrb[0].mxu0 %v462
  %v1346 = vpop.f32.mrb[0].mxu0
  %v1347 = vadd.f32 %v962, %v1346
  %v1348 = vpop.f32.mrb[0].mxu0
  %1349 = vmatprep.mubr.f32.mxu0 %v495
  %1350 = vmatmul.mubr.f32.gmra.mrb[0].mxu0 %v463
  %v1351 = vpop.f32.mrb[0].mxu0
  %v1352 = vadd.f32 %v967, %v1351
  %v1353 = vpop.f32.mrb[0].mxu0
  %1354 = vmatprep.mubr.f32.mxu0 %v496
  %1355 = vmatmul.mubr.f32.gmra.mrb[0].mxu0 %v464
  %v1356 = vpop.f32.mrb[0].mxu0
  %v1357 = vadd.f32 %v972, %v1356
  %v1358 = vpop.f32.mrb[0].mxu0
  %1359 = vmatprep.mubr.f32.mxu0 %v497
  %1360 = vmatmul.mubr.f32.gmra.mrb[0].mxu0 %v465
  %v1361 = vpop.f32.mrb[0].mxu0
  %v1362 = vadd.f32 %v977, %v1361
  %v1363 = vpop.f32.mrb[0].mxu0
  %1364 = vmatprep.mubr.f32.mxu0 %v498
  %1365 = vmatmul.mubr.f32.gmra.mrb[0].mxu0 %v466
  %v1366 = vpop.f32.mrb[0].mxu0
  %v1367 = vadd.f32 %v982, %v1366
  %v1368 = vpop.f32.mrb[0].mxu0
  %1369 = vmatprep.mubr.f32.mxu0 %v499
  %1370 = vmatmul.mubr.f32.gmra.mrb[0].mxu0 %v467
  %v1371 = vpop.f32.mrb[0].mxu0
  %v1372 = vadd.f32 %v987, %v1371
  %v1373 = vpop.f32.mrb[0].mxu0
  %1374 = vmatprep.mubr.f32.mxu0 %v500
  %1375 = vmatmul.mubr.f32.gmra.mrb[0].mxu0 %v468
  %v1376 = vpop.f32.mrb[0].mxu0
  %v1377 = vadd.f32 %v992, %v1376
  %v1378 = vpop.f32.mrb[0].mxu0
  %1379 = vmatprep.mubr.f32.mxu0 %v501
  %1380 = vmatmul.mubr.f32.gmra.mrb[0].mxu0 %v469
  %v1381 = vpop.f32.mrb[0].mxu0
  %v1382 = vadd.f32 %v997, %v1381
  %v1383 = vpop.f32.mrb[0].mxu0
  %1384 = vmatprep.mubr.f32.mxu0 %v502
  %1385 = vmatmul.mubr.f32.gmra.mrb[0].mxu0 %v470
  %v1386 = vpop.f32.mrb[0].mxu0
  %v1387 = vadd.f32 %v1002, %v1386
  %v1388 = vpop.f32.mrb[0].mxu0
  %1389 = vmatprep.mubr.f32.mxu0 %v503
  %1390 = vmatmul.mubr.f32.gmra.mrb[0].mxu0 %v471
  %v1391 = vpop.f32.mrb[0].mxu0
  %v1392 = vadd.f32 %v1007, %v1391
  %v1393 = vpop.f32.mrb[0].mxu0
  %1394 = vmatprep.mubr.f32.mxu0 %v504
  %1395 = vmatmul.mubr.f32.gmra.mrb[0].mxu0 %v472
  %v1396 = vpop.f32.mrb[0].mxu0
  %v1397 = vadd.f32 %v1012, %v1396
  %v1398 = vpop.f32.mrb[0].mxu0
  %1399 = vmatprep.mubr.f32.mxu0 %v505
  %1400 = vmatmul.mubr.f32.gmra.mrb[0].mxu0 %v473
  %v1401 = vpop.f32.mrb[0].mxu0
  %v1402 = vadd.f32 %v1017, %v1401
  %v1403 = vpop.f32.mrb[0].mxu0
  %1404 = vmatprep.mubr.f32.mxu0 %v506
  %1405 = vmatmul.mubr.f32.gmra.mrb[0].mxu0 %v474
  %v1406 = vpop.f32.mrb[0].mxu0
  %v1407 = vadd.f32 %v1022, %v1406
  %v1408 = vpop.f32.mrb[0].mxu0
  %1409 = vmatprep.mubr.f32.mxu0 %v584
  %1410 = vmatmul.mubr.f32.gmra.mrb[0].mxu0 %v552
  %v1411 = vpop.f32.mrb[0].mxu0
  %v1412 = vadd.f32 %v1027, %v1411
  %v1413 = vpop.f32.mrb[0].mxu0
  %1414 = vmatprep.mubr.f32.mxu0 %v585
  %1415 = vmatmul.mubr.f32.gmra.mrb[0].mxu0 %v553
  %v1416 = vpop.f32.mrb[0].mxu0
  %v1417 = vadd.f32 %v1032, %v1416
  %v1418 = vpop.f32.mrb[0].mxu0
  %1419 = vmatprep.mubr.f32.mxu0 %v586
  %1420 = vmatmul.mubr.f32.gmra.mrb[0].mxu0 %v554
  %v1421 = vpop.f32.mrb[0].mxu0
  %v1422 = vadd.f32 %v1037, %v1421
  %v1423 = vpop.f32.mrb[0].mxu0
  %1424 = vmatprep.mubr.f32.mxu0 %v587
  %1425 = vmatmul.mubr.f32.gmra.mrb[0].mxu0 %v555
  %v1426 = vpop.f32.mrb[0].mxu0
  %v1427 = vadd.f32 %v1042, %v1426
  %v1428 = vpop.f32.mrb[0].mxu0
  %1429 = vmatprep.mubr.f32.mxu0 %v588
  %1430 = vmatmul.mubr.f32.gmra.mrb[0].mxu0 %v556
  %v1431 = vpop.f32.mrb[0].mxu0
  %v1432 = vadd.f32 %v1047, %v1431
  %v1433 = vpop.f32.mrb[0].mxu0
  %1434 = vmatprep.mubr.f32.mxu0 %v589
  %1435 = vmatmul.mubr.f32.gmra.mrb[0].mxu0 %v557
  %v1436 = vpop.f32.mrb[0].mxu0
  %v1437 = vadd.f32 %v1052, %v1436
  %v1438 = vpop.f32.mrb[0].mxu0
  %1439 = vmatprep.mubr.f32.mxu0 %v590
  %1440 = vmatmul.mubr.f32.gmra.mrb[0].mxu0 %v558
  %v1441 = vpop.f32.mrb[0].mxu0
  %v1442 = vadd.f32 %v1057, %v1441
  %v1443 = vpop.f32.mrb[0].mxu0
  %1444 = vmatprep.mubr.f32.mxu0 %v591
  %1445 = vmatmul.mubr.f32.gmra.mrb[0].mxu0 %v559
  %v1446 = vpop.f32.mrb[0].mxu0
  %v1447 = vadd.f32 %v1062, %v1446
  %v1448 = vpop.f32.mrb[0].mxu0
  %1449 = vmatprep.mubr.f32.mxu0 %v592
  %1450 = vmatmul.mubr.f32.gmra.mrb[0].mxu0 %v560
  %v1451 = vpop.f32.mrb[0].mxu0
  %v1452 = vadd.f32 %v1067, %v1451
  %v1453 = vpop.f32.mrb[0].mxu0
  %1454 = vmatprep.mubr.f32.mxu0 %v593
  %1455 = vmatmul.mubr.f32.gmra.mrb[0].mxu0 %v561
  %v1456 = vpop.f32.mrb[0].mxu0
  %v1457 = vadd.f32 %v1072, %v1456
  %v1458 = vpop.f32.mrb[0].mxu0
  %1459 = vmatprep.mubr.f32.mxu0 %v594
  %1460 = vmatmul.mubr.f32.gmra.mrb[0].mxu0 %v562
  %v1461 = vpop.f32.mrb[0].mxu0
  %v1462 = vadd.f32 %v1077, %v1461
  %v1463 = vpop.f32.mrb[0].mxu0
  %1464 = vmatprep.mubr.f32.mxu0 %v595
  %1465 = vmatmul.mubr.f32.gmra.mrb[0].mxu0 %v563
  %v1466 = vpop.f32.mrb[0].mxu0
  %v1467 = vadd.f32 %v1082, %v1466
  %v1468 = vpop.f32.mrb[0].mxu0
  %1469 = vmatprep.mubr.f32.mxu0 %v596
  %1470 = vmatmul.mubr.f32.gmra.mrb[0].mxu0 %v564
  %v1471 = vpop.f32.mrb[0].mxu0
  %v1472 = vadd.f32 %v1087, %v1471
  %v1473 = vpop.f32.mrb[0].mxu0
  %1474 = vmatprep.mubr.f32.mxu0 %v597
  %1475 = vmatmul.mubr.f32.gmra.mrb[0].mxu0 %v565
  %v1476 = vpop.f32.mrb[0].mxu0
  %v1477 = vadd.f32 %v1092, %v1476
  %v1478 = vpop.f32.mrb[0].mxu0
  %1479 = vmatprep.mubr.f32.mxu0 %v598
  %1480 = vmatmul.mubr.f32.gmra.mrb[0].mxu0 %v566
  %v1481 = vpop.f32.mrb[0].mxu0
  %v1482 = vadd.f32 %v1097, %v1481
  %v1483 = vpop.f32.mrb[0].mxu0
  %1484 = vmatprep.mubr.f32.mxu0 %v599
  %1485 = vmatmul.mubr.f32.gmra.mrb[0].mxu0 %v567
  %v1486 = vpop.f32.mrb[0].mxu0
  %v1487 = vadd.f32 %v1102, %v1486
  %v1488 = vpop.f32.mrb[0].mxu0
  %1489 = vmatprep.mubr.f32.mxu0 %v600
  %1490 = vmatmul.mubr.f32.gmra.mrb[0].mxu0 %v568
  %v1491 = vpop.f32.mrb[0].mxu0
  %v1492 = vadd.f32 %v1107, %v1491
  %v1493 = vpop.f32.mrb[0].mxu0
  %1494 = vmatprep.mubr.f32.mxu0 %v601
  %1495 = vmatmul.mubr.f32.gmra.mrb[0].mxu0 %v569
  %v1496 = vpop.f32.mrb[0].mxu0
  %v1497 = vadd.f32 %v1112, %v1496
  %v1498 = vpop.f32.mrb[0].mxu0
  %1499 = vmatprep.mubr.f32.mxu0 %v602
  %1500 = vmatmul.mubr.f32.gmra.mrb[0].mxu0 %v570
  %v1501 = vpop.f32.mrb[0].mxu0
  %v1502 = vadd.f32 %v1117, %v1501
  %v1503 = vpop.f32.mrb[0].mxu0
  %1504 = vmatprep.mubr.f32.mxu0 %v603
  %1505 = vmatmul.mubr.f32.gmra.mrb[0].mxu0 %v571
  %v1506 = vpop.f32.mrb[0].mxu0
  %v1507 = vadd.f32 %v1122, %v1506
  %v1508 = vpop.f32.mrb[0].mxu0
  %1509 = vmatprep.mubr.f32.mxu0 %v604
  %1510 = vmatmul.mubr.f32.gmra.mrb[0].mxu0 %v572
  %v1511 = vpop.f32.mrb[0].mxu0
  %v1512 = vadd.f32 %v1127, %v1511
  %v1513 = vpop.f32.mrb[0].mxu0
  %1514 = vmatprep.mubr.f32.mxu0 %v605
  %1515 = vmatmul.mubr.f32.gmra.mrb[0].mxu0 %v573
  %v1516 = vpop.f32.mrb[0].mxu0
  %v1517 = vadd.f32 %v1132, %v1516
  %v1518 = vpop.f32.mrb[0].mxu0
  %1519 = vmatprep.mubr.f32.mxu0 %v606
  %1520 = vmatmul.mubr.f32.gmra.mrb[0].mxu0 %v574
  %v1521 = vpop.f32.mrb[0].mxu0
  %v1522 = vadd.f32 %v1137, %v1521
  %v1523 = vpop.f32.mrb[0].mxu0
  %1524 = vmatprep.mubr.f32.mxu0 %v607
  %1525 = vmatmul.mubr.f32.gmra.mrb[0].mxu0 %v575
  %v1526 = vpop.f32.mrb[0].mxu0
  %v1527 = vadd.f32 %v1142, %v1526
  %v1528 = vpop.f32.mrb[0].mxu0
  %1529 = vmatprep.mubr.f32.mxu0 %v608
  %1530 = vmatmul.mubr.f32.gmra.mrb[0].mxu0 %v576
  %v1531 = vpop.f32.mrb[0].mxu0
  %v1532 = vadd.f32 %v1147, %v1531
  %v1533 = vpop.f32.mrb[0].mxu0
  %1534 = vmatprep.mubr.f32.mxu0 %v609
  %1535 = vmatmul.mubr.f32.gmra.mrb[0].mxu0 %v577
  %v1536 = vpop.f32.mrb[0].mxu0
  %v1537 = vadd.f32 %v1152, %v1536
  %v1538 = vpop.f32.mrb[0].mxu0
  %1539 = vmatprep.mubr.f32.mxu0 %v610
  %1540 = vmatmul.mubr.f32.gmra.mrb[0].mxu0 %v578
  %v1541 = vpop.f32.mrb[0].mxu0
  %v1542 = vadd.f32 %v1157, %v1541
  %v1543 = vpop.f32.mrb[0].mxu0
  %1544 = vmatprep.mubr.f32.mxu0 %v611
  %1545 = vmatmul.mubr.f32.gmra.mrb[0].mxu0 %v579
  %v1546 = vpop.f32.mrb[0].mxu0
  %v1547 = vadd.f32 %v1162, %v1546
  %v1548 = vpop.f32.mrb[0].mxu0
  %1549 = vmatprep.mubr.f32.mxu0 %v612
  %1550 = vmatmul.mubr.f32.gmra.mrb[0].mxu0 %v580
  %v1551 = vpop.f32.mrb[0].mxu0
  %v1552 = vadd.f32 %v1167, %v1551
  %v1553 = vpop.f32.mrb[0].mxu0
  %1554 = vmatprep.mubr.f32.mxu0 %v613
  %1555 = vmatmul.mubr.f32.gmra.mrb[0].mxu0 %v581
  %v1556 = vpop.f32.mrb[0].mxu0
  %v1557 = vadd.f32 %v1172, %v1556
  %v1558 = vpop.f32.mrb[0].mxu0
  %1559 = vmatprep.mubr.f32.mxu0 %v614
  %1560 = vmatmul.mubr.f32.gmra.mrb[0].mxu0 %v582
  %v1561 = vpop.f32.mrb[0].mxu0
  %v1562 = vadd.f32 %v1177, %v1561
  %v1563 = vpop.f32.mrb[0].mxu0
  %1564 = vmatprep.mubr.f32.mxu0 %v615
  %1565 = vmatmul.mubr.f32.gmra.mrb[0].mxu0 %v583
  %v1566 = vpop.f32.mrb[0].mxu0
  %v1567 = vadd.f32 %v1182, %v1566
  %v1568 = vpop.f32.mrb[0].mxu0
  %1569 = vdwg.mxu0
  %1570 = vmatprep.subr.mxu0 0.0
  %1571 = vmatpush1.msra.mxu0 %v720
  %1572 = vmatprep.subr.mxu0 0.0
  %1573 = vmatpush1.msra.mxu0 %v721
  %1574 = vmatprep.subr.mxu0 0.0
  %1575 = vmatpush1.msra.mxu0 %v722
  %1576 = vmatprep.subr.mxu0 0.0
  %1577 = vmatpush1.msra.mxu0 %v723
  %1578 = vmatprep.subr.mxu0 0.0
  %1579 = vmatpush1.msra.mxu0 %v724
  %1580 = vmatprep.subr.mxu0 0.0
  %1581 = vmatpush1.msra.mxu0 %v725
  %1582 = vmatprep.subr.mxu0 0.0
  %1583 = vmatpush1.msra.mxu0 %v726
  %1584 = vmatprep.subr.mxu0 0.0
  %1585 = vmatpush1.msra.mxu0 %v727
  %1586 = vmatprep.subr.mxu0 0.0
  %1587 = vmatpush1.msra.mxu0 %v728
  %1588 = vmatprep.subr.mxu0 0.0
  %1589 = vmatpush1.msra.mxu0 %v729
  %1590 = vmatprep.subr.mxu0 0.0
  %1591 = vmatpush1.msra.mxu0 %v730
  %1592 = vmatprep.subr.mxu0 0.0
  %1593 = vmatpush1.msra.mxu0 %v731
  %1594 = vmatprep.subr.mxu0 0.0
  %1595 = vmatpush1.msra.mxu0 %v732
  %1596 = vmatprep.subr.mxu0 0.0
  %1597 = vmatpush1.msra.mxu0 %v733
  %1598 = vmatprep.subr.mxu0 0.0
  %1599 = vmatpush1.msra.mxu0 %v734
  %1600 = vmatprep.subr.mxu0 0.0
  %1601 = vmatpush1.msra.mxu0 %v735
  %1602 = vmatprep.subr.mxu0 0.0
  %1603 = vmatpush1.msra.mxu0 %v736
  %1604 = vmatprep.subr.mxu0 0.0
  %1605 = vmatpush1.msra.mxu0 %v737
  %1606 = vmatprep.subr.mxu0 0.0
  %1607 = vmatpush1.msra.mxu0 %v738
  %1608 = vmatprep.subr.mxu0 0.0
  %1609 = vmatpush1.msra.mxu0 %v739
  %1610 = vmatprep.subr.mxu0 0.0
  %1611 = vmatpush1.msra.mxu0 %v740
  %1612 = vmatprep.subr.mxu0 0.0
  %1613 = vmatpush1.msra.mxu0 %v741
  %1614 = vmatprep.subr.mxu0 0.0
  %1615 = vmatpush1.msra.mxu0 %v742
  %1616 = vmatprep.subr.mxu0 0.0
  %1617 = vmatpush1.msra.mxu0 %v743
  %1618 = vmatprep.subr.mxu0 0.0
  %1619 = vmatpush1.msra.mxu0 %v744
  %1620 = vmatprep.subr.mxu0 0.0
  %1621 = vmatpush1.msra.mxu0 %v745
  %1622 = vmatprep.subr.mxu0 0.0
  %1623 = vmatpush1.msra.mxu0 %v746
  %1624 = vmatprep.subr.mxu0 0.0
  %1625 = vmatpush1.msra.mxu0 %v747
  %1626 = vmatprep.subr.mxu0 0.0
  %1627 = vmatpush1.msra.mxu0 %v748
  %1628 = vmatprep.subr.mxu0 0.0
  %1629 = vmatpush1.msra.mxu0 %v749
  %1630 = vmatprep.subr.mxu0 0.0
  %1631 = vmatpush1.msra.mxu0 %v750
  %1632 = vmatprep.subr.mxu0 0.0
  %1633 = vmatpush1.msra.mxu0 %v751
  %1634 = vmatprep.mubr.f32.mxu0 %v479
  %1635 = vmatmul.mubr.f32.gmra.mrb[0].mxu0 %v477
  %v1636 = vpop.f32.mrb[0].mxu0
  %v1637 = vadd.f32 %v1252, %v1636
  %v1638 = vpop.f32.mrb[0].mxu0
  %1639 = vmatprep.mubr.f32.mxu0 %v480
  %1640 = vmatmul.mubr.f32.gmra.mrb[0].mxu0 %v478
  %v1641 = vpop.f32.mrb[0].mxu0
  %v1642 = vadd.f32 %v1257, %v1641
  %v1643 = vpop.f32.mrb[0].mxu0
  %1644 = vmatprep.mubr.f32.mxu0 %v481
  %1645 = vmatmul.mubr.f32.gmra.mrb[0].mxu0 %v479
  %v1646 = vpop.f32.mrb[0].mxu0
  %v1647 = vadd.f32 %v1262, %v1646
  %v1648 = vpop.f32.mrb[0].mxu0
  %1649 = vmatprep.mubr.f32.mxu0 %v482
  %1650 = vmatmul.mubr.f32.gmra.mrb[0].mxu0 %v480
  %v1651 = vpop.f32.mrb[0].mxu0
  %v1652 = vadd.f32 %v1267, %v1651
  %v1653 = vpop.f32.mrb[0].mxu0
  %1654 = vmatprep.mubr.f32.mxu0 %v483
  %1655 = vmatmul.mubr.f32.gmra.mrb[0].mxu0 %v481
  %v1656 = vpop.f32.mrb[0].mxu0
  %v1657 = vadd.f32 %v1272, %v1656
  %v1658 = vpop.f32.mrb[0].mxu0
  %1659 = vmatprep.mubr.f32.mxu0 %v484
  %1660 = vmatmul.mubr.f32.gmra.mrb[0].mxu0 %v482
  %v1661 = vpop.f32.mrb[0].mxu0
  %v1662 = vadd.f32 %v1277, %v1661
  %v1663 = vpop.f32.mrb[0].mxu0
  %1664 = vmatprep.mubr.f32.mxu0 %v485
  %1665 = vmatmul.mubr.f32.gmra.mrb[0].mxu0 %v483
  %v1666 = vpop.f32.mrb[0].mxu0
  %v1667 = vadd.f32 %v1282, %v1666
  %v1668 = vpop.f32.mrb[0].mxu0
  %1669 = vmatprep.mubr.f32.mxu0 %v486
  %1670 = vmatmul.mubr.f32.gmra.mrb[0].mxu0 %v484
  %v1671 = vpop.f32.mrb[0].mxu0
  %v1672 = vadd.f32 %v1287, %v1671
  %v1673 = vpop.f32.mrb[0].mxu0
  %1674 = vmatprep.mubr.f32.mxu0 %v487
  %1675 = vmatmul.mubr.f32.gmra.mrb[0].mxu0 %v485
  %v1676 = vpop.f32.mrb[0].mxu0
  %v1677 = vadd.f32 %v1292, %v1676
  %v1678 = vpop.f32.mrb[0].mxu0
  %1679 = vmatprep.mubr.f32.mxu0 %v488
  %1680 = vmatmul.mubr.f32.gmra.mrb[0].mxu0 %v486
  %v1681 = vpop.f32.mrb[0].mxu0
  %v1682 = vadd.f32 %v1297, %v1681
  %v1683 = vpop.f32.mrb[0].mxu0
  %1684 = vmatprep.mubr.f32.mxu0 %v489
  %1685 = vmatmul.mubr.f32.gmra.mrb[0].mxu0 %v487
  %v1686 = vpop.f32.mrb[0].mxu0
  %v1687 = vadd.f32 %v1302, %v1686
  %v1688 = vpop.f32.mrb[0].mxu0
  %1689 = vmatprep.mubr.f32.mxu0 %v490
  %1690 = vmatmul.mubr.f32.gmra.mrb[0].mxu0 %v488
  %v1691 = vpop.f32.mrb[0].mxu0
  %v1692 = vadd.f32 %v1307, %v1691
  %v1693 = vpop.f32.mrb[0].mxu0
  %1694 = vmatprep.mubr.f32.mxu0 %v491
  %1695 = vmatmul.mubr.f32.gmra.mrb[0].mxu0 %v489
  %v1696 = vpop.f32.mrb[0].mxu0
  %v1697 = vadd.f32 %v1312, %v1696
  %v1698 = vpop.f32.mrb[0].mxu0
  %1699 = vmatprep.mubr.f32.mxu0 %v492
  %1700 = vmatmul.mubr.f32.gmra.mrb[0].mxu0 %v490
  %v1701 = vpop.f32.mrb[0].mxu0
  %v1702 = vadd.f32 %v1317, %v1701
  %v1703 = vpop.f32.mrb[0].mxu0
  %1704 = vmatprep.mubr.f32.mxu0 %v493
  %1705 = vmatmul.mubr.f32.gmra.mrb[0].mxu0 %v491
  %v1706 = vpop.f32.mrb[0].mxu0
  %v1707 = vadd.f32 %v1322, %v1706
  %v1708 = vpop.f32.mrb[0].mxu0
  %1709 = vmatprep.mubr.f32.mxu0 %v494
  %1710 = vmatmul.mubr.f32.gmra.mrb[0].mxu0 %v492
  %v1711 = vpop.f32.mrb[0].mxu0
  %v1712 = vadd.f32 %v1327, %v1711
  %v1713 = vpop.f32.mrb[0].mxu0
  %1714 = vmatprep.mubr.f32.mxu0 %v495
  %1715 = vmatmul.mubr.f32.gmra.mrb[0].mxu0 %v493
  %v1716 = vpop.f32.mrb[0].mxu0
  %v1717 = vadd.f32 %v1332, %v1716
  %v1718 = vpop.f32.mrb[0].mxu0
  %1719 = vmatprep.mubr.f32.mxu0 %v496
  %1720 = vmatmul.mubr.f32.gmra.mrb[0].mxu0 %v494
  %v1721 = vpop.f32.mrb[0].mxu0
  %v1722 = vadd.f32 %v1337, %v1721
  %v1723 = vpop.f32.mrb[0].mxu0
  %1724 = vmatprep.mubr.f32.mxu0 %v497
  %1725 = vmatmul.mubr.f32.gmra.mrb[0].mxu0 %v495
  %v1726 = vpop.f32.mrb[0].mxu0
  %v1727 = vadd.f32 %v1342, %v1726
  %v1728 = vpop.f32.mrb[0].mxu0
  %1729 = vmatprep.mubr.f32.mxu0 %v498
  %1730 = vmatmul.mubr.f32.gmra.mrb[0].mxu0 %v496
  %v1731 = vpop.f32.mrb[0].mxu0
  %v1732 = vadd.f32 %v1347, %v1731
  %v1733 = vpop.f32.mrb[0].mxu0
  %1734 = vmatprep.mubr.f32.mxu0 %v499
  %1735 = vmatmul.mubr.f32.gmra.mrb[0].mxu0 %v497
  %v1736 = vpop.f32.mrb[0].mxu0
  %v1737 = vadd.f32 %v1352, %v1736
  %v1738 = vpop.f32.mrb[0].mxu0
  %1739 = vmatprep.mubr.f32.mxu0 %v500
  %1740 = vmatmul.mubr.f32.gmra.mrb[0].mxu0 %v498
  %v1741 = vpop.f32.mrb[0].mxu0
  %v1742 = vadd.f32 %v1357, %v1741
  %v1743 = vpop.f32.mrb[0].mxu0
  %1744 = vmatprep.mubr.f32.mxu0 %v501
  %1745 = vmatmul.mubr.f32.gmra.mrb[0].mxu0 %v499
  %v1746 = vpop.f32.mrb[0].mxu0
  %v1747 = vadd.f32 %v1362, %v1746
  %v1748 = vpop.f32.mrb[0].mxu0
  %1749 = vmatprep.mubr.f32.mxu0 %v502
  %1750 = vmatmul.mubr.f32.gmra.mrb[0].mxu0 %v500
  %v1751 = vpop.f32.mrb[0].mxu0
  %v1752 = vadd.f32 %v1367, %v1751
  %v1753 = vpop.f32.mrb[0].mxu0
  %1754 = vmatprep.mubr.f32.mxu0 %v503
  %1755 = vmatmul.mubr.f32.gmra.mrb[0].mxu0 %v501
  %v1756 = vpop.f32.mrb[0].mxu0
  %v1757 = vadd.f32 %v1372, %v1756
  %v1758 = vpop.f32.mrb[0].mxu0
  %1759 = vmatprep.mubr.f32.mxu0 %v504
  %1760 = vmatmul.mubr.f32.gmra.mrb[0].mxu0 %v502
  %v1761 = vpop.f32.mrb[0].mxu0
  %v1762 = vadd.f32 %v1377, %v1761
  %v1763 = vpop.f32.mrb[0].mxu0
  %1764 = vmatprep.mubr.f32.mxu0 %v505
  %1765 = vmatmul.mubr.f32.gmra.mrb[0].mxu0 %v503
  %v1766 = vpop.f32.mrb[0].mxu0
  %v1767 = vadd.f32 %v1382, %v1766
  %v1768 = vpop.f32.mrb[0].mxu0
  %1769 = vmatprep.mubr.f32.mxu0 %v506
  %1770 = vmatmul.mubr.f32.gmra.mrb[0].mxu0 %v504
  %v1771 = vpop.f32.mrb[0].mxu0
  %v1772 = vadd.f32 %v1387, %v1771
  %v1773 = vpop.f32.mrb[0].mxu0
  %1774 = vmatprep.mubr.f32.mxu0 %v507
  %1775 = vmatmul.mubr.f32.gmra.mrb[0].mxu0 %v505
  %v1776 = vpop.f32.mrb[0].mxu0
  %v1777 = vadd.f32 %v1392, %v1776
  %v1778 = vpop.f32.mrb[0].mxu0
  %1779 = vmatprep.mubr.f32.mxu0 %v508
  %1780 = vmatmul.mubr.f32.gmra.mrb[0].mxu0 %v506
  %v1781 = vpop.f32.mrb[0].mxu0
  %v1782 = vadd.f32 %v1397, %v1781
  %v1783 = vpop.f32.mrb[0].mxu0
  %1784 = vmatprep.mubr.f32.mxu0 %v509
  %1785 = vmatmul.mubr.f32.gmra.mrb[0].mxu0 %v507
  %v1786 = vpop.f32.mrb[0].mxu0
  %v1787 = vadd.f32 %v1402, %v1786
  %v1788 = vpop.f32.mrb[0].mxu0
  %1789 = vmatprep.mubr.f32.mxu0 %v510
  %1790 = vmatmul.mubr.f32.gmra.mrb[0].mxu0 %v508
  %v1791 = vpop.f32.mrb[0].mxu0
  %v1792 = vadd.f32 %v1407, %v1791
  %v1793 = vpop.f32.mrb[0].mxu0
  %1794 = vmatprep.mubr.f32.mxu0 %v588
  %1795 = vmatmul.mubr.f32.gmra.mrb[0].mxu0 %v586
  %v1796 = vpop.f32.mrb[0].mxu0
  %v1797 = vadd.f32 %v1412, %v1796
  %v1798 = vpop.f32.mrb[0].mxu0
  %1799 = vmatprep.mubr.f32.mxu0 %v589
  %1800 = vmatmul.mubr.f32.gmra.mrb[0].mxu0 %v587
  %v1801 = vpop.f32.mrb[0].mxu0
  %v1802 = vadd.f32 %v1417, %v1801
  %v1803 = vpop.f32.mrb[0].mxu0
  %1804 = vmatprep.mubr.f32.mxu0 %v590
  %1805 = vmatmul.mubr.f32.gmra.mrb[0].mxu0 %v588
  %v1806 = vpop.f32.mrb[0].mxu0
  %v1807 = vadd.f32 %v1422, %v1806
  %v1808 = vpop.f32.mrb[0].mxu0
  %1809 = vmatprep.mubr.f32.mxu0 %v591
  %1810 = vmatmul.mubr.f32.gmra.mrb[0].mxu0 %v589
  %v1811 = vpop.f32.mrb[0].mxu0
  %v1812 = vadd.f32 %v1427, %v1811
  %v1813 = vpop.f32.mrb[0].mxu0
  %1814 = vmatprep.mubr.f32.mxu0 %v592
  %1815 = vmatmul.mubr.f32.gmra.mrb[0].mxu0 %v590
  %v1816 = vpop.f32.mrb[0].mxu0
  %v1817 = vadd.f32 %v1432, %v1816
  %v1818 = vpop.f32.mrb[0].mxu0
  %1819 = vmatprep.mubr.f32.mxu0 %v593
  %1820 = vmatmul.mubr.f32.gmra.mrb[0].mxu0 %v591
  %v1821 = vpop.f32.mrb[0].mxu0
  %v1822 = vadd.f32 %v1437, %v1821
  %v1823 = vpop.f32.mrb[0].mxu0
  %1824 = vmatprep.mubr.f32.mxu0 %v594
  %1825 = vmatmul.mubr.f32.gmra.mrb[0].mxu0 %v592
  %v1826 = vpop.f32.mrb[0].mxu0
  %v1827 = vadd.f32 %v1442, %v1826
  %v1828 = vpop.f32.mrb[0].mxu0
  %1829 = vmatprep.mubr.f32.mxu0 %v595
  %1830 = vmatmul.mubr.f32.gmra.mrb[0].mxu0 %v593
  %v1831 = vpop.f32.mrb[0].mxu0
  %v1832 = vadd.f32 %v1447, %v1831
  %v1833 = vpop.f32.mrb[0].mxu0
  %1834 = vmatprep.mubr.f32.mxu0 %v596
  %1835 = vmatmul.mubr.f32.gmra.mrb[0].mxu0 %v594
  %v1836 = vpop.f32.mrb[0].mxu0
  %v1837 = vadd.f32 %v1452, %v1836
  %v1838 = vpop.f32.mrb[0].mxu0
  %1839 = vmatprep.mubr.f32.mxu0 %v597
  %1840 = vmatmul.mubr.f32.gmra.mrb[0].mxu0 %v595
  %v1841 = vpop.f32.mrb[0].mxu0
  %v1842 = vadd.f32 %v1457, %v1841
  %v1843 = vpop.f32.mrb[0].mxu0
  %1844 = vmatprep.mubr.f32.mxu0 %v598
  %1845 = vmatmul.mubr.f32.gmra.mrb[0].mxu0 %v596
  %v1846 = vpop.f32.mrb[0].mxu0
  %v1847 = vadd.f32 %v1462, %v1846
  %v1848 = vpop.f32.mrb[0].mxu0
  %1849 = vmatprep.mubr.f32.mxu0 %v599
  %1850 = vmatmul.mubr.f32.gmra.mrb[0].mxu0 %v597
  %v1851 = vpop.f32.mrb[0].mxu0
  %v1852 = vadd.f32 %v1467, %v1851
  %v1853 = vpop.f32.mrb[0].mxu0
  %1854 = vmatprep.mubr.f32.mxu0 %v600
  %1855 = vmatmul.mubr.f32.gmra.mrb[0].mxu0 %v598
  %v1856 = vpop.f32.mrb[0].mxu0
  %v1857 = vadd.f32 %v1472, %v1856
  %v1858 = vpop.f32.mrb[0].mxu0
  %1859 = vmatprep.mubr.f32.mxu0 %v601
  %1860 = vmatmul.mubr.f32.gmra.mrb[0].mxu0 %v599
  %v1861 = vpop.f32.mrb[0].mxu0
  %v1862 = vadd.f32 %v1477, %v1861
  %v1863 = vpop.f32.mrb[0].mxu0
  %1864 = vmatprep.mubr.f32.mxu0 %v602
  %1865 = vmatmul.mubr.f32.gmra.mrb[0].mxu0 %v600
  %v1866 = vpop.f32.mrb[0].mxu0
  %v1867 = vadd.f32 %v1482, %v1866
  %v1868 = vpop.f32.mrb[0].mxu0
  %1869 = vmatprep.mubr.f32.mxu0 %v603
  %1870 = vmatmul.mubr.f32.gmra.mrb[0].mxu0 %v601
  %v1871 = vpop.f32.mrb[0].mxu0
  %v1872 = vadd.f32 %v1487, %v1871
  %v1873 = vpop.f32.mrb[0].mxu0
  %1874 = vmatprep.mubr.f32.mxu0 %v604
  %1875 = vmatmul.mubr.f32.gmra.mrb[0].mxu0 %v602
  %v1876 = vpop.f32.mrb[0].mxu0
  %v1877 = vadd.f32 %v1492, %v1876
  %v1878 = vpop.f32.mrb[0].mxu0
  %1879 = vmatprep.mubr.f32.mxu0 %v605
  %1880 = vmatmul.mubr.f32.gmra.mrb[0].mxu0 %v603
  %v1881 = vpop.f32.mrb[0].mxu0
  %v1882 = vadd.f32 %v1497, %v1881
  %v1883 = vpop.f32.mrb[0].mxu0
  %1884 = vmatprep.mubr.f32.mxu0 %v606
  %1885 = vmatmul.mubr.f32.gmra.mrb[0].mxu0 %v604
  %v1886 = vpop.f32.mrb[0].mxu0
  %v1887 = vadd.f32 %v1502, %v1886
  %v1888 = vpop.f32.mrb[0].mxu0
  %1889 = vmatprep.mubr.f32.mxu0 %v607
  %1890 = vmatmul.mubr.f32.gmra.mrb[0].mxu0 %v605
  %v1891 = vpop.f32.mrb[0].mxu0
  %v1892 = vadd.f32 %v1507, %v1891
  %v1893 = vpop.f32.mrb[0].mxu0
  %1894 = vmatprep.mubr.f32.mxu0 %v608
  %1895 = vmatmul.mubr.f32.gmra.mrb[0].mxu0 %v606
  %v1896 = vpop.f32.mrb[0].mxu0
  %v1897 = vadd.f32 %v1512, %v1896
  %v1898 = vpop.f32.mrb[0].mxu0
  %1899 = vmatprep.mubr.f32.mxu0 %v609
  %1900 = vmatmul.mubr.f32.gmra.mrb[0].mxu0 %v607
  %v1901 = vpop.f32.mrb[0].mxu0
  %v1902 = vadd.f32 %v1517, %v1901
  %v1903 = vpop.f32.mrb[0].mxu0
  %1904 = vmatprep.mubr.f32.mxu0 %v610
  %1905 = vmatmul.mubr.f32.gmra.mrb[0].mxu0 %v608
  %v1906 = vpop.f32.mrb[0].mxu0
  %v1907 = vadd.f32 %v1522, %v1906
  %v1908 = vpop.f32.mrb[0].mxu0
  %1909 = vmatprep.mubr.f32.mxu0 %v611
  %1910 = vmatmul.mubr.f32.gmra.mrb[0].mxu0 %v609
  %v1911 = vpop.f32.mrb[0].mxu0
  %v1912 = vadd.f32 %v1527, %v1911
  %v1913 = vpop.f32.mrb[0].mxu0
  %1914 = vmatprep.mubr.f32.mxu0 %v612
  %1915 = vmatmul.mubr.f32.gmra.mrb[0].mxu0 %v610
  %v1916 = vpop.f32.mrb[0].mxu0
  %v1917 = vadd.f32 %v1532, %v1916
  %v1918 = vpop.f32.mrb[0].mxu0
  %1919 = vmatprep.mubr.f32.mxu0 %v613
  %1920 = vmatmul.mubr.f32.gmra.mrb[0].mxu0 %v611
  %v1921 = vpop.f32.mrb[0].mxu0
  %v1922 = vadd.f32 %v1537, %v1921
  %v1923 = vpop.f32.mrb[0].mxu0
  %1924 = vmatprep.mubr.f32.mxu0 %v614
  %1925 = vmatmul.mubr.f32.gmra.mrb[0].mxu0 %v612
  %v1926 = vpop.f32.mrb[0].mxu0
  %v1927 = vadd.f32 %v1542, %v1926
  %v1928 = vpop.f32.mrb[0].mxu0
  %1929 = vmatprep.mubr.f32.mxu0 %v615
  %1930 = vmatmul.mubr.f32.gmra.mrb[0].mxu0 %v613
  %v1931 = vpop.f32.mrb[0].mxu0
  %v1932 = vadd.f32 %v1547, %v1931
  %v1933 = vpop.f32.mrb[0].mxu0
  %1934 = vmatprep.mubr.f32.mxu0 %v616
  %1935 = vmatmul.mubr.f32.gmra.mrb[0].mxu0 %v614
  %v1936 = vpop.f32.mrb[0].mxu0
  %v1937 = vadd.f32 %v1552, %v1936
  %v1938 = vpop.f32.mrb[0].mxu0
  %1939 = vmatprep.mubr.f32.mxu0 %v617
  %1940 = vmatmul.mubr.f32.gmra.mrb[0].mxu0 %v615
  %v1941 = vpop.f32.mrb[0].mxu0
  %v1942 = vadd.f32 %v1557, %v1941
  %v1943 = vpop.f32.mrb[0].mxu0
  %1944 = vmatprep.mubr.f32.mxu0 %v618
  %1945 = vmatmul.mubr.f32.gmra.mrb[0].mxu0 %v616
  %v1946 = vpop.f32.mrb[0].mxu0
  %v1947 = vadd.f32 %v1562, %v1946
  %v1948 = vpop.f32.mrb[0].mxu0
  %1949 = vmatprep.mubr.f32.mxu0 %v619
  %1950 = vmatmul.mubr.f32.gmra.mrb[0].mxu0 %v617
  %v1951 = vpop.f32.mrb[0].mxu0
  %v1952 = vadd.f32 %v1567, %v1951
  %v1953 = vpop.f32.mrb[0].mxu0
  %1954 = vdwg.mxu0
  %1955 = vmatprep.subr.mxu0 0.0
  %1956 = vmatpush1.msra.mxu0 %v752
  %1957 = vmatprep.subr.mxu0 0.0
  %1958 = vmatpush1.msra.mxu0 %v753
  %1959 = vmatprep.subr.mxu0 0.0
  %1960 = vmatpush1.msra.mxu0 %v754
  %1961 = vmatprep.subr.mxu0 0.0
  %1962 = vmatpush1.msra.mxu0 %v755
  %1963 = vmatprep.subr.mxu0 0.0
  %1964 = vmatpush1.msra.mxu0 %v756
  %1965 = vmatprep.subr.mxu0 0.0
  %1966 = vmatpush1.msra.mxu0 %v757
  %1967 = vmatprep.subr.mxu0 0.0
  %1968 = vmatpush1.msra.mxu0 %v758
  %1969 = vmatprep.subr.mxu0 0.0
  %1970 = vmatpush1.msra.mxu0 %v759
  %1971 = vmatprep.subr.mxu0 0.0
  %1972 = vmatpush1.msra.mxu0 %v760
  %1973 = vmatprep.subr.mxu0 0.0
  %1974 = vmatpush1.msra.mxu0 %v761
  %1975 = vmatprep.subr.mxu0 0.0
  %1976 = vmatpush1.msra.mxu0 %v762
  %1977 = vmatprep.subr.mxu0 0.0
  %1978 = vmatpush1.msra.mxu0 %v763
  %1979 = vmatprep.subr.mxu0 0.0
  %1980 = vmatpush1.msra.mxu0 %v764
  %1981 = vmatprep.subr.mxu0 0.0
  %1982 = vmatpush1.msra.mxu0 %v765
  %1983 = vmatprep.subr.mxu0 0.0
  %1984 = vmatpush1.msra.mxu0 %v766
  %1985 = vmatprep.subr.mxu0 0.0
  %1986 = vmatpush1.msra.mxu0 %v767
  %1987 = vmatprep.subr.mxu0 0.0
  %1988 = vmatpush1.msra.mxu0 %v768
  %1989 = vmatprep.subr.mxu0 0.0
  %1990 = vmatpush1.msra.mxu0 %v769
  %1991 = vmatprep.subr.mxu0 0.0
  %1992 = vmatpush1.msra.mxu0 %v770
  %1993 = vmatprep.subr.mxu0 0.0
  %1994 = vmatpush1.msra.mxu0 %v771
  %1995 = vmatprep.subr.mxu0 0.0
  %1996 = vmatpush1.msra.mxu0 %v772
  %1997 = vmatprep.subr.mxu0 0.0
  %1998 = vmatpush1.msra.mxu0 %v773
  %1999 = vmatprep.subr.mxu0 0.0
  %2000 = vmatpush1.msra.mxu0 %v774
  %2001 = vmatprep.subr.mxu0 0.0
  %2002 = vmatpush1.msra.mxu0 %v775
  %2003 = vmatprep.subr.mxu0 0.0
  %2004 = vmatpush1.msra.mxu0 %v776
  %2005 = vmatprep.subr.mxu0 0.0
  %2006 = vmatpush1.msra.mxu0 %v777
  %2007 = vmatprep.subr.mxu0 0.0
  %2008 = vmatpush1.msra.mxu0 %v778
  %2009 = vmatprep.subr.mxu0 0.0
  %2010 = vmatpush1.msra.mxu0 %v779
  %2011 = vmatprep.subr.mxu0 0.0
  %2012 = vmatpush1.msra.mxu0 %v780
  %2013 = vmatprep.subr.mxu0 0.0
  %2014 = vmatpush1.msra.mxu0 %v781
  %2015 = vmatprep.subr.mxu0 0.0
  %2016 = vmatpush1.msra.mxu0 %v782
  %2017 = vmatprep.subr.mxu0 0.0
  %2018 = vmatpush1.msra.mxu0 %v783
  %2019 = vmatprep.mubr.f32.mxu0 %v513
  %2020 = vmatmul.mubr.f32.gmra.mrb[0].mxu0 %v511
  %v2021 = vpop.f32.mrb[0].mxu0
  %v2022 = vadd.f32 %v1637, %v2021
  %v2023 = vpop.f32.mrb[0].mxu0
  %2024 = vmatprep.mubr.f32.mxu0 %v514
  %2025 = vmatmul.mubr.f32.gmra.mrb[0].mxu0 %v512
  %v2026 = vpop.f32.mrb[0].mxu0
  %v2027 = vadd.f32 %v1642, %v2026
  %v2028 = vpop.f32.mrb[0].mxu0
  %2029 = vmatprep.mubr.f32.mxu0 %v515
  %2030 = vmatmul.mubr.f32.gmra.mrb[0].mxu0 %v513
  %v2031 = vpop.f32.mrb[0].mxu0
  %v2032 = vadd.f32 %v1647, %v2031
  %v2033 = vpop.f32.mrb[0].mxu0
  %2034 = vmatprep.mubr.f32.mxu0 %v516
  %2035 = vmatmul.mubr.f32.gmra.mrb[0].mxu0 %v514
  %v2036 = vpop.f32.mrb[0].mxu0
  %v2037 = vadd.f32 %v1652, %v2036
  %v2038 = vpop.f32.mrb[0].mxu0
  %2039 = vmatprep.mubr.f32.mxu0 %v517
  %2040 = vmatmul.mubr.f32.gmra.mrb[0].mxu0 %v515
  %v2041 = vpop.f32.mrb[0].mxu0
  %v2042 = vadd.f32 %v1657, %v2041
  %v2043 = vpop.f32.mrb[0].mxu0
  %2044 = vmatprep.mubr.f32.mxu0 %v518
  %2045 = vmatmul.mubr.f32.gmra.mrb[0].mxu0 %v516
  %v2046 = vpop.f32.mrb[0].mxu0
  %v2047 = vadd.f32 %v1662, %v2046
  %v2048 = vpop.f32.mrb[0].mxu0
  %2049 = vmatprep.mubr.f32.mxu0 %v519
  %2050 = vmatmul.mubr.f32.gmra.mrb[0].mxu0 %v517
  %v2051 = vpop.f32.mrb[0].mxu0
  %v2052 = vadd.f32 %v1667, %v2051
  %v2053 = vpop.f32.mrb[0].mxu0
  %2054 = vmatprep.mubr.f32.mxu0 %v520
  %2055 = vmatmul.mubr.f32.gmra.mrb[0].mxu0 %v518
  %v2056 = vpop.f32.mrb[0].mxu0
  %v2057 = vadd.f32 %v1672, %v2056
  %v2058 = vpop.f32.mrb[0].mxu0
  %2059 = vmatprep.mubr.f32.mxu0 %v521
  %2060 = vmatmul.mubr.f32.gmra.mrb[0].mxu0 %v519
  %v2061 = vpop.f32.mrb[0].mxu0
  %v2062 = vadd.f32 %v1677, %v2061
  %v2063 = vpop.f32.mrb[0].mxu0
  %2064 = vmatprep.mubr.f32.mxu0 %v522
  %2065 = vmatmul.mubr.f32.gmra.mrb[0].mxu0 %v520
  %v2066 = vpop.f32.mrb[0].mxu0
  %v2067 = vadd.f32 %v1682, %v2066
  %v2068 = vpop.f32.mrb[0].mxu0
  %2069 = vmatprep.mubr.f32.mxu0 %v523
  %2070 = vmatmul.mubr.f32.gmra.mrb[0].mxu0 %v521
  %v2071 = vpop.f32.mrb[0].mxu0
  %v2072 = vadd.f32 %v1687, %v2071
  %v2073 = vpop.f32.mrb[0].mxu0
  %2074 = vmatprep.mubr.f32.mxu0 %v524
  %2075 = vmatmul.mubr.f32.gmra.mrb[0].mxu0 %v522
  %v2076 = vpop.f32.mrb[0].mxu0
  %v2077 = vadd.f32 %v1692, %v2076
  %v2078 = vpop.f32.mrb[0].mxu0
  %2079 = vmatprep.mubr.f32.mxu0 %v525
  %2080 = vmatmul.mubr.f32.gmra.mrb[0].mxu0 %v523
  %v2081 = vpop.f32.mrb[0].mxu0
  %v2082 = vadd.f32 %v1697, %v2081
  %v2083 = vpop.f32.mrb[0].mxu0
  %2084 = vmatprep.mubr.f32.mxu0 %v526
  %2085 = vmatmul.mubr.f32.gmra.mrb[0].mxu0 %v524
  %v2086 = vpop.f32.mrb[0].mxu0
  %v2087 = vadd.f32 %v1702, %v2086
  %v2088 = vpop.f32.mrb[0].mxu0
  %2089 = vmatprep.mubr.f32.mxu0 %v527
  %2090 = vmatmul.mubr.f32.gmra.mrb[0].mxu0 %v525
  %v2091 = vpop.f32.mrb[0].mxu0
  %v2092 = vadd.f32 %v1707, %v2091
  %v2093 = vpop.f32.mrb[0].mxu0
  %2094 = vmatprep.mubr.f32.mxu0 %v528
  %2095 = vmatmul.mubr.f32.gmra.mrb[0].mxu0 %v526
  %v2096 = vpop.f32.mrb[0].mxu0
  %v2097 = vadd.f32 %v1712, %v2096
  %v2098 = vpop.f32.mrb[0].mxu0
  %2099 = vmatprep.mubr.f32.mxu0 %v529
  %2100 = vmatmul.mubr.f32.gmra.mrb[0].mxu0 %v527
  %v2101 = vpop.f32.mrb[0].mxu0
  %v2102 = vadd.f32 %v1717, %v2101
  %v2103 = vpop.f32.mrb[0].mxu0
  %2104 = vmatprep.mubr.f32.mxu0 %v530
  %2105 = vmatmul.mubr.f32.gmra.mrb[0].mxu0 %v528
  %v2106 = vpop.f32.mrb[0].mxu0
  %v2107 = vadd.f32 %v1722, %v2106
  %v2108 = vpop.f32.mrb[0].mxu0
  %2109 = vmatprep.mubr.f32.mxu0 %v531
  %2110 = vmatmul.mubr.f32.gmra.mrb[0].mxu0 %v529
  %v2111 = vpop.f32.mrb[0].mxu0
  %v2112 = vadd.f32 %v1727, %v2111
  %v2113 = vpop.f32.mrb[0].mxu0
  %2114 = vmatprep.mubr.f32.mxu0 %v532
  %2115 = vmatmul.mubr.f32.gmra.mrb[0].mxu0 %v530
  %v2116 = vpop.f32.mrb[0].mxu0
  %v2117 = vadd.f32 %v1732, %v2116
  %v2118 = vpop.f32.mrb[0].mxu0
  %2119 = vmatprep.mubr.f32.mxu0 %v533
  %2120 = vmatmul.mubr.f32.gmra.mrb[0].mxu0 %v531
  %v2121 = vpop.f32.mrb[0].mxu0
  %v2122 = vadd.f32 %v1737, %v2121
  %v2123 = vpop.f32.mrb[0].mxu0
  %2124 = vmatprep.mubr.f32.mxu0 %v534
  %2125 = vmatmul.mubr.f32.gmra.mrb[0].mxu0 %v532
  %v2126 = vpop.f32.mrb[0].mxu0
  %v2127 = vadd.f32 %v1742, %v2126
  %v2128 = vpop.f32.mrb[0].mxu0
  %2129 = vmatprep.mubr.f32.mxu0 %v535
  %2130 = vmatmul.mubr.f32.gmra.mrb[0].mxu0 %v533
  %v2131 = vpop.f32.mrb[0].mxu0
  %v2132 = vadd.f32 %v1747, %v2131
  %v2133 = vpop.f32.mrb[0].mxu0
  %2134 = vmatprep.mubr.f32.mxu0 %v536
  %2135 = vmatmul.mubr.f32.gmra.mrb[0].mxu0 %v534
  %v2136 = vpop.f32.mrb[0].mxu0
  %v2137 = vadd.f32 %v1752, %v2136
  %v2138 = vpop.f32.mrb[0].mxu0
  %2139 = vmatprep.mubr.f32.mxu0 %v537
  %2140 = vmatmul.mubr.f32.gmra.mrb[0].mxu0 %v535
  %v2141 = vpop.f32.mrb[0].mxu0
  %v2142 = vadd.f32 %v1757, %v2141
  %v2143 = vpop.f32.mrb[0].mxu0
  %2144 = vmatprep.mubr.f32.mxu0 %v538
  %2145 = vmatmul.mubr.f32.gmra.mrb[0].mxu0 %v536
  %v2146 = vpop.f32.mrb[0].mxu0
  %v2147 = vadd.f32 %v1762, %v2146
  %v2148 = vpop.f32.mrb[0].mxu0
  %2149 = vmatprep.mubr.f32.mxu0 %v539
  %2150 = vmatmul.mubr.f32.gmra.mrb[0].mxu0 %v537
  %v2151 = vpop.f32.mrb[0].mxu0
  %v2152 = vadd.f32 %v1767, %v2151
  %v2153 = vpop.f32.mrb[0].mxu0
  %2154 = vmatprep.mubr.f32.mxu0 %v540
  %2155 = vmatmul.mubr.f32.gmra.mrb[0].mxu0 %v538
  %v2156 = vpop.f32.mrb[0].mxu0
  %v2157 = vadd.f32 %v1772, %v2156
  %v2158 = vpop.f32.mrb[0].mxu0
  %2159 = vmatprep.mubr.f32.mxu0 %v541
  %2160 = vmatmul.mubr.f32.gmra.mrb[0].mxu0 %v539
  %v2161 = vpop.f32.mrb[0].mxu0
  %v2162 = vadd.f32 %v1777, %v2161
  %v2163 = vpop.f32.mrb[0].mxu0
  %2164 = vmatprep.mubr.f32.mxu0 %v542
  %2165 = vmatmul.mubr.f32.gmra.mrb[0].mxu0 %v540
  %v2166 = vpop.f32.mrb[0].mxu0
  %v2167 = vadd.f32 %v1782, %v2166
  %v2168 = vpop.f32.mrb[0].mxu0
  %2169 = vmatprep.mubr.f32.mxu0 %v543
  %2170 = vmatmul.mubr.f32.gmra.mrb[0].mxu0 %v541
  %v2171 = vpop.f32.mrb[0].mxu0
  %v2172 = vadd.f32 %v1787, %v2171
  %v2173 = vpop.f32.mrb[0].mxu0
  %2174 = vmatprep.mubr.f32.mxu0 %v544
  %2175 = vmatmul.mubr.f32.gmra.mrb[0].mxu0 %v542
  %v2176 = vpop.f32.mrb[0].mxu0
  %v2177 = vadd.f32 %v1792, %v2176
  %v2178 = vpop.f32.mrb[0].mxu0
  %2179 = vmatprep.mubr.f32.mxu0 %v622
  %2180 = vmatmul.mubr.f32.gmra.mrb[0].mxu0 %v620
  %v2181 = vpop.f32.mrb[0].mxu0
  %v2182 = vadd.f32 %v1797, %v2181
  %v2183 = vpop.f32.mrb[0].mxu0
  %2184 = vmatprep.mubr.f32.mxu0 %v623
  %2185 = vmatmul.mubr.f32.gmra.mrb[0].mxu0 %v621
  %v2186 = vpop.f32.mrb[0].mxu0
  %v2187 = vadd.f32 %v1802, %v2186
  %v2188 = vpop.f32.mrb[0].mxu0
  %2189 = vmatprep.mubr.f32.mxu0 %v624
  %2190 = vmatmul.mubr.f32.gmra.mrb[0].mxu0 %v622
  %v2191 = vpop.f32.mrb[0].mxu0
  %v2192 = vadd.f32 %v1807, %v2191
  %v2193 = vpop.f32.mrb[0].mxu0
  %2194 = vmatprep.mubr.f32.mxu0 %v625
  %2195 = vmatmul.mubr.f32.gmra.mrb[0].mxu0 %v623
  %v2196 = vpop.f32.mrb[0].mxu0
  %v2197 = vadd.f32 %v1812, %v2196
  %v2198 = vpop.f32.mrb[0].mxu0
  %2199 = vmatprep.mubr.f32.mxu0 %v626
  %2200 = vmatmul.mubr.f32.gmra.mrb[0].mxu0 %v624
  %v2201 = vpop.f32.mrb[0].mxu0
  %v2202 = vadd.f32 %v1817, %v2201
  %v2203 = vpop.f32.mrb[0].mxu0
  %2204 = vmatprep.mubr.f32.mxu0 %v627
  %2205 = vmatmul.mubr.f32.gmra.mrb[0].mxu0 %v625
  %v2206 = vpop.f32.mrb[0].mxu0
  %v2207 = vadd.f32 %v1822, %v2206
  %v2208 = vpop.f32.mrb[0].mxu0
  %2209 = vmatprep.mubr.f32.mxu0 %v628
  %2210 = vmatmul.mubr.f32.gmra.mrb[0].mxu0 %v626
  %v2211 = vpop.f32.mrb[0].mxu0
  %v2212 = vadd.f32 %v1827, %v2211
  %v2213 = vpop.f32.mrb[0].mxu0
  %2214 = vmatprep.mubr.f32.mxu0 %v629
  %2215 = vmatmul.mubr.f32.gmra.mrb[0].mxu0 %v627
  %v2216 = vpop.f32.mrb[0].mxu0
  %v2217 = vadd.f32 %v1832, %v2216
  %v2218 = vpop.f32.mrb[0].mxu0
  %2219 = vmatprep.mubr.f32.mxu0 %v630
  %2220 = vmatmul.mubr.f32.gmra.mrb[0].mxu0 %v628
  %v2221 = vpop.f32.mrb[0].mxu0
  %v2222 = vadd.f32 %v1837, %v2221
  %v2223 = vpop.f32.mrb[0].mxu0
  %2224 = vmatprep.mubr.f32.mxu0 %v631
  %2225 = vmatmul.mubr.f32.gmra.mrb[0].mxu0 %v629
  %v2226 = vpop.f32.mrb[0].mxu0
  %v2227 = vadd.f32 %v1842, %v2226
  %v2228 = vpop.f32.mrb[0].mxu0
  %2229 = vmatprep.mubr.f32.mxu0 %v632
  %2230 = vmatmul.mubr.f32.gmra.mrb[0].mxu0 %v630
  %v2231 = vpop.f32.mrb[0].mxu0
  %v2232 = vadd.f32 %v1847, %v2231
  %v2233 = vpop.f32.mrb[0].mxu0
  %2234 = vmatprep.mubr.f32.mxu0 %v633
  %2235 = vmatmul.mubr.f32.gmra.mrb[0].mxu0 %v631
  %v2236 = vpop.f32.mrb[0].mxu0
  %v2237 = vadd.f32 %v1852, %v2236
  %v2238 = vpop.f32.mrb[0].mxu0
  %2239 = vmatprep.mubr.f32.mxu0 %v634
  %2240 = vmatmul.mubr.f32.gmra.mrb[0].mxu0 %v632
  %v2241 = vpop.f32.mrb[0].mxu0
  %v2242 = vadd.f32 %v1857, %v2241
  %v2243 = vpop.f32.mrb[0].mxu0
  %2244 = vmatprep.mubr.f32.mxu0 %v635
  %2245 = vmatmul.mubr.f32.gmra.mrb[0].mxu0 %v633
  %v2246 = vpop.f32.mrb[0].mxu0
  %v2247 = vadd.f32 %v1862, %v2246
  %v2248 = vpop.f32.mrb[0].mxu0
  %2249 = vmatprep.mubr.f32.mxu0 %v636
  %2250 = vmatmul.mubr.f32.gmra.mrb[0].mxu0 %v634
  %v2251 = vpop.f32.mrb[0].mxu0
  %v2252 = vadd.f32 %v1867, %v2251
  %v2253 = vpop.f32.mrb[0].mxu0
  %2254 = vmatprep.mubr.f32.mxu0 %v637
  %2255 = vmatmul.mubr.f32.gmra.mrb[0].mxu0 %v635
  %v2256 = vpop.f32.mrb[0].mxu0
  %v2257 = vadd.f32 %v1872, %v2256
  %v2258 = vpop.f32.mrb[0].mxu0
  %2259 = vmatprep.mubr.f32.mxu0 %v638
  %2260 = vmatmul.mubr.f32.gmra.mrb[0].mxu0 %v636
  %v2261 = vpop.f32.mrb[0].mxu0
  %v2262 = vadd.f32 %v1877, %v2261
  %v2263 = vpop.f32.mrb[0].mxu0
  %2264 = vmatprep.mubr.f32.mxu0 %v639
  %2265 = vmatmul.mubr.f32.gmra.mrb[0].mxu0 %v637
  %v2266 = vpop.f32.mrb[0].mxu0
  %v2267 = vadd.f32 %v1882, %v2266
  %v2268 = vpop.f32.mrb[0].mxu0
  %2269 = vmatprep.mubr.f32.mxu0 %v640
  %2270 = vmatmul.mubr.f32.gmra.mrb[0].mxu0 %v638
  %v2271 = vpop.f32.mrb[0].mxu0
  %v2272 = vadd.f32 %v1887, %v2271
  %v2273 = vpop.f32.mrb[0].mxu0
  %2274 = vmatprep.mubr.f32.mxu0 %v641
  %2275 = vmatmul.mubr.f32.gmra.mrb[0].mxu0 %v639
  %v2276 = vpop.f32.mrb[0].mxu0
  %v2277 = vadd.f32 %v1892, %v2276
  %v2278 = vpop.f32.mrb[0].mxu0
  %2279 = vmatprep.mubr.f32.mxu0 %v642
  %2280 = vmatmul.mubr.f32.gmra.mrb[0].mxu0 %v640
  %v2281 = vpop.f32.mrb[0].mxu0
  %v2282 = vadd.f32 %v1897, %v2281
  %v2283 = vpop.f32.mrb[0].mxu0
  %2284 = vmatprep.mubr.f32.mxu0 %v643
  %2285 = vmatmul.mubr.f32.gmra.mrb[0].mxu0 %v641
  %v2286 = vpop.f32.mrb[0].mxu0
  %v2287 = vadd.f32 %v1902, %v2286
  %v2288 = vpop.f32.mrb[0].mxu0
  %2289 = vmatprep.mubr.f32.mxu0 %v644
  %2290 = vmatmul.mubr.f32.gmra.mrb[0].mxu0 %v642
  %v2291 = vpop.f32.mrb[0].mxu0
  %v2292 = vadd.f32 %v1907, %v2291
  %v2293 = vpop.f32.mrb[0].mxu0
  %2294 = vmatprep.mubr.f32.mxu0 %v645
  %2295 = vmatmul.mubr.f32.gmra.mrb[0].mxu0 %v643
  %v2296 = vpop.f32.mrb[0].mxu0
  %v2297 = vadd.f32 %v1912, %v2296
  %v2298 = vpop.f32.mrb[0].mxu0
  %2299 = vmatprep.mubr.f32.mxu0 %v646
  %2300 = vmatmul.mubr.f32.gmra.mrb[0].mxu0 %v644
  %v2301 = vpop.f32.mrb[0].mxu0
  %v2302 = vadd.f32 %v1917, %v2301
  %v2303 = vpop.f32.mrb[0].mxu0
  %2304 = vmatprep.mubr.f32.mxu0 %v647
  %2305 = vmatmul.mubr.f32.gmra.mrb[0].mxu0 %v645
  %v2306 = vpop.f32.mrb[0].mxu0
  %v2307 = vadd.f32 %v1922, %v2306
  %v2308 = vpop.f32.mrb[0].mxu0
  %2309 = vmatprep.mubr.f32.mxu0 %v648
  %2310 = vmatmul.mubr.f32.gmra.mrb[0].mxu0 %v646
  %v2311 = vpop.f32.mrb[0].mxu0
  %v2312 = vadd.f32 %v1927, %v2311
  %v2313 = vpop.f32.mrb[0].mxu0
  %2314 = vmatprep.mubr.f32.mxu0 %v649
  %2315 = vmatmul.mubr.f32.gmra.mrb[0].mxu0 %v647
  %v2316 = vpop.f32.mrb[0].mxu0
  %v2317 = vadd.f32 %v1932, %v2316
  %v2318 = vpop.f32.mrb[0].mxu0
  %2319 = vmatprep.mubr.f32.mxu0 %v650
  %2320 = vmatmul.mubr.f32.gmra.mrb[0].mxu0 %v648
  %v2321 = vpop.f32.mrb[0].mxu0
  %v2322 = vadd.f32 %v1937, %v2321
  %v2323 = vpop.f32.mrb[0].mxu0
  %2324 = vmatprep.mubr.f32.mxu0 %v651
  %2325 = vmatmul.mubr.f32.gmra.mrb[0].mxu0 %v649
  %v2326 = vpop.f32.mrb[0].mxu0
  %v2327 = vadd.f32 %v1942, %v2326
  %v2328 = vpop.f32.mrb[0].mxu0
  %2329 = vmatprep.mubr.f32.mxu0 %v652
  %2330 = vmatmul.mubr.f32.gmra.mrb[0].mxu0 %v650
  %v2331 = vpop.f32.mrb[0].mxu0
  %v2332 = vadd.f32 %v1947, %v2331
  %v2333 = vpop.f32.mrb[0].mxu0
  %2334 = vmatprep.mubr.f32.mxu0 %v653
  %2335 = vmatmul.mubr.f32.gmra.mrb[0].mxu0 %v651
  %v2336 = vpop.f32.mrb[0].mxu0
  %v2337 = vadd.f32 %v1952, %v2336
  %v2338 = vpop.f32.mrb[0].mxu0
  %2339 = vdwg.mxu0
  %2340 = vmatprep.subr.mxu0 0.0
  %2341 = vmatpush1.msra.mxu0 %v784
  %2342 = vmatprep.subr.mxu0 0.0
  %2343 = vmatpush1.msra.mxu0 %v785
  %2344 = vmatprep.subr.mxu0 0.0
  %2345 = vmatpush1.msra.mxu0 %v786
  %2346 = vmatprep.subr.mxu0 0.0
  %2347 = vmatpush1.msra.mxu0 %v787
  %2348 = vmatprep.subr.mxu0 0.0
  %2349 = vmatpush1.msra.mxu0 %v788
  %2350 = vmatprep.subr.mxu0 0.0
  %2351 = vmatpush1.msra.mxu0 %v789
  %2352 = vmatprep.subr.mxu0 0.0
  %2353 = vmatpush1.msra.mxu0 %v790
  %2354 = vmatprep.subr.mxu0 0.0
  %2355 = vmatpush1.msra.mxu0 %v791
  %2356 = vmatprep.subr.mxu0 0.0
  %2357 = vmatpush1.msra.mxu0 %v792
  %2358 = vmatprep.subr.mxu0 0.0
  %2359 = vmatpush1.msra.mxu0 %v793
  %2360 = vmatprep.subr.mxu0 0.0
  %2361 = vmatpush1.msra.mxu0 %v794
  %2362 = vmatprep.subr.mxu0 0.0
  %2363 = vmatpush1.msra.mxu0 %v795
  %2364 = vmatprep.subr.mxu0 0.0
  %2365 = vmatpush1.msra.mxu0 %v796
  %2366 = vmatprep.subr.mxu0 0.0
  %2367 = vmatpush1.msra.mxu0 %v797
  %2368 = vmatprep.subr.mxu0 0.0
  %2369 = vmatpush1.msra.mxu0 %v798
  %2370 = vmatprep.subr.mxu0 0.0
  %2371 = vmatpush1.msra.mxu0 %v799
  %2372 = vmatprep.subr.mxu0 0.0
  %2373 = vmatpush1.msra.mxu0 0.0
  %2374 = vmatprep.subr.mxu0 0.0
  %2375 = vmatpush1.msra.mxu0 0.0
  %2376 = vmatprep.subr.mxu0 0.0
  %2377 = vmatpush1.msra.mxu0 0.0
  %2378 = vmatprep.subr.mxu0 0.0
  %2379 = vmatpush1.msra.mxu0 0.0
  %2380 = vmatprep.subr.mxu0 0.0
  %2381 = vmatpush1.msra.mxu0 0.0
  %2382 = vmatprep.subr.mxu0 0.0
  %2383 = vmatpush1.msra.mxu0 0.0
  %2384 = vmatprep.subr.mxu0 0.0
  %2385 = vmatpush1.msra.mxu0 0.0
  %2386 = vmatprep.subr.mxu0 0.0
  %2387 = vmatpush1.msra.mxu0 0.0
  %2388 = vmatprep.subr.mxu0 0.0
  %2389 = vmatpush1.msra.mxu0 0.0
  %2390 = vmatprep.subr.mxu0 0.0
  %2391 = vmatpush1.msra.mxu0 0.0
  %2392 = vmatprep.subr.mxu0 0.0
  %2393 = vmatpush1.msra.mxu0 0.0
  %2394 = vmatprep.subr.mxu0 0.0
  %2395 = vmatpush1.msra.mxu0 0.0
  %2396 = vmatprep.subr.mxu0 0.0
  %2397 = vmatpush1.msra.mxu0 0.0
  %2398 = vmatprep.subr.mxu0 0.0
  %2399 = vmatpush1.msra.mxu0 0.0
  %2400 = vmatprep.subr.mxu0 0.0
  %2401 = vmatpush1.msra.mxu0 0.0
  %2402 = vmatprep.subr.mxu0 0.0
  %2403 = vmatpush1.msra.mxu0 0.0
  %2404 = vmatprep.mubr.f32.mxu0 0.0
  %2405 = vmatmul.mubr.f32.gmra.mrb[0].mxu0 %v515
  %v2406 = vpop.f32.mrb[0].mxu0
  %v2407 = vadd.f32 %v2022, %v2406
  %v2408 = vpop.f32.mrb[0].mxu0
  %2409 = vmatprep.mubr.f32.mxu0 0.0
  %2410 = vmatmul.mubr.f32.gmra.mrb[0].mxu0 %v516
  %v2411 = vpop.f32.mrb[0].mxu0
  %v2412 = vadd.f32 %v2027, %v2411
  %v2413 = vpop.f32.mrb[0].mxu0
  %2414 = vmatprep.mubr.f32.mxu0 0.0
  %2415 = vmatmul.mubr.f32.gmra.mrb[0].mxu0 %v517
  %v2416 = vpop.f32.mrb[0].mxu0
  %v2417 = vadd.f32 %v2032, %v2416
  %v2418 = vpop.f32.mrb[0].mxu0
  %2419 = vmatprep.mubr.f32.mxu0 0.0
  %2420 = vmatmul.mubr.f32.gmra.mrb[0].mxu0 %v518
  %v2421 = vpop.f32.mrb[0].mxu0
  %v2422 = vadd.f32 %v2037, %v2421
  %v2423 = vpop.f32.mrb[0].mxu0
  %2424 = vmatprep.mubr.f32.mxu0 0.0
  %2425 = vmatmul.mubr.f32.gmra.mrb[0].mxu0 %v519
  %v2426 = vpop.f32.mrb[0].mxu0
  %v2427 = vadd.f32 %v2042, %v2426
  %v2428 = vpop.f32.mrb[0].mxu0
  %2429 = vmatprep.mubr.f32.mxu0 0.0
  %2430 = vmatmul.mubr.f32.gmra.mrb[0].mxu0 %v520
  %v2431 = vpop.f32.mrb[0].mxu0
  %v2432 = vadd.f32 %v2047, %v2431
  %v2433 = vpop.f32.mrb[0].mxu0
  %2434 = vmatprep.mubr.f32.mxu0 0.0
  %2435 = vmatmul.mubr.f32.gmra.mrb[0].mxu0 %v521
  %v2436 = vpop.f32.mrb[0].mxu0
  %v2437 = vadd.f32 %v2052, %v2436
  %v2438 = vpop.f32.mrb[0].mxu0
  %2439 = vmatprep.mubr.f32.mxu0 0.0
  %2440 = vmatmul.mubr.f32.gmra.mrb[0].mxu0 %v522
  %v2441 = vpop.f32.mrb[0].mxu0
  %v2442 = vadd.f32 %v2057, %v2441
  %v2443 = vpop.f32.mrb[0].mxu0
  %2444 = vmatprep.mubr.f32.mxu0 0.0
  %2445 = vmatmul.mubr.f32.gmra.mrb[0].mxu0 %v523
  %v2446 = vpop.f32.mrb[0].mxu0
  %v2447 = vadd.f32 %v2062, %v2446
  %v2448 = vpop.f32.mrb[0].mxu0
  %2449 = vmatprep.mubr.f32.mxu0 0.0
  %2450 = vmatmul.mubr.f32.gmra.mrb[0].mxu0 %v524
  %v2451 = vpop.f32.mrb[0].mxu0
  %v2452 = vadd.f32 %v2067, %v2451
  %v2453 = vpop.f32.mrb[0].mxu0
  %2454 = vmatprep.mubr.f32.mxu0 0.0
  %2455 = vmatmul.mubr.f32.gmra.mrb[0].mxu0 %v525
  %v2456 = vpop.f32.mrb[0].mxu0
  %v2457 = vadd.f32 %v2072, %v2456
  %v2458 = vpop.f32.mrb[0].mxu0
  %2459 = vmatprep.mubr.f32.mxu0 0.0
  %2460 = vmatmul.mubr.f32.gmra.mrb[0].mxu0 %v526
  %v2461 = vpop.f32.mrb[0].mxu0
  %v2462 = vadd.f32 %v2077, %v2461
  %v2463 = vpop.f32.mrb[0].mxu0
  %2464 = vmatprep.mubr.f32.mxu0 0.0
  %2465 = vmatmul.mubr.f32.gmra.mrb[0].mxu0 %v527
  %v2466 = vpop.f32.mrb[0].mxu0
  %v2467 = vadd.f32 %v2082, %v2466
  %v2468 = vpop.f32.mrb[0].mxu0
  %2469 = vmatprep.mubr.f32.mxu0 0.0
  %2470 = vmatmul.mubr.f32.gmra.mrb[0].mxu0 %v528
  %v2471 = vpop.f32.mrb[0].mxu0
  %v2472 = vadd.f32 %v2087, %v2471
  %v2473 = vpop.f32.mrb[0].mxu0
  %2474 = vmatprep.mubr.f32.mxu0 0.0
  %2475 = vmatmul.mubr.f32.gmra.mrb[0].mxu0 %v529
  %v2476 = vpop.f32.mrb[0].mxu0
  %v2477 = vadd.f32 %v2092, %v2476
  %v2478 = vpop.f32.mrb[0].mxu0
  %2479 = vmatprep.mubr.f32.mxu0 0.0
  %2480 = vmatmul.mubr.f32.gmra.mrb[0].mxu0 %v530
  %v2481 = vpop.f32.mrb[0].mxu0
  %v2482 = vadd.f32 %v2097, %v2481
  %v2483 = vpop.f32.mrb[0].mxu0
  %2484 = vmatprep.mubr.f32.mxu0 0.0
  %2485 = vmatmul.mubr.f32.gmra.mrb[0].mxu0 %v531
  %v2486 = vpop.f32.mrb[0].mxu0
  %v2487 = vadd.f32 %v2102, %v2486
  %v2488 = vpop.f32.mrb[0].mxu0
  %2489 = vmatprep.mubr.f32.mxu0 0.0
  %2490 = vmatmul.mubr.f32.gmra.mrb[0].mxu0 %v532
  %v2491 = vpop.f32.mrb[0].mxu0
  %v2492 = vadd.f32 %v2107, %v2491
  %v2493 = vpop.f32.mrb[0].mxu0
  %2494 = vmatprep.mubr.f32.mxu0 0.0
  %2495 = vmatmul.mubr.f32.gmra.mrb[0].mxu0 %v533
  %v2496 = vpop.f32.mrb[0].mxu0
  %v2497 = vadd.f32 %v2112, %v2496
  %v2498 = vpop.f32.mrb[0].mxu0
  %2499 = vmatprep.mubr.f32.mxu0 0.0
  %2500 = vmatmul.mubr.f32.gmra.mrb[0].mxu0 %v534
  %v2501 = vpop.f32.mrb[0].mxu0
  %v2502 = vadd.f32 %v2117, %v2501
  %v2503 = vpop.f32.mrb[0].mxu0
  %2504 = vmatprep.mubr.f32.mxu0 0.0
  %2505 = vmatmul.mubr.f32.gmra.mrb[0].mxu0 %v535
  %v2506 = vpop.f32.mrb[0].mxu0
  %v2507 = vadd.f32 %v2122, %v2506
  %v2508 = vpop.f32.mrb[0].mxu0
  %2509 = vmatprep.mubr.f32.mxu0 0.0
  %2510 = vmatmul.mubr.f32.gmra.mrb[0].mxu0 %v536
  %v2511 = vpop.f32.mrb[0].mxu0
  %v2512 = vadd.f32 %v2127, %v2511
  %v2513 = vpop.f32.mrb[0].mxu0
  %2514 = vmatprep.mubr.f32.mxu0 0.0
  %2515 = vmatmul.mubr.f32.gmra.mrb[0].mxu0 %v537
  %v2516 = vpop.f32.mrb[0].mxu0
  %v2517 = vadd.f32 %v2132, %v2516
  %v2518 = vpop.f32.mrb[0].mxu0
  %2519 = vmatprep.mubr.f32.mxu0 0.0
  %2520 = vmatmul.mubr.f32.gmra.mrb[0].mxu0 %v538
  %v2521 = vpop.f32.mrb[0].mxu0
  %v2522 = vadd.f32 %v2137, %v2521
  %v2523 = vpop.f32.mrb[0].mxu0
  %2524 = vmatprep.mubr.f32.mxu0 0.0
  %2525 = vmatmul.mubr.f32.gmra.mrb[0].mxu0 %v539
  %v2526 = vpop.f32.mrb[0].mxu0
  %v2527 = vadd.f32 %v2142, %v2526
  %v2528 = vpop.f32.mrb[0].mxu0
  %2529 = vmatprep.mubr.f32.mxu0 0.0
  %2530 = vmatmul.mubr.f32.gmra.mrb[0].mxu0 %v540
  %v2531 = vpop.f32.mrb[0].mxu0
  %v2532 = vadd.f32 %v2147, %v2531
  %v2533 = vpop.f32.mrb[0].mxu0
  %2534 = vmatprep.mubr.f32.mxu0 0.0
  %2535 = vmatmul.mubr.f32.gmra.mrb[0].mxu0 %v541
  %v2536 = vpop.f32.mrb[0].mxu0
  %v2537 = vadd.f32 %v2152, %v2536
  %v2538 = vpop.f32.mrb[0].mxu0
  %2539 = vmatprep.mubr.f32.mxu0 0.0
  %2540 = vmatmul.mubr.f32.gmra.mrb[0].mxu0 %v542
  %v2541 = vpop.f32.mrb[0].mxu0
  %v2542 = vadd.f32 %v2157, %v2541
  %v2543 = vpop.f32.mrb[0].mxu0
  %2544 = vmatprep.mubr.f32.mxu0 0.0
  %2545 = vmatmul.mubr.f32.gmra.mrb[0].mxu0 %v543
  %v2546 = vpop.f32.mrb[0].mxu0
  %v2547 = vadd.f32 %v2162, %v2546
  %v2548 = vpop.f32.mrb[0].mxu0
  %2549 = vmatprep.mubr.f32.mxu0 0.0
  %2550 = vmatmul.mubr.f32.gmra.mrb[0].mxu0 %v544
  %v2551 = vpop.f32.mrb[0].mxu0
  %v2552 = vadd.f32 %v2167, %v2551
  %v2553 = vpop.f32.mrb[0].mxu0
  %2554 = vmatprep.mubr.f32.mxu0 0.0
  %2555 = vmatmul.mubr.f32.gmra.mrb[0].mxu0 %v545
  %v2556 = vpop.f32.mrb[0].mxu0
  %v2557 = vadd.f32 %v2172, %v2556
  %v2558 = vpop.f32.mrb[0].mxu0
  %2559 = vmatprep.mubr.f32.mxu0 0.0
  %2560 = vmatmul.mubr.f32.gmra.mrb[0].mxu0 %v546
  %v2561 = vpop.f32.mrb[0].mxu0
  %v2562 = vadd.f32 %v2177, %v2561
  %v2563 = vpop.f32.mrb[0].mxu0
  %2564 = vmatprep.mubr.f32.mxu0 0.0
  %2565 = vmatmul.mubr.f32.gmra.mrb[0].mxu0 %v624
  %v2566 = vpop.f32.mrb[0].mxu0
  %v2567 = vadd.f32 %v2182, %v2566
  %v2568 = vpop.f32.mrb[0].mxu0
  %2569 = vmatprep.mubr.f32.mxu0 0.0
  %2570 = vmatmul.mubr.f32.gmra.mrb[0].mxu0 %v625
  %v2571 = vpop.f32.mrb[0].mxu0
  %v2572 = vadd.f32 %v2187, %v2571
  %v2573 = vpop.f32.mrb[0].mxu0
  %2574 = vmatprep.mubr.f32.mxu0 0.0
  %2575 = vmatmul.mubr.f32.gmra.mrb[0].mxu0 %v626
  %v2576 = vpop.f32.mrb[0].mxu0
  %v2577 = vadd.f32 %v2192, %v2576
  %v2578 = vpop.f32.mrb[0].mxu0
  %2579 = vmatprep.mubr.f32.mxu0 0.0
  %2580 = vmatmul.mubr.f32.gmra.mrb[0].mxu0 %v627
  %v2581 = vpop.f32.mrb[0].mxu0
  %v2582 = vadd.f32 %v2197, %v2581
  %v2583 = vpop.f32.mrb[0].mxu0
  %2584 = vmatprep.mubr.f32.mxu0 0.0
  %2585 = vmatmul.mubr.f32.gmra.mrb[0].mxu0 %v628
  %v2586 = vpop.f32.mrb[0].mxu0
  %v2587 = vadd.f32 %v2202, %v2586
  %v2588 = vpop.f32.mrb[0].mxu0
  %2589 = vmatprep.mubr.f32.mxu0 0.0
  %2590 = vmatmul.mubr.f32.gmra.mrb[0].mxu0 %v629
  %v2591 = vpop.f32.mrb[0].mxu0
  %v2592 = vadd.f32 %v2207, %v2591
  %v2593 = vpop.f32.mrb[0].mxu0
  %2594 = vmatprep.mubr.f32.mxu0 0.0
  %2595 = vmatmul.mubr.f32.gmra.mrb[0].mxu0 %v630
  %v2596 = vpop.f32.mrb[0].mxu0
  %v2597 = vadd.f32 %v2212, %v2596
  %v2598 = vpop.f32.mrb[0].mxu0
  %2599 = vmatprep.mubr.f32.mxu0 0.0
  %2600 = vmatmul.mubr.f32.gmra.mrb[0].mxu0 %v631
  %v2601 = vpop.f32.mrb[0].mxu0
  %v2602 = vadd.f32 %v2217, %v2601
  %v2603 = vpop.f32.mrb[0].mxu0
  %2604 = vmatprep.mubr.f32.mxu0 0.0
  %2605 = vmatmul.mubr.f32.gmra.mrb[0].mxu0 %v632
  %v2606 = vpop.f32.mrb[0].mxu0
  %v2607 = vadd.f32 %v2222, %v2606
  %v2608 = vpop.f32.mrb[0].mxu0
  %2609 = vmatprep.mubr.f32.mxu0 0.0
  %2610 = vmatmul.mubr.f32.gmra.mrb[0].mxu0 %v633
  %v2611 = vpop.f32.mrb[0].mxu0
  %v2612 = vadd.f32 %v2227, %v2611
  %v2613 = vpop.f32.mrb[0].mxu0
  %2614 = vmatprep.mubr.f32.mxu0 0.0
  %2615 = vmatmul.mubr.f32.gmra.mrb[0].mxu0 %v634
  %v2616 = vpop.f32.mrb[0].mxu0
  %v2617 = vadd.f32 %v2232, %v2616
  %v2618 = vpop.f32.mrb[0].mxu0
  %2619 = vmatprep.mubr.f32.mxu0 0.0
  %2620 = vmatmul.mubr.f32.gmra.mrb[0].mxu0 %v635
  %v2621 = vpop.f32.mrb[0].mxu0
  %v2622 = vadd.f32 %v2237, %v2621
  %v2623 = vpop.f32.mrb[0].mxu0
  %2624 = vmatprep.mubr.f32.mxu0 0.0
  %2625 = vmatmul.mubr.f32.gmra.mrb[0].mxu0 %v636
  %v2626 = vpop.f32.mrb[0].mxu0
  %v2627 = vadd.f32 %v2242, %v2626
  %v2628 = vpop.f32.mrb[0].mxu0
  %2629 = vmatprep.mubr.f32.mxu0 0.0
  %2630 = vmatmul.mubr.f32.gmra.mrb[0].mxu0 %v637
  %v2631 = vpop.f32.mrb[0].mxu0
  %v2632 = vadd.f32 %v2247, %v2631
  %v2633 = vpop.f32.mrb[0].mxu0
  %2634 = vmatprep.mubr.f32.mxu0 0.0
  %2635 = vmatmul.mubr.f32.gmra.mrb[0].mxu0 %v638
  %v2636 = vpop.f32.mrb[0].mxu0
  %v2637 = vadd.f32 %v2252, %v2636
  %v2638 = vpop.f32.mrb[0].mxu0
  %2639 = vmatprep.mubr.f32.mxu0 0.0
  %2640 = vmatmul.mubr.f32.gmra.mrb[0].mxu0 %v639
  %v2641 = vpop.f32.mrb[0].mxu0
  %v2642 = vadd.f32 %v2257, %v2641
  %v2643 = vpop.f32.mrb[0].mxu0
  %2644 = vmatprep.mubr.f32.mxu0 0.0
  %2645 = vmatmul.mubr.f32.gmra.mrb[0].mxu0 %v640
  %v2646 = vpop.f32.mrb[0].mxu0
  %v2647 = vadd.f32 %v2262, %v2646
  %v2648 = vpop.f32.mrb[0].mxu0
  %2649 = vmatprep.mubr.f32.mxu0 0.0
  %2650 = vmatmul.mubr.f32.gmra.mrb[0].mxu0 %v641
  %v2651 = vpop.f32.mrb[0].mxu0
  %v2652 = vadd.f32 %v2267, %v2651
  %v2653 = vpop.f32.mrb[0].mxu0
  %2654 = vmatprep.mubr.f32.mxu0 0.0
  %2655 = vmatmul.mubr.f32.gmra.mrb[0].mxu0 %v642
  %v2656 = vpop.f32.mrb[0].mxu0
  %v2657 = vadd.f32 %v2272, %v2656
  %v2658 = vpop.f32.mrb[0].mxu0
  %2659 = vmatprep.mubr.f32.mxu0 0.0
  %2660 = vmatmul.mubr.f32.gmra.mrb[0].mxu0 %v643
  %v2661 = vpop.f32.mrb[0].mxu0
  %v2662 = vadd.f32 %v2277, %v2661
  %v2663 = vpop.f32.mrb[0].mxu0
  %2664 = vmatprep.mubr.f32.mxu0 0.0
  %2665 = vmatmul.mubr.f32.gmra.mrb[0].mxu0 %v644
  %v2666 = vpop.f32.mrb[0].mxu0
  %v2667 = vadd.f32 %v2282, %v2666
  %v2668 = vpop.f32.mrb[0].mxu0
  %2669 = vmatprep.mubr.f32.mxu0 0.0
  %2670 = vmatmul.mubr.f32.gmra.mrb[0].mxu0 %v645
  %v2671 = vpop.f32.mrb[0].mxu0
  %v2672 = vadd.f32 %v2287, %v2671
  %v2673 = vpop.f32.mrb[0].mxu0
  %2674 = vmatprep.mubr.f32.mxu0 0.0
  %2675 = vmatmul.mubr.f32.gmra.mrb[0].mxu0 %v646
  %v2676 = vpop.f32.mrb[0].mxu0
  %v2677 = vadd.f32 %v2292, %v2676
  %v2678 = vpop.f32.mrb[0].mxu0
  %2679 = vmatprep.mubr.f32.mxu0 0.0
  %2680 = vmatmul.mubr.f32.gmra.mrb[0].mxu0 %v647
  %v2681 = vpop.f32.mrb[0].mxu0
  %v2682 = vadd.f32 %v2297, %v2681
  %v2683 = vpop.f32.mrb[0].mxu0
  %2684 = vmatprep.mubr.f32.mxu0 0.0
  %2685 = vmatmul.mubr.f32.gmra.mrb[0].mxu0 %v648
  %v2686 = vpop.f32.mrb[0].mxu0
  %v2687 = vadd.f32 %v2302, %v2686
  %v2688 = vpop.f32.mrb[0].mxu0
  %2689 = vmatprep.mubr.f32.mxu0 0.0
  %2690 = vmatmul.mubr.f32.gmra.mrb[0].mxu0 %v649
  %v2691 = vpop.f32.mrb[0].mxu0
  %v2692 = vadd.f32 %v2307, %v2691
  %v2693 = vpop.f32.mrb[0].mxu0
  %2694 = vmatprep.mubr.f32.mxu0 0.0
  %2695 = vmatmul.mubr.f32.gmra.mrb[0].mxu0 %v650
  %v2696 = vpop.f32.mrb[0].mxu0
  %v2697 = vadd.f32 %v2312, %v2696
  %v2698 = vpop.f32.mrb[0].mxu0
  %2699 = vmatprep.mubr.f32.mxu0 0.0
  %2700 = vmatmul.mubr.f32.gmra.mrb[0].mxu0 %v651
  %v2701 = vpop.f32.mrb[0].mxu0
  %v2702 = vadd.f32 %v2317, %v2701
  %v2703 = vpop.f32.mrb[0].mxu0
  %2704 = vmatprep.mubr.f32.mxu0 0.0
  %2705 = vmatmul.mubr.f32.gmra.mrb[0].mxu0 %v652
  %v2706 = vpop.f32.mrb[0].mxu0
  %v2707 = vadd.f32 %v2322, %v2706
  %v2708 = vpop.f32.mrb[0].mxu0
  %2709 = vmatprep.mubr.f32.mxu0 0.0
  %2710 = vmatmul.mubr.f32.gmra.mrb[0].mxu0 %v653
  %v2711 = vpop.f32.mrb[0].mxu0
  %v2712 = vadd.f32 %v2327, %v2711
  %v2713 = vpop.f32.mrb[0].mxu0
  %2714 = vmatprep.mubr.f32.mxu0 0.0
  %2715 = vmatmul.mubr.f32.gmra.mrb[0].mxu0 %v654
  %v2716 = vpop.f32.mrb[0].mxu0
  %v2717 = vadd.f32 %v2332, %v2716
  %v2718 = vpop.f32.mrb[0].mxu0
  %2719 = vmatprep.mubr.f32.mxu0 0.0
  %2720 = vmatmul.mubr.f32.gmra.mrb[0].mxu0 %v655
  %v2721 = vpop.f32.mrb[0].mxu0
  %v2722 = vadd.f32 %v2337, %v2721
  %v2723 = vpop.f32.mrb[0].mxu0
  %2724 = vdwg.mxu0
  %2725 = vst [vmem:[%s4] sm:$0xff] %v2407
  %2726 = vst [vmem:[%s4 + $0x8] sm:$0xff] %v2412
  %2727 = vst [vmem:[%s4 + $0x10] sm:$0xff] %v2417
  %2728 = vst [vmem:[%s4 + $0x18] sm:$0xff] %v2422
  %2729 = vst [vmem:[%s4 + $0x20] sm:$0xff] %v2427
  %2730 = vst [vmem:[%s4 + $0x28] sm:$0xff] %v2432
  %2731 = vst [vmem:[%s4 + $0x30] sm:$0xff] %v2437
  %2732 = vst [vmem:[%s4 + $0x38] sm:$0xff] %v2442
  %2733 = vst [vmem:[%s4 + $0x40] sm:$0xff] %v2447
  %2734 = vst [vmem:[%s4 + $0x48] sm:$0xff] %v2452
  %2735 = vst [vmem:[%s4 + $0x50] sm:$0xff] %v2457
  %2736 = vst [vmem:[%s4 + $0x58] sm:$0xff] %v2462
  %2737 = vst [vmem:[%s4 + $0x60] sm:$0xff] %v2467
  %2738 = vst [vmem:[%s4 + $0x68] sm:$0xff] %v2472
  %2739 = vst [vmem:[%s4 + $0x70] sm:$0xff] %v2477
  %2740 = vst [vmem:[%s4 + $0x78] sm:$0xff] %v2482
  %2741 = vst [vmem:[%s4 + $0x80] sm:$0xff] %v2487
  %2742 = vst [vmem:[%s4 + $0x88] sm:$0xff] %v2492
  %2743 = vst [vmem:[%s4 + $0x90] sm:$0xff] %v2497
  %2744 = vst [vmem:[%s4 + $0x98] sm:$0xff] %v2502
  %2745 = vst [vmem:[%s4 + $0xa0] sm:$0xff] %v2507
  %2746 = vst [vmem:[%s4 + $0xa8] sm:$0xff] %v2512
  %2747 = vst [vmem:[%s4 + $0xb0] sm:$0xff] %v2517
  %2748 = vst [vmem:[%s4 + $0xb8] sm:$0xff] %v2522
  %2749 = vst [vmem:[%s4 + $0xc0] sm:$0xff] %v2527
  %2750 = vst [vmem:[%s4 + $0xc8] sm:$0xff] %v2532
  %2751 = vst [vmem:[%s4 + $0xd0] sm:$0xff] %v2537
  %2752 = vst [vmem:[%s4 + $0xd8] sm:$0xff] %v2542
  %2753 = vst [vmem:[%s4 + $0xe0] sm:$0xff] %v2547
  %2754 = vst [vmem:[%s4 + $0xe8] sm:$0xff] %v2552
  %2755 = vst [vmem:[%s4 + $0xf0] sm:$0xff] %v2557
  %2756 = vst [vmem:[%s4 + $0xf8] sm:$0xff] %v2562
  %2757 = vst [vmem:[%s4 + $0x100] sm:$0xff] %v2567
  %2758 = vst [vmem:[%s4 + $0x108] sm:$0xff] %v2572
  %2759 = vst [vmem:[%s4 + $0x110] sm:$0xff] %v2577
  %2760 = vst [vmem:[%s4 + $0x118] sm:$0xff] %v2582
  %2761 = vst [vmem:[%s4 + $0x120] sm:$0xff] %v2587
  %2762 = vst [vmem:[%s4 + $0x128] sm:$0xff] %v2592
  %2763 = vst [vmem:[%s4 + $0x130] sm:$0xff] %v2597
  %2764 = vst [vmem:[%s4 + $0x138] sm:$0xff] %v2602
  %2765 = vst [vmem:[%s4 + $0x140] sm:$0xff] %v2607
  %2766 = vst [vmem:[%s4 + $0x148] sm:$0xff] %v2612
  %2767 = vst [vmem:[%s4 + $0x150] sm:$0xff] %v2617
  %2768 = vst [vmem:[%s4 + $0x158] sm:$0xff] %v2622
  %2769 = vst [vmem:[%s4 + $0x160] sm:$0xff] %v2627
  %2770 = vst [vmem:[%s4 + $0x168] sm:$0xff] %v2632
  %2771 = vst [vmem:[%s4 + $0x170] sm:$0xff] %v2637
  %2772 = vst [vmem:[%s4 + $0x178] sm:$0xff] %v2642
  %2773 = vst [vmem:[%s4 + $0x180] sm:$0xff] %v2647
  %2774 = vst [vmem:[%s4 + $0x188] sm:$0xff] %v2652
  %2775 = vst [vmem:[%s4 + $0x190] sm:$0xff] %v2657
  %2776 = vst [vmem:[%s4 + $0x198] sm:$0xff] %v2662
  %2777 = vst [vmem:[%s4 + $0x1a0] sm:$0xff] %v2667
  %2778 = vst [vmem:[%s4 + $0x1a8] sm:$0xff] %v2672
  %2779 = vst [vmem:[%s4 + $0x1b0] sm:$0xff] %v2677
  %2780 = vst [vmem:[%s4 + $0x1b8] sm:$0xff] %v2682
  %2781 = vst [vmem:[%s4 + $0x1c0] sm:$0xff] %v2687
  %2782 = vst [vmem:[%s4 + $0x1c8] sm:$0xff] %v2692
  %2783 = vst [vmem:[%s4 + $0x1d0] sm:$0xff] %v2697
  %2784 = vst [vmem:[%s4 + $0x1d8] sm:$0xff] %v2702
  %2785 = vst [vmem:[%s4 + $0x1e0] sm:$0xff] %v2707
  %2786 = vst [vmem:[%s4 + $0x1e8] sm:$0xff] %v2712
  %2787 = vst [vmem:[%s4 + $0x1f0] sm:$0xff] %v2717
  %2788 = vst [vmem:[%s4 + $0x1f8] sm:$0xff] %v2722
  %v2789 = vadd.f32 %v2407, %v2412
  %v2790 = vadd.f32 %v2789, %v2417
  %v2791 = vadd.f32 %v2790, %v2422
  %v2792 = vadd.f32 %v2791, %v2427
  %v2793 = vadd.f32 %v2792, %v2432
  %v2794 = vadd.f32 %v2793, %v2437
  %v2795 = vadd.f32 %v2794, %v2442
  %v2796 = vadd.f32 %v2795, %v2447
  %v2797 = vadd.f32 %v2796, %v2452
  %v2798 = vadd.f32 %v2797, %v2457
  %v2799 = vadd.f32 %v2798, %v2462
  %v2800 = vadd.f32 %v2799, %v2467
  %v2801 = vadd.f32 %v2800, %v2472
  %v2802 = vadd.f32 %v2801, %v2477
  %v2803 = vadd.f32 %v2802, %v2482
  %v2804 = vadd.f32 %v2803, %v2487
  %v2805 = vadd.f32 %v2804, %v2492
  %v2806 = vadd.f32 %v2805, %v2497
  %v2807 = vadd.f32 %v2806, %v2502
  %v2808 = vadd.f32 %v2807, %v2507
  %v2809 = vadd.f32 %v2808, %v2512
  %v2810 = vadd.f32 %v2809, %v2517
  %v2811 = vadd.f32 %v2810, %v2522
  %v2812 = vadd.f32 %v2811, %v2527
  %v2813 = vadd.f32 %v2812, %v2532
  %v2814 = vadd.f32 %v2813, %v2537
  %v2815 = vadd.f32 %v2814, %v2542
  %v2816 = vadd.f32 %v2815, %v2547
  %v2817 = vadd.f32 %v2816, %v2552
  %v2818 = vadd.f32 %v2817, %v2557
  %v2819 = vadd.f32 %v2818, %v2562
  %v2820 = vadd.f32 %v2819, %v2567
  %v2821 = vadd.f32 %v2820, %v2572
  %v2822 = vadd.f32 %v2821, %v2577
  %v2823 = vadd.f32 %v2822, %v2582
  %v2824 = vadd.f32 %v2823, %v2587
  %v2825 = vadd.f32 %v2824, %v2592
  %v2826 = vadd.f32 %v2825, %v2597
  %v2827 = vadd.f32 %v2826, %v2602
  %v2828 = vadd.f32 %v2827, %v2607
  %v2829 = vadd.f32 %v2828, %v2612
  %v2830 = vadd.f32 %v2829, %v2617
  %v2831 = vadd.f32 %v2830, %v2622
  %v2832 = vadd.f32 %v2831, %v2627
  %v2833 = vadd.f32 %v2832, %v2632
  %v2834 = vadd.f32 %v2833, %v2637
  %v2835 = vadd.f32 %v2834, %v2642
  %v2836 = vadd.f32 %v2835, %v2647
  %v2837 = vadd.f32 %v2836, %v2652
  %v2838 = vadd.f32 %v2837, %v2657
  %v2839 = vadd.f32 %v2838, %v2662
  %v2840 = vadd.f32 %v2839, %v2667
  %v2841 = vadd.f32 %v2840, %v2672
  %v2842 = vadd.f32 %v2841, %v2677
  %v2843 = vadd.f32 %v2842, %v2682
  %v2844 = vadd.f32 %v2843, %v2687
  %v2845 = vadd.f32 %v2844, %v2692
  %v2846 = vadd.f32 %v2845, %v2697
  %v2847 = vadd.f32 %v2846, %v2702
  %v2848 = vadd.f32 %v2847, %v2707
  %v2849 = vadd.f32 %v2848, %v2712
  %v2850 = vadd.f32 %v2849, %v2717
  %v2851 = vadd.f32 %v2850, %v2722
  %v2852 = vrot.slane %v2851, 4
  %v2853 = vadd.f32 %v2851, %v2852
  %v2854 = vrot.slane %v2853, 2
  %v2855 = vadd.f32 %v2853, %v2854
  %v2856 = vrot.slane %v2855, 1
  %v2857 = vadd.f32 %v2855, %v2856
  %v2858 = vmul.f32 %v2407, %v2407
  %v2859 = vmul.f32 %v2412, %v2412
  %v2860 = vmul.f32 %v2417, %v2417
  %v2861 = vmul.f32 %v2422, %v2422
  %v2862 = vmul.f32 %v2427, %v2427
  %v2863 = vmul.f32 %v2432, %v2432
  %v2864 = vmul.f32 %v2437, %v2437
  %v2865 = vmul.f32 %v2442, %v2442
  %v2866 = vmul.f32 %v2447, %v2447
  %v2867 = vmul.f32 %v2452, %v2452
  %v2868 = vmul.f32 %v2457, %v2457
  %v2869 = vmul.f32 %v2462, %v2462
  %v2870 = vmul.f32 %v2467, %v2467
  %v2871 = vmul.f32 %v2472, %v2472
  %v2872 = vmul.f32 %v2477, %v2477
  %v2873 = vmul.f32 %v2482, %v2482
  %v2874 = vmul.f32 %v2487, %v2487
  %v2875 = vmul.f32 %v2492, %v2492
  %v2876 = vmul.f32 %v2497, %v2497
  %v2877 = vmul.f32 %v2502, %v2502
  %v2878 = vmul.f32 %v2507, %v2507
  %v2879 = vmul.f32 %v2512, %v2512
  %v2880 = vmul.f32 %v2517, %v2517
  %v2881 = vmul.f32 %v2522, %v2522
  %v2882 = vmul.f32 %v2527, %v2527
  %v2883 = vmul.f32 %v2532, %v2532
  %v2884 = vmul.f32 %v2537, %v2537
  %v2885 = vmul.f32 %v2542, %v2542
  %v2886 = vmul.f32 %v2547, %v2547
  %v2887 = vmul.f32 %v2552, %v2552
  %v2888 = vmul.f32 %v2557, %v2557
  %v2889 = vmul.f32 %v2562, %v2562
  %v2890 = vmul.f32 %v2567, %v2567
  %v2891 = vmul.f32 %v2572, %v2572
  %v2892 = vmul.f32 %v2577, %v2577
  %v2893 = vmul.f32 %v2582, %v2582
  %v2894 = vmul.f32 %v2587, %v2587
  %v2895 = vmul.f32 %v2592, %v2592
  %v2896 = vmul.f32 %v2597, %v2597
  %v2897 = vmul.f32 %v2602, %v2602
  %v2898 = vmul.f32 %v2607, %v2607
  %v2899 = vmul.f32 %v2612, %v2612
  %v2900 = vmul.f32 %v2617, %v2617
  %v2901 = vmul.f32 %v2622, %v2622
  %v2902 = vmul.f32 %v2627, %v2627
  %v2903 = vmul.f32 %v2632, %v2632
  %v2904 = vmul.f32 %v2637, %v2637
  %v2905 = vmul.f32 %v2642, %v2642
  %v2906 = vmul.f32 %v2647, %v2647
  %v2907 = vmul.f32 %v2652, %v2652
  %v2908 = vmul.f32 %v2657, %v2657
  %v2909 = vmul.f32 %v2662, %v2662
  %v2910 = vmul.f32 %v2667, %v2667
  %v2911 = vmul.f32 %v2672, %v2672
  %v2912 = vmul.f32 %v2677, %v2677
  %v2913 = vmul.f32 %v2682, %v2682
  %v2914 = vmul.f32 %v2687, %v2687
  %v2915 = vmul.f32 %v2692, %v2692
  %v2916 = vmul.f32 %v2697, %v2697
  %v2917 = vmul.f32 %v2702, %v2702
  %v2918 = vmul.f32 %v2707, %v2707
  %v2919 = vmul.f32 %v2712, %v2712
  %v2920 = vmul.f32 %v2717, %v2717
  %v2921 = vmul.f32 %v2722, %v2722
  %v2922 = vadd.f32 %v2858, %v2859
  %v2923 = vadd.f32 %v2922, %v2860
  %v2924 = vadd.f32 %v2923, %v2861
  %v2925 = vadd.f32 %v2924, %v2862
  %v2926 = vadd.f32 %v2925, %v2863
  %v2927 = vadd.f32 %v2926, %v2864
  %v2928 = vadd.f32 %v2927, %v2865
  %v2929 = vadd.f32 %v2928, %v2866
  %v2930 = vadd.f32 %v2929, %v2867
  %v2931 = vadd.f32 %v2930, %v2868
  %v2932 = vadd.f32 %v2931, %v2869
  %v2933 = vadd.f32 %v2932, %v2870
  %v2934 = vadd.f32 %v2933, %v2871
  %v2935 = vadd.f32 %v2934, %v2872
  %v2936 = vadd.f32 %v2935, %v2873
  %v2937 = vadd.f32 %v2936, %v2874
  %v2938 = vadd.f32 %v2937, %v2875
  %v2939 = vadd.f32 %v2938, %v2876
  %v2940 = vadd.f32 %v2939, %v2877
  %v2941 = vadd.f32 %v2940, %v2878
  %v2942 = vadd.f32 %v2941, %v2879
  %v2943 = vadd.f32 %v2942, %v2880
  %v2944 = vadd.f32 %v2943, %v2881
  %v2945 = vadd.f32 %v2944, %v2882
  %v2946 = vadd.f32 %v2945, %v2883
  %v2947 = vadd.f32 %v2946, %v2884
  %v2948 = vadd.f32 %v2947, %v2885
  %v2949 = vadd.f32 %v2948, %v2886
  %v2950 = vadd.f32 %v2949, %v2887
  %v2951 = vadd.f32 %v2950, %v2888
  %v2952 = vadd.f32 %v2951, %v2889
  %v2953 = vadd.f32 %v2952, %v2890
  %v2954 = vadd.f32 %v2953, %v2891
  %v2955 = vadd.f32 %v2954, %v2892
  %v2956 = vadd.f32 %v2955, %v2893
  %v2957 = vadd.f32 %v2956, %v2894
  %v2958 = vadd.f32 %v2957, %v2895
  %v2959 = vadd.f32 %v2958, %v2896
  %v2960 = vadd.f32 %v2959, %v2897
  %v2961 = vadd.f32 %v2960, %v2898
  %v2962 = vadd.f32 %v2961, %v2899
  %v2963 = vadd.f32 %v2962, %v2900
  %v2964 = vadd.f32 %v2963, %v2901
  %v2965 = vadd.f32 %v2964, %v2902
  %v2966 = vadd.f32 %v2965, %v2903
  %v2967 = vadd.f32 %v2966, %v2904
  %v2968 = vadd.f32 %v2967, %v2905
  %v2969 = vadd.f32 %v2968, %v2906
  %v2970 = vadd.f32 %v2969, %v2907
  %v2971 = vadd.f32 %v2970, %v2908
  %v2972 = vadd.f32 %v2971, %v2909
  %v2973 = vadd.f32 %v2972, %v2910
  %v2974 = vadd.f32 %v2973, %v2911
  %v2975 = vadd.f32 %v2974, %v2912
  %v2976 = vadd.f32 %v2975, %v2913
  %v2977 = vadd.f32 %v2976, %v2914
  %v2978 = vadd.f32 %v2977, %v2915
  %v2979 = vadd.f32 %v2978, %v2916
  %v2980 = vadd.f32 %v2979, %v2917
  %v2981 = vadd.f32 %v2980, %v2918
  %v2982 = vadd.f32 %v2981, %v2919
  %v2983 = vadd.f32 %v2982, %v2920
  %v2984 = vadd.f32 %v2983, %v2921
  %v2985 = vrot.slane %v2984, 4
  %v2986 = vadd.f32 %v2984, %v2985
  %v2987 = vrot.slane %v2986, 2
  %v2988 = vadd.f32 %v2986, %v2987
  %v2989 = vrot.slane %v2988, 1
  %v2990 = vadd.f32 %v2988, %v2989
  %vm2991 = vcmask 1040384
  %v2992 = vsel %vm2991, %v2857, %v2990
  %2993 = vst [vmem:[%s5] sm:$0x3] %v2992
  // Predicated region
  $region18: #{basic_block_forward.4} parent=0 // pred_check
    _
  $region19: #{basic_block_forward.4} parent=0 // pred_check_branch
    %2995 = sbr.rel (0) target = $region21
  $region20: #{basic_block_forward.4} parent=0 // pred_region
    _
  $region21: #{basic_block_forward.4} parent=0 // pred_fallthru
    _
  // Predicated region
  $region22: #{basic_block_forward.4} parent=0 // pred_check
    _
  $region23: #{basic_block_forward.4} parent=0 // pred_check_branch
    %2997 = sbr.rel (0) target = $region25
  $region24: #{basic_block_forward.4} parent=0 // pred_region
    _
  $region25: #{basic_block_forward.4} parent=0 // pred_fallthru
    _
  // Predicated region
  $region26: #{basic_block_forward.4} parent=0 // pred_check
    _
  $region27: #{basic_block_forward.4} parent=0 // pred_check_branch
    %2999 = sbr.rel (0) target = $region29
  $region28: #{basic_block_forward.4} parent=0 // pred_region
    _
  $region29: #{basic_block_forward.4} parent=0 // pred_fallthru
    _
  // Predicated region
  $region30: #{basic_block_forward.4} parent=0 // pred_check
    _
  $region31: #{basic_block_forward.4} parent=0 // pred_check_branch
    %3001 = sbr.rel (0) target = $region33
  $region32: #{basic_block_forward.4} parent=0 // pred_region
    _
  $region33: #{basic_block_forward.4} parent=0 // pred_fallthru
    _

</llo_original>
